<compile_context>
chip_gen: v6e
topology: v6e:2x2x1
jax: 0.10.0
libtpu: 0.0.40
codegen_flags: <defaults>
</compile_context>

<pallas_src>
import jax
import jax.numpy as jnp
from jax import lax
from jax.experimental import pallas as pl
from jax.experimental.pallas import tpu as pltpu

OUT_DIM = 128
CONV_DIMS = [(9, 32), (32, 64), (64, 128)]       # (Cin, Cout) per stage
CH_IN, C1, C2, C3 = 9, 32, 64, 128
L_IN = 300                                       # 300 -> 150 -> 75 -> 37
L1, L2, L3 = L_IN // 2, L_IN // 4, L_IN // 8     # 150, 75, 37
FC_IN = C3 * L3                                  # 4736
BN_EPS = 1e-5


def _round_up(x, m):
    return (x + m - 1) // m * m


# Per-sample slot sizes inside the batch-concatenated padded scratch buffers.
# slot >= l_in + 2 (zero row each side) and slot/2 a multiple of 8 so per-sample
# pooled-output blocks start on a sublane-tile boundary.
S1 = _round_up(L_IN + 2, 16)     # 304
S2 = _round_up(L1 + 2, 16)       # 160
S3 = _round_up(L2 + 2, 16)       # 80
H1, H2, H3 = S1 // 2, S2 // 2, S3 // 2   # 152, 80, 40 (per-sample output stride)
GUARD = 8                        # tap k=3 over-reads 2 rows past the last slot


# ---------------------------------------------------------------------------
# Fused kernel: one grid step = one batch tile of b_tile samples
# ---------------------------------------------------------------------------
def _make_kernel(b_tile):
    f32 = jnp.float32
    bf16 = jnp.bfloat16

    def kernel(x_ref,
               w1_ref, t1_ref, w2_ref, t2_ref, w3_ref, t3_ref,
               fcw_ref, fcb_ref,
               o_ref,
               pad1, pad2, pad3, h3):
        """x_ref: (b_tile, L, 9) channels-last tile.  o_ref: (b_tile, out_dim).

        padN: f32 VMEM scratch holding the zero-padded conv-N input for the
        whole batch tile (sample b occupies rows [b*slot, (b+1)*slot)).
        Conv1d(k=3,pad=1) + folded-BN + ReLU + MaxPool1d(2) is computed as 6
        strided (b_tile*half, Cin) @ (Cin, Cout) MXU matmuls (even/odd output
        parity), pooled on register values, shift+ReLU applied once after the
        pool.  h3: (b_tile*H3, 128) f32 stage-3 feature scratch for the FC.
        """

        def conv_bn_relu_pool(pad_ref, slot, w_ref, shift_ref):
            half = slot // 2
            m = b_tile * half
            # taps[k][r] = padded[2r + k]; sample b's outputs sit at rows
            # [b*half, b*half + lh) of the result, the rest is discarded.
            taps = [pad_ref[pl.ds(k, m, stride=2), :].astype(bf16)
                    for k in range(4)]
            wa, wb, wc = w_ref[0], w_ref[1], w_ref[2]      # bf16 (Cin, Cout)
            ye = (jnp.dot(taps[0], wa, preferred_element_type=f32)
                  + jnp.dot(taps[1], wb, preferred_element_type=f32)
                  + jnp.dot(taps[2], wc, preferred_element_type=f32))
            yo = (jnp.dot(taps[1], wa, preferred_element_type=f32)
                  + jnp.dot(taps[2], wb, preferred_element_type=f32)
                  + jnp.dot(taps[3], wc, preferred_element_type=f32))
            # Pool first, then one shift+ReLU (exact: BN scale is inside w).
            return jnp.maximum(jnp.maximum(ye, yo) + shift_ref[...], 0.0)

        # ---- stage 1: fill pad1 (data rows + only the border rows that valid
        # outputs read; interior is fully overwritten every step) -------------
        z1 = jnp.zeros((1, CH_IN), f32)
        for b in range(b_tile):
            base = b * S1
            pad1[pl.ds(base, 1), :] = z1                       # left zero pad
            pad1[pl.ds(base + 1, L_IN), :] = x_ref[b]          # data
            pad1[pl.ds(base + 1 + L_IN, 1), :] = z1            # right zero pad
        h1 = conv_bn_relu_pool(pad1, S1, w1_ref, t1_ref)       # (b*152, 32)

        # ---- stage 2 ---------------------------------------------------------
        z2 = jnp.zeros((1, C1), f32)
        for b in range(b_tile):
            base = b * S2
            pad2[pl.ds(base, 1), :] = z2
            pad2[pl.ds(base + 1, L1), :] = h1[b * H1: b * H1 + L1]
            pad2[pl.ds(base + 1 + L1, 1), :] = z2
        h2 = conv_bn_relu_pool(pad2, S2, w2_ref, t2_ref)       # (b*80, 64)

        # ---- stage 3 (odd length 75: the right pad row is never read by a
        # kept pooling window, so only the left zero row is required) ---------
        z3 = jnp.zeros((1, C2), f32)
        for b in range(b_tile):
            base = b * S3
            pad3[pl.ds(base, 1), :] = z3
            pad3[pl.ds(base + 1, L2), :] = h2[b * H2: b * H2 + L2]
        h3[...] = conv_bn_relu_pool(pad3, S3, w3_ref, t3_ref)  # (b*40, 128)

        # ---- Dropout (identity, eval) + flatten + FC + ReLU ------------------
        # torch flattens (C=128, L=37) channel-major; fcw_ref is pre-permuted to
        # (L3, C3, out) so   out[b] = sum_l h3[b, l, :] @ fcw[l]
        # with batch folded into M via strided row gathers (stride = H3).
        acc = jnp.dot(h3[pl.ds(0, b_tile, stride=H3), :].astype(bf16),
                      fcw_ref[0], preferred_element_type=f32)
        for l in range(1, L3):
            acc += jnp.dot(h3[pl.ds(l, b_tile, stride=H3), :].astype(bf16),
                           fcw_ref[l], preferred_element_type=f32)
        o_ref[...] = jnp.maximum(acc + fcb_ref[...], 0.0)

    return kernel


def _pick_b_tile(batch, b_tile):
    if batch <= b_tile:
        return batch                      # single grid step, block == full array
    bt = _round_up(b_tile, 8)             # grid > 1 => batch block sublane-aligned
    return batch if bt >= batch else bt


# ---------------------------------------------------------------------------
# Pallas wrapper
# ---------------------------------------------------------------------------
def phys_branch_forward(x_ncl, params, b_tile=8):
    """x_ncl: (B, 9, L) PyTorch NCW layout -> (B, out_dim)."""
    batch = x_ncl.shape[0]
    b_tile = _pick_b_tile(batch, b_tile)
    # channels-last; tiny tensor, the XLA transpose cost is negligible here.
    x = jnp.transpose(x_ncl, (0, 2, 1)).astype(jnp.float32)    # (B, L, C)
    bp = _round_up(batch, b_tile)
    if bp != batch:
        x = jnp.pad(x, ((0, bp - batch), (0, 0), (0, 0)))
    out_dim = params["fc_b"].shape[1]

    out = pl.pallas_call(
        _make_kernel(b_tile),
        out_shape=jax.ShapeDtypeStruct((bp, out_dim), jnp.float32),
        grid_spec=pltpu.PrefetchScalarGridSpec(
            num_scalar_prefetch=0,
            grid=(bp // b_tile,),
            in_specs=[
                pl.BlockSpec((b_tile, L_IN, CH_IN), lambda i: (i, 0, 0)),
                # weights / folded-BN shifts: constant block index => DMA'd once,
                # resident in VMEM across every grid step.
                pl.BlockSpec((3, CH_IN, C1), lambda i: (0, 0, 0)),
                pl.BlockSpec((1, C1), lambda i: (0, 0)),
                pl.BlockSpec((3, C1, C2), lambda i: (0, 0, 0)),
                pl.BlockSpec((1, C2), lambda i: (0, 0)),
                pl.BlockSpec((3, C2, C3), lambda i: (0, 0, 0)),
                pl.BlockSpec((1, C3), lambda i: (0, 0)),
                pl.BlockSpec((L3, C3, out_dim), lambda i: (0, 0, 0)),
                pl.BlockSpec((1, out_dim), lambda i: (0, 0)),
            ],
            out_specs=pl.BlockSpec((b_tile, out_dim), lambda i: (i, 0)),
            scratch_shapes=[
                pltpu.VMEM((b_tile * S1 + GUARD, CH_IN), jnp.float32),
                pltpu.VMEM((b_tile * S2 + GUARD, C1), jnp.float32),
                pltpu.VMEM((b_tile * S3 + GUARD, C2), jnp.float32),
                pltpu.VMEM((b_tile * H3, C3), jnp.float32),
            ],
        ),
        compiler_params=pltpu.CompilerParams(
            dimension_semantics=("parallel",)),   # v7x: shard batch tiles over 2 TCs
    )(x,
      params["w1"], params["shift1"],
      params["w2"], params["shift2"],
      params["w3"], params["shift3"],
      params["fc_w3"], params["fc_b"])
    return out[:batch]


# ---------------------------------------------------------------------------
# Deterministic parameter init (synthetic, shapes per the PyTorch __init__)
# ---------------------------------------------------------------------------
def init_params(key, out_dim=OUT_DIM):
    params = {}
    keys = jax.random.split(key, 2 * len(CONV_DIMS) + 2)
    for i, (cin, cout) in enumerate(CONV_DIMS, start=1):
        kw, kb = keys[2 * (i - 1)], keys[2 * (i - 1) + 1]
        # weights stored as (3, Cin, Cout); torch layout is (Cout, Cin, 3)
        w = jax.random.normal(kw, (3, cin, cout), jnp.float32) / jnp.sqrt(3.0 * cin)
        conv_b = jax.random.normal(kb, (cout,), jnp.float32) * 0.01
        gamma = jnp.ones((cout,), jnp.float32)
        beta = jnp.zeros((cout,), jnp.float32)
        run_mean = jnp.zeros((cout,), jnp.float32)
        run_var = jnp.ones((cout,), jnp.float32)
        scale = gamma / jnp.sqrt(run_var + BN_EPS)
        shift = beta - run_mean * scale + conv_b * scale      # conv bias folded in
        # Fold the BN scale into the conv weight (per output channel): kernel
        # then only needs one add (shift) after the matmul.
        params[f"w{i}"] = (w * scale[None, None, :]).astype(jnp.bfloat16)
        params[f"shift{i}"] = shift.reshape(1, cout)
    kfw, kfb = keys[-2], keys[-1]
    fc_w = (jax.random.normal(kfw, (FC_IN, out_dim), jnp.float32)
            / jnp.sqrt(FC_IN)).astype(jnp.bfloat16)           # rows = c*L3 + l
    params["fc_w"] = fc_w
    # Permute FC rows to (l, c, out) so the kernel contracts the (L3, C3)
    # feature map without any in-kernel flatten / transpose.
    params["fc_w3"] = jnp.transpose(
        fc_w.reshape(C3, L3, out_dim), (1, 0, 2))
    params["fc_b"] = (jax.random.normal(kfb, (out_dim,), jnp.float32) * 0.01
                      ).reshape(1, out_dim)
    return params


# ---------------------------------------------------------------------------
# Pure-JAX reference (same eval semantics, same bf16 operand rounding)
# ---------------------------------------------------------------------------
def reference_forward(x_ncl, params):
    x = x_ncl.astype(jnp.float32)                             # (B, C, L)
    for i, (cin, cout) in enumerate(CONV_DIMS, start=1):
        w_oih = jnp.transpose(params[f"w{i}"], (2, 1, 0))     # (Cout, Cin, 3) bf16
        y = lax.conv_general_dilated(
            x.astype(jnp.bfloat16), w_oih, window_strides=(1,), padding=((1, 1),),
            dimension_numbers=("NCH", "OIH", "NCH"),
            preferred_element_type=jnp.float32)
        y = jnp.maximum(y + params[f"shift{i}"].reshape(1, cout, 1), 0.0)
        y = lax.reduce_window(y, -jnp.inf, lax.max,
                              window_dimensions=(1, 1, 2),
                              window_strides=(1, 1, 2),
                              padding="VALID")
        x = y
    feat = x.reshape(x.shape[0], -1)                          # torch .view on (B,C,L)
    logits = jnp.dot(feat.astype(jnp.bfloat16), params["fc_w"],
                     preferred_element_type=jnp.float32)
    return jnp.maximum(logits + params["fc_b"], 0.0)


if __name__ == "__main__":
    key = jax.random.PRNGKey(0)
    params = init_params(key)
    fwd = jax.jit(phys_branch_forward)

    # Small check: B=2 (b_tile clamps to 2, single grid step).
    x = jax.random.normal(jax.random.fold_in(key, 123), (2, 9, L_IN), jnp.float32)
    out = jax.block_until_ready(fwd(x, params))
    assert out.shape == (2, OUT_DIM), out.shape
    ref = reference_forward(x, params)
    err = float(jnp.max(jnp.abs(out - ref)))
    assert err < 2e-3, f"max abs error vs reference too large (B=2): {err}"

    # Multi-step check: B=10 with b_tile=8 -> padded to 16, grid=(2,).
    x2 = jax.random.normal(jax.random.fold_in(key, 456), (10, 9, L_IN), jnp.float32)
    out2 = jax.block_until_ready(fwd(x2, params))
    assert out2.shape == (10, OUT_DIM), out2.shape
    ref2 = reference_forward(x2, params)
    err2 = float(jnp.max(jnp.abs(out2 - ref2)))
    assert err2 < 2e-3, f"max abs error vs reference too large (B=10): {err2}"

    print("KERNEL_OK")
</pallas_src>

<mosaic_0001>
module attributes {stable_mosaic.version = 11 : i64} {
  func.func @kernel(%arg0: i32, %arg1: memref<2x300x9xf32, #tpu.memory_space<vmem>>, %arg2: memref<3x9x32xbf16, #tpu.memory_space<vmem>>, %arg3: memref<1x32xf32, #tpu.memory_space<vmem>>, %arg4: memref<3x32x64xbf16, #tpu.memory_space<vmem>>, %arg5: memref<1x64xf32, #tpu.memory_space<vmem>>, %arg6: memref<3x64x128xbf16, #tpu.memory_space<vmem>>, %arg7: memref<1x128xf32, #tpu.memory_space<vmem>>, %arg8: memref<37x128x128xbf16, #tpu.memory_space<vmem>>, %arg9: memref<1x128xf32, #tpu.memory_space<vmem>>, %arg10: memref<2x128xf32, #tpu.memory_space<vmem>>, %arg11: memref<616x9xf32, #tpu.memory_space<vmem>>, %arg12: memref<328x32xf32, #tpu.memory_space<vmem>>, %arg13: memref<168x64xf32, #tpu.memory_space<vmem>>, %arg14: memref<80x128xf32, #tpu.memory_space<vmem>>) attributes {dimension_semantics = [#tpu.dimension_semantics<parallel>], iteration_bounds = array<i64: 1>, scalar_prefetch = 0 : i64, scratch_operands = 4 : i64, tpu.core_type = #tpu.core_type<tc>, window_params = [{transform_indices = @transform_0, window_bounds = array<i64: 2, 300, 9>}, {pipeline_mode = #tpu.pipeline_mode<synchronous>, transform_indices = @transform_1, window_bounds = array<i64: 3, 9, 32>}, {pipeline_mode = #tpu.pipeline_mode<synchronous>, transform_indices = @transform_2, window_bounds = array<i64: 1, 32>}, {pipeline_mode = #tpu.pipeline_mode<synchronous>, transform_indices = @transform_3, window_bounds = array<i64: 3, 32, 64>}, {pipeline_mode = #tpu.pipeline_mode<synchronous>, transform_indices = @transform_4, window_bounds = array<i64: 1, 64>}, {pipeline_mode = #tpu.pipeline_mode<synchronous>, transform_indices = @transform_5, window_bounds = array<i64: 3, 64, 128>}, {pipeline_mode = #tpu.pipeline_mode<synchronous>, transform_indices = @transform_6, window_bounds = array<i64: 1, 128>}, {pipeline_mode = #tpu.pipeline_mode<synchronous>, transform_indices = @transform_7, window_bounds = array<i64: 37, 128, 128>}, {pipeline_mode = #tpu.pipeline_mode<synchronous>, transform_indices = @transform_8, window_bounds = array<i64: 1, 128>}, {transform_indices = @transform_9, window_bounds = array<i64: 2, 128>}]} {
    %cst = arith.constant 0.000000e+00 : f32
    %0 = vector.broadcast %cst : f32 to vector<1x9xf32>
    %c0 = arith.constant 0 : index
    %c0_0 = arith.constant 0 : index
    %1 = vector.load %arg11[%c0, %c0_0] : memref<616x9xf32, #tpu.memory_space<vmem>>, vector<1x9xf32>
    tpu.vector_store %arg11[%c0, %c0_0], %0 {strides = array<i32>} : memref<616x9xf32, #tpu.memory_space<vmem>>, vector<1x9xf32>,
    %c0_1 = arith.constant 0 : index
    %c0_2 = arith.constant 0 : index
    %c0_3 = arith.constant 0 : index
    %2 = vector.load %arg1[%c0_1, %c0_2, %c0_3] : memref<2x300x9xf32, #tpu.memory_space<vmem>>, vector<1x300x9xf32>
    %3 = vector.shape_cast %2 : vector<1x300x9xf32> to vector<300x9xf32>
    %c1 = arith.constant 1 : index
    %c0_4 = arith.constant 0 : index
    %4 = vector.load %arg11[%c1, %c0_4] : memref<616x9xf32, #tpu.memory_space<vmem>>, vector<300x9xf32>
    tpu.vector_store %arg11[%c1, %c0_4], %3 {strides = array<i32>} : memref<616x9xf32, #tpu.memory_space<vmem>>, vector<300x9xf32>,
    %c301 = arith.constant 301 : index
    %c0_5 = arith.constant 0 : index
    %5 = vector.load %arg11[%c301, %c0_5] : memref<616x9xf32, #tpu.memory_space<vmem>>, vector<1x9xf32>
    tpu.vector_store %arg11[%c301, %c0_5], %0 {strides = array<i32>} : memref<616x9xf32, #tpu.memory_space<vmem>>, vector<1x9xf32>,
    %c304 = arith.constant 304 : index
    %c0_6 = arith.constant 0 : index
    %6 = vector.load %arg11[%c304, %c0_6] : memref<616x9xf32, #tpu.memory_space<vmem>>, vector<1x9xf32>
    tpu.vector_store %arg11[%c304, %c0_6], %0 {strides = array<i32>} : memref<616x9xf32, #tpu.memory_space<vmem>>, vector<1x9xf32>,
    %c1_7 = arith.constant 1 : index
    %c0_8 = arith.constant 0 : index
    %c0_9 = arith.constant 0 : index
    %7 = vector.load %arg1[%c1_7, %c0_8, %c0_9] : memref<2x300x9xf32, #tpu.memory_space<vmem>>, vector<1x300x9xf32>
    %8 = vector.shape_cast %7 : vector<1x300x9xf32> to vector<300x9xf32>
    %c305 = arith.constant 305 : index
    %c0_10 = arith.constant 0 : index
    %9 = vector.load %arg11[%c305, %c0_10] : memref<616x9xf32, #tpu.memory_space<vmem>>, vector<300x9xf32>
    tpu.vector_store %arg11[%c305, %c0_10], %8 {strides = array<i32>} : memref<616x9xf32, #tpu.memory_space<vmem>>, vector<300x9xf32>,
    %c605 = arith.constant 605 : index
    %c0_11 = arith.constant 0 : index
    %10 = vector.load %arg11[%c605, %c0_11] : memref<616x9xf32, #tpu.memory_space<vmem>>, vector<1x9xf32>
    tpu.vector_store %arg11[%c605, %c0_11], %0 {strides = array<i32>} : memref<616x9xf32, #tpu.memory_space<vmem>>, vector<1x9xf32>,
    %c0_12 = arith.constant 0 : index
    %c0_13 = arith.constant 0 : index
    %11 = tpu.strided_load %arg11[%c0_12, %c0_13] {strides = array<i32: 2, 1>} : memref<616x9xf32, #tpu.memory_space<vmem>>, vector<304x9xf32>
    %12 = arith.truncf %11 : vector<304x9xf32> to vector<304x9xbf16>
    %c1_14 = arith.constant 1 : index
    %c0_15 = arith.constant 0 : index
    %13 = tpu.strided_load %arg11[%c1_14, %c0_15] {strides = array<i32: 2, 1>} : memref<616x9xf32, #tpu.memory_space<vmem>>, vector<304x9xf32>
    %14 = arith.truncf %13 : vector<304x9xf32> to vector<304x9xbf16>
    %c2 = arith.constant 2 : index
    %c0_16 = arith.constant 0 : index
    %15 = tpu.strided_load %arg11[%c2, %c0_16] {strides = array<i32: 2, 1>} : memref<616x9xf32, #tpu.memory_space<vmem>>, vector<304x9xf32>
    %16 = arith.truncf %15 : vector<304x9xf32> to vector<304x9xbf16>
    %c3 = arith.constant 3 : index
    %c0_17 = arith.constant 0 : index
    %17 = tpu.strided_load %arg11[%c3, %c0_17] {strides = array<i32: 2, 1>} : memref<616x9xf32, #tpu.memory_space<vmem>>, vector<304x9xf32>
    %18 = arith.truncf %17 : vector<304x9xf32> to vector<304x9xbf16>
    %c0_18 = arith.constant 0 : index
    %c0_19 = arith.constant 0 : index
    %c0_20 = arith.constant 0 : index
    %19 = vector.load %arg2[%c0_18, %c0_19, %c0_20] : memref<3x9x32xbf16, #tpu.memory_space<vmem>>, vector<1x9x32xbf16>
    %20 = vector.shape_cast %19 : vector<1x9x32xbf16> to vector<9x32xbf16>
    %c1_21 = arith.constant 1 : index
    %c0_22 = arith.constant 0 : index
    %c0_23 = arith.constant 0 : index
    %21 = vector.load %arg2[%c1_21, %c0_22, %c0_23] : memref<3x9x32xbf16, #tpu.memory_space<vmem>>, vector<1x9x32xbf16>
    %22 = vector.shape_cast %21 : vector<1x9x32xbf16> to vector<9x32xbf16>
    %c2_24 = arith.constant 2 : index
    %c0_25 = arith.constant 0 : index
    %c0_26 = arith.constant 0 : index
    %23 = vector.load %arg2[%c2_24, %c0_25, %c0_26] : memref<3x9x32xbf16, #tpu.memory_space<vmem>>, vector<1x9x32xbf16>
    %24 = vector.shape_cast %23 : vector<1x9x32xbf16> to vector<9x32xbf16>
    %cst_27 = arith.constant dense<0.000000e+00> : vector<304x32xf32>
    %25 = tpu.matmul %12, %20, %cst_27 {dimension_numbers = #tpu.dot_dimension_numbers<[1], [0], [0], [1], [0, 0, 1, 1], [], []>} : vector<304x9xbf16>, vector<9x32xbf16>, vector<304x32xf32> -> vector<304x32xf32>
    %cst_28 = arith.constant dense<0.000000e+00> : vector<304x32xf32>
    %26 = tpu.matmul %14, %22, %cst_28 {dimension_numbers = #tpu.dot_dimension_numbers<[1], [0], [0], [1], [0, 0, 1, 1], [], []>} : vector<304x9xbf16>, vector<9x32xbf16>, vector<304x32xf32> -> vector<304x32xf32>
    %27 = arith.addf %25, %26 : vector<304x32xf32>
    %cst_29 = arith.constant dense<0.000000e+00> : vector<304x32xf32>
    %28 = tpu.matmul %16, %24, %cst_29 {dimension_numbers = #tpu.dot_dimension_numbers<[1], [0], [0], [1], [0, 0, 1, 1], [], []>} : vector<304x9xbf16>, vector<9x32xbf16>, vector<304x32xf32> -> vector<304x32xf32>
    %29 = arith.addf %27, %28 : vector<304x32xf32>
    %cst_30 = arith.constant dense<0.000000e+00> : vector<304x32xf32>
    %30 = tpu.matmul %14, %20, %cst_30 {dimension_numbers = #tpu.dot_dimension_numbers<[1], [0], [0], [1], [0, 0, 1, 1], [], []>} : vector<304x9xbf16>, vector<9x32xbf16>, vector<304x32xf32> -> vector<304x32xf32>
    %cst_31 = arith.constant dense<0.000000e+00> : vector<304x32xf32>
    %31 = tpu.matmul %16, %22, %cst_31 {dimension_numbers = #tpu.dot_dimension_numbers<[1], [0], [0], [1], [0, 0, 1, 1], [], []>} : vector<304x9xbf16>, vector<9x32xbf16>, vector<304x32xf32> -> vector<304x32xf32>
    %32 = arith.addf %30, %31 : vector<304x32xf32>
    %cst_32 = arith.constant dense<0.000000e+00> : vector<304x32xf32>
    %33 = tpu.matmul %18, %24, %cst_32 {dimension_numbers = #tpu.dot_dimension_numbers<[1], [0], [0], [1], [0, 0, 1, 1], [], []>} : vector<304x9xbf16>, vector<9x32xbf16>, vector<304x32xf32> -> vector<304x32xf32>
    %34 = arith.addf %32, %33 : vector<304x32xf32>
    %35 = arith.maximumf %29, %34 : vector<304x32xf32>
    %c0_33 = arith.constant 0 : index
    %c0_34 = arith.constant 0 : index
    %36 = vector.load %arg3[%c0_33, %c0_34] : memref<1x32xf32, #tpu.memory_space<vmem>>, vector<1x32xf32>
    %37 = vector.broadcast %36 : vector<1x32xf32> to vector<304x32xf32>
    %38 = arith.addf %35, %37 : vector<304x32xf32>
    %cst_35 = arith.constant 0.000000e+00 : f32
    %39 = vector.broadcast %cst_35 : f32 to vector<304x32xf32>
    %40 = arith.maximumf %38, %39 : vector<304x32xf32>
    %cst_36 = arith.constant 0.000000e+00 : f32
    %41 = vector.broadcast %cst_36 : f32 to vector<1x32xf32>
    %c0_37 = arith.constant 0 : index
    %c0_38 = arith.constant 0 : index
    %42 = vector.load %arg12[%c0_37, %c0_38] : memref<328x32xf32, #tpu.memory_space<vmem>>, vector<1x32xf32>
    tpu.vector_store %arg12[%c0_37, %c0_38], %41 {strides = array<i32>} : memref<328x32xf32, #tpu.memory_space<vmem>>, vector<1x32xf32>,
    %43 = vector.extract_strided_slice %40 {offsets = [0, 0], sizes = [150, 32], strides = [1, 1]} : vector<304x32xf32> to vector<150x32xf32>
    %c1_39 = arith.constant 1 : index
    %c0_40 = arith.constant 0 : index
    %44 = vector.load %arg12[%c1_39, %c0_40] : memref<328x32xf32, #tpu.memory_space<vmem>>, vector<150x32xf32>
    tpu.vector_store %arg12[%c1_39, %c0_40], %43 {strides = array<i32>} : memref<328x32xf32, #tpu.memory_space<vmem>>, vector<150x32xf32>,
    %c151 = arith.constant 151 : index
    %c0_41 = arith.constant 0 : index
    %45 = vector.load %arg12[%c151, %c0_41] : memref<328x32xf32, #tpu.memory_space<vmem>>, vector<1x32xf32>
    tpu.vector_store %arg12[%c151, %c0_41], %41 {strides = array<i32>} : memref<328x32xf32, #tpu.memory_space<vmem>>, vector<1x32xf32>,
    %c160 = arith.constant 160 : index
    %c0_42 = arith.constant 0 : index
    %46 = vector.load %arg12[%c160, %c0_42] : memref<328x32xf32, #tpu.memory_space<vmem>>, vector<1x32xf32>
    tpu.vector_store %arg12[%c160, %c0_42], %41 {strides = array<i32>} : memref<328x32xf32, #tpu.memory_space<vmem>>, vector<1x32xf32>,
    %47 = vector.extract_strided_slice %40 {offsets = [152, 0], sizes = [150, 32], strides = [1, 1]} : vector<304x32xf32> to vector<150x32xf32>
    %c161 = arith.constant 161 : index
    %c0_43 = arith.constant 0 : index
    %48 = vector.load %arg12[%c161, %c0_43] : memref<328x32xf32, #tpu.memory_space<vmem>>, vector<150x32xf32>
    tpu.vector_store %arg12[%c161, %c0_43], %47 {strides = array<i32>} : memref<328x32xf32, #tpu.memory_space<vmem>>, vector<150x32xf32>,
    %c311 = arith.constant 311 : index
    %c0_44 = arith.constant 0 : index
    %49 = vector.load %arg12[%c311, %c0_44] : memref<328x32xf32, #tpu.memory_space<vmem>>, vector<1x32xf32>
    tpu.vector_store %arg12[%c311, %c0_44], %41 {strides = array<i32>} : memref<328x32xf32, #tpu.memory_space<vmem>>, vector<1x32xf32>,
    %c0_45 = arith.constant 0 : index
    %c0_46 = arith.constant 0 : index
    %50 = tpu.strided_load %arg12[%c0_45, %c0_46] {strides = array<i32: 2, 1>} : memref<328x32xf32, #tpu.memory_space<vmem>>, vector<160x32xf32>
    %51 = arith.truncf %50 : vector<160x32xf32> to vector<160x32xbf16>
    %c1_47 = arith.constant 1 : index
    %c0_48 = arith.constant 0 : index
    %52 = tpu.strided_load %arg12[%c1_47, %c0_48] {strides = array<i32: 2, 1>} : memref<328x32xf32, #tpu.memory_space<vmem>>, vector<160x32xf32>
    %53 = arith.truncf %52 : vector<160x32xf32> to vector<160x32xbf16>
    %c2_49 = arith.constant 2 : index
    %c0_50 = arith.constant 0 : index
    %54 = tpu.strided_load %arg12[%c2_49, %c0_50] {strides = array<i32: 2, 1>} : memref<328x32xf32, #tpu.memory_space<vmem>>, vector<160x32xf32>
    %55 = arith.truncf %54 : vector<160x32xf32> to vector<160x32xbf16>
    %c3_51 = arith.constant 3 : index
    %c0_52 = arith.constant 0 : index
    %56 = tpu.strided_load %arg12[%c3_51, %c0_52] {strides = array<i32: 2, 1>} : memref<328x32xf32, #tpu.memory_space<vmem>>, vector<160x32xf32>
    %57 = arith.truncf %56 : vector<160x32xf32> to vector<160x32xbf16>
    %c0_53 = arith.constant 0 : index
    %c0_54 = arith.constant 0 : index
    %c0_55 = arith.constant 0 : index
    %58 = vector.load %arg4[%c0_53, %c0_54, %c0_55] : memref<3x32x64xbf16, #tpu.memory_space<vmem>>, vector<1x32x64xbf16>
    %59 = vector.shape_cast %58 : vector<1x32x64xbf16> to vector<32x64xbf16>
    %c1_56 = arith.constant 1 : index
    %c0_57 = arith.constant 0 : index
    %c0_58 = arith.constant 0 : index
    %60 = vector.load %arg4[%c1_56, %c0_57, %c0_58] : memref<3x32x64xbf16, #tpu.memory_space<vmem>>, vector<1x32x64xbf16>
    %61 = vector.shape_cast %60 : vector<1x32x64xbf16> to vector<32x64xbf16>
    %c2_59 = arith.constant 2 : index
    %c0_60 = arith.constant 0 : index
    %c0_61 = arith.constant 0 : index
    %62 = vector.load %arg4[%c2_59, %c0_60, %c0_61] : memref<3x32x64xbf16, #tpu.memory_space<vmem>>, vector<1x32x64xbf16>
    %63 = vector.shape_cast %62 : vector<1x32x64xbf16> to vector<32x64xbf16>
    %cst_62 = arith.constant dense<0.000000e+00> : vector<160x64xf32>
    %64 = tpu.matmul %51, %59, %cst_62 {dimension_numbers = #tpu.dot_dimension_numbers<[1], [0], [0], [1], [0, 0, 1, 1], [], []>} : vector<160x32xbf16>, vector<32x64xbf16>, vector<160x64xf32> -> vector<160x64xf32>
    %cst_63 = arith.constant dense<0.000000e+00> : vector<160x64xf32>
    %65 = tpu.matmul %53, %61, %cst_63 {dimension_numbers = #tpu.dot_dimension_numbers<[1], [0], [0], [1], [0, 0, 1, 1], [], []>} : vector<160x32xbf16>, vector<32x64xbf16>, vector<160x64xf32> -> vector<160x64xf32>
    %66 = arith.addf %64, %65 : vector<160x64xf32>
    %cst_64 = arith.constant dense<0.000000e+00> : vector<160x64xf32>
    %67 = tpu.matmul %55, %63, %cst_64 {dimension_numbers = #tpu.dot_dimension_numbers<[1], [0], [0], [1], [0, 0, 1, 1], [], []>} : vector<160x32xbf16>, vector<32x64xbf16>, vector<160x64xf32> -> vector<160x64xf32>
    %68 = arith.addf %66, %67 : vector<160x64xf32>
    %cst_65 = arith.constant dense<0.000000e+00> : vector<160x64xf32>
    %69 = tpu.matmul %53, %59, %cst_65 {dimension_numbers = #tpu.dot_dimension_numbers<[1], [0], [0], [1], [0, 0, 1, 1], [], []>} : vector<160x32xbf16>, vector<32x64xbf16>, vector<160x64xf32> -> vector<160x64xf32>
    %cst_66 = arith.constant dense<0.000000e+00> : vector<160x64xf32>
    %70 = tpu.matmul %55, %61, %cst_66 {dimension_numbers = #tpu.dot_dimension_numbers<[1], [0], [0], [1], [0, 0, 1, 1], [], []>} : vector<160x32xbf16>, vector<32x64xbf16>, vector<160x64xf32> -> vector<160x64xf32>
    %71 = arith.addf %69, %70 : vector<160x64xf32>
    %cst_67 = arith.constant dense<0.000000e+00> : vector<160x64xf32>
    %72 = tpu.matmul %57, %63, %cst_67 {dimension_numbers = #tpu.dot_dimension_numbers<[1], [0], [0], [1], [0, 0, 1, 1], [], []>} : vector<160x32xbf16>, vector<32x64xbf16>, vector<160x64xf32> -> vector<160x64xf32>
    %73 = arith.addf %71, %72 : vector<160x64xf32>
    %74 = arith.maximumf %68, %73 : vector<160x64xf32>
    %c0_68 = arith.constant 0 : index
    %c0_69 = arith.constant 0 : index
    %75 = vector.load %arg5[%c0_68, %c0_69] : memref<1x64xf32, #tpu.memory_space<vmem>>, vector<1x64xf32>
    %76 = vector.broadcast %75 : vector<1x64xf32> to vector<160x64xf32>
    %77 = arith.addf %74, %76 : vector<160x64xf32>
    %cst_70 = arith.constant 0.000000e+00 : f32
    %78 = vector.broadcast %cst_70 : f32 to vector<160x64xf32>
    %79 = arith.maximumf %77, %78 : vector<160x64xf32>
    %cst_71 = arith.constant 0.000000e+00 : f32
    %80 = vector.broadcast %cst_71 : f32 to vector<1x64xf32>
    %c0_72 = arith.constant 0 : index
    %c0_73 = arith.constant 0 : index
    %81 = vector.load %arg13[%c0_72, %c0_73] : memref<168x64xf32, #tpu.memory_space<vmem>>, vector<1x64xf32>
    tpu.vector_store %arg13[%c0_72, %c0_73], %80 {strides = array<i32>} : memref<168x64xf32, #tpu.memory_space<vmem>>, vector<1x64xf32>,
    %82 = vector.extract_strided_slice %79 {offsets = [0, 0], sizes = [75, 64], strides = [1, 1]} : vector<160x64xf32> to vector<75x64xf32>
    %c1_74 = arith.constant 1 : index
    %c0_75 = arith.constant 0 : index
    %83 = vector.load %arg13[%c1_74, %c0_75] : memref<168x64xf32, #tpu.memory_space<vmem>>, vector<75x64xf32>
    tpu.vector_store %arg13[%c1_74, %c0_75], %82 {strides = array<i32>} : memref<168x64xf32, #tpu.memory_space<vmem>>, vector<75x64xf32>,
    %c80 = arith.constant 80 : index
    %c0_76 = arith.constant 0 : index
    %84 = vector.load %arg13[%c80, %c0_76] : memref<168x64xf32, #tpu.memory_space<vmem>>, vector<1x64xf32>
    tpu.vector_store %arg13[%c80, %c0_76], %80 {strides = array<i32>} : memref<168x64xf32, #tpu.memory_space<vmem>>, vector<1x64xf32>,
    %85 = vector.extract_strided_slice %79 {offsets = [80, 0], sizes = [75, 64], strides = [1, 1]} : vector<160x64xf32> to vector<75x64xf32>
    %c81 = arith.constant 81 : index
    %c0_77 = arith.constant 0 : index
    %86 = vector.load %arg13[%c81, %c0_77] : memref<168x64xf32, #tpu.memory_space<vmem>>, vector<75x64xf32>
    tpu.vector_store %arg13[%c81, %c0_77], %85 {strides = array<i32>} : memref<168x64xf32, #tpu.memory_space<vmem>>, vector<75x64xf32>,
    %c0_78 = arith.constant 0 : index
    %c0_79 = arith.constant 0 : index
    %87 = tpu.strided_load %arg13[%c0_78, %c0_79] {strides = array<i32: 2, 1>} : memref<168x64xf32, #tpu.memory_space<vmem>>, vector<80x64xf32>
    %88 = arith.truncf %87 : vector<80x64xf32> to vector<80x64xbf16>
    %c1_80 = arith.constant 1 : index
    %c0_81 = arith.constant 0 : index
    %89 = tpu.strided_load %arg13[%c1_80, %c0_81] {strides = array<i32: 2, 1>} : memref<168x64xf32, #tpu.memory_space<vmem>>, vector<80x64xf32>
    %90 = arith.truncf %89 : vector<80x64xf32> to vector<80x64xbf16>
    %c2_82 = arith.constant 2 : index
    %c0_83 = arith.constant 0 : index
    %91 = tpu.strided_load %arg13[%c2_82, %c0_83] {strides = array<i32: 2, 1>} : memref<168x64xf32, #tpu.memory_space<vmem>>, vector<80x64xf32>
    %92 = arith.truncf %91 : vector<80x64xf32> to vector<80x64xbf16>
    %c3_84 = arith.constant 3 : index
    %c0_85 = arith.constant 0 : index
    %93 = tpu.strided_load %arg13[%c3_84, %c0_85] {strides = array<i32: 2, 1>} : memref<168x64xf32, #tpu.memory_space<vmem>>, vector<80x64xf32>
    %94 = arith.truncf %93 : vector<80x64xf32> to vector<80x64xbf16>
    %c0_86 = arith.constant 0 : index
    %c0_87 = arith.constant 0 : index
    %c0_88 = arith.constant 0 : index
    %95 = vector.load %arg6[%c0_86, %c0_87, %c0_88] : memref<3x64x128xbf16, #tpu.memory_space<vmem>>, vector<1x64x128xbf16>
    %96 = vector.shape_cast %95 : vector<1x64x128xbf16> to vector<64x128xbf16>
    %c1_89 = arith.constant 1 : index
    %c0_90 = arith.constant 0 : index
    %c0_91 = arith.constant 0 : index
    %97 = vector.load %arg6[%c1_89, %c0_90, %c0_91] : memref<3x64x128xbf16, #tpu.memory_space<vmem>>, vector<1x64x128xbf16>
    %98 = vector.shape_cast %97 : vector<1x64x128xbf16> to vector<64x128xbf16>
    %c2_92 = arith.constant 2 : index
    %c0_93 = arith.constant 0 : index
    %c0_94 = arith.constant 0 : index
    %99 = vector.load %arg6[%c2_92, %c0_93, %c0_94] : memref<3x64x128xbf16, #tpu.memory_space<vmem>>, vector<1x64x128xbf16>
    %100 = vector.shape_cast %99 : vector<1x64x128xbf16> to vector<64x128xbf16>
    %cst_95 = arith.constant dense<0.000000e+00> : vector<80x128xf32>
    %101 = tpu.matmul %88, %96, %cst_95 {dimension_numbers = #tpu.dot_dimension_numbers<[1], [0], [0], [1], [0, 0, 1, 1], [], []>} : vector<80x64xbf16>, vector<64x128xbf16>, vector<80x128xf32> -> vector<80x128xf32>
    %cst_96 = arith.constant dense<0.000000e+00> : vector<80x128xf32>
    %102 = tpu.matmul %90, %98, %cst_96 {dimension_numbers = #tpu.dot_dimension_numbers<[1], [0], [0], [1], [0, 0, 1, 1], [], []>} : vector<80x64xbf16>, vector<64x128xbf16>, vector<80x128xf32> -> vector<80x128xf32>
    %103 = arith.addf %101, %102 : vector<80x128xf32>
    %cst_97 = arith.constant dense<0.000000e+00> : vector<80x128xf32>
    %104 = tpu.matmul %92, %100, %cst_97 {dimension_numbers = #tpu.dot_dimension_numbers<[1], [0], [0], [1], [0, 0, 1, 1], [], []>} : vector<80x64xbf16>, vector<64x128xbf16>, vector<80x128xf32> -> vector<80x128xf32>
    %105 = arith.addf %103, %104 : vector<80x128xf32>
    %cst_98 = arith.constant dense<0.000000e+00> : vector<80x128xf32>
    %106 = tpu.matmul %90, %96, %cst_98 {dimension_numbers = #tpu.dot_dimension_numbers<[1], [0], [0], [1], [0, 0, 1, 1], [], []>} : vector<80x64xbf16>, vector<64x128xbf16>, vector<80x128xf32> -> vector<80x128xf32>
    %cst_99 = arith.constant dense<0.000000e+00> : vector<80x128xf32>
    %107 = tpu.matmul %92, %98, %cst_99 {dimension_numbers = #tpu.dot_dimension_numbers<[1], [0], [0], [1], [0, 0, 1, 1], [], []>} : vector<80x64xbf16>, vector<64x128xbf16>, vector<80x128xf32> -> vector<80x128xf32>
    %108 = arith.addf %106, %107 : vector<80x128xf32>
    %cst_100 = arith.constant dense<0.000000e+00> : vector<80x128xf32>
    %109 = tpu.matmul %94, %100, %cst_100 {dimension_numbers = #tpu.dot_dimension_numbers<[1], [0], [0], [1], [0, 0, 1, 1], [], []>} : vector<80x64xbf16>, vector<64x128xbf16>, vector<80x128xf32> -> vector<80x128xf32>
    %110 = arith.addf %108, %109 : vector<80x128xf32>
    %111 = arith.maximumf %105, %110 : vector<80x128xf32>
    %c0_101 = arith.constant 0 : index
    %c0_102 = arith.constant 0 : index
    %112 = vector.load %arg7[%c0_101, %c0_102] : memref<1x128xf32, #tpu.memory_space<vmem>>, vector<1x128xf32>
    %113 = vector.broadcast %112 : vector<1x128xf32> to vector<80x128xf32>
    %114 = arith.addf %111, %113 : vector<80x128xf32>
    %cst_103 = arith.constant 0.000000e+00 : f32
    %115 = vector.broadcast %cst_103 : f32 to vector<80x128xf32>
    %116 = arith.maximumf %114, %115 : vector<80x128xf32>
    %c0_104 = arith.constant 0 : index
    %c0_105 = arith.constant 0 : index
    %117 = vector.load %arg14[%c0_104, %c0_105] : memref<80x128xf32, #tpu.memory_space<vmem>>, vector<80x128xf32>
    tpu.vector_store %arg14[%c0_104, %c0_105], %116 {strides = array<i32>} : memref<80x128xf32, #tpu.memory_space<vmem>>, vector<80x128xf32>,
    %c0_106 = arith.constant 0 : index
    %c0_107 = arith.constant 0 : index
    %118 = tpu.strided_load %arg14[%c0_106, %c0_107] {strides = array<i32: 40, 1>} : memref<80x128xf32, #tpu.memory_space<vmem>>, vector<2x128xf32>
    %119 = arith.truncf %118 : vector<2x128xf32> to vector<2x128xbf16>
    %c0_108 = arith.constant 0 : index
    %c0_109 = arith.constant 0 : index
    %c0_110 = arith.constant 0 : index
    %120 = vector.load %arg8[%c0_108, %c0_109, %c0_110] : memref<37x128x128xbf16, #tpu.memory_space<vmem>>, vector<1x128x128xbf16>
    %121 = vector.shape_cast %120 : vector<1x128x128xbf16> to vector<128x128xbf16>
    %cst_111 = arith.constant dense<0.000000e+00> : vector<2x128xf32>
    %122 = tpu.matmul %119, %121, %cst_111 {dimension_numbers = #tpu.dot_dimension_numbers<[1], [0], [0], [1], [0, 0, 1, 1], [], []>} : vector<2x128xbf16>, vector<128x128xbf16>, vector<2x128xf32> -> vector<2x128xf32>
    %c1_112 = arith.constant 1 : index
    %c0_113 = arith.constant 0 : index
    %123 = tpu.strided_load %arg14[%c1_112, %c0_113] {strides = array<i32: 40, 1>} : memref<80x128xf32, #tpu.memory_space<vmem>>, vector<2x128xf32>
    %124 = arith.truncf %123 : vector<2x128xf32> to vector<2x128xbf16>
    %c1_114 = arith.constant 1 : index
    %c0_115 = arith.constant 0 : index
    %c0_116 = arith.constant 0 : index
    %125 = vector.load %arg8[%c1_114, %c0_115, %c0_116] : memref<37x128x128xbf16, #tpu.memory_space<vmem>>, vector<1x128x128xbf16>
    %126 = vector.shape_cast %125 : vector<1x128x128xbf16> to vector<128x128xbf16>
    %cst_117 = arith.constant dense<0.000000e+00> : vector<2x128xf32>
    %127 = tpu.matmul %124, %126, %cst_117 {dimension_numbers = #tpu.dot_dimension_numbers<[1], [0], [0], [1], [0, 0, 1, 1], [], []>} : vector<2x128xbf16>, vector<128x128xbf16>, vector<2x128xf32> -> vector<2x128xf32>
    %128 = arith.addf %122, %127 : vector<2x128xf32>
    %c2_118 = arith.constant 2 : index
    %c0_119 = arith.constant 0 : index
    %129 = tpu.strided_load %arg14[%c2_118, %c0_119] {strides = array<i32: 40, 1>} : memref<80x128xf32, #tpu.memory_space<vmem>>, vector<2x128xf32>
    %130 = arith.truncf %129 : vector<2x128xf32> to vector<2x128xbf16>
    %c2_120 = arith.constant 2 : index
    %c0_121 = arith.constant 0 : index
    %c0_122 = arith.constant 0 : index
    %131 = vector.load %arg8[%c2_120, %c0_121, %c0_122] : memref<37x128x128xbf16, #tpu.memory_space<vmem>>, vector<1x128x128xbf16>
    %132 = vector.shape_cast %131 : vector<1x128x128xbf16> to vector<128x128xbf16>
    %cst_123 = arith.constant dense<0.000000e+00> : vector<2x128xf32>
    %133 = tpu.matmul %130, %132, %cst_123 {dimension_numbers = #tpu.dot_dimension_numbers<[1], [0], [0], [1], [0, 0, 1, 1], [], []>} : vector<2x128xbf16>, vector<128x128xbf16>, vector<2x128xf32> -> vector<2x128xf32>
    %134 = arith.addf %128, %133 : vector<2x128xf32>
    %c3_124 = arith.constant 3 : index
    %c0_125 = arith.constant 0 : index
    %135 = tpu.strided_load %arg14[%c3_124, %c0_125] {strides = array<i32: 40, 1>} : memref<80x128xf32, #tpu.memory_space<vmem>>, vector<2x128xf32>
    %136 = arith.truncf %135 : vector<2x128xf32> to vector<2x128xbf16>
    %c3_126 = arith.constant 3 : index
    %c0_127 = arith.constant 0 : index
    %c0_128 = arith.constant 0 : index
    %137 = vector.load %arg8[%c3_126, %c0_127, %c0_128] : memref<37x128x128xbf16, #tpu.memory_space<vmem>>, vector<1x128x128xbf16>
    %138 = vector.shape_cast %137 : vector<1x128x128xbf16> to vector<128x128xbf16>
    %cst_129 = arith.constant dense<0.000000e+00> : vector<2x128xf32>
    %139 = tpu.matmul %136, %138, %cst_129 {dimension_numbers = #tpu.dot_dimension_numbers<[1], [0], [0], [1], [0, 0, 1, 1], [], []>} : vector<2x128xbf16>, vector<128x128xbf16>, vector<2x128xf32> -> vector<2x128xf32>
    %140 = arith.addf %134, %139 : vector<2x128xf32>
    %c4 = arith.constant 4 : index
    %c0_130 = arith.constant 0 : index
    %141 = tpu.strided_load %arg14[%c4, %c0_130] {strides = array<i32: 40, 1>} : memref<80x128xf32, #tpu.memory_space<vmem>>, vector<2x128xf32>
    %142 = arith.truncf %141 : vector<2x128xf32> to vector<2x128xbf16>
    %c4_131 = arith.constant 4 : index
    %c0_132 = arith.constant 0 : index
    %c0_133 = arith.constant 0 : index
    %143 = vector.load %arg8[%c4_131, %c0_132, %c0_133] : memref<37x128x128xbf16, #tpu.memory_space<vmem>>, vector<1x128x128xbf16>
    %144 = vector.shape_cast %143 : vector<1x128x128xbf16> to vector<128x128xbf16>
    %cst_134 = arith.constant dense<0.000000e+00> : vector<2x128xf32>
    %145 = tpu.matmul %142, %144, %cst_134 {dimension_numbers = #tpu.dot_dimension_numbers<[1], [0], [0], [1], [0, 0, 1, 1], [], []>} : vector<2x128xbf16>, vector<128x128xbf16>, vector<2x128xf32> -> vector<2x128xf32>
    %146 = arith.addf %140, %145 : vector<2x128xf32>
    %c5 = arith.constant 5 : index
    %c0_135 = arith.constant 0 : index
    %147 = tpu.strided_load %arg14[%c5, %c0_135] {strides = array<i32: 40, 1>} : memref<80x128xf32, #tpu.memory_space<vmem>>, vector<2x128xf32>
    %148 = arith.truncf %147 : vector<2x128xf32> to vector<2x128xbf16>
    %c5_136 = arith.constant 5 : index
    %c0_137 = arith.constant 0 : index
    %c0_138 = arith.constant 0 : index
    %149 = vector.load %arg8[%c5_136, %c0_137, %c0_138] : memref<37x128x128xbf16, #tpu.memory_space<vmem>>, vector<1x128x128xbf16>
    %150 = vector.shape_cast %149 : vector<1x128x128xbf16> to vector<128x128xbf16>
    %cst_139 = arith.constant dense<0.000000e+00> : vector<2x128xf32>
    %151 = tpu.matmul %148, %150, %cst_139 {dimension_numbers = #tpu.dot_dimension_numbers<[1], [0], [0], [1], [0, 0, 1, 1], [], []>} : vector<2x128xbf16>, vector<128x128xbf16>, vector<2x128xf32> -> vector<2x128xf32>
    %152 = arith.addf %146, %151 : vector<2x128xf32>
    %c6 = arith.constant 6 : index
    %c0_140 = arith.constant 0 : index
    %153 = tpu.strided_load %arg14[%c6, %c0_140] {strides = array<i32: 40, 1>} : memref<80x128xf32, #tpu.memory_space<vmem>>, vector<2x128xf32>
    %154 = arith.truncf %153 : vector<2x128xf32> to vector<2x128xbf16>
    %c6_141 = arith.constant 6 : index
    %c0_142 = arith.constant 0 : index
    %c0_143 = arith.constant 0 : index
    %155 = vector.load %arg8[%c6_141, %c0_142, %c0_143] : memref<37x128x128xbf16, #tpu.memory_space<vmem>>, vector<1x128x128xbf16>
    %156 = vector.shape_cast %155 : vector<1x128x128xbf16> to vector<128x128xbf16>
    %cst_144 = arith.constant dense<0.000000e+00> : vector<2x128xf32>
    %157 = tpu.matmul %154, %156, %cst_144 {dimension_numbers = #tpu.dot_dimension_numbers<[1], [0], [0], [1], [0, 0, 1, 1], [], []>} : vector<2x128xbf16>, vector<128x128xbf16>, vector<2x128xf32> -> vector<2x128xf32>
    %158 = arith.addf %152, %157 : vector<2x128xf32>
    %c7 = arith.constant 7 : index
    %c0_145 = arith.constant 0 : index
    %159 = tpu.strided_load %arg14[%c7, %c0_145] {strides = array<i32: 40, 1>} : memref<80x128xf32, #tpu.memory_space<vmem>>, vector<2x128xf32>
    %160 = arith.truncf %159 : vector<2x128xf32> to vector<2x128xbf16>
    %c7_146 = arith.constant 7 : index
    %c0_147 = arith.constant 0 : index
    %c0_148 = arith.constant 0 : index
    %161 = vector.load %arg8[%c7_146, %c0_147, %c0_148] : memref<37x128x128xbf16, #tpu.memory_space<vmem>>, vector<1x128x128xbf16>
    %162 = vector.shape_cast %161 : vector<1x128x128xbf16> to vector<128x128xbf16>
    %cst_149 = arith.constant dense<0.000000e+00> : vector<2x128xf32>
    %163 = tpu.matmul %160, %162, %cst_149 {dimension_numbers = #tpu.dot_dimension_numbers<[1], [0], [0], [1], [0, 0, 1, 1], [], []>} : vector<2x128xbf16>, vector<128x128xbf16>, vector<2x128xf32> -> vector<2x128xf32>
    %164 = arith.addf %158, %163 : vector<2x128xf32>
    %c8 = arith.constant 8 : index
    %c0_150 = arith.constant 0 : index
    %165 = tpu.strided_load %arg14[%c8, %c0_150] {strides = array<i32: 40, 1>} : memref<80x128xf32, #tpu.memory_space<vmem>>, vector<2x128xf32>
    %166 = arith.truncf %165 : vector<2x128xf32> to vector<2x128xbf16>
    %c8_151 = arith.constant 8 : index
    %c0_152 = arith.constant 0 : index
    %c0_153 = arith.constant 0 : index
    %167 = vector.load %arg8[%c8_151, %c0_152, %c0_153] : memref<37x128x128xbf16, #tpu.memory_space<vmem>>, vector<1x128x128xbf16>
    %168 = vector.shape_cast %167 : vector<1x128x128xbf16> to vector<128x128xbf16>
    %cst_154 = arith.constant dense<0.000000e+00> : vector<2x128xf32>
    %169 = tpu.matmul %166, %168, %cst_154 {dimension_numbers = #tpu.dot_dimension_numbers<[1], [0], [0], [1], [0, 0, 1, 1], [], []>} : vector<2x128xbf16>, vector<128x128xbf16>, vector<2x128xf32> -> vector<2x128xf32>
    %170 = arith.addf %164, %169 : vector<2x128xf32>
    %c9 = arith.constant 9 : index
    %c0_155 = arith.constant 0 : index
    %171 = tpu.strided_load %arg14[%c9, %c0_155] {strides = array<i32: 40, 1>} : memref<80x128xf32, #tpu.memory_space<vmem>>, vector<2x128xf32>
    %172 = arith.truncf %171 : vector<2x128xf32> to vector<2x128xbf16>
    %c9_156 = arith.constant 9 : index
    %c0_157 = arith.constant 0 : index
    %c0_158 = arith.constant 0 : index
    %173 = vector.load %arg8[%c9_156, %c0_157, %c0_158] : memref<37x128x128xbf16, #tpu.memory_space<vmem>>, vector<1x128x128xbf16>
    %174 = vector.shape_cast %173 : vector<1x128x128xbf16> to vector<128x128xbf16>
    %cst_159 = arith.constant dense<0.000000e+00> : vector<2x128xf32>
    %175 = tpu.matmul %172, %174, %cst_159 {dimension_numbers = #tpu.dot_dimension_numbers<[1], [0], [0], [1], [0, 0, 1, 1], [], []>} : vector<2x128xbf16>, vector<128x128xbf16>, vector<2x128xf32> -> vector<2x128xf32>
    %176 = arith.addf %170, %175 : vector<2x128xf32>
    %c10 = arith.constant 10 : index
    %c0_160 = arith.constant 0 : index
    %177 = tpu.strided_load %arg14[%c10, %c0_160] {strides = array<i32: 40, 1>} : memref<80x128xf32, #tpu.memory_space<vmem>>, vector<2x128xf32>
    %178 = arith.truncf %177 : vector<2x128xf32> to vector<2x128xbf16>
    %c10_161 = arith.constant 10 : index
    %c0_162 = arith.constant 0 : index
    %c0_163 = arith.constant 0 : index
    %179 = vector.load %arg8[%c10_161, %c0_162, %c0_163] : memref<37x128x128xbf16, #tpu.memory_space<vmem>>, vector<1x128x128xbf16>
    %180 = vector.shape_cast %179 : vector<1x128x128xbf16> to vector<128x128xbf16>
    %cst_164 = arith.constant dense<0.000000e+00> : vector<2x128xf32>
    %181 = tpu.matmul %178, %180, %cst_164 {dimension_numbers = #tpu.dot_dimension_numbers<[1], [0], [0], [1], [0, 0, 1, 1], [], []>} : vector<2x128xbf16>, vector<128x128xbf16>, vector<2x128xf32> -> vector<2x128xf32>
    %182 = arith.addf %176, %181 : vector<2x128xf32>
    %c11 = arith.constant 11 : index
    %c0_165 = arith.constant 0 : index
    %183 = tpu.strided_load %arg14[%c11, %c0_165] {strides = array<i32: 40, 1>} : memref<80x128xf32, #tpu.memory_space<vmem>>, vector<2x128xf32>
    %184 = arith.truncf %183 : vector<2x128xf32> to vector<2x128xbf16>
    %c11_166 = arith.constant 11 : index
    %c0_167 = arith.constant 0 : index
    %c0_168 = arith.constant 0 : index
    %185 = vector.load %arg8[%c11_166, %c0_167, %c0_168] : memref<37x128x128xbf16, #tpu.memory_space<vmem>>, vector<1x128x128xbf16>
    %186 = vector.shape_cast %185 : vector<1x128x128xbf16> to vector<128x128xbf16>
    %cst_169 = arith.constant dense<0.000000e+00> : vector<2x128xf32>
    %187 = tpu.matmul %184, %186, %cst_169 {dimension_numbers = #tpu.dot_dimension_numbers<[1], [0], [0], [1], [0, 0, 1, 1], [], []>} : vector<2x128xbf16>, vector<128x128xbf16>, vector<2x128xf32> -> vector<2x128xf32>
    %188 = arith.addf %182, %187 : vector<2x128xf32>
    %c12 = arith.constant 12 : index
    %c0_170 = arith.constant 0 : index
    %189 = tpu.strided_load %arg14[%c12, %c0_170] {strides = array<i32: 40, 1>} : memref<80x128xf32, #tpu.memory_space<vmem>>, vector<2x128xf32>
    %190 = arith.truncf %189 : vector<2x128xf32> to vector<2x128xbf16>
    %c12_171 = arith.constant 12 : index
    %c0_172 = arith.constant 0 : index
    %c0_173 = arith.constant 0 : index
    %191 = vector.load %arg8[%c12_171, %c0_172, %c0_173] : memref<37x128x128xbf16, #tpu.memory_space<vmem>>, vector<1x128x128xbf16>
    %192 = vector.shape_cast %191 : vector<1x128x128xbf16> to vector<128x128xbf16>
    %cst_174 = arith.constant dense<0.000000e+00> : vector<2x128xf32>
    %193 = tpu.matmul %190, %192, %cst_174 {dimension_numbers = #tpu.dot_dimension_numbers<[1], [0], [0], [1], [0, 0, 1, 1], [], []>} : vector<2x128xbf16>, vector<128x128xbf16>, vector<2x128xf32> -> vector<2x128xf32>
    %194 = arith.addf %188, %193 : vector<2x128xf32>
    %c13 = arith.constant 13 : index
    %c0_175 = arith.constant 0 : index
    %195 = tpu.strided_load %arg14[%c13, %c0_175] {strides = array<i32: 40, 1>} : memref<80x128xf32, #tpu.memory_space<vmem>>, vector<2x128xf32>
    %196 = arith.truncf %195 : vector<2x128xf32> to vector<2x128xbf16>
    %c13_176 = arith.constant 13 : index
    %c0_177 = arith.constant 0 : index
    %c0_178 = arith.constant 0 : index
    %197 = vector.load %arg8[%c13_176, %c0_177, %c0_178] : memref<37x128x128xbf16, #tpu.memory_space<vmem>>, vector<1x128x128xbf16>
    %198 = vector.shape_cast %197 : vector<1x128x128xbf16> to vector<128x128xbf16>
    %cst_179 = arith.constant dense<0.000000e+00> : vector<2x128xf32>
    %199 = tpu.matmul %196, %198, %cst_179 {dimension_numbers = #tpu.dot_dimension_numbers<[1], [0], [0], [1], [0, 0, 1, 1], [], []>} : vector<2x128xbf16>, vector<128x128xbf16>, vector<2x128xf32> -> vector<2x128xf32>
    %200 = arith.addf %194, %199 : vector<2x128xf32>
    %c14 = arith.constant 14 : index
    %c0_180 = arith.constant 0 : index
    %201 = tpu.strided_load %arg14[%c14, %c0_180] {strides = array<i32: 40, 1>} : memref<80x128xf32, #tpu.memory_space<vmem>>, vector<2x128xf32>
    %202 = arith.truncf %201 : vector<2x128xf32> to vector<2x128xbf16>
    %c14_181 = arith.constant 14 : index
    %c0_182 = arith.constant 0 : index
    %c0_183 = arith.constant 0 : index
    %203 = vector.load %arg8[%c14_181, %c0_182, %c0_183] : memref<37x128x128xbf16, #tpu.memory_space<vmem>>, vector<1x128x128xbf16>
    %204 = vector.shape_cast %203 : vector<1x128x128xbf16> to vector<128x128xbf16>
    %cst_184 = arith.constant dense<0.000000e+00> : vector<2x128xf32>
    %205 = tpu.matmul %202, %204, %cst_184 {dimension_numbers = #tpu.dot_dimension_numbers<[1], [0], [0], [1], [0, 0, 1, 1], [], []>} : vector<2x128xbf16>, vector<128x128xbf16>, vector<2x128xf32> -> vector<2x128xf32>
    %206 = arith.addf %200, %205 : vector<2x128xf32>
    %c15 = arith.constant 15 : index
    %c0_185 = arith.constant 0 : index
    %207 = tpu.strided_load %arg14[%c15, %c0_185] {strides = array<i32: 40, 1>} : memref<80x128xf32, #tpu.memory_space<vmem>>, vector<2x128xf32>
    %208 = arith.truncf %207 : vector<2x128xf32> to vector<2x128xbf16>
    %c15_186 = arith.constant 15 : index
    %c0_187 = arith.constant 0 : index
    %c0_188 = arith.constant 0 : index
    %209 = vector.load %arg8[%c15_186, %c0_187, %c0_188] : memref<37x128x128xbf16, #tpu.memory_space<vmem>>, vector<1x128x128xbf16>
    %210 = vector.shape_cast %209 : vector<1x128x128xbf16> to vector<128x128xbf16>
    %cst_189 = arith.constant dense<0.000000e+00> : vector<2x128xf32>
    %211 = tpu.matmul %208, %210, %cst_189 {dimension_numbers = #tpu.dot_dimension_numbers<[1], [0], [0], [1], [0, 0, 1, 1], [], []>} : vector<2x128xbf16>, vector<128x128xbf16>, vector<2x128xf32> -> vector<2x128xf32>
    %212 = arith.addf %206, %211 : vector<2x128xf32>
    %c16 = arith.constant 16 : index
    %c0_190 = arith.constant 0 : index
    %213 = tpu.strided_load %arg14[%c16, %c0_190] {strides = array<i32: 40, 1>} : memref<80x128xf32, #tpu.memory_space<vmem>>, vector<2x128xf32>
    %214 = arith.truncf %213 : vector<2x128xf32> to vector<2x128xbf16>
    %c16_191 = arith.constant 16 : index
    %c0_192 = arith.constant 0 : index
    %c0_193 = arith.constant 0 : index
    %215 = vector.load %arg8[%c16_191, %c0_192, %c0_193] : memref<37x128x128xbf16, #tpu.memory_space<vmem>>, vector<1x128x128xbf16>
    %216 = vector.shape_cast %215 : vector<1x128x128xbf16> to vector<128x128xbf16>
    %cst_194 = arith.constant dense<0.000000e+00> : vector<2x128xf32>
    %217 = tpu.matmul %214, %216, %cst_194 {dimension_numbers = #tpu.dot_dimension_numbers<[1], [0], [0], [1], [0, 0, 1, 1], [], []>} : vector<2x128xbf16>, vector<128x128xbf16>, vector<2x128xf32> -> vector<2x128xf32>
    %218 = arith.addf %212, %217 : vector<2x128xf32>
    %c17 = arith.constant 17 : index
    %c0_195 = arith.constant 0 : index
    %219 = tpu.strided_load %arg14[%c17, %c0_195] {strides = array<i32: 40, 1>} : memref<80x128xf32, #tpu.memory_space<vmem>>, vector<2x128xf32>
    %220 = arith.truncf %219 : vector<2x128xf32> to vector<2x128xbf16>
    %c17_196 = arith.constant 17 : index
    %c0_197 = arith.constant 0 : index
    %c0_198 = arith.constant 0 : index
    %221 = vector.load %arg8[%c17_196, %c0_197, %c0_198] : memref<37x128x128xbf16, #tpu.memory_space<vmem>>, vector<1x128x128xbf16>
    %222 = vector.shape_cast %221 : vector<1x128x128xbf16> to vector<128x128xbf16>
    %cst_199 = arith.constant dense<0.000000e+00> : vector<2x128xf32>
    %223 = tpu.matmul %220, %222, %cst_199 {dimension_numbers = #tpu.dot_dimension_numbers<[1], [0], [0], [1], [0, 0, 1, 1], [], []>} : vector<2x128xbf16>, vector<128x128xbf16>, vector<2x128xf32> -> vector<2x128xf32>
    %224 = arith.addf %218, %223 : vector<2x128xf32>
    %c18 = arith.constant 18 : index
    %c0_200 = arith.constant 0 : index
    %225 = tpu.strided_load %arg14[%c18, %c0_200] {strides = array<i32: 40, 1>} : memref<80x128xf32, #tpu.memory_space<vmem>>, vector<2x128xf32>
    %226 = arith.truncf %225 : vector<2x128xf32> to vector<2x128xbf16>
    %c18_201 = arith.constant 18 : index
    %c0_202 = arith.constant 0 : index
    %c0_203 = arith.constant 0 : index
    %227 = vector.load %arg8[%c18_201, %c0_202, %c0_203] : memref<37x128x128xbf16, #tpu.memory_space<vmem>>, vector<1x128x128xbf16>
    %228 = vector.shape_cast %227 : vector<1x128x128xbf16> to vector<128x128xbf16>
    %cst_204 = arith.constant dense<0.000000e+00> : vector<2x128xf32>
    %229 = tpu.matmul %226, %228, %cst_204 {dimension_numbers = #tpu.dot_dimension_numbers<[1], [0], [0], [1], [0, 0, 1, 1], [], []>} : vector<2x128xbf16>, vector<128x128xbf16>, vector<2x128xf32> -> vector<2x128xf32>
    %230 = arith.addf %224, %229 : vector<2x128xf32>
    %c19 = arith.constant 19 : index
    %c0_205 = arith.constant 0 : index
    %231 = tpu.strided_load %arg14[%c19, %c0_205] {strides = array<i32: 40, 1>} : memref<80x128xf32, #tpu.memory_space<vmem>>, vector<2x128xf32>
    %232 = arith.truncf %231 : vector<2x128xf32> to vector<2x128xbf16>
    %c19_206 = arith.constant 19 : index
    %c0_207 = arith.constant 0 : index
    %c0_208 = arith.constant 0 : index
    %233 = vector.load %arg8[%c19_206, %c0_207, %c0_208] : memref<37x128x128xbf16, #tpu.memory_space<vmem>>, vector<1x128x128xbf16>
    %234 = vector.shape_cast %233 : vector<1x128x128xbf16> to vector<128x128xbf16>
    %cst_209 = arith.constant dense<0.000000e+00> : vector<2x128xf32>
    %235 = tpu.matmul %232, %234, %cst_209 {dimension_numbers = #tpu.dot_dimension_numbers<[1], [0], [0], [1], [0, 0, 1, 1], [], []>} : vector<2x128xbf16>, vector<128x128xbf16>, vector<2x128xf32> -> vector<2x128xf32>
    %236 = arith.addf %230, %235 : vector<2x128xf32>
    %c20 = arith.constant 20 : index
    %c0_210 = arith.constant 0 : index
    %237 = tpu.strided_load %arg14[%c20, %c0_210] {strides = array<i32: 40, 1>} : memref<80x128xf32, #tpu.memory_space<vmem>>, vector<2x128xf32>
    %238 = arith.truncf %237 : vector<2x128xf32> to vector<2x128xbf16>
    %c20_211 = arith.constant 20 : index
    %c0_212 = arith.constant 0 : index
    %c0_213 = arith.constant 0 : index
    %239 = vector.load %arg8[%c20_211, %c0_212, %c0_213] : memref<37x128x128xbf16, #tpu.memory_space<vmem>>, vector<1x128x128xbf16>
    %240 = vector.shape_cast %239 : vector<1x128x128xbf16> to vector<128x128xbf16>
    %cst_214 = arith.constant dense<0.000000e+00> : vector<2x128xf32>
    %241 = tpu.matmul %238, %240, %cst_214 {dimension_numbers = #tpu.dot_dimension_numbers<[1], [0], [0], [1], [0, 0, 1, 1], [], []>} : vector<2x128xbf16>, vector<128x128xbf16>, vector<2x128xf32> -> vector<2x128xf32>
    %242 = arith.addf %236, %241 : vector<2x128xf32>
    %c21 = arith.constant 21 : index
    %c0_215 = arith.constant 0 : index
    %243 = tpu.strided_load %arg14[%c21, %c0_215] {strides = array<i32: 40, 1>} : memref<80x128xf32, #tpu.memory_space<vmem>>, vector<2x128xf32>
    %244 = arith.truncf %243 : vector<2x128xf32> to vector<2x128xbf16>
    %c21_216 = arith.constant 21 : index
    %c0_217 = arith.constant 0 : index
    %c0_218 = arith.constant 0 : index
    %245 = vector.load %arg8[%c21_216, %c0_217, %c0_218] : memref<37x128x128xbf16, #tpu.memory_space<vmem>>, vector<1x128x128xbf16>
    %246 = vector.shape_cast %245 : vector<1x128x128xbf16> to vector<128x128xbf16>
    %cst_219 = arith.constant dense<0.000000e+00> : vector<2x128xf32>
    %247 = tpu.matmul %244, %246, %cst_219 {dimension_numbers = #tpu.dot_dimension_numbers<[1], [0], [0], [1], [0, 0, 1, 1], [], []>} : vector<2x128xbf16>, vector<128x128xbf16>, vector<2x128xf32> -> vector<2x128xf32>
    %248 = arith.addf %242, %247 : vector<2x128xf32>
    %c22 = arith.constant 22 : index
    %c0_220 = arith.constant 0 : index
    %249 = tpu.strided_load %arg14[%c22, %c0_220] {strides = array<i32: 40, 1>} : memref<80x128xf32, #tpu.memory_space<vmem>>, vector<2x128xf32>
    %250 = arith.truncf %249 : vector<2x128xf32> to vector<2x128xbf16>
    %c22_221 = arith.constant 22 : index
    %c0_222 = arith.constant 0 : index
    %c0_223 = arith.constant 0 : index
    %251 = vector.load %arg8[%c22_221, %c0_222, %c0_223] : memref<37x128x128xbf16, #tpu.memory_space<vmem>>, vector<1x128x128xbf16>
    %252 = vector.shape_cast %251 : vector<1x128x128xbf16> to vector<128x128xbf16>
    %cst_224 = arith.constant dense<0.000000e+00> : vector<2x128xf32>
    %253 = tpu.matmul %250, %252, %cst_224 {dimension_numbers = #tpu.dot_dimension_numbers<[1], [0], [0], [1], [0, 0, 1, 1], [], []>} : vector<2x128xbf16>, vector<128x128xbf16>, vector<2x128xf32> -> vector<2x128xf32>
    %254 = arith.addf %248, %253 : vector<2x128xf32>
    %c23 = arith.constant 23 : index
    %c0_225 = arith.constant 0 : index
    %255 = tpu.strided_load %arg14[%c23, %c0_225] {strides = array<i32: 40, 1>} : memref<80x128xf32, #tpu.memory_space<vmem>>, vector<2x128xf32>
    %256 = arith.truncf %255 : vector<2x128xf32> to vector<2x128xbf16>
    %c23_226 = arith.constant 23 : index
    %c0_227 = arith.constant 0 : index
    %c0_228 = arith.constant 0 : index
    %257 = vector.load %arg8[%c23_226, %c0_227, %c0_228] : memref<37x128x128xbf16, #tpu.memory_space<vmem>>, vector<1x128x128xbf16>
    %258 = vector.shape_cast %257 : vector<1x128x128xbf16> to vector<128x128xbf16>
    %cst_229 = arith.constant dense<0.000000e+00> : vector<2x128xf32>
    %259 = tpu.matmul %256, %258, %cst_229 {dimension_numbers = #tpu.dot_dimension_numbers<[1], [0], [0], [1], [0, 0, 1, 1], [], []>} : vector<2x128xbf16>, vector<128x128xbf16>, vector<2x128xf32> -> vector<2x128xf32>
    %260 = arith.addf %254, %259 : vector<2x128xf32>
    %c24 = arith.constant 24 : index
    %c0_230 = arith.constant 0 : index
    %261 = tpu.strided_load %arg14[%c24, %c0_230] {strides = array<i32: 40, 1>} : memref<80x128xf32, #tpu.memory_space<vmem>>, vector<2x128xf32>
    %262 = arith.truncf %261 : vector<2x128xf32> to vector<2x128xbf16>
    %c24_231 = arith.constant 24 : index
    %c0_232 = arith.constant 0 : index
    %c0_233 = arith.constant 0 : index
    %263 = vector.load %arg8[%c24_231, %c0_232, %c0_233] : memref<37x128x128xbf16, #tpu.memory_space<vmem>>, vector<1x128x128xbf16>
    %264 = vector.shape_cast %263 : vector<1x128x128xbf16> to vector<128x128xbf16>
    %cst_234 = arith.constant dense<0.000000e+00> : vector<2x128xf32>
    %265 = tpu.matmul %262, %264, %cst_234 {dimension_numbers = #tpu.dot_dimension_numbers<[1], [0], [0], [1], [0, 0, 1, 1], [], []>} : vector<2x128xbf16>, vector<128x128xbf16>, vector<2x128xf32> -> vector<2x128xf32>
    %266 = arith.addf %260, %265 : vector<2x128xf32>
    %c25 = arith.constant 25 : index
    %c0_235 = arith.constant 0 : index
    %267 = tpu.strided_load %arg14[%c25, %c0_235] {strides = array<i32: 40, 1>} : memref<80x128xf32, #tpu.memory_space<vmem>>, vector<2x128xf32>
    %268 = arith.truncf %267 : vector<2x128xf32> to vector<2x128xbf16>
    %c25_236 = arith.constant 25 : index
    %c0_237 = arith.constant 0 : index
    %c0_238 = arith.constant 0 : index
    %269 = vector.load %arg8[%c25_236, %c0_237, %c0_238] : memref<37x128x128xbf16, #tpu.memory_space<vmem>>, vector<1x128x128xbf16>
    %270 = vector.shape_cast %269 : vector<1x128x128xbf16> to vector<128x128xbf16>
    %cst_239 = arith.constant dense<0.000000e+00> : vector<2x128xf32>
    %271 = tpu.matmul %268, %270, %cst_239 {dimension_numbers = #tpu.dot_dimension_numbers<[1], [0], [0], [1], [0, 0, 1, 1], [], []>} : vector<2x128xbf16>, vector<128x128xbf16>, vector<2x128xf32> -> vector<2x128xf32>
    %272 = arith.addf %266, %271 : vector<2x128xf32>
    %c26 = arith.constant 26 : index
    %c0_240 = arith.constant 0 : index
    %273 = tpu.strided_load %arg14[%c26, %c0_240] {strides = array<i32: 40, 1>} : memref<80x128xf32, #tpu.memory_space<vmem>>, vector<2x128xf32>
    %274 = arith.truncf %273 : vector<2x128xf32> to vector<2x128xbf16>
    %c26_241 = arith.constant 26 : index
    %c0_242 = arith.constant 0 : index
    %c0_243 = arith.constant 0 : index
    %275 = vector.load %arg8[%c26_241, %c0_242, %c0_243] : memref<37x128x128xbf16, #tpu.memory_space<vmem>>, vector<1x128x128xbf16>
    %276 = vector.shape_cast %275 : vector<1x128x128xbf16> to vector<128x128xbf16>
    %cst_244 = arith.constant dense<0.000000e+00> : vector<2x128xf32>
    %277 = tpu.matmul %274, %276, %cst_244 {dimension_numbers = #tpu.dot_dimension_numbers<[1], [0], [0], [1], [0, 0, 1, 1], [], []>} : vector<2x128xbf16>, vector<128x128xbf16>, vector<2x128xf32> -> vector<2x128xf32>
    %278 = arith.addf %272, %277 : vector<2x128xf32>
    %c27 = arith.constant 27 : index
    %c0_245 = arith.constant 0 : index
    %279 = tpu.strided_load %arg14[%c27, %c0_245] {strides = array<i32: 40, 1>} : memref<80x128xf32, #tpu.memory_space<vmem>>, vector<2x128xf32>
    %280 = arith.truncf %279 : vector<2x128xf32> to vector<2x128xbf16>
    %c27_246 = arith.constant 27 : index
    %c0_247 = arith.constant 0 : index
    %c0_248 = arith.constant 0 : index
    %281 = vector.load %arg8[%c27_246, %c0_247, %c0_248] : memref<37x128x128xbf16, #tpu.memory_space<vmem>>, vector<1x128x128xbf16>
    %282 = vector.shape_cast %281 : vector<1x128x128xbf16> to vector<128x128xbf16>
    %cst_249 = arith.constant dense<0.000000e+00> : vector<2x128xf32>
    %283 = tpu.matmul %280, %282, %cst_249 {dimension_numbers = #tpu.dot_dimension_numbers<[1], [0], [0], [1], [0, 0, 1, 1], [], []>} : vector<2x128xbf16>, vector<128x128xbf16>, vector<2x128xf32> -> vector<2x128xf32>
    %284 = arith.addf %278, %283 : vector<2x128xf32>
    %c28 = arith.constant 28 : index
    %c0_250 = arith.constant 0 : index
    %285 = tpu.strided_load %arg14[%c28, %c0_250] {strides = array<i32: 40, 1>} : memref<80x128xf32, #tpu.memory_space<vmem>>, vector<2x128xf32>
    %286 = arith.truncf %285 : vector<2x128xf32> to vector<2x128xbf16>
    %c28_251 = arith.constant 28 : index
    %c0_252 = arith.constant 0 : index
    %c0_253 = arith.constant 0 : index
    %287 = vector.load %arg8[%c28_251, %c0_252, %c0_253] : memref<37x128x128xbf16, #tpu.memory_space<vmem>>, vector<1x128x128xbf16>
    %288 = vector.shape_cast %287 : vector<1x128x128xbf16> to vector<128x128xbf16>
    %cst_254 = arith.constant dense<0.000000e+00> : vector<2x128xf32>
    %289 = tpu.matmul %286, %288, %cst_254 {dimension_numbers = #tpu.dot_dimension_numbers<[1], [0], [0], [1], [0, 0, 1, 1], [], []>} : vector<2x128xbf16>, vector<128x128xbf16>, vector<2x128xf32> -> vector<2x128xf32>
    %290 = arith.addf %284, %289 : vector<2x128xf32>
    %c29 = arith.constant 29 : index
    %c0_255 = arith.constant 0 : index
    %291 = tpu.strided_load %arg14[%c29, %c0_255] {strides = array<i32: 40, 1>} : memref<80x128xf32, #tpu.memory_space<vmem>>, vector<2x128xf32>
    %292 = arith.truncf %291 : vector<2x128xf32> to vector<2x128xbf16>
    %c29_256 = arith.constant 29 : index
    %c0_257 = arith.constant 0 : index
    %c0_258 = arith.constant 0 : index
    %293 = vector.load %arg8[%c29_256, %c0_257, %c0_258] : memref<37x128x128xbf16, #tpu.memory_space<vmem>>, vector<1x128x128xbf16>
    %294 = vector.shape_cast %293 : vector<1x128x128xbf16> to vector<128x128xbf16>
    %cst_259 = arith.constant dense<0.000000e+00> : vector<2x128xf32>
    %295 = tpu.matmul %292, %294, %cst_259 {dimension_numbers = #tpu.dot_dimension_numbers<[1], [0], [0], [1], [0, 0, 1, 1], [], []>} : vector<2x128xbf16>, vector<128x128xbf16>, vector<2x128xf32> -> vector<2x128xf32>
    %296 = arith.addf %290, %295 : vector<2x128xf32>
    %c30 = arith.constant 30 : index
    %c0_260 = arith.constant 0 : index
    %297 = tpu.strided_load %arg14[%c30, %c0_260] {strides = array<i32: 40, 1>} : memref<80x128xf32, #tpu.memory_space<vmem>>, vector<2x128xf32>
    %298 = arith.truncf %297 : vector<2x128xf32> to vector<2x128xbf16>
    %c30_261 = arith.constant 30 : index
    %c0_262 = arith.constant 0 : index
    %c0_263 = arith.constant 0 : index
    %299 = vector.load %arg8[%c30_261, %c0_262, %c0_263] : memref<37x128x128xbf16, #tpu.memory_space<vmem>>, vector<1x128x128xbf16>
    %300 = vector.shape_cast %299 : vector<1x128x128xbf16> to vector<128x128xbf16>
    %cst_264 = arith.constant dense<0.000000e+00> : vector<2x128xf32>
    %301 = tpu.matmul %298, %300, %cst_264 {dimension_numbers = #tpu.dot_dimension_numbers<[1], [0], [0], [1], [0, 0, 1, 1], [], []>} : vector<2x128xbf16>, vector<128x128xbf16>, vector<2x128xf32> -> vector<2x128xf32>
    %302 = arith.addf %296, %301 : vector<2x128xf32>
    %c31 = arith.constant 31 : index
    %c0_265 = arith.constant 0 : index
    %303 = tpu.strided_load %arg14[%c31, %c0_265] {strides = array<i32: 40, 1>} : memref<80x128xf32, #tpu.memory_space<vmem>>, vector<2x128xf32>
    %304 = arith.truncf %303 : vector<2x128xf32> to vector<2x128xbf16>
    %c31_266 = arith.constant 31 : index
    %c0_267 = arith.constant 0 : index
    %c0_268 = arith.constant 0 : index
    %305 = vector.load %arg8[%c31_266, %c0_267, %c0_268] : memref<37x128x128xbf16, #tpu.memory_space<vmem>>, vector<1x128x128xbf16>
    %306 = vector.shape_cast %305 : vector<1x128x128xbf16> to vector<128x128xbf16>
    %cst_269 = arith.constant dense<0.000000e+00> : vector<2x128xf32>
    %307 = tpu.matmul %304, %306, %cst_269 {dimension_numbers = #tpu.dot_dimension_numbers<[1], [0], [0], [1], [0, 0, 1, 1], [], []>} : vector<2x128xbf16>, vector<128x128xbf16>, vector<2x128xf32> -> vector<2x128xf32>
    %308 = arith.addf %302, %307 : vector<2x128xf32>
    %c32 = arith.constant 32 : index
    %c0_270 = arith.constant 0 : index
    %309 = tpu.strided_load %arg14[%c32, %c0_270] {strides = array<i32: 40, 1>} : memref<80x128xf32, #tpu.memory_space<vmem>>, vector<2x128xf32>
    %310 = arith.truncf %309 : vector<2x128xf32> to vector<2x128xbf16>
    %c32_271 = arith.constant 32 : index
    %c0_272 = arith.constant 0 : index
    %c0_273 = arith.constant 0 : index
    %311 = vector.load %arg8[%c32_271, %c0_272, %c0_273] : memref<37x128x128xbf16, #tpu.memory_space<vmem>>, vector<1x128x128xbf16>
    %312 = vector.shape_cast %311 : vector<1x128x128xbf16> to vector<128x128xbf16>
    %cst_274 = arith.constant dense<0.000000e+00> : vector<2x128xf32>
    %313 = tpu.matmul %310, %312, %cst_274 {dimension_numbers = #tpu.dot_dimension_numbers<[1], [0], [0], [1], [0, 0, 1, 1], [], []>} : vector<2x128xbf16>, vector<128x128xbf16>, vector<2x128xf32> -> vector<2x128xf32>
    %314 = arith.addf %308, %313 : vector<2x128xf32>
    %c33 = arith.constant 33 : index
    %c0_275 = arith.constant 0 : index
    %315 = tpu.strided_load %arg14[%c33, %c0_275] {strides = array<i32: 40, 1>} : memref<80x128xf32, #tpu.memory_space<vmem>>, vector<2x128xf32>
    %316 = arith.truncf %315 : vector<2x128xf32> to vector<2x128xbf16>
    %c33_276 = arith.constant 33 : index
    %c0_277 = arith.constant 0 : index
    %c0_278 = arith.constant 0 : index
    %317 = vector.load %arg8[%c33_276, %c0_277, %c0_278] : memref<37x128x128xbf16, #tpu.memory_space<vmem>>, vector<1x128x128xbf16>
    %318 = vector.shape_cast %317 : vector<1x128x128xbf16> to vector<128x128xbf16>
    %cst_279 = arith.constant dense<0.000000e+00> : vector<2x128xf32>
    %319 = tpu.matmul %316, %318, %cst_279 {dimension_numbers = #tpu.dot_dimension_numbers<[1], [0], [0], [1], [0, 0, 1, 1], [], []>} : vector<2x128xbf16>, vector<128x128xbf16>, vector<2x128xf32> -> vector<2x128xf32>
    %320 = arith.addf %314, %319 : vector<2x128xf32>
    %c34 = arith.constant 34 : index
    %c0_280 = arith.constant 0 : index
    %321 = tpu.strided_load %arg14[%c34, %c0_280] {strides = array<i32: 40, 1>} : memref<80x128xf32, #tpu.memory_space<vmem>>, vector<2x128xf32>
    %322 = arith.truncf %321 : vector<2x128xf32> to vector<2x128xbf16>
    %c34_281 = arith.constant 34 : index
    %c0_282 = arith.constant 0 : index
    %c0_283 = arith.constant 0 : index
    %323 = vector.load %arg8[%c34_281, %c0_282, %c0_283] : memref<37x128x128xbf16, #tpu.memory_space<vmem>>, vector<1x128x128xbf16>
    %324 = vector.shape_cast %323 : vector<1x128x128xbf16> to vector<128x128xbf16>
    %cst_284 = arith.constant dense<0.000000e+00> : vector<2x128xf32>
    %325 = tpu.matmul %322, %324, %cst_284 {dimension_numbers = #tpu.dot_dimension_numbers<[1], [0], [0], [1], [0, 0, 1, 1], [], []>} : vector<2x128xbf16>, vector<128x128xbf16>, vector<2x128xf32> -> vector<2x128xf32>
    %326 = arith.addf %320, %325 : vector<2x128xf32>
    %c35 = arith.constant 35 : index
    %c0_285 = arith.constant 0 : index
    %327 = tpu.strided_load %arg14[%c35, %c0_285] {strides = array<i32: 40, 1>} : memref<80x128xf32, #tpu.memory_space<vmem>>, vector<2x128xf32>
    %328 = arith.truncf %327 : vector<2x128xf32> to vector<2x128xbf16>
    %c35_286 = arith.constant 35 : index
    %c0_287 = arith.constant 0 : index
    %c0_288 = arith.constant 0 : index
    %329 = vector.load %arg8[%c35_286, %c0_287, %c0_288] : memref<37x128x128xbf16, #tpu.memory_space<vmem>>, vector<1x128x128xbf16>
    %330 = vector.shape_cast %329 : vector<1x128x128xbf16> to vector<128x128xbf16>
    %cst_289 = arith.constant dense<0.000000e+00> : vector<2x128xf32>
    %331 = tpu.matmul %328, %330, %cst_289 {dimension_numbers = #tpu.dot_dimension_numbers<[1], [0], [0], [1], [0, 0, 1, 1], [], []>} : vector<2x128xbf16>, vector<128x128xbf16>, vector<2x128xf32> -> vector<2x128xf32>
    %332 = arith.addf %326, %331 : vector<2x128xf32>
    %c36 = arith.constant 36 : index
    %c0_290 = arith.constant 0 : index
    %333 = tpu.strided_load %arg14[%c36, %c0_290] {strides = array<i32: 40, 1>} : memref<80x128xf32, #tpu.memory_space<vmem>>, vector<2x128xf32>
    %334 = arith.truncf %333 : vector<2x128xf32> to vector<2x128xbf16>
    %c36_291 = arith.constant 36 : index
    %c0_292 = arith.constant 0 : index
    %c0_293 = arith.constant 0 : index
    %335 = vector.load %arg8[%c36_291, %c0_292, %c0_293] : memref<37x128x128xbf16, #tpu.memory_space<vmem>>, vector<1x128x128xbf16>
    %336 = vector.shape_cast %335 : vector<1x128x128xbf16> to vector<128x128xbf16>
    %cst_294 = arith.constant dense<0.000000e+00> : vector<2x128xf32>
    %337 = tpu.matmul %334, %336, %cst_294 {dimension_numbers = #tpu.dot_dimension_numbers<[1], [0], [0], [1], [0, 0, 1, 1], [], []>} : vector<2x128xbf16>, vector<128x128xbf16>, vector<2x128xf32> -> vector<2x128xf32>
    %338 = arith.addf %332, %337 : vector<2x128xf32>
    %c0_295 = arith.constant 0 : index
    %c0_296 = arith.constant 0 : index
    %339 = vector.load %arg9[%c0_295, %c0_296] : memref<1x128xf32, #tpu.memory_space<vmem>>, vector<1x128xf32>
    %340 = vector.broadcast %339 : vector<1x128xf32> to vector<2x128xf32>
    %341 = arith.addf %338, %340 : vector<2x128xf32>
    %cst_297 = arith.constant 0.000000e+00 : f32
    %342 = vector.broadcast %cst_297 : f32 to vector<2x128xf32>
    %343 = arith.maximumf %341, %342 : vector<2x128xf32>
    %c0_298 = arith.constant 0 : index
    %c0_299 = arith.constant 0 : index
    %344 = vector.load %arg10[%c0_298, %c0_299] : memref<2x128xf32, #tpu.memory_space<vmem>>, vector<2x128xf32>
    tpu.vector_store %arg10[%c0_298, %c0_299], %343 {strides = array<i32>} : memref<2x128xf32, #tpu.memory_space<vmem>>, vector<2x128xf32>,
    return
  }
  func.func @transform_0(%arg0: i32) -> (i32, i32, i32) {
    %c0_i32 = arith.constant 0 : i32
    %c0_i32_0 = arith.constant 0 : i32
    %c0_i32_1 = arith.constant 0 : i32
    return %arg0, %c0_i32, %c0_i32_0 : i32, i32, i32
  }
  func.func @transform_1(%arg0: i32) -> (i32, i32, i32) {
    %c0_i32 = arith.constant 0 : i32
    %c0_i32_0 = arith.constant 0 : i32
    %c0_i32_1 = arith.constant 0 : i32
    %c0_i32_2 = arith.constant 0 : i32
    return %c0_i32, %c0_i32_0, %c0_i32_1 : i32, i32, i32
  }
  func.func @transform_2(%arg0: i32) -> (i32, i32) {
    %c0_i32 = arith.constant 0 : i32
    %c0_i32_0 = arith.constant 0 : i32
    %c0_i32_1 = arith.constant 0 : i32
    return %c0_i32, %c0_i32_0 : i32, i32
  }
  func.func @transform_3(%arg0: i32) -> (i32, i32, i32) {
    %c0_i32 = arith.constant 0 : i32
    %c0_i32_0 = arith.constant 0 : i32
    %c0_i32_1 = arith.constant 0 : i32
    %c0_i32_2 = arith.constant 0 : i32
    return %c0_i32, %c0_i32_0, %c0_i32_1 : i32, i32, i32
  }
  func.func @transform_4(%arg0: i32) -> (i32, i32) {
    %c0_i32 = arith.constant 0 : i32
    %c0_i32_0 = arith.constant 0 : i32
    %c0_i32_1 = arith.constant 0 : i32
    return %c0_i32, %c0_i32_0 : i32, i32
  }
  func.func @transform_5(%arg0: i32) -> (i32, i32, i32) {
    %c0_i32 = arith.constant 0 : i32
    %c0_i32_0 = arith.constant 0 : i32
    %c0_i32_1 = arith.constant 0 : i32
    %c0_i32_2 = arith.constant 0 : i32
    return %c0_i32, %c0_i32_0, %c0_i32_1 : i32, i32, i32
  }
  func.func @transform_6(%arg0: i32) -> (i32, i32) {
    %c0_i32 = arith.constant 0 : i32
    %c0_i32_0 = arith.constant 0 : i32
    %c0_i32_1 = arith.constant 0 : i32
    return %c0_i32, %c0_i32_0 : i32, i32
  }
  func.func @transform_7(%arg0: i32) -> (i32, i32, i32) {
    %c0_i32 = arith.constant 0 : i32
    %c0_i32_0 = arith.constant 0 : i32
    %c0_i32_1 = arith.constant 0 : i32
    %c0_i32_2 = arith.constant 0 : i32
    return %c0_i32, %c0_i32_0, %c0_i32_1 : i32, i32, i32
  }
  func.func @transform_8(%arg0: i32) -> (i32, i32) {
    %c0_i32 = arith.constant 0 : i32
    %c0_i32_0 = arith.constant 0 : i32
    %c0_i32_1 = arith.constant 0 : i32
    return %c0_i32, %c0_i32_0 : i32, i32
  }
  func.func @transform_9(%arg0: i32) -> (i32, i32) {
    %c0_i32 = arith.constant 0 : i32
    %c0_i32_0 = arith.constant 0 : i32
    return %arg0, %c0_i32 : i32, i32
  }
}

</mosaic_0001>

<llo_original>
// kernel: phys_branch_forward.1
$region0: #{phys_branch_forward.1}
  #allocation0 [shape = 'u32[]', space=smem, size = 0x4, offset = 0x4, fixed_abs, tag = 'smem constant byte address 0x4 - core index']
  #allocation1 [shape = 'u32[144,128]{1,0:T(1,128)}', space=vmem, size = 0x12000, scoped, tag = 'internal scratch']
  #allocation2 [shape = 'f32[616,9]{1,0:T(8,128)}', space=vmem, size = 0x4d000, scoped, tag = 'scratch operand']
  #allocation3 [shape = 'f32[328,32]{1,0:T(8,128)}', space=vmem, size = 0x29000, scoped, tag = 'scratch operand']
  #allocation4 [shape = 'f32[168,64]{1,0:T(8,128)}', space=vmem, size = 0x15000, scoped, tag = 'scratch operand']
  #allocation5 [shape = 'f32[80,128]{1,0:T(8,128)}', space=vmem, size = 0xa000, scoped, tag = 'scratch operand']
  %s0 = inlined_call_operand.vmem [shape: f32[2,300,9], index: 0, kind: input, shape index: {}]
  %s1 = inlined_call_operand.vmem [shape: bf16[3,9,32], index: 1, kind: input, shape index: {}]
  %s2 = inlined_call_operand.hbm [shape: f32[1,32], index: 2, kind: input, shape index: {}]
  %s3 = inlined_call_operand.hbm [shape: bf16[3,32,64], index: 3, kind: input, shape index: {}]
  %s4 = inlined_call_operand.hbm [shape: f32[1,64], index: 4, kind: input, shape index: {}]
  %s5 = inlined_call_operand.hbm [shape: bf16[3,64,128], index: 5, kind: input, shape index: {}]
  %s6 = inlined_call_operand.hbm [shape: f32[1,128], index: 6, kind: input, shape index: {}]
  %s7 = inlined_call_operand.hbm [shape: bf16[37,128,128], index: 7, kind: input, shape index: {}]
  %s8 = inlined_call_operand.hbm [shape: f32[1,128], index: 8, kind: input, shape index: {}]
  %s9 = inlined_call_operand.hbm [shape: f32[2,128], index: 9, kind: output, shape index: {}]
  %s10 = sld [smem:[#allocation0]]
  $region74: #{phys_branch_forward.1} parent=0
    _
  %s12 = ssub.s32 1, %s10
  %s13 = scalar_select 0, %s12, %s10
  $region1: #{phys_branch_forward.1} parent=0
    #allocation6 [shape = 'u8[512]{0}', space=vmem, size = 0x400, scoped, tag = 'input window, operand 2, single buffered']
    #allocation7 [shape = 's32[1]{0}', space=sflag, size = 0x4, scoped, tag = 'scoped memory for phys_branch_forward.1']
    #allocation8 [shape = 's32[1]{0}', space=sflag, size = 0x4, scoped, tag = 'scoped memory for phys_branch_forward.1']
    #allocation9 [shape = 'u8[24576]{0}', space=vmem, size = 0x6000, scoped, tag = 'input window, operand 3, single buffered']
    #allocation10 [shape = 's32[1]{0}', space=sflag, size = 0x4, scoped, tag = 'scoped memory for phys_branch_forward.1']
    #allocation11 [shape = 'u8[512]{0}', space=vmem, size = 0x400, scoped, tag = 'input window, operand 4, single buffered']
    #allocation12 [shape = 'u8[49152]{0}', space=vmem, size = 0xc000, scoped, tag = 'input window, operand 5, single buffered']
    #allocation13 [shape = 's32[1]{0}', space=sflag, size = 0x4, scoped, tag = 'scoped memory for phys_branch_forward.1']
    #allocation14 [shape = 'u8[512]{0}', space=vmem, size = 0x400, scoped, tag = 'input window, operand 6, single buffered']
    #allocation15 [shape = 'u8[1212416]{0}', space=vmem, size = 0x128000, scoped, tag = 'input window, operand 7, single buffered']
    #allocation16 [shape = 's32[1]{0}', space=sflag, size = 0x4, scoped, tag = 'scoped memory for phys_branch_forward.1']
    #allocation17 [shape = 'u8[512]{0}', space=vmem, size = 0x400, scoped, tag = 'input window, operand 8, single buffered']
    #allocation18 [shape = 'u8[1024]{0}', space=vmem, size = 0x400, scoped, tag = 'output window, operand 0, single buffered']
    %14 = vsyncpa [#allocation7], 0
    %15 = vsyncpa [#allocation10], 0
    %16 = vsyncpa [#allocation13], 0
    %17 = vsyncpa [#allocation16], 0
    %18 = vsyncpa [#allocation8], 0
    // Predicated region
    $region2: #{phys_branch_forward.1} parent=1 // pred_check
      _
    $region3: #{phys_branch_forward.1} parent=1 // pred_check_branch
      %20 = sbr.rel (0) target = $region5
    $region4: #{phys_branch_forward.1} parent=1 // pred_region
      _
    $region5: #{phys_branch_forward.1} parent=1 // pred_fallthru
      _
    // Predicated region
    $region6: #{phys_branch_forward.1} parent=1 // pred_check
      _
    $region7: #{phys_branch_forward.1} parent=1 // pred_check_branch
      %22 = sbr.rel (0) target = $region9
    $region8: #{phys_branch_forward.1} parent=1 // pred_region
      _
    $region9: #{phys_branch_forward.1} parent=1 // pred_fallthru
      _
    // Predicated region
    $region10: #{phys_branch_forward.1} parent=1 // pred_check
      _
    $region11: #{phys_branch_forward.1} parent=1 // pred_check_branch
      %24 = sbr.rel (0) target = $region13
    $region12: #{phys_branch_forward.1} parent=1 // pred_region
      %s26 = ssub.s32 16, 16
      %27 = vsyncadd [#allocation7], %s26
      %s29 = sshll.u32 [#allocation6], 4
      %s30 = int_to_ptr.vmem [resolvable:$true] %s29
      %32 = dma.hbm_to_vmem [thread:$0]  %s2, 16, %s30, [#allocation7]
    $region13: #{phys_branch_forward.1} parent=1 // pred_fallthru
      _
    // Predicated region
    $region14: #{phys_branch_forward.1} parent=1 // pred_check
      _
    $region15: #{phys_branch_forward.1} parent=1 // pred_check_branch
      %34 = sbr.rel (0) target = $region17
    $region16: #{phys_branch_forward.1} parent=1 // pred_region
      %s36 = ssub.s32 768, 768
      %37 = vsyncadd [#allocation10], %s36
      %s38 = sshll.u32 [#allocation9], 4
      %s39 = int_to_ptr.vmem [resolvable:$true] %s38
      %44 = dma.hbm_to_vmem [thread:$0]  %s3, 768, %s39, [#allocation10], 64, 64, 4
    $region17: #{phys_branch_forward.1} parent=1 // pred_fallthru
      _
    // Predicated region
    $region18: #{phys_branch_forward.1} parent=1 // pred_check
      _
    $region19: #{phys_branch_forward.1} parent=1 // pred_check_branch
      %46 = sbr.rel (0) target = $region21
    $region20: #{phys_branch_forward.1} parent=1 // pred_region
      %s48 = ssub.s32 16, 16
      %49 = vsyncadd [#allocation10], %s48
      %s51 = sshll.u32 [#allocation11], 4
      %s52 = int_to_ptr.vmem [resolvable:$true] %s51
      %54 = dma.hbm_to_vmem [thread:$0]  %s4, 16, %s52, [#allocation10]
    $region21: #{phys_branch_forward.1} parent=1 // pred_fallthru
      _
    // Predicated region
    $region22: #{phys_branch_forward.1} parent=1 // pred_check
      _
    $region23: #{phys_branch_forward.1} parent=1 // pred_check_branch
      %56 = sbr.rel (0) target = $region25
    $region24: #{phys_branch_forward.1} parent=1 // pred_region
      %s58 = ssub.s32 1536, 1536
      %59 = vsyncadd [#allocation13], %s58
      %s60 = sshll.u32 [#allocation12], 4
      %s61 = int_to_ptr.vmem [resolvable:$true] %s60
      %66 = dma.hbm_to_vmem [thread:$0]  %s5, 1536, %s61, [#allocation13], 64, 64, 4
    $region25: #{phys_branch_forward.1} parent=1 // pred_fallthru
      _
    // Predicated region
    $region26: #{phys_branch_forward.1} parent=1 // pred_check
      _
    $region27: #{phys_branch_forward.1} parent=1 // pred_check_branch
      %68 = sbr.rel (0) target = $region29
    $region28: #{phys_branch_forward.1} parent=1 // pred_region
      %s70 = ssub.s32 16, 16
      %71 = vsyncadd [#allocation13], %s70
      %s73 = sshll.u32 [#allocation14], 4
      %s74 = int_to_ptr.vmem [resolvable:$true] %s73
      %76 = dma.hbm_to_vmem [thread:$0]  %s6, 16, %s74, [#allocation13]
    $region29: #{phys_branch_forward.1} parent=1 // pred_fallthru
      _
    // Predicated region
    $region30: #{phys_branch_forward.1} parent=1 // pred_check
      _
    $region31: #{phys_branch_forward.1} parent=1 // pred_check_branch
      %78 = sbr.rel (0) target = $region33
    $region32: #{phys_branch_forward.1} parent=1 // pred_region
      %s80 = ssub.s32 37888, 37888
      %81 = vsyncadd [#allocation16], %s80
      %s82 = sshll.u32 [#allocation15], 4
      %s83 = int_to_ptr.vmem [resolvable:$true] %s82
      %88 = dma.hbm_to_vmem [thread:$0]  %s7, 37888, %s83, [#allocation16], 64, 64, 4
    $region33: #{phys_branch_forward.1} parent=1 // pred_fallthru
      _
    // Predicated region
    $region34: #{phys_branch_forward.1} parent=1 // pred_check
      _
    $region35: #{phys_branch_forward.1} parent=1 // pred_check_branch
      %90 = sbr.rel (0) target = $region37
    $region36: #{phys_branch_forward.1} parent=1 // pred_region
      %s92 = ssub.s32 16, 16
      %93 = vsyncadd [#allocation16], %s92
      %s95 = sshll.u32 [#allocation17], 4
      %s96 = int_to_ptr.vmem [resolvable:$true] %s95
      %98 = dma.hbm_to_vmem [thread:$0]  %s8, 16, %s96, [#allocation16]
    $region37: #{phys_branch_forward.1} parent=1 // pred_fallthru
      _
    // Predicated region
    $region38: #{phys_branch_forward.1} parent=1 // pred_check
      _
    $region39: #{phys_branch_forward.1} parent=1 // pred_check_branch
      %100 = sbr.rel (0) target = $region41
    $region40: #{phys_branch_forward.1} parent=1 // pred_region
      %101 = dma.done [#allocation7], 16
    $region41: #{phys_branch_forward.1} parent=1 // pred_fallthru
      _
    // Predicated region
    $region42: #{phys_branch_forward.1} parent=1 // pred_check
      _
    $region43: #{phys_branch_forward.1} parent=1 // pred_check_branch
      %103 = sbr.rel (0) target = $region45
    $region44: #{phys_branch_forward.1} parent=1 // pred_region
      %104 = dma.done [#allocation10], 768
    $region45: #{phys_branch_forward.1} parent=1 // pred_fallthru
      _
    // Predicated region
    $region46: #{phys_branch_forward.1} parent=1 // pred_check
      _
    $region47: #{phys_branch_forward.1} parent=1 // pred_check_branch
      %106 = sbr.rel (0) target = $region49
    $region48: #{phys_branch_forward.1} parent=1 // pred_region
      %107 = dma.done [#allocation10], 16
    $region49: #{phys_branch_forward.1} parent=1 // pred_fallthru
      _
    // Predicated region
    $region50: #{phys_branch_forward.1} parent=1 // pred_check
      _
    $region51: #{phys_branch_forward.1} parent=1 // pred_check_branch
      %109 = sbr.rel (0) target = $region53
    $region52: #{phys_branch_forward.1} parent=1 // pred_region
      %110 = dma.done [#allocation13], 1536
    $region53: #{phys_branch_forward.1} parent=1 // pred_fallthru
      _
    // Predicated region
    $region54: #{phys_branch_forward.1} parent=1 // pred_check
      _
    $region55: #{phys_branch_forward.1} parent=1 // pred_check_branch
      %112 = sbr.rel (0) target = $region57
    $region56: #{phys_branch_forward.1} parent=1 // pred_region
      %113 = dma.done [#allocation13], 16
    $region57: #{phys_branch_forward.1} parent=1 // pred_fallthru
      _
    // Predicated region
    $region58: #{phys_branch_forward.1} parent=1 // pred_check
      _
    $region59: #{phys_branch_forward.1} parent=1 // pred_check_branch
      %115 = sbr.rel (0) target = $region61
    $region60: #{phys_branch_forward.1} parent=1 // pred_region
      %116 = dma.done [#allocation16], 37888
    $region61: #{phys_branch_forward.1} parent=1 // pred_fallthru
      _
    // Predicated region
    $region62: #{phys_branch_forward.1} parent=1 // pred_check
      _
    $region63: #{phys_branch_forward.1} parent=1 // pred_check_branch
      %118 = sbr.rel (0) target = $region65
    $region64: #{phys_branch_forward.1} parent=1 // pred_region
      %119 = dma.done [#allocation16], 16
    $region65: #{phys_branch_forward.1} parent=1 // pred_fallthru
      _
    %vm121 = vcmask 65536
    %122 = vst.msk [vmem:[#allocation2] sm:$0x1] %vm121, 0.0
    %v123 = vld [vmem:[%s0] sm:$0xff]
    %v124 = vld [vmem:[%s0 + $0x8] sm:$0xff]
    %v125 = vld [vmem:[%s0 + $0x10] sm:$0xff]
    %v126 = vld [vmem:[%s0 + $0x18] sm:$0xff]
    %v127 = vld [vmem:[%s0 + $0x20] sm:$0xff]
    %v128 = vld [vmem:[%s0 + $0x28] sm:$0xff]
    %v129 = vld [vmem:[%s0 + $0x30] sm:$0xff]
    %v130 = vld [vmem:[%s0 + $0x38] sm:$0xff]
    %v131 = vld [vmem:[%s0 + $0x40] sm:$0xff]
    %v132 = vld [vmem:[%s0 + $0x48] sm:$0xff]
    %v133 = vld [vmem:[%s0 + $0x50] sm:$0xff]
    %v134 = vld [vmem:[%s0 + $0x58] sm:$0xff]
    %v135 = vld [vmem:[%s0 + $0x60] sm:$0xff]
    %v136 = vld [vmem:[%s0 + $0x68] sm:$0xff]
    %v137 = vld [vmem:[%s0 + $0x70] sm:$0xff]
    %v138 = vld [vmem:[%s0 + $0x78] sm:$0xff]
    %v139 = vld [vmem:[%s0 + $0x80] sm:$0xff]
    %v140 = vld [vmem:[%s0 + $0x88] sm:$0xff]
    %v141 = vld [vmem:[%s0 + $0x90] sm:$0xff]
    %v142 = vld [vmem:[%s0 + $0x98] sm:$0xff]
    %v143 = vld [vmem:[%s0 + $0xa0] sm:$0xff]
    %v144 = vld [vmem:[%s0 + $0xa8] sm:$0xff]
    %v145 = vld [vmem:[%s0 + $0xb0] sm:$0xff]
    %v146 = vld [vmem:[%s0 + $0xb8] sm:$0xff]
    %v147 = vld [vmem:[%s0 + $0xc0] sm:$0xff]
    %v148 = vld [vmem:[%s0 + $0xc8] sm:$0xff]
    %v149 = vld [vmem:[%s0 + $0xd0] sm:$0xff]
    %v150 = vld [vmem:[%s0 + $0xd8] sm:$0xff]
    %v151 = vld [vmem:[%s0 + $0xe0] sm:$0xff]
    %v152 = vld [vmem:[%s0 + $0xe8] sm:$0xff]
    %v153 = vld [vmem:[%s0 + $0xf0] sm:$0xff]
    %v154 = vld [vmem:[%s0 + $0xf8] sm:$0xff]
    %v155 = vld [vmem:[%s0 + $0x100] sm:$0xff]
    %v156 = vld [vmem:[%s0 + $0x108] sm:$0xff]
    %v157 = vld [vmem:[%s0 + $0x110] sm:$0xff]
    %v158 = vld [vmem:[%s0 + $0x118] sm:$0xff]
    %v159 = vld [vmem:[%s0 + $0x120] sm:$0xff]
    %v160 = vld [vmem:[%s0 + $0x128] sm:$0xf]
    %vm161 = vcmask 72704
    %162 = vst.msk [vmem:[#allocation2 + $0x1] sm:$0xff] %vm161, %v123
    %163 = vst.msk [vmem:[#allocation2 + $0x9] sm:$0xff] %vm161, %v124
    %164 = vst.msk [vmem:[#allocation2 + $0x11] sm:$0xff] %vm161, %v125
    %165 = vst.msk [vmem:[#allocation2 + $0x19] sm:$0xff] %vm161, %v126
    %166 = vst.msk [vmem:[#allocation2 + $0x21] sm:$0xff] %vm161, %v127
    %167 = vst.msk [vmem:[#allocation2 + $0x29] sm:$0xff] %vm161, %v128
    %168 = vst.msk [vmem:[#allocation2 + $0x31] sm:$0xff] %vm161, %v129
    %169 = vst.msk [vmem:[#allocation2 + $0x39] sm:$0xff] %vm161, %v130
    %170 = vst.msk [vmem:[#allocation2 + $0x41] sm:$0xff] %vm161, %v131
    %171 = vst.msk [vmem:[#allocation2 + $0x49] sm:$0xff] %vm161, %v132
    %172 = vst.msk [vmem:[#allocation2 + $0x51] sm:$0xff] %vm161, %v133
    %173 = vst.msk [vmem:[#allocation2 + $0x59] sm:$0xff] %vm161, %v134
    %174 = vst.msk [vmem:[#allocation2 + $0x61] sm:$0xff] %vm161, %v135
    %175 = vst.msk [vmem:[#allocation2 + $0x69] sm:$0xff] %vm161, %v136
    %176 = vst.msk [vmem:[#allocation2 + $0x71] sm:$0xff] %vm161, %v137
    %177 = vst.msk [vmem:[#allocation2 + $0x79] sm:$0xff] %vm161, %v138
    %178 = vst.msk [vmem:[#allocation2 + $0x81] sm:$0xff] %vm161, %v139
    %179 = vst.msk [vmem:[#allocation2 + $0x89] sm:$0xff] %vm161, %v140
    %180 = vst.msk [vmem:[#allocation2 + $0x91] sm:$0xff] %vm161, %v141
    %181 = vst.msk [vmem:[#allocation2 + $0x99] sm:$0xff] %vm161, %v142
    %182 = vst.msk [vmem:[#allocation2 + $0xa1] sm:$0xff] %vm161, %v143
    %183 = vst.msk [vmem:[#allocation2 + $0xa9] sm:$0xff] %vm161, %v144
    %184 = vst.msk [vmem:[#allocation2 + $0xb1] sm:$0xff] %vm161, %v145
    %185 = vst.msk [vmem:[#allocation2 + $0xb9] sm:$0xff] %vm161, %v146
    %186 = vst.msk [vmem:[#allocation2 + $0xc1] sm:$0xff] %vm161, %v147
    %187 = vst.msk [vmem:[#allocation2 + $0xc9] sm:$0xff] %vm161, %v148
    %188 = vst.msk [vmem:[#allocation2 + $0xd1] sm:$0xff] %vm161, %v149
    %189 = vst.msk [vmem:[#allocation2 + $0xd9] sm:$0xff] %vm161, %v150
    %190 = vst.msk [vmem:[#allocation2 + $0xe1] sm:$0xff] %vm161, %v151
    %191 = vst.msk [vmem:[#allocation2 + $0xe9] sm:$0xff] %vm161, %v152
    %192 = vst.msk [vmem:[#allocation2 + $0xf1] sm:$0xff] %vm161, %v153
    %193 = vst.msk [vmem:[#allocation2 + $0xf9] sm:$0xff] %vm161, %v154
    %194 = vst.msk [vmem:[#allocation2 + $0x101] sm:$0xff] %vm161, %v155
    %195 = vst.msk [vmem:[#allocation2 + $0x109] sm:$0xff] %vm161, %v156
    %196 = vst.msk [vmem:[#allocation2 + $0x111] sm:$0xff] %vm161, %v157
    %197 = vst.msk [vmem:[#allocation2 + $0x119] sm:$0xff] %vm161, %v158
    %198 = vst.msk [vmem:[#allocation2 + $0x121] sm:$0xff] %vm161, %v159
    %vm199 = vcmask 68608
    %200 = vst.msk [vmem:[#allocation2 + $0x129] sm:$0xf] %vm199, %v160
    %201 = vst.msk [vmem:[#allocation2 + $0x12d] sm:$0x1] %vm121, 0.0
    %202 = vst.msk [vmem:[#allocation2 + $0x130] sm:$0x1] %vm121, 0.0
    %s203 = scalar_lea.vmem %s0, 304
    %v204 = vld [vmem:[%s203] sm:$0xff]
    %v205 = vld [vmem:[%s203 + $0x8] sm:$0xff]
    %v206 = vld [vmem:[%s203 + $0x10] sm:$0xff]
    %v207 = vld [vmem:[%s203 + $0x18] sm:$0xff]
    %v208 = vld [vmem:[%s203 + $0x20] sm:$0xff]
    %v209 = vld [vmem:[%s203 + $0x28] sm:$0xff]
    %v210 = vld [vmem:[%s203 + $0x30] sm:$0xff]
    %v211 = vld [vmem:[%s203 + $0x38] sm:$0xff]
    %v212 = vld [vmem:[%s203 + $0x40] sm:$0xff]
    %v213 = vld [vmem:[%s203 + $0x48] sm:$0xff]
    %v214 = vld [vmem:[%s203 + $0x50] sm:$0xff]
    %v215 = vld [vmem:[%s203 + $0x58] sm:$0xff]
    %v216 = vld [vmem:[%s203 + $0x60] sm:$0xff]
    %v217 = vld [vmem:[%s203 + $0x68] sm:$0xff]
    %v218 = vld [vmem:[%s203 + $0x70] sm:$0xff]
    %v219 = vld [vmem:[%s203 + $0x78] sm:$0xff]
    %v220 = vld [vmem:[%s203 + $0x80] sm:$0xff]
    %v221 = vld [vmem:[%s203 + $0x88] sm:$0xff]
    %v222 = vld [vmem:[%s203 + $0x90] sm:$0xff]
    %v223 = vld [vmem:[%s203 + $0x98] sm:$0xff]
    %v224 = vld [vmem:[%s203 + $0xa0] sm:$0xff]
    %v225 = vld [vmem:[%s203 + $0xa8] sm:$0xff]
    %v226 = vld [vmem:[%s203 + $0xb0] sm:$0xff]
    %v227 = vld [vmem:[%s203 + $0xb8] sm:$0xff]
    %v228 = vld [vmem:[%s203 + $0xc0] sm:$0xff]
    %v229 = vld [vmem:[%s203 + $0xc8] sm:$0xff]
    %v230 = vld [vmem:[%s203 + $0xd0] sm:$0xff]
    %v231 = vld [vmem:[%s203 + $0xd8] sm:$0xff]
    %v232 = vld [vmem:[%s203 + $0xe0] sm:$0xff]
    %v233 = vld [vmem:[%s203 + $0xe8] sm:$0xff]
    %v234 = vld [vmem:[%s203 + $0xf0] sm:$0xff]
    %v235 = vld [vmem:[%s203 + $0xf8] sm:$0xff]
    %v236 = vld [vmem:[%s203 + $0x100] sm:$0xff]
    %v237 = vld [vmem:[%s203 + $0x108] sm:$0xff]
    %v238 = vld [vmem:[%s203 + $0x110] sm:$0xff]
    %v239 = vld [vmem:[%s203 + $0x118] sm:$0xff]
    %v240 = vld [vmem:[%s203 + $0x120] sm:$0xff]
    %v241 = vld [vmem:[%s203 + $0x128] sm:$0xf]
    %242 = vst.msk [vmem:[#allocation2 + $0x131] sm:$0xff] %vm161, %v204
    %243 = vst.msk [vmem:[#allocation2 + $0x139] sm:$0xff] %vm161, %v205
    %244 = vst.msk [vmem:[#allocation2 + $0x141] sm:$0xff] %vm161, %v206
    %245 = vst.msk [vmem:[#allocation2 + $0x149] sm:$0xff] %vm161, %v207
    %246 = vst.msk [vmem:[#allocation2 + $0x151] sm:$0xff] %vm161, %v208
    %247 = vst.msk [vmem:[#allocation2 + $0x159] sm:$0xff] %vm161, %v209
    %248 = vst.msk [vmem:[#allocation2 + $0x161] sm:$0xff] %vm161, %v210
    %249 = vst.msk [vmem:[#allocation2 + $0x169] sm:$0xff] %vm161, %v211
    %250 = vst.msk [vmem:[#allocation2 + $0x171] sm:$0xff] %vm161, %v212
    %251 = vst.msk [vmem:[#allocation2 + $0x179] sm:$0xff] %vm161, %v213
    %252 = vst.msk [vmem:[#allocation2 + $0x181] sm:$0xff] %vm161, %v214
    %253 = vst.msk [vmem:[#allocation2 + $0x189] sm:$0xff] %vm161, %v215
    %254 = vst.msk [vmem:[#allocation2 + $0x191] sm:$0xff] %vm161, %v216
    %255 = vst.msk [vmem:[#allocation2 + $0x199] sm:$0xff] %vm161, %v217
    %256 = vst.msk [vmem:[#allocation2 + $0x1a1] sm:$0xff] %vm161, %v218
    %257 = vst.msk [vmem:[#allocation2 + $0x1a9] sm:$0xff] %vm161, %v219
    %258 = vst.msk [vmem:[#allocation2 + $0x1b1] sm:$0xff] %vm161, %v220
    %259 = vst.msk [vmem:[#allocation2 + $0x1b9] sm:$0xff] %vm161, %v221
    %260 = vst.msk [vmem:[#allocation2 + $0x1c1] sm:$0xff] %vm161, %v222
    %261 = vst.msk [vmem:[#allocation2 + $0x1c9] sm:$0xff] %vm161, %v223
    %262 = vst.msk [vmem:[#allocation2 + $0x1d1] sm:$0xff] %vm161, %v224
    %263 = vst.msk [vmem:[#allocation2 + $0x1d9] sm:$0xff] %vm161, %v225
    %264 = vst.msk [vmem:[#allocation2 + $0x1e1] sm:$0xff] %vm161, %v226
    %265 = vst.msk [vmem:[#allocation2 + $0x1e9] sm:$0xff] %vm161, %v227
    %266 = vst.msk [vmem:[#allocation2 + $0x1f1] sm:$0xff] %vm161, %v228
    %267 = vst.msk [vmem:[#allocation2 + $0x1f9] sm:$0xff] %vm161, %v229
    %268 = vst.msk [vmem:[#allocation2 + $0x201] sm:$0xff] %vm161, %v230
    %269 = vst.msk [vmem:[#allocation2 + $0x209] sm:$0xff] %vm161, %v231
    %270 = vst.msk [vmem:[#allocation2 + $0x211] sm:$0xff] %vm161, %v232
    %271 = vst.msk [vmem:[#allocation2 + $0x219] sm:$0xff] %vm161, %v233
    %272 = vst.msk [vmem:[#allocation2 + $0x221] sm:$0xff] %vm161, %v234
    %273 = vst.msk [vmem:[#allocation2 + $0x229] sm:$0xff] %vm161, %v235
    %274 = vst.msk [vmem:[#allocation2 + $0x231] sm:$0xff] %vm161, %v236
    %275 = vst.msk [vmem:[#allocation2 + $0x239] sm:$0xff] %vm161, %v237
    %276 = vst.msk [vmem:[#allocation2 + $0x241] sm:$0xff] %vm161, %v238
    %277 = vst.msk [vmem:[#allocation2 + $0x249] sm:$0xff] %vm161, %v239
    %278 = vst.msk [vmem:[#allocation2 + $0x251] sm:$0xff] %vm161, %v240
    %279 = vst.msk [vmem:[#allocation2 + $0x259] sm:$0xf] %vm199, %v241
    %280 = vst.msk [vmem:[#allocation2 + $0x25d] sm:$0x1] %vm121, 0.0
    %v281 = vld [vmem:[#allocation2] ss:$2 sm:$0xff]
    %s282 = scalar_lea.vmem [#allocation2], 16
    %v283 = vld [vmem:[%s282] ss:$2 sm:$0xff]
    %s284 = scalar_lea.vmem [#allocation2], 32
    %v285 = vld [vmem:[%s284] ss:$2 sm:$0xff]
    %s286 = scalar_lea.vmem [#allocation2], 48
    %v287 = vld [vmem:[%s286] ss:$2 sm:$0xff]
    %s288 = scalar_lea.vmem [#allocation2], 64
    %v289 = vld [vmem:[%s288] ss:$2 sm:$0xff]
    %s290 = scalar_lea.vmem [#allocation2], 80
    %v291 = vld [vmem:[%s290] ss:$2 sm:$0xff]
    %s292 = scalar_lea.vmem [#allocation2], 96
    %v293 = vld [vmem:[%s292] ss:$2 sm:$0xff]
    %s294 = scalar_lea.vmem [#allocation2], 112
    %v295 = vld [vmem:[%s294] ss:$2 sm:$0xff]
    %s296 = scalar_lea.vmem [#allocation2], 128
    %v297 = vld [vmem:[%s296] ss:$2 sm:$0xff]
    %s298 = scalar_lea.vmem [#allocation2], 144
    %v299 = vld [vmem:[%s298] ss:$2 sm:$0xff]
    %s300 = scalar_lea.vmem [#allocation2], 160
    %v301 = vld [vmem:[%s300] ss:$2 sm:$0xff]
    %s302 = scalar_lea.vmem [#allocation2], 176
    %v303 = vld [vmem:[%s302] ss:$2 sm:$0xff]
    %s304 = scalar_lea.vmem [#allocation2], 192
    %v305 = vld [vmem:[%s304] ss:$2 sm:$0xff]
    %s306 = scalar_lea.vmem [#allocation2], 208
    %v307 = vld [vmem:[%s306] ss:$2 sm:$0xff]
    %s308 = scalar_lea.vmem [#allocation2], 224
    %v309 = vld [vmem:[%s308] ss:$2 sm:$0xff]
    %s310 = scalar_lea.vmem [#allocation2], 240
    %v311 = vld [vmem:[%s310] ss:$2 sm:$0xff]
    %s312 = scalar_lea.vmem [#allocation2], 256
    %v313 = vld [vmem:[%s312] ss:$2 sm:$0xff]
    %s314 = scalar_lea.vmem [#allocation2], 272
    %v315 = vld [vmem:[%s314] ss:$2 sm:$0xff]
    %s316 = scalar_lea.vmem [#allocation2], 288
    %v317 = vld [vmem:[%s316] ss:$2 sm:$0xff]
    %s318 = scalar_lea.vmem [#allocation2], 304
    %v319 = vld [vmem:[%s318] ss:$2 sm:$0xff]
    %s320 = scalar_lea.vmem [#allocation2], 320
    %v321 = vld [vmem:[%s320] ss:$2 sm:$0xff]
    %s322 = scalar_lea.vmem [#allocation2], 336
    %v323 = vld [vmem:[%s322] ss:$2 sm:$0xff]
    %s324 = scalar_lea.vmem [#allocation2], 352
    %v325 = vld [vmem:[%s324] ss:$2 sm:$0xff]
    %s326 = scalar_lea.vmem [#allocation2], 368
    %v327 = vld [vmem:[%s326] ss:$2 sm:$0xff]
    %s328 = scalar_lea.vmem [#allocation2], 384
    %v329 = vld [vmem:[%s328] ss:$2 sm:$0xff]
    %s330 = scalar_lea.vmem [#allocation2], 400
    %v331 = vld [vmem:[%s330] ss:$2 sm:$0xff]
    %s332 = scalar_lea.vmem [#allocation2], 416
    %v333 = vld [vmem:[%s332] ss:$2 sm:$0xff]
    %s334 = scalar_lea.vmem [#allocation2], 432
    %v335 = vld [vmem:[%s334] ss:$2 sm:$0xff]
    %s336 = scalar_lea.vmem [#allocation2], 448
    %v337 = vld [vmem:[%s336] ss:$2 sm:$0xff]
    %s338 = scalar_lea.vmem [#allocation2], 464
    %v339 = vld [vmem:[%s338] ss:$2 sm:$0xff]
    %s340 = scalar_lea.vmem [#allocation2], 480
    %v341 = vld [vmem:[%s340] ss:$2 sm:$0xff]
    %s342 = scalar_lea.vmem [#allocation2], 496
    %v343 = vld [vmem:[%s342] ss:$2 sm:$0xff]
    %s344 = scalar_lea.vmem [#allocation2], 512
    %v345 = vld [vmem:[%s344] ss:$2 sm:$0xff]
    %s346 = scalar_lea.vmem [#allocation2], 528
    %v347 = vld [vmem:[%s346] ss:$2 sm:$0xff]
    %s348 = scalar_lea.vmem [#allocation2], 544
    %v349 = vld [vmem:[%s348] ss:$2 sm:$0xff]
    %s350 = scalar_lea.vmem [#allocation2], 560
    %v351 = vld [vmem:[%s350] ss:$2 sm:$0xff]
    %s352 = scalar_lea.vmem [#allocation2], 576
    %v353 = vld [vmem:[%s352] ss:$2 sm:$0xff]
    %s354 = scalar_lea.vmem [#allocation2], 592
    %v355 = vld [vmem:[%s354] ss:$2 sm:$0xff]
    %v356 = vpack.c.bf16 %v283, %v281
    %v357 = vpack.c.bf16 %v287, %v285
    %v358 = vpack.c.bf16 %v291, %v289
    %v359 = vpack.c.bf16 %v295, %v293
    %v360 = vpack.c.bf16 %v299, %v297
    %v361 = vpack.c.bf16 %v303, %v301
    %v362 = vpack.c.bf16 %v307, %v305
    %v363 = vpack.c.bf16 %v311, %v309
    %v364 = vpack.c.bf16 %v315, %v313
    %v365 = vpack.c.bf16 %v319, %v317
    %v366 = vpack.c.bf16 %v323, %v321
    %v367 = vpack.c.bf16 %v327, %v325
    %v368 = vpack.c.bf16 %v331, %v329
    %v369 = vpack.c.bf16 %v335, %v333
    %v370 = vpack.c.bf16 %v339, %v337
    %v371 = vpack.c.bf16 %v343, %v341
    %v372 = vpack.c.bf16 %v347, %v345
    %v373 = vpack.c.bf16 %v351, %v349
    %v374 = vpack.c.bf16 %v355, %v353
    %s375 = scalar_lea.vmem [#allocation2], 1
    %v376 = vld [vmem:[%s375] ss:$2 sm:$0xff]
    %s377 = scalar_lea.vmem [#allocation2], 17
    %v378 = vld [vmem:[%s377] ss:$2 sm:$0xff]
    %s379 = scalar_lea.vmem [#allocation2], 33
    %v380 = vld [vmem:[%s379] ss:$2 sm:$0xff]
    %s381 = scalar_lea.vmem [#allocation2], 49
    %v382 = vld [vmem:[%s381] ss:$2 sm:$0xff]
    %s383 = scalar_lea.vmem [#allocation2], 65
    %v384 = vld [vmem:[%s383] ss:$2 sm:$0xff]
    %s385 = scalar_lea.vmem [#allocation2], 81
    %v386 = vld [vmem:[%s385] ss:$2 sm:$0xff]
    %s387 = scalar_lea.vmem [#allocation2], 97
    %v388 = vld [vmem:[%s387] ss:$2 sm:$0xff]
    %s389 = scalar_lea.vmem [#allocation2], 113
    %v390 = vld [vmem:[%s389] ss:$2 sm:$0xff]
    %s391 = scalar_lea.vmem [#allocation2], 129
    %v392 = vld [vmem:[%s391] ss:$2 sm:$0xff]
    %s393 = scalar_lea.vmem [#allocation2], 145
    %v394 = vld [vmem:[%s393] ss:$2 sm:$0xff]
    %s395 = scalar_lea.vmem [#allocation2], 161
    %v396 = vld [vmem:[%s395] ss:$2 sm:$0xff]
    %s397 = scalar_lea.vmem [#allocation2], 177
    %v398 = vld [vmem:[%s397] ss:$2 sm:$0xff]
    %s399 = scalar_lea.vmem [#allocation2], 193
    %v400 = vld [vmem:[%s399] ss:$2 sm:$0xff]
    %s401 = scalar_lea.vmem [#allocation2], 209
    %v402 = vld [vmem:[%s401] ss:$2 sm:$0xff]
    %s403 = scalar_lea.vmem [#allocation2], 225
    %v404 = vld [vmem:[%s403] ss:$2 sm:$0xff]
    %s405 = scalar_lea.vmem [#allocation2], 241
    %v406 = vld [vmem:[%s405] ss:$2 sm:$0xff]
    %s407 = scalar_lea.vmem [#allocation2], 257
    %v408 = vld [vmem:[%s407] ss:$2 sm:$0xff]
    %s409 = scalar_lea.vmem [#allocation2], 273
    %v410 = vld [vmem:[%s409] ss:$2 sm:$0xff]
    %s411 = scalar_lea.vmem [#allocation2], 289
    %v412 = vld [vmem:[%s411] ss:$2 sm:$0xff]
    %s413 = scalar_lea.vmem [#allocation2], 305
    %v414 = vld [vmem:[%s413] ss:$2 sm:$0xff]
    %s415 = scalar_lea.vmem [#allocation2], 321
    %v416 = vld [vmem:[%s415] ss:$2 sm:$0xff]
    %s417 = scalar_lea.vmem [#allocation2], 337
    %v418 = vld [vmem:[%s417] ss:$2 sm:$0xff]
    %s419 = scalar_lea.vmem [#allocation2], 353
    %v420 = vld [vmem:[%s419] ss:$2 sm:$0xff]
    %s421 = scalar_lea.vmem [#allocation2], 369
    %v422 = vld [vmem:[%s421] ss:$2 sm:$0xff]
    %s423 = scalar_lea.vmem [#allocation2], 385
    %v424 = vld [vmem:[%s423] ss:$2 sm:$0xff]
    %s425 = scalar_lea.vmem [#allocation2], 401
    %v426 = vld [vmem:[%s425] ss:$2 sm:$0xff]
    %s427 = scalar_lea.vmem [#allocation2], 417
    %v428 = vld [vmem:[%s427] ss:$2 sm:$0xff]
    %s429 = scalar_lea.vmem [#allocation2], 433
    %v430 = vld [vmem:[%s429] ss:$2 sm:$0xff]
    %s431 = scalar_lea.vmem [#allocation2], 449
    %v432 = vld [vmem:[%s431] ss:$2 sm:$0xff]
    %s433 = scalar_lea.vmem [#allocation2], 465
    %v434 = vld [vmem:[%s433] ss:$2 sm:$0xff]
    %s435 = scalar_lea.vmem [#allocation2], 481
    %v436 = vld [vmem:[%s435] ss:$2 sm:$0xff]
    %s437 = scalar_lea.vmem [#allocation2], 497
    %v438 = vld [vmem:[%s437] ss:$2 sm:$0xff]
    %s439 = scalar_lea.vmem [#allocation2], 513
    %v440 = vld [vmem:[%s439] ss:$2 sm:$0xff]
    %s441 = scalar_lea.vmem [#allocation2], 529
    %v442 = vld [vmem:[%s441] ss:$2 sm:$0xff]
    %s443 = scalar_lea.vmem [#allocation2], 545
    %v444 = vld [vmem:[%s443] ss:$2 sm:$0xff]
    %s445 = scalar_lea.vmem [#allocation2], 561
    %v446 = vld [vmem:[%s445] ss:$2 sm:$0xff]
    %s447 = scalar_lea.vmem [#allocation2], 577
    %v448 = vld [vmem:[%s447] ss:$2 sm:$0xff]
    %s449 = scalar_lea.vmem [#allocation2], 593
    %v450 = vld [vmem:[%s449] ss:$2 sm:$0xff]
    %v451 = vpack.c.bf16 %v378, %v376
    %v452 = vpack.c.bf16 %v382, %v380
    %v453 = vpack.c.bf16 %v386, %v384
    %v454 = vpack.c.bf16 %v390, %v388
    %v455 = vpack.c.bf16 %v394, %v392
    %v456 = vpack.c.bf16 %v398, %v396
    %v457 = vpack.c.bf16 %v402, %v400
    %v458 = vpack.c.bf16 %v406, %v404
    %v459 = vpack.c.bf16 %v410, %v408
    %v460 = vpack.c.bf16 %v414, %v412
    %v461 = vpack.c.bf16 %v418, %v416
    %v462 = vpack.c.bf16 %v422, %v420
    %v463 = vpack.c.bf16 %v426, %v424
    %v464 = vpack.c.bf16 %v430, %v428
    %v465 = vpack.c.bf16 %v434, %v432
    %v466 = vpack.c.bf16 %v438, %v436
    %v467 = vpack.c.bf16 %v442, %v440
    %v468 = vpack.c.bf16 %v446, %v444
    %v469 = vpack.c.bf16 %v450, %v448
    %s470 = scalar_lea.vmem [#allocation2], 2
    %v471 = vld [vmem:[%s470] ss:$2 sm:$0xff]
    %s472 = scalar_lea.vmem [#allocation2], 18
    %v473 = vld [vmem:[%s472] ss:$2 sm:$0xff]
    %s474 = scalar_lea.vmem [#allocation2], 34
    %v475 = vld [vmem:[%s474] ss:$2 sm:$0xff]
    %s476 = scalar_lea.vmem [#allocation2], 50
    %v477 = vld [vmem:[%s476] ss:$2 sm:$0xff]
    %s478 = scalar_lea.vmem [#allocation2], 66
    %v479 = vld [vmem:[%s478] ss:$2 sm:$0xff]
    %s480 = scalar_lea.vmem [#allocation2], 82
    %v481 = vld [vmem:[%s480] ss:$2 sm:$0xff]
    %s482 = scalar_lea.vmem [#allocation2], 98
    %v483 = vld [vmem:[%s482] ss:$2 sm:$0xff]
    %s484 = scalar_lea.vmem [#allocation2], 114
    %v485 = vld [vmem:[%s484] ss:$2 sm:$0xff]
    %s486 = scalar_lea.vmem [#allocation2], 130
    %v487 = vld [vmem:[%s486] ss:$2 sm:$0xff]
    %s488 = scalar_lea.vmem [#allocation2], 146
    %v489 = vld [vmem:[%s488] ss:$2 sm:$0xff]
    %s490 = scalar_lea.vmem [#allocation2], 162
    %v491 = vld [vmem:[%s490] ss:$2 sm:$0xff]
    %s492 = scalar_lea.vmem [#allocation2], 178
    %v493 = vld [vmem:[%s492] ss:$2 sm:$0xff]
    %s494 = scalar_lea.vmem [#allocation2], 194
    %v495 = vld [vmem:[%s494] ss:$2 sm:$0xff]
    %s496 = scalar_lea.vmem [#allocation2], 210
    %v497 = vld [vmem:[%s496] ss:$2 sm:$0xff]
    %s498 = scalar_lea.vmem [#allocation2], 226
    %v499 = vld [vmem:[%s498] ss:$2 sm:$0xff]
    %s500 = scalar_lea.vmem [#allocation2], 242
    %v501 = vld [vmem:[%s500] ss:$2 sm:$0xff]
    %s502 = scalar_lea.vmem [#allocation2], 258
    %v503 = vld [vmem:[%s502] ss:$2 sm:$0xff]
    %s504 = scalar_lea.vmem [#allocation2], 274
    %v505 = vld [vmem:[%s504] ss:$2 sm:$0xff]
    %s506 = scalar_lea.vmem [#allocation2], 290
    %v507 = vld [vmem:[%s506] ss:$2 sm:$0xff]
    %s508 = scalar_lea.vmem [#allocation2], 306
    %v509 = vld [vmem:[%s508] ss:$2 sm:$0xff]
    %s510 = scalar_lea.vmem [#allocation2], 322
    %v511 = vld [vmem:[%s510] ss:$2 sm:$0xff]
    %s512 = scalar_lea.vmem [#allocation2], 338
    %v513 = vld [vmem:[%s512] ss:$2 sm:$0xff]
    %s514 = scalar_lea.vmem [#allocation2], 354
    %v515 = vld [vmem:[%s514] ss:$2 sm:$0xff]
    %s516 = scalar_lea.vmem [#allocation2], 370
    %v517 = vld [vmem:[%s516] ss:$2 sm:$0xff]
    %s518 = scalar_lea.vmem [#allocation2], 386
    %v519 = vld [vmem:[%s518] ss:$2 sm:$0xff]
    %s520 = scalar_lea.vmem [#allocation2], 402
    %v521 = vld [vmem:[%s520] ss:$2 sm:$0xff]
    %s522 = scalar_lea.vmem [#allocation2], 418
    %v523 = vld [vmem:[%s522] ss:$2 sm:$0xff]
    %s524 = scalar_lea.vmem [#allocation2], 434
    %v525 = vld [vmem:[%s524] ss:$2 sm:$0xff]
    %s526 = scalar_lea.vmem [#allocation2], 450
    %v527 = vld [vmem:[%s526] ss:$2 sm:$0xff]
    %s528 = scalar_lea.vmem [#allocation2], 466
    %v529 = vld [vmem:[%s528] ss:$2 sm:$0xff]
    %s530 = scalar_lea.vmem [#allocation2], 482
    %v531 = vld [vmem:[%s530] ss:$2 sm:$0xff]
    %s532 = scalar_lea.vmem [#allocation2], 498
    %v533 = vld [vmem:[%s532] ss:$2 sm:$0xff]
    %s534 = scalar_lea.vmem [#allocation2], 514
    %v535 = vld [vmem:[%s534] ss:$2 sm:$0xff]
    %s536 = scalar_lea.vmem [#allocation2], 530
    %v537 = vld [vmem:[%s536] ss:$2 sm:$0xff]
    %s538 = scalar_lea.vmem [#allocation2], 546
    %v539 = vld [vmem:[%s538] ss:$2 sm:$0xff]
    %s540 = scalar_lea.vmem [#allocation2], 562
    %v541 = vld [vmem:[%s540] ss:$2 sm:$0xff]
    %s542 = scalar_lea.vmem [#allocation2], 578
    %v543 = vld [vmem:[%s542] ss:$2 sm:$0xff]
    %s544 = scalar_lea.vmem [#allocation2], 594
    %v545 = vld [vmem:[%s544] ss:$2 sm:$0xff]
    %v546 = vpack.c.bf16 %v473, %v471
    %v547 = vpack.c.bf16 %v477, %v475
    %v548 = vpack.c.bf16 %v481, %v479
    %v549 = vpack.c.bf16 %v485, %v483
    %v550 = vpack.c.bf16 %v489, %v487
    %v551 = vpack.c.bf16 %v493, %v491
    %v552 = vpack.c.bf16 %v497, %v495
    %v553 = vpack.c.bf16 %v501, %v499
    %v554 = vpack.c.bf16 %v505, %v503
    %v555 = vpack.c.bf16 %v509, %v507
    %v556 = vpack.c.bf16 %v513, %v511
    %v557 = vpack.c.bf16 %v517, %v515
    %v558 = vpack.c.bf16 %v521, %v519
    %v559 = vpack.c.bf16 %v525, %v523
    %v560 = vpack.c.bf16 %v529, %v527
    %v561 = vpack.c.bf16 %v533, %v531
    %v562 = vpack.c.bf16 %v537, %v535
    %v563 = vpack.c.bf16 %v541, %v539
    %v564 = vpack.c.bf16 %v545, %v543
    %s565 = scalar_lea.vmem [#allocation2], 3
    %v566 = vld [vmem:[%s565] ss:$2 sm:$0xff]
    %s567 = scalar_lea.vmem [#allocation2], 19
    %v568 = vld [vmem:[%s567] ss:$2 sm:$0xff]
    %s569 = scalar_lea.vmem [#allocation2], 35
    %v570 = vld [vmem:[%s569] ss:$2 sm:$0xff]
    %s571 = scalar_lea.vmem [#allocation2], 51
    %v572 = vld [vmem:[%s571] ss:$2 sm:$0xff]
    %s573 = scalar_lea.vmem [#allocation2], 67
    %v574 = vld [vmem:[%s573] ss:$2 sm:$0xff]
    %s575 = scalar_lea.vmem [#allocation2], 83
    %v576 = vld [vmem:[%s575] ss:$2 sm:$0xff]
    %s577 = scalar_lea.vmem [#allocation2], 99
    %v578 = vld [vmem:[%s577] ss:$2 sm:$0xff]
    %s579 = scalar_lea.vmem [#allocation2], 115
    %v580 = vld [vmem:[%s579] ss:$2 sm:$0xff]
    %s581 = scalar_lea.vmem [#allocation2], 131
    %v582 = vld [vmem:[%s581] ss:$2 sm:$0xff]
    %s583 = scalar_lea.vmem [#allocation2], 147
    %v584 = vld [vmem:[%s583] ss:$2 sm:$0xff]
    %s585 = scalar_lea.vmem [#allocation2], 163
    %v586 = vld [vmem:[%s585] ss:$2 sm:$0xff]
    %s587 = scalar_lea.vmem [#allocation2], 179
    %v588 = vld [vmem:[%s587] ss:$2 sm:$0xff]
    %s589 = scalar_lea.vmem [#allocation2], 195
    %v590 = vld [vmem:[%s589] ss:$2 sm:$0xff]
    %s591 = scalar_lea.vmem [#allocation2], 211
    %v592 = vld [vmem:[%s591] ss:$2 sm:$0xff]
    %s593 = scalar_lea.vmem [#allocation2], 227
    %v594 = vld [vmem:[%s593] ss:$2 sm:$0xff]
    %s595 = scalar_lea.vmem [#allocation2], 243
    %v596 = vld [vmem:[%s595] ss:$2 sm:$0xff]
    %s597 = scalar_lea.vmem [#allocation2], 259
    %v598 = vld [vmem:[%s597] ss:$2 sm:$0xff]
    %s599 = scalar_lea.vmem [#allocation2], 275
    %v600 = vld [vmem:[%s599] ss:$2 sm:$0xff]
    %s601 = scalar_lea.vmem [#allocation2], 291
    %v602 = vld [vmem:[%s601] ss:$2 sm:$0xff]
    %s603 = scalar_lea.vmem [#allocation2], 307
    %v604 = vld [vmem:[%s603] ss:$2 sm:$0xff]
    %s605 = scalar_lea.vmem [#allocation2], 323
    %v606 = vld [vmem:[%s605] ss:$2 sm:$0xff]
    %s607 = scalar_lea.vmem [#allocation2], 339
    %v608 = vld [vmem:[%s607] ss:$2 sm:$0xff]
    %s609 = scalar_lea.vmem [#allocation2], 355
    %v610 = vld [vmem:[%s609] ss:$2 sm:$0xff]
    %s611 = scalar_lea.vmem [#allocation2], 371
    %v612 = vld [vmem:[%s611] ss:$2 sm:$0xff]
    %s613 = scalar_lea.vmem [#allocation2], 387
    %v614 = vld [vmem:[%s613] ss:$2 sm:$0xff]
    %s615 = scalar_lea.vmem [#allocation2], 403
    %v616 = vld [vmem:[%s615] ss:$2 sm:$0xff]
    %s617 = scalar_lea.vmem [#allocation2], 419
    %v618 = vld [vmem:[%s617] ss:$2 sm:$0xff]
    %s619 = scalar_lea.vmem [#allocation2], 435
    %v620 = vld [vmem:[%s619] ss:$2 sm:$0xff]
    %s621 = scalar_lea.vmem [#allocation2], 451
    %v622 = vld [vmem:[%s621] ss:$2 sm:$0xff]
    %s623 = scalar_lea.vmem [#allocation2], 467
    %v624 = vld [vmem:[%s623] ss:$2 sm:$0xff]
    %s625 = scalar_lea.vmem [#allocation2], 483
    %v626 = vld [vmem:[%s625] ss:$2 sm:$0xff]
    %s627 = scalar_lea.vmem [#allocation2], 499
    %v628 = vld [vmem:[%s627] ss:$2 sm:$0xff]
    %s629 = scalar_lea.vmem [#allocation2], 515
    %v630 = vld [vmem:[%s629] ss:$2 sm:$0xff]
    %s631 = scalar_lea.vmem [#allocation2], 531
    %v632 = vld [vmem:[%s631] ss:$2 sm:$0xff]
    %s633 = scalar_lea.vmem [#allocation2], 547
    %v634 = vld [vmem:[%s633] ss:$2 sm:$0xff]
    %s635 = scalar_lea.vmem [#allocation2], 563
    %v636 = vld [vmem:[%s635] ss:$2 sm:$0xff]
    %s637 = scalar_lea.vmem [#allocation2], 579
    %v638 = vld [vmem:[%s637] ss:$2 sm:$0xff]
    %s639 = scalar_lea.vmem [#allocation2], 595
    %v640 = vld [vmem:[%s639] ss:$2 sm:$0xff]
    %v641 = vpack.c.bf16 %v568, %v566
    %v642 = vpack.c.bf16 %v572, %v570
    %v643 = vpack.c.bf16 %v576, %v574
    %v644 = vpack.c.bf16 %v580, %v578
    %v645 = vpack.c.bf16 %v584, %v582
    %v646 = vpack.c.bf16 %v588, %v586
    %v647 = vpack.c.bf16 %v592, %v590
    %v648 = vpack.c.bf16 %v596, %v594
    %v649 = vpack.c.bf16 %v600, %v598
    %v650 = vpack.c.bf16 %v604, %v602
    %v651 = vpack.c.bf16 %v608, %v606
    %v652 = vpack.c.bf16 %v612, %v610
    %v653 = vpack.c.bf16 %v616, %v614
    %v654 = vpack.c.bf16 %v620, %v618
    %v655 = vpack.c.bf16 %v624, %v622
    %v656 = vpack.c.bf16 %v628, %v626
    %v657 = vpack.c.bf16 %v632, %v630
    %v658 = vpack.c.bf16 %v636, %v634
    %v659 = vpack.c.bf16 %v640, %v638
    %v660 = vld [vmem:[%s1] sm:$0xf]
    %v661 = vld [vmem:[%s1 + $0x4] sm:$0x1]
    %s662 = scalar_lea.vmem %s1, 8
    %v663 = vld [vmem:[%s662] sm:$0xf]
    %v664 = vld [vmem:[%s662 + $0x4] sm:$0x1]
    %s665 = scalar_lea.vmem %s1, 16
    %v666 = vld [vmem:[%s665] sm:$0xf]
    %v667 = vld [vmem:[%s665 + $0x4] sm:$0x1]
    %v670 = vunpack.c.l.b16 %v663
    %v671 = vunpack.c.l.b16 %v664
    %v672 = vpack.c.b16 %v671, %v670
    %v674 = vsel %vm161, %v451, 0
    %v677 = vsel %vm161, %v452, 0
    %v680 = vsel %vm161, %v453, 0
    %v683 = vsel %vm161, %v454, 0
    %v686 = vsel %vm161, %v455, 0
    %v689 = vsel %vm161, %v456, 0
    %v692 = vsel %vm161, %v457, 0
    %v695 = vsel %vm161, %v458, 0
    %v698 = vsel %vm161, %v459, 0
    %v701 = vsel %vm161, %v460, 0
    %v704 = vsel %vm161, %v461, 0
    %v707 = vsel %vm161, %v462, 0
    %v710 = vsel %vm161, %v463, 0
    %v713 = vsel %vm161, %v464, 0
    %v716 = vsel %vm161, %v465, 0
    %v719 = vsel %vm161, %v466, 0
    %v722 = vsel %vm161, %v467, 0
    %v725 = vsel %vm161, %v468, 0
    %v728 = vsel %vm161, %v469, 0
    %vm730 = vcmask 1043456
    %vm731 = vcmask 1044480
    %v732 = vsel %vm730, 4294967295, 65535
    %v733 = vsel %vm731, %v732, 0
    %v735 = vand.u32 %v672, %v733
    %737 = vmatprep.subr.bf16.mxu0 0
    %738 = vmatpush1.bf16.msra.mxu0 0
    %739 = vmatprep.subr.bf16.mxu0 0
    %740 = vmatpush1.bf16.msra.mxu0 0
    %741 = vmatprep.subr.bf16.mxu0 0
    %742 = vmatpush1.bf16.msra.mxu0 0
    %743 = vmatprep.subr.bf16.mxu0 0
    %744 = vmatpush1.bf16.msra.mxu0 0
    %745 = vmatprep.subr.bf16.mxu0 0
    %746 = vmatpush1.bf16.msra.mxu0 0
    %747 = vmatprep.subr.bf16.mxu0 0
    %748 = vmatpush1.bf16.msra.mxu0 0
    %749 = vmatprep.subr.bf16.mxu0 0
    %750 = vmatpush1.bf16.msra.mxu0 0
    %751 = vmatprep.subr.bf16.mxu0 0
    %752 = vmatpush1.bf16.msra.mxu0 %v735
    %753 = vmatprep.subr.bf16.mxu0 0
    %754 = vmatpush2.bf16.msra.mxu0 0
    %755 = vmatprep.subr.bf16.mxu0 0
    %756 = vmatpush2.bf16.msra.mxu0 0
    %757 = vmatprep.subr.bf16.mxu0 0
    %758 = vmatpush2.bf16.msra.mxu0 0
    %759 = vmatprep.subr.bf16.mxu0 0
    %760 = vmatpush2.bf16.msra.mxu0 0
    %761 = vmatprep.subr.bf16.mxu0 0
    %762 = vmatpush2.bf16.msra.mxu0 0
    %763 = vmatprep.subr.bf16.mxu0 0
    %764 = vmatpush2.bf16.msra.mxu0 0
    %765 = vmatprep.subr.bf16.mxu0 0
    %766 = vmatpush2.bf16.msra.mxu0 0
    %767 = vmatprep.subr.bf16.mxu0 0
    %768 = vmatpush2.bf16.msra.mxu0 0
    %769 = vmatprep.mubr.bf16.mxu0 0
    %770 = vmatmul.mubr.bf16.gmra.mxu0 %v674
    %v771 = vpop.f32.mrf.mxu0
    %v772 = vadd.f32 0.0, %v771
    %v773 = vpop.f32.mrf.mxu0
    %v774 = vpop.f32.mrf.mxu0
    %v775 = vadd.f32 0.0, %v774
    %v776 = vpop.f32.mrf.mxu0
    %777 = vmatprep.mubr.bf16.mxu0 0
    %778 = vmatmul.mubr.bf16.gmra.mxu0 %v677
    %v779 = vpop.f32.mrf.mxu0
    %v780 = vadd.f32 0.0, %v779
    %v781 = vpop.f32.mrf.mxu0
    %v782 = vpop.f32.mrf.mxu0
    %v783 = vadd.f32 0.0, %v782
    %v784 = vpop.f32.mrf.mxu0
    %785 = vmatprep.mubr.bf16.mxu0 0
    %786 = vmatmul.mubr.bf16.gmra.mxu0 %v680
    %v787 = vpop.f32.mrf.mxu0
    %v788 = vadd.f32 0.0, %v787
    %v789 = vpop.f32.mrf.mxu0
    %v790 = vpop.f32.mrf.mxu0
    %v791 = vadd.f32 0.0, %v790
    %v792 = vpop.f32.mrf.mxu0
    %793 = vmatprep.mubr.bf16.mxu0 0
    %794 = vmatmul.mubr.bf16.gmra.mxu0 %v683
    %v795 = vpop.f32.mrf.mxu0
    %v796 = vadd.f32 0.0, %v795
    %v797 = vpop.f32.mrf.mxu0
    %v798 = vpop.f32.mrf.mxu0
    %v799 = vadd.f32 0.0, %v798
    %v800 = vpop.f32.mrf.mxu0
    %801 = vmatprep.mubr.bf16.mxu0 0
    %802 = vmatmul.mubr.bf16.gmra.mxu0 %v686
    %v803 = vpop.f32.mrf.mxu0
    %v804 = vadd.f32 0.0, %v803
    %v805 = vpop.f32.mrf.mxu0
    %v806 = vpop.f32.mrf.mxu0
    %v807 = vadd.f32 0.0, %v806
    %v808 = vpop.f32.mrf.mxu0
    %809 = vmatprep.mubr.bf16.mxu0 0
    %810 = vmatmul.mubr.bf16.gmra.mxu0 %v689
    %v811 = vpop.f32.mrf.mxu0
    %v812 = vadd.f32 0.0, %v811
    %v813 = vpop.f32.mrf.mxu0
    %v814 = vpop.f32.mrf.mxu0
    %v815 = vadd.f32 0.0, %v814
    %v816 = vpop.f32.mrf.mxu0
    %817 = vmatprep.mubr.bf16.mxu0 0
    %818 = vmatmul.mubr.bf16.gmra.mxu0 %v692
    %v819 = vpop.f32.mrf.mxu0
    %v820 = vadd.f32 0.0, %v819
    %v821 = vpop.f32.mrf.mxu0
    %v822 = vpop.f32.mrf.mxu0
    %v823 = vadd.f32 0.0, %v822
    %v824 = vpop.f32.mrf.mxu0
    %825 = vmatprep.mubr.bf16.mxu0 0
    %826 = vmatmul.mubr.bf16.gmra.mxu0 %v695
    %v827 = vpop.f32.mrf.mxu0
    %v828 = vadd.f32 0.0, %v827
    %v829 = vpop.f32.mrf.mxu0
    %v830 = vpop.f32.mrf.mxu0
    %v831 = vadd.f32 0.0, %v830
    %v832 = vpop.f32.mrf.mxu0
    %833 = vmatprep.mubr.bf16.mxu0 0
    %834 = vmatmul.mubr.bf16.gmra.mxu0 %v698
    %v835 = vpop.f32.mrf.mxu0
    %v836 = vadd.f32 0.0, %v835
    %v837 = vpop.f32.mrf.mxu0
    %v838 = vpop.f32.mrf.mxu0
    %v839 = vadd.f32 0.0, %v838
    %v840 = vpop.f32.mrf.mxu0
    %841 = vmatprep.mubr.bf16.mxu0 0
    %842 = vmatmul.mubr.bf16.gmra.mxu0 %v701
    %v843 = vpop.f32.mrf.mxu0
    %v844 = vadd.f32 0.0, %v843
    %v845 = vpop.f32.mrf.mxu0
    %v846 = vpop.f32.mrf.mxu0
    %v847 = vadd.f32 0.0, %v846
    %v848 = vpop.f32.mrf.mxu0
    %849 = vmatprep.mubr.bf16.mxu0 0
    %850 = vmatmul.mubr.bf16.gmra.mxu0 %v704
    %v851 = vpop.f32.mrf.mxu0
    %v852 = vadd.f32 0.0, %v851
    %v853 = vpop.f32.mrf.mxu0
    %v854 = vpop.f32.mrf.mxu0
    %v855 = vadd.f32 0.0, %v854
    %v856 = vpop.f32.mrf.mxu0
    %857 = vmatprep.mubr.bf16.mxu0 0
    %858 = vmatmul.mubr.bf16.gmra.mxu0 %v707
    %v859 = vpop.f32.mrf.mxu0
    %v860 = vadd.f32 0.0, %v859
    %v861 = vpop.f32.mrf.mxu0
    %v862 = vpop.f32.mrf.mxu0
    %v863 = vadd.f32 0.0, %v862
    %v864 = vpop.f32.mrf.mxu0
    %865 = vmatprep.mubr.bf16.mxu0 0
    %866 = vmatmul.mubr.bf16.gmra.mxu0 %v710
    %v867 = vpop.f32.mrf.mxu0
    %v868 = vadd.f32 0.0, %v867
    %v869 = vpop.f32.mrf.mxu0
    %v870 = vpop.f32.mrf.mxu0
    %v871 = vadd.f32 0.0, %v870
    %v872 = vpop.f32.mrf.mxu0
    %873 = vmatprep.mubr.bf16.mxu0 0
    %874 = vmatmul.mubr.bf16.gmra.mxu0 %v713
    %v875 = vpop.f32.mrf.mxu0
    %v876 = vadd.f32 0.0, %v875
    %v877 = vpop.f32.mrf.mxu0
    %v878 = vpop.f32.mrf.mxu0
    %v879 = vadd.f32 0.0, %v878
    %v880 = vpop.f32.mrf.mxu0
    %881 = vmatprep.mubr.bf16.mxu0 0
    %882 = vmatmul.mubr.bf16.gmra.mxu0 %v716
    %v883 = vpop.f32.mrf.mxu0
    %v884 = vadd.f32 0.0, %v883
    %v885 = vpop.f32.mrf.mxu0
    %v886 = vpop.f32.mrf.mxu0
    %v887 = vadd.f32 0.0, %v886
    %v888 = vpop.f32.mrf.mxu0
    %889 = vmatprep.mubr.bf16.mxu0 0
    %890 = vmatmul.mubr.bf16.gmra.mxu0 %v719
    %v891 = vpop.f32.mrf.mxu0
    %v892 = vadd.f32 0.0, %v891
    %v893 = vpop.f32.mrf.mxu0
    %v894 = vpop.f32.mrf.mxu0
    %v895 = vadd.f32 0.0, %v894
    %v896 = vpop.f32.mrf.mxu0
    %897 = vmatprep.mubr.bf16.mxu0 0
    %898 = vmatmul.mubr.bf16.gmra.mxu0 %v722
    %v899 = vpop.f32.mrf.mxu0
    %v900 = vadd.f32 0.0, %v899
    %v901 = vpop.f32.mrf.mxu0
    %v902 = vpop.f32.mrf.mxu0
    %v903 = vadd.f32 0.0, %v902
    %v904 = vpop.f32.mrf.mxu0
    %905 = vmatprep.mubr.bf16.mxu0 0
    %906 = vmatmul.mubr.bf16.gmra.mxu0 %v725
    %v907 = vpop.f32.mrf.mxu0
    %v908 = vadd.f32 0.0, %v907
    %v909 = vpop.f32.mrf.mxu0
    %v910 = vpop.f32.mrf.mxu0
    %v911 = vadd.f32 0.0, %v910
    %v912 = vpop.f32.mrf.mxu0
    %913 = vmatprep.mubr.bf16.mxu0 0
    %914 = vmatmul.mubr.bf16.gmra.mxu0 %v728
    %v915 = vpop.f32.mrf.mxu0
    %v916 = vadd.f32 0.0, %v915
    %v917 = vpop.f32.mrf.mxu0
    %v918 = vpop.f32.mrf.mxu0
    %v919 = vadd.f32 0.0, %v918
    %v920 = vpop.f32.mrf.mxu0
    %921 = vdwg.mxu0
    %v924 = vunpack.c.l.b16 %v660
    %v925 = vunpack.c.l.b16 %v661
    %v926 = vpack.c.b16 %v925, %v924
    %v928 = vsel %vm161, %v356, 0
    %v931 = vsel %vm161, %v357, 0
    %v934 = vsel %vm161, %v358, 0
    %v937 = vsel %vm161, %v359, 0
    %v940 = vsel %vm161, %v360, 0
    %v943 = vsel %vm161, %v361, 0
    %v946 = vsel %vm161, %v362, 0
    %v949 = vsel %vm161, %v363, 0
    %v952 = vsel %vm161, %v364, 0
    %v955 = vsel %vm161, %v365, 0
    %v958 = vsel %vm161, %v366, 0
    %v961 = vsel %vm161, %v367, 0
    %v964 = vsel %vm161, %v368, 0
    %v967 = vsel %vm161, %v369, 0
    %v970 = vsel %vm161, %v370, 0
    %v973 = vsel %vm161, %v371, 0
    %v976 = vsel %vm161, %v372, 0
    %v979 = vsel %vm161, %v373, 0
    %v982 = vsel %vm161, %v374, 0
    %v985 = vand.u32 %v926, %v733
    %987 = vmatprep.subr.bf16.mxu0 0
    %988 = vmatpush1.bf16.msra.mxu0 0
    %989 = vmatprep.subr.bf16.mxu0 0
    %990 = vmatpush1.bf16.msra.mxu0 0
    %991 = vmatprep.subr.bf16.mxu0 0
    %992 = vmatpush1.bf16.msra.mxu0 0
    %993 = vmatprep.subr.bf16.mxu0 0
    %994 = vmatpush1.bf16.msra.mxu0 0
    %995 = vmatprep.subr.bf16.mxu0 0
    %996 = vmatpush1.bf16.msra.mxu0 0
    %997 = vmatprep.subr.bf16.mxu0 0
    %998 = vmatpush1.bf16.msra.mxu0 0
    %999 = vmatprep.subr.bf16.mxu0 0
    %1000 = vmatpush1.bf16.msra.mxu0 0
    %1001 = vmatprep.subr.bf16.mxu0 0
    %1002 = vmatpush1.bf16.msra.mxu0 %v985
    %1003 = vmatprep.subr.bf16.mxu0 0
    %1004 = vmatpush2.bf16.msra.mxu0 0
    %1005 = vmatprep.subr.bf16.mxu0 0
    %1006 = vmatpush2.bf16.msra.mxu0 0
    %1007 = vmatprep.subr.bf16.mxu0 0
    %1008 = vmatpush2.bf16.msra.mxu0 0
    %1009 = vmatprep.subr.bf16.mxu0 0
    %1010 = vmatpush2.bf16.msra.mxu0 0
    %1011 = vmatprep.subr.bf16.mxu0 0
    %1012 = vmatpush2.bf16.msra.mxu0 0
    %1013 = vmatprep.subr.bf16.mxu0 0
    %1014 = vmatpush2.bf16.msra.mxu0 0
    %1015 = vmatprep.subr.bf16.mxu0 0
    %1016 = vmatpush2.bf16.msra.mxu0 0
    %1017 = vmatprep.subr.bf16.mxu0 0
    %1018 = vmatpush2.bf16.msra.mxu0 0
    %1019 = vmatprep.mubr.bf16.mxu0 0
    %1020 = vmatmul.mubr.bf16.gmra.mxu0 %v928
    %v1021 = vpop.f32.mrf.mxu0
    %v1022 = vadd.f32 %v772, %v1021
    %v1023 = vpop.f32.mrf.mxu0
    %v1024 = vpop.f32.mrf.mxu0
    %v1025 = vadd.f32 %v775, %v1024
    %v1026 = vpop.f32.mrf.mxu0
    %1027 = vmatprep.mubr.bf16.mxu0 0
    %1028 = vmatmul.mubr.bf16.gmra.mxu0 %v931
    %v1029 = vpop.f32.mrf.mxu0
    %v1030 = vadd.f32 %v780, %v1029
    %v1031 = vpop.f32.mrf.mxu0
    %v1032 = vpop.f32.mrf.mxu0
    %v1033 = vadd.f32 %v783, %v1032
    %v1034 = vpop.f32.mrf.mxu0
    %1035 = vmatprep.mubr.bf16.mxu0 0
    %1036 = vmatmul.mubr.bf16.gmra.mxu0 %v934
    %v1037 = vpop.f32.mrf.mxu0
    %v1038 = vadd.f32 %v788, %v1037
    %v1039 = vpop.f32.mrf.mxu0
    %v1040 = vpop.f32.mrf.mxu0
    %v1041 = vadd.f32 %v791, %v1040
    %v1042 = vpop.f32.mrf.mxu0
    %1043 = vmatprep.mubr.bf16.mxu0 0
    %1044 = vmatmul.mubr.bf16.gmra.mxu0 %v937
    %v1045 = vpop.f32.mrf.mxu0
    %v1046 = vadd.f32 %v796, %v1045
    %v1047 = vpop.f32.mrf.mxu0
    %v1048 = vpop.f32.mrf.mxu0
    %v1049 = vadd.f32 %v799, %v1048
    %v1050 = vpop.f32.mrf.mxu0
    %1051 = vmatprep.mubr.bf16.mxu0 0
    %1052 = vmatmul.mubr.bf16.gmra.mxu0 %v940
    %v1053 = vpop.f32.mrf.mxu0
    %v1054 = vadd.f32 %v804, %v1053
    %v1055 = vpop.f32.mrf.mxu0
    %v1056 = vpop.f32.mrf.mxu0
    %v1057 = vadd.f32 %v807, %v1056
    %v1058 = vpop.f32.mrf.mxu0
    %1059 = vmatprep.mubr.bf16.mxu0 0
    %1060 = vmatmul.mubr.bf16.gmra.mxu0 %v943
    %v1061 = vpop.f32.mrf.mxu0
    %v1062 = vadd.f32 %v812, %v1061
    %v1063 = vpop.f32.mrf.mxu0
    %v1064 = vpop.f32.mrf.mxu0
    %v1065 = vadd.f32 %v815, %v1064
    %v1066 = vpop.f32.mrf.mxu0
    %1067 = vmatprep.mubr.bf16.mxu0 0
    %1068 = vmatmul.mubr.bf16.gmra.mxu0 %v946
    %v1069 = vpop.f32.mrf.mxu0
    %v1070 = vadd.f32 %v820, %v1069
    %v1071 = vpop.f32.mrf.mxu0
    %v1072 = vpop.f32.mrf.mxu0
    %v1073 = vadd.f32 %v823, %v1072
    %v1074 = vpop.f32.mrf.mxu0
    %1075 = vmatprep.mubr.bf16.mxu0 0
    %1076 = vmatmul.mubr.bf16.gmra.mxu0 %v949
    %v1077 = vpop.f32.mrf.mxu0
    %v1078 = vadd.f32 %v828, %v1077
    %v1079 = vpop.f32.mrf.mxu0
    %v1080 = vpop.f32.mrf.mxu0
    %v1081 = vadd.f32 %v831, %v1080
    %v1082 = vpop.f32.mrf.mxu0
    %1083 = vmatprep.mubr.bf16.mxu0 0
    %1084 = vmatmul.mubr.bf16.gmra.mxu0 %v952
    %v1085 = vpop.f32.mrf.mxu0
    %v1086 = vadd.f32 %v836, %v1085
    %v1087 = vpop.f32.mrf.mxu0
    %v1088 = vpop.f32.mrf.mxu0
    %v1089 = vadd.f32 %v839, %v1088
    %v1090 = vpop.f32.mrf.mxu0
    %1091 = vmatprep.mubr.bf16.mxu0 0
    %1092 = vmatmul.mubr.bf16.gmra.mxu0 %v955
    %v1093 = vpop.f32.mrf.mxu0
    %v1094 = vadd.f32 %v844, %v1093
    %v1095 = vpop.f32.mrf.mxu0
    %v1096 = vpop.f32.mrf.mxu0
    %v1097 = vadd.f32 %v847, %v1096
    %v1098 = vpop.f32.mrf.mxu0
    %1099 = vmatprep.mubr.bf16.mxu0 0
    %1100 = vmatmul.mubr.bf16.gmra.mxu0 %v958
    %v1101 = vpop.f32.mrf.mxu0
    %v1102 = vadd.f32 %v852, %v1101
    %v1103 = vpop.f32.mrf.mxu0
    %v1104 = vpop.f32.mrf.mxu0
    %v1105 = vadd.f32 %v855, %v1104
    %v1106 = vpop.f32.mrf.mxu0
    %1107 = vmatprep.mubr.bf16.mxu0 0
    %1108 = vmatmul.mubr.bf16.gmra.mxu0 %v961
    %v1109 = vpop.f32.mrf.mxu0
    %v1110 = vadd.f32 %v860, %v1109
    %v1111 = vpop.f32.mrf.mxu0
    %v1112 = vpop.f32.mrf.mxu0
    %v1113 = vadd.f32 %v863, %v1112
    %v1114 = vpop.f32.mrf.mxu0
    %1115 = vmatprep.mubr.bf16.mxu0 0
    %1116 = vmatmul.mubr.bf16.gmra.mxu0 %v964
    %v1117 = vpop.f32.mrf.mxu0
    %v1118 = vadd.f32 %v868, %v1117
    %v1119 = vpop.f32.mrf.mxu0
    %v1120 = vpop.f32.mrf.mxu0
    %v1121 = vadd.f32 %v871, %v1120
    %v1122 = vpop.f32.mrf.mxu0
    %1123 = vmatprep.mubr.bf16.mxu0 0
    %1124 = vmatmul.mubr.bf16.gmra.mxu0 %v967
    %v1125 = vpop.f32.mrf.mxu0
    %v1126 = vadd.f32 %v876, %v1125
    %v1127 = vpop.f32.mrf.mxu0
    %v1128 = vpop.f32.mrf.mxu0
    %v1129 = vadd.f32 %v879, %v1128
    %v1130 = vpop.f32.mrf.mxu0
    %1131 = vmatprep.mubr.bf16.mxu0 0
    %1132 = vmatmul.mubr.bf16.gmra.mxu0 %v970
    %v1133 = vpop.f32.mrf.mxu0
    %v1134 = vadd.f32 %v884, %v1133
    %v1135 = vpop.f32.mrf.mxu0
    %v1136 = vpop.f32.mrf.mxu0
    %v1137 = vadd.f32 %v887, %v1136
    %v1138 = vpop.f32.mrf.mxu0
    %1139 = vmatprep.mubr.bf16.mxu0 0
    %1140 = vmatmul.mubr.bf16.gmra.mxu0 %v973
    %v1141 = vpop.f32.mrf.mxu0
    %v1142 = vadd.f32 %v892, %v1141
    %v1143 = vpop.f32.mrf.mxu0
    %v1144 = vpop.f32.mrf.mxu0
    %v1145 = vadd.f32 %v895, %v1144
    %v1146 = vpop.f32.mrf.mxu0
    %1147 = vmatprep.mubr.bf16.mxu0 0
    %1148 = vmatmul.mubr.bf16.gmra.mxu0 %v976
    %v1149 = vpop.f32.mrf.mxu0
    %v1150 = vadd.f32 %v900, %v1149
    %v1151 = vpop.f32.mrf.mxu0
    %v1152 = vpop.f32.mrf.mxu0
    %v1153 = vadd.f32 %v903, %v1152
    %v1154 = vpop.f32.mrf.mxu0
    %1155 = vmatprep.mubr.bf16.mxu0 0
    %1156 = vmatmul.mubr.bf16.gmra.mxu0 %v979
    %v1157 = vpop.f32.mrf.mxu0
    %v1158 = vadd.f32 %v908, %v1157
    %v1159 = vpop.f32.mrf.mxu0
    %v1160 = vpop.f32.mrf.mxu0
    %v1161 = vadd.f32 %v911, %v1160
    %v1162 = vpop.f32.mrf.mxu0
    %1163 = vmatprep.mubr.bf16.mxu0 0
    %1164 = vmatmul.mubr.bf16.gmra.mxu0 %v982
    %v1165 = vpop.f32.mrf.mxu0
    %v1166 = vadd.f32 %v916, %v1165
    %v1167 = vpop.f32.mrf.mxu0
    %v1168 = vpop.f32.mrf.mxu0
    %v1169 = vadd.f32 %v919, %v1168
    %v1170 = vpop.f32.mrf.mxu0
    %1171 = vdwg.mxu0
    %v1174 = vunpack.c.l.b16 %v666
    %v1175 = vunpack.c.l.b16 %v667
    %v1176 = vpack.c.b16 %v1175, %v1174
    %v1178 = vsel %vm161, %v546, 0
    %v1181 = vsel %vm161, %v547, 0
    %v1184 = vsel %vm161, %v548, 0
    %v1187 = vsel %vm161, %v549, 0
    %v1190 = vsel %vm161, %v550, 0
    %v1193 = vsel %vm161, %v551, 0
    %v1196 = vsel %vm161, %v552, 0
    %v1199 = vsel %vm161, %v553, 0
    %v1202 = vsel %vm161, %v554, 0
    %v1205 = vsel %vm161, %v555, 0
    %v1208 = vsel %vm161, %v556, 0
    %v1211 = vsel %vm161, %v557, 0
    %v1214 = vsel %vm161, %v558, 0
    %v1217 = vsel %vm161, %v559, 0
    %v1220 = vsel %vm161, %v560, 0
    %v1223 = vsel %vm161, %v561, 0
    %v1226 = vsel %vm161, %v562, 0
    %v1229 = vsel %vm161, %v563, 0
    %v1232 = vsel %vm161, %v564, 0
    %v1235 = vand.u32 %v1176, %v733
    %1237 = vmatprep.subr.bf16.mxu0 0
    %1238 = vmatpush1.bf16.msra.mxu0 0
    %1239 = vmatprep.subr.bf16.mxu0 0
    %1240 = vmatpush1.bf16.msra.mxu0 0
    %1241 = vmatprep.subr.bf16.mxu0 0
    %1242 = vmatpush1.bf16.msra.mxu0 0
    %1243 = vmatprep.subr.bf16.mxu0 0
    %1244 = vmatpush1.bf16.msra.mxu0 0
    %1245 = vmatprep.subr.bf16.mxu0 0
    %1246 = vmatpush1.bf16.msra.mxu0 0
    %1247 = vmatprep.subr.bf16.mxu0 0
    %1248 = vmatpush1.bf16.msra.mxu0 0
    %1249 = vmatprep.subr.bf16.mxu0 0
    %1250 = vmatpush1.bf16.msra.mxu0 0
    %1251 = vmatprep.subr.bf16.mxu0 0
    %1252 = vmatpush1.bf16.msra.mxu0 %v1235
    %1253 = vmatprep.subr.bf16.mxu0 0
    %1254 = vmatpush2.bf16.msra.mxu0 0
    %1255 = vmatprep.subr.bf16.mxu0 0
    %1256 = vmatpush2.bf16.msra.mxu0 0
    %1257 = vmatprep.subr.bf16.mxu0 0
    %1258 = vmatpush2.bf16.msra.mxu0 0
    %1259 = vmatprep.subr.bf16.mxu0 0
    %1260 = vmatpush2.bf16.msra.mxu0 0
    %1261 = vmatprep.subr.bf16.mxu0 0
    %1262 = vmatpush2.bf16.msra.mxu0 0
    %1263 = vmatprep.subr.bf16.mxu0 0
    %1264 = vmatpush2.bf16.msra.mxu0 0
    %1265 = vmatprep.subr.bf16.mxu0 0
    %1266 = vmatpush2.bf16.msra.mxu0 0
    %1267 = vmatprep.subr.bf16.mxu0 0
    %1268 = vmatpush2.bf16.msra.mxu0 0
    %1269 = vmatprep.mubr.bf16.mxu0 0
    %1270 = vmatmul.mubr.bf16.gmra.mxu0 %v1178
    %v1271 = vpop.f32.mrf.mxu0
    %v1272 = vadd.f32 0.0, %v1271
    %v1273 = vpop.f32.mrf.mxu0
    %v1274 = vpop.f32.mrf.mxu0
    %v1275 = vadd.f32 0.0, %v1274
    %v1276 = vpop.f32.mrf.mxu0
    %1277 = vmatprep.mubr.bf16.mxu0 0
    %1278 = vmatmul.mubr.bf16.gmra.mxu0 %v1181
    %v1279 = vpop.f32.mrf.mxu0
    %v1280 = vadd.f32 0.0, %v1279
    %v1281 = vpop.f32.mrf.mxu0
    %v1282 = vpop.f32.mrf.mxu0
    %v1283 = vadd.f32 0.0, %v1282
    %v1284 = vpop.f32.mrf.mxu0
    %1285 = vmatprep.mubr.bf16.mxu0 0
    %1286 = vmatmul.mubr.bf16.gmra.mxu0 %v1184
    %v1287 = vpop.f32.mrf.mxu0
    %v1288 = vadd.f32 0.0, %v1287
    %v1289 = vpop.f32.mrf.mxu0
    %v1290 = vpop.f32.mrf.mxu0
    %v1291 = vadd.f32 0.0, %v1290
    %v1292 = vpop.f32.mrf.mxu0
    %1293 = vmatprep.mubr.bf16.mxu0 0
    %1294 = vmatmul.mubr.bf16.gmra.mxu0 %v1187
    %v1295 = vpop.f32.mrf.mxu0
    %v1296 = vadd.f32 0.0, %v1295
    %v1297 = vpop.f32.mrf.mxu0
    %v1298 = vpop.f32.mrf.mxu0
    %v1299 = vadd.f32 0.0, %v1298
    %v1300 = vpop.f32.mrf.mxu0
    %1301 = vmatprep.mubr.bf16.mxu0 0
    %1302 = vmatmul.mubr.bf16.gmra.mxu0 %v1190
    %v1303 = vpop.f32.mrf.mxu0
    %v1304 = vadd.f32 0.0, %v1303
    %v1305 = vpop.f32.mrf.mxu0
    %v1306 = vpop.f32.mrf.mxu0
    %v1307 = vadd.f32 0.0, %v1306
    %v1308 = vpop.f32.mrf.mxu0
    %1309 = vmatprep.mubr.bf16.mxu0 0
    %1310 = vmatmul.mubr.bf16.gmra.mxu0 %v1193
    %v1311 = vpop.f32.mrf.mxu0
    %v1312 = vadd.f32 0.0, %v1311
    %v1313 = vpop.f32.mrf.mxu0
    %v1314 = vpop.f32.mrf.mxu0
    %v1315 = vadd.f32 0.0, %v1314
    %v1316 = vpop.f32.mrf.mxu0
    %1317 = vmatprep.mubr.bf16.mxu0 0
    %1318 = vmatmul.mubr.bf16.gmra.mxu0 %v1196
    %v1319 = vpop.f32.mrf.mxu0
    %v1320 = vadd.f32 0.0, %v1319
    %v1321 = vpop.f32.mrf.mxu0
    %v1322 = vpop.f32.mrf.mxu0
    %v1323 = vadd.f32 0.0, %v1322
    %v1324 = vpop.f32.mrf.mxu0
    %1325 = vmatprep.mubr.bf16.mxu0 0
    %1326 = vmatmul.mubr.bf16.gmra.mxu0 %v1199
    %v1327 = vpop.f32.mrf.mxu0
    %v1328 = vadd.f32 0.0, %v1327
    %v1329 = vpop.f32.mrf.mxu0
    %v1330 = vpop.f32.mrf.mxu0
    %v1331 = vadd.f32 0.0, %v1330
    %v1332 = vpop.f32.mrf.mxu0
    %1333 = vmatprep.mubr.bf16.mxu0 0
    %1334 = vmatmul.mubr.bf16.gmra.mxu0 %v1202
    %v1335 = vpop.f32.mrf.mxu0
    %v1336 = vadd.f32 0.0, %v1335
    %v1337 = vpop.f32.mrf.mxu0
    %v1338 = vpop.f32.mrf.mxu0
    %v1339 = vadd.f32 0.0, %v1338
    %v1340 = vpop.f32.mrf.mxu0
    %1341 = vmatprep.mubr.bf16.mxu0 0
    %1342 = vmatmul.mubr.bf16.gmra.mxu0 %v1205
    %v1343 = vpop.f32.mrf.mxu0
    %v1344 = vadd.f32 0.0, %v1343
    %v1345 = vpop.f32.mrf.mxu0
    %v1346 = vpop.f32.mrf.mxu0
    %v1347 = vadd.f32 0.0, %v1346
    %v1348 = vpop.f32.mrf.mxu0
    %1349 = vmatprep.mubr.bf16.mxu0 0
    %1350 = vmatmul.mubr.bf16.gmra.mxu0 %v1208
    %v1351 = vpop.f32.mrf.mxu0
    %v1352 = vadd.f32 0.0, %v1351
    %v1353 = vpop.f32.mrf.mxu0
    %v1354 = vpop.f32.mrf.mxu0
    %v1355 = vadd.f32 0.0, %v1354
    %v1356 = vpop.f32.mrf.mxu0
    %1357 = vmatprep.mubr.bf16.mxu0 0
    %1358 = vmatmul.mubr.bf16.gmra.mxu0 %v1211
    %v1359 = vpop.f32.mrf.mxu0
    %v1360 = vadd.f32 0.0, %v1359
    %v1361 = vpop.f32.mrf.mxu0
    %v1362 = vpop.f32.mrf.mxu0
    %v1363 = vadd.f32 0.0, %v1362
    %v1364 = vpop.f32.mrf.mxu0
    %1365 = vmatprep.mubr.bf16.mxu0 0
    %1366 = vmatmul.mubr.bf16.gmra.mxu0 %v1214
    %v1367 = vpop.f32.mrf.mxu0
    %v1368 = vadd.f32 0.0, %v1367
    %v1369 = vpop.f32.mrf.mxu0
    %v1370 = vpop.f32.mrf.mxu0
    %v1371 = vadd.f32 0.0, %v1370
    %v1372 = vpop.f32.mrf.mxu0
    %1373 = vmatprep.mubr.bf16.mxu0 0
    %1374 = vmatmul.mubr.bf16.gmra.mxu0 %v1217
    %v1375 = vpop.f32.mrf.mxu0
    %v1376 = vadd.f32 0.0, %v1375
    %v1377 = vpop.f32.mrf.mxu0
    %v1378 = vpop.f32.mrf.mxu0
    %v1379 = vadd.f32 0.0, %v1378
    %v1380 = vpop.f32.mrf.mxu0
    %1381 = vmatprep.mubr.bf16.mxu0 0
    %1382 = vmatmul.mubr.bf16.gmra.mxu0 %v1220
    %v1383 = vpop.f32.mrf.mxu0
    %v1384 = vadd.f32 0.0, %v1383
    %v1385 = vpop.f32.mrf.mxu0
    %v1386 = vpop.f32.mrf.mxu0
    %v1387 = vadd.f32 0.0, %v1386
    %v1388 = vpop.f32.mrf.mxu0
    %1389 = vmatprep.mubr.bf16.mxu0 0
    %1390 = vmatmul.mubr.bf16.gmra.mxu0 %v1223
    %v1391 = vpop.f32.mrf.mxu0
    %v1392 = vadd.f32 0.0, %v1391
    %v1393 = vpop.f32.mrf.mxu0
    %v1394 = vpop.f32.mrf.mxu0
    %v1395 = vadd.f32 0.0, %v1394
    %v1396 = vpop.f32.mrf.mxu0
    %1397 = vmatprep.mubr.bf16.mxu0 0
    %1398 = vmatmul.mubr.bf16.gmra.mxu0 %v1226
    %v1399 = vpop.f32.mrf.mxu0
    %v1400 = vadd.f32 0.0, %v1399
    %v1401 = vpop.f32.mrf.mxu0
    %v1402 = vpop.f32.mrf.mxu0
    %v1403 = vadd.f32 0.0, %v1402
    %v1404 = vpop.f32.mrf.mxu0
    %1405 = vmatprep.mubr.bf16.mxu0 0
    %1406 = vmatmul.mubr.bf16.gmra.mxu0 %v1229
    %v1407 = vpop.f32.mrf.mxu0
    %v1408 = vadd.f32 0.0, %v1407
    %v1409 = vpop.f32.mrf.mxu0
    %v1410 = vpop.f32.mrf.mxu0
    %v1411 = vadd.f32 0.0, %v1410
    %v1412 = vpop.f32.mrf.mxu0
    %1413 = vmatprep.mubr.bf16.mxu0 0
    %1414 = vmatmul.mubr.bf16.gmra.mxu0 %v1232
    %v1415 = vpop.f32.mrf.mxu0
    %v1416 = vadd.f32 0.0, %v1415
    %v1417 = vpop.f32.mrf.mxu0
    %v1418 = vpop.f32.mrf.mxu0
    %v1419 = vadd.f32 0.0, %v1418
    %v1420 = vpop.f32.mrf.mxu0
    %1421 = vdwg.mxu0
    %v1422 = vadd.f32 %v1022, %v1272
    %v1423 = vadd.f32 %v1025, %v1275
    %v1424 = vadd.f32 %v1030, %v1280
    %v1425 = vadd.f32 %v1033, %v1283
    %v1426 = vadd.f32 %v1038, %v1288
    %v1427 = vadd.f32 %v1041, %v1291
    %v1428 = vadd.f32 %v1046, %v1296
    %v1429 = vadd.f32 %v1049, %v1299
    %v1430 = vadd.f32 %v1054, %v1304
    %v1431 = vadd.f32 %v1057, %v1307
    %v1432 = vadd.f32 %v1062, %v1312
    %v1433 = vadd.f32 %v1065, %v1315
    %v1434 = vadd.f32 %v1070, %v1320
    %v1435 = vadd.f32 %v1073, %v1323
    %v1436 = vadd.f32 %v1078, %v1328
    %v1437 = vadd.f32 %v1081, %v1331
    %v1438 = vadd.f32 %v1086, %v1336
    %v1439 = vadd.f32 %v1089, %v1339
    %v1440 = vadd.f32 %v1094, %v1344
    %v1441 = vadd.f32 %v1097, %v1347
    %v1442 = vadd.f32 %v1102, %v1352
    %v1443 = vadd.f32 %v1105, %v1355
    %v1444 = vadd.f32 %v1110, %v1360
    %v1445 = vadd.f32 %v1113, %v1363
    %v1446 = vadd.f32 %v1118, %v1368
    %v1447 = vadd.f32 %v1121, %v1371
    %v1448 = vadd.f32 %v1126, %v1376
    %v1449 = vadd.f32 %v1129, %v1379
    %v1450 = vadd.f32 %v1134, %v1384
    %v1451 = vadd.f32 %v1137, %v1387
    %v1452 = vadd.f32 %v1142, %v1392
    %v1453 = vadd.f32 %v1145, %v1395
    %v1454 = vadd.f32 %v1150, %v1400
    %v1455 = vadd.f32 %v1153, %v1403
    %v1456 = vadd.f32 %v1158, %v1408
    %v1457 = vadd.f32 %v1161, %v1411
    %v1458 = vadd.f32 %v1166, %v1416
    %v1459 = vadd.f32 %v1169, %v1419
    %1460 = vmatprep.subr.bf16.mxu0 0
    %1461 = vmatpush1.bf16.msra.mxu0 0
    %1462 = vmatprep.subr.bf16.mxu0 0
    %1463 = vmatpush1.bf16.msra.mxu0 0
    %1464 = vmatprep.subr.bf16.mxu0 0
    %1465 = vmatpush1.bf16.msra.mxu0 0
    %1466 = vmatprep.subr.bf16.mxu0 0
    %1467 = vmatpush1.bf16.msra.mxu0 0
    %1468 = vmatprep.subr.bf16.mxu0 0
    %1469 = vmatpush1.bf16.msra.mxu0 0
    %1470 = vmatprep.subr.bf16.mxu0 0
    %1471 = vmatpush1.bf16.msra.mxu0 0
    %1472 = vmatprep.subr.bf16.mxu0 0
    %1473 = vmatpush1.bf16.msra.mxu0 0
    %1474 = vmatprep.subr.bf16.mxu0 0
    %1475 = vmatpush1.bf16.msra.mxu0 %v735
    %1476 = vmatprep.subr.bf16.mxu0 0
    %1477 = vmatpush2.bf16.msra.mxu0 0
    %1478 = vmatprep.subr.bf16.mxu0 0
    %1479 = vmatpush2.bf16.msra.mxu0 0
    %1480 = vmatprep.subr.bf16.mxu0 0
    %1481 = vmatpush2.bf16.msra.mxu0 0
    %1482 = vmatprep.subr.bf16.mxu0 0
    %1483 = vmatpush2.bf16.msra.mxu0 0
    %1484 = vmatprep.subr.bf16.mxu0 0
    %1485 = vmatpush2.bf16.msra.mxu0 0
    %1486 = vmatprep.subr.bf16.mxu0 0
    %1487 = vmatpush2.bf16.msra.mxu0 0
    %1488 = vmatprep.subr.bf16.mxu0 0
    %1489 = vmatpush2.bf16.msra.mxu0 0
    %1490 = vmatprep.subr.bf16.mxu0 0
    %1491 = vmatpush2.bf16.msra.mxu0 0
    %1492 = vmatprep.mubr.bf16.mxu0 0
    %1493 = vmatmul.mubr.bf16.gmra.mxu0 %v1178
    %v1494 = vpop.f32.mrf.mxu0
    %v1495 = vadd.f32 0.0, %v1494
    %v1496 = vpop.f32.mrf.mxu0
    %v1497 = vpop.f32.mrf.mxu0
    %v1498 = vadd.f32 0.0, %v1497
    %v1499 = vpop.f32.mrf.mxu0
    %1500 = vmatprep.mubr.bf16.mxu0 0
    %1501 = vmatmul.mubr.bf16.gmra.mxu0 %v1181
    %v1502 = vpop.f32.mrf.mxu0
    %v1503 = vadd.f32 0.0, %v1502
    %v1504 = vpop.f32.mrf.mxu0
    %v1505 = vpop.f32.mrf.mxu0
    %v1506 = vadd.f32 0.0, %v1505
    %v1507 = vpop.f32.mrf.mxu0
    %1508 = vmatprep.mubr.bf16.mxu0 0
    %1509 = vmatmul.mubr.bf16.gmra.mxu0 %v1184
    %v1510 = vpop.f32.mrf.mxu0
    %v1511 = vadd.f32 0.0, %v1510
    %v1512 = vpop.f32.mrf.mxu0
    %v1513 = vpop.f32.mrf.mxu0
    %v1514 = vadd.f32 0.0, %v1513
    %v1515 = vpop.f32.mrf.mxu0
    %1516 = vmatprep.mubr.bf16.mxu0 0
    %1517 = vmatmul.mubr.bf16.gmra.mxu0 %v1187
    %v1518 = vpop.f32.mrf.mxu0
    %v1519 = vadd.f32 0.0, %v1518
    %v1520 = vpop.f32.mrf.mxu0
    %v1521 = vpop.f32.mrf.mxu0
    %v1522 = vadd.f32 0.0, %v1521
    %v1523 = vpop.f32.mrf.mxu0
    %1524 = vmatprep.mubr.bf16.mxu0 0
    %1525 = vmatmul.mubr.bf16.gmra.mxu0 %v1190
    %v1526 = vpop.f32.mrf.mxu0
    %v1527 = vadd.f32 0.0, %v1526
    %v1528 = vpop.f32.mrf.mxu0
    %v1529 = vpop.f32.mrf.mxu0
    %v1530 = vadd.f32 0.0, %v1529
    %v1531 = vpop.f32.mrf.mxu0
    %1532 = vmatprep.mubr.bf16.mxu0 0
    %1533 = vmatmul.mubr.bf16.gmra.mxu0 %v1193
    %v1534 = vpop.f32.mrf.mxu0
    %v1535 = vadd.f32 0.0, %v1534
    %v1536 = vpop.f32.mrf.mxu0
    %v1537 = vpop.f32.mrf.mxu0
    %v1538 = vadd.f32 0.0, %v1537
    %v1539 = vpop.f32.mrf.mxu0
    %1540 = vmatprep.mubr.bf16.mxu0 0
    %1541 = vmatmul.mubr.bf16.gmra.mxu0 %v1196
    %v1542 = vpop.f32.mrf.mxu0
    %v1543 = vadd.f32 0.0, %v1542
    %v1544 = vpop.f32.mrf.mxu0
    %v1545 = vpop.f32.mrf.mxu0
    %v1546 = vadd.f32 0.0, %v1545
    %v1547 = vpop.f32.mrf.mxu0
    %1548 = vmatprep.mubr.bf16.mxu0 0
    %1549 = vmatmul.mubr.bf16.gmra.mxu0 %v1199
    %v1550 = vpop.f32.mrf.mxu0
    %v1551 = vadd.f32 0.0, %v1550
    %v1552 = vpop.f32.mrf.mxu0
    %v1553 = vpop.f32.mrf.mxu0
    %v1554 = vadd.f32 0.0, %v1553
    %v1555 = vpop.f32.mrf.mxu0
    %1556 = vmatprep.mubr.bf16.mxu0 0
    %1557 = vmatmul.mubr.bf16.gmra.mxu0 %v1202
    %v1558 = vpop.f32.mrf.mxu0
    %v1559 = vadd.f32 0.0, %v1558
    %v1560 = vpop.f32.mrf.mxu0
    %v1561 = vpop.f32.mrf.mxu0
    %v1562 = vadd.f32 0.0, %v1561
    %v1563 = vpop.f32.mrf.mxu0
    %1564 = vmatprep.mubr.bf16.mxu0 0
    %1565 = vmatmul.mubr.bf16.gmra.mxu0 %v1205
    %v1566 = vpop.f32.mrf.mxu0
    %v1567 = vadd.f32 0.0, %v1566
    %v1568 = vpop.f32.mrf.mxu0
    %v1569 = vpop.f32.mrf.mxu0
    %v1570 = vadd.f32 0.0, %v1569
    %v1571 = vpop.f32.mrf.mxu0
    %1572 = vmatprep.mubr.bf16.mxu0 0
    %1573 = vmatmul.mubr.bf16.gmra.mxu0 %v1208
    %v1574 = vpop.f32.mrf.mxu0
    %v1575 = vadd.f32 0.0, %v1574
    %v1576 = vpop.f32.mrf.mxu0
    %v1577 = vpop.f32.mrf.mxu0
    %v1578 = vadd.f32 0.0, %v1577
    %v1579 = vpop.f32.mrf.mxu0
    %1580 = vmatprep.mubr.bf16.mxu0 0
    %1581 = vmatmul.mubr.bf16.gmra.mxu0 %v1211
    %v1582 = vpop.f32.mrf.mxu0
    %v1583 = vadd.f32 0.0, %v1582
    %v1584 = vpop.f32.mrf.mxu0
    %v1585 = vpop.f32.mrf.mxu0
    %v1586 = vadd.f32 0.0, %v1585
    %v1587 = vpop.f32.mrf.mxu0
    %1588 = vmatprep.mubr.bf16.mxu0 0
    %1589 = vmatmul.mubr.bf16.gmra.mxu0 %v1214
    %v1590 = vpop.f32.mrf.mxu0
    %v1591 = vadd.f32 0.0, %v1590
    %v1592 = vpop.f32.mrf.mxu0
    %v1593 = vpop.f32.mrf.mxu0
    %v1594 = vadd.f32 0.0, %v1593
    %v1595 = vpop.f32.mrf.mxu0
    %1596 = vmatprep.mubr.bf16.mxu0 0
    %1597 = vmatmul.mubr.bf16.gmra.mxu0 %v1217
    %v1598 = vpop.f32.mrf.mxu0
    %v1599 = vadd.f32 0.0, %v1598
    %v1600 = vpop.f32.mrf.mxu0
    %v1601 = vpop.f32.mrf.mxu0
    %v1602 = vadd.f32 0.0, %v1601
    %v1603 = vpop.f32.mrf.mxu0
    %1604 = vmatprep.mubr.bf16.mxu0 0
    %1605 = vmatmul.mubr.bf16.gmra.mxu0 %v1220
    %v1606 = vpop.f32.mrf.mxu0
    %v1607 = vadd.f32 0.0, %v1606
    %v1608 = vpop.f32.mrf.mxu0
    %v1609 = vpop.f32.mrf.mxu0
    %v1610 = vadd.f32 0.0, %v1609
    %v1611 = vpop.f32.mrf.mxu0
    %1612 = vmatprep.mubr.bf16.mxu0 0
    %1613 = vmatmul.mubr.bf16.gmra.mxu0 %v1223
    %v1614 = vpop.f32.mrf.mxu0
    %v1615 = vadd.f32 0.0, %v1614
    %v1616 = vpop.f32.mrf.mxu0
    %v1617 = vpop.f32.mrf.mxu0
    %v1618 = vadd.f32 0.0, %v1617
    %v1619 = vpop.f32.mrf.mxu0
    %1620 = vmatprep.mubr.bf16.mxu0 0
    %1621 = vmatmul.mubr.bf16.gmra.mxu0 %v1226
    %v1622 = vpop.f32.mrf.mxu0
    %v1623 = vadd.f32 0.0, %v1622
    %v1624 = vpop.f32.mrf.mxu0
    %v1625 = vpop.f32.mrf.mxu0
    %v1626 = vadd.f32 0.0, %v1625
    %v1627 = vpop.f32.mrf.mxu0
    %1628 = vmatprep.mubr.bf16.mxu0 0
    %1629 = vmatmul.mubr.bf16.gmra.mxu0 %v1229
    %v1630 = vpop.f32.mrf.mxu0
    %v1631 = vadd.f32 0.0, %v1630
    %v1632 = vpop.f32.mrf.mxu0
    %v1633 = vpop.f32.mrf.mxu0
    %v1634 = vadd.f32 0.0, %v1633
    %v1635 = vpop.f32.mrf.mxu0
    %1636 = vmatprep.mubr.bf16.mxu0 0
    %1637 = vmatmul.mubr.bf16.gmra.mxu0 %v1232
    %v1638 = vpop.f32.mrf.mxu0
    %v1639 = vadd.f32 0.0, %v1638
    %v1640 = vpop.f32.mrf.mxu0
    %v1641 = vpop.f32.mrf.mxu0
    %v1642 = vadd.f32 0.0, %v1641
    %v1643 = vpop.f32.mrf.mxu0
    %1644 = vdwg.mxu0
    %1645 = vmatprep.subr.bf16.mxu0 0
    %1646 = vmatpush1.bf16.msra.mxu0 0
    %1647 = vmatprep.subr.bf16.mxu0 0
    %1648 = vmatpush1.bf16.msra.mxu0 0
    %1649 = vmatprep.subr.bf16.mxu0 0
    %1650 = vmatpush1.bf16.msra.mxu0 0
    %1651 = vmatprep.subr.bf16.mxu0 0
    %1652 = vmatpush1.bf16.msra.mxu0 0
    %1653 = vmatprep.subr.bf16.mxu0 0
    %1654 = vmatpush1.bf16.msra.mxu0 0
    %1655 = vmatprep.subr.bf16.mxu0 0
    %1656 = vmatpush1.bf16.msra.mxu0 0
    %1657 = vmatprep.subr.bf16.mxu0 0
    %1658 = vmatpush1.bf16.msra.mxu0 0
    %1659 = vmatprep.subr.bf16.mxu0 0
    %1660 = vmatpush1.bf16.msra.mxu0 %v985
    %1661 = vmatprep.subr.bf16.mxu0 0
    %1662 = vmatpush2.bf16.msra.mxu0 0
    %1663 = vmatprep.subr.bf16.mxu0 0
    %1664 = vmatpush2.bf16.msra.mxu0 0
    %1665 = vmatprep.subr.bf16.mxu0 0
    %1666 = vmatpush2.bf16.msra.mxu0 0
    %1667 = vmatprep.subr.bf16.mxu0 0
    %1668 = vmatpush2.bf16.msra.mxu0 0
    %1669 = vmatprep.subr.bf16.mxu0 0
    %1670 = vmatpush2.bf16.msra.mxu0 0
    %1671 = vmatprep.subr.bf16.mxu0 0
    %1672 = vmatpush2.bf16.msra.mxu0 0
    %1673 = vmatprep.subr.bf16.mxu0 0
    %1674 = vmatpush2.bf16.msra.mxu0 0
    %1675 = vmatprep.subr.bf16.mxu0 0
    %1676 = vmatpush2.bf16.msra.mxu0 0
    %1677 = vmatprep.mubr.bf16.mxu0 0
    %1678 = vmatmul.mubr.bf16.gmra.mxu0 %v674
    %v1679 = vpop.f32.mrf.mxu0
    %v1680 = vadd.f32 %v1495, %v1679
    %v1681 = vpop.f32.mrf.mxu0
    %v1682 = vpop.f32.mrf.mxu0
    %v1683 = vadd.f32 %v1498, %v1682
    %v1684 = vpop.f32.mrf.mxu0
    %1685 = vmatprep.mubr.bf16.mxu0 0
    %1686 = vmatmul.mubr.bf16.gmra.mxu0 %v677
    %v1687 = vpop.f32.mrf.mxu0
    %v1688 = vadd.f32 %v1503, %v1687
    %v1689 = vpop.f32.mrf.mxu0
    %v1690 = vpop.f32.mrf.mxu0
    %v1691 = vadd.f32 %v1506, %v1690
    %v1692 = vpop.f32.mrf.mxu0
    %1693 = vmatprep.mubr.bf16.mxu0 0
    %1694 = vmatmul.mubr.bf16.gmra.mxu0 %v680
    %v1695 = vpop.f32.mrf.mxu0
    %v1696 = vadd.f32 %v1511, %v1695
    %v1697 = vpop.f32.mrf.mxu0
    %v1698 = vpop.f32.mrf.mxu0
    %v1699 = vadd.f32 %v1514, %v1698
    %v1700 = vpop.f32.mrf.mxu0
    %1701 = vmatprep.mubr.bf16.mxu0 0
    %1702 = vmatmul.mubr.bf16.gmra.mxu0 %v683
    %v1703 = vpop.f32.mrf.mxu0
    %v1704 = vadd.f32 %v1519, %v1703
    %v1705 = vpop.f32.mrf.mxu0
    %v1706 = vpop.f32.mrf.mxu0
    %v1707 = vadd.f32 %v1522, %v1706
    %v1708 = vpop.f32.mrf.mxu0
    %1709 = vmatprep.mubr.bf16.mxu0 0
    %1710 = vmatmul.mubr.bf16.gmra.mxu0 %v686
    %v1711 = vpop.f32.mrf.mxu0
    %v1712 = vadd.f32 %v1527, %v1711
    %v1713 = vpop.f32.mrf.mxu0
    %v1714 = vpop.f32.mrf.mxu0
    %v1715 = vadd.f32 %v1530, %v1714
    %v1716 = vpop.f32.mrf.mxu0
    %1717 = vmatprep.mubr.bf16.mxu0 0
    %1718 = vmatmul.mubr.bf16.gmra.mxu0 %v689
    %v1719 = vpop.f32.mrf.mxu0
    %v1720 = vadd.f32 %v1535, %v1719
    %v1721 = vpop.f32.mrf.mxu0
    %v1722 = vpop.f32.mrf.mxu0
    %v1723 = vadd.f32 %v1538, %v1722
    %v1724 = vpop.f32.mrf.mxu0
    %1725 = vmatprep.mubr.bf16.mxu0 0
    %1726 = vmatmul.mubr.bf16.gmra.mxu0 %v692
    %v1727 = vpop.f32.mrf.mxu0
    %v1728 = vadd.f32 %v1543, %v1727
    %v1729 = vpop.f32.mrf.mxu0
    %v1730 = vpop.f32.mrf.mxu0
    %v1731 = vadd.f32 %v1546, %v1730
    %v1732 = vpop.f32.mrf.mxu0
    %1733 = vmatprep.mubr.bf16.mxu0 0
    %1734 = vmatmul.mubr.bf16.gmra.mxu0 %v695
    %v1735 = vpop.f32.mrf.mxu0
    %v1736 = vadd.f32 %v1551, %v1735
    %v1737 = vpop.f32.mrf.mxu0
    %v1738 = vpop.f32.mrf.mxu0
    %v1739 = vadd.f32 %v1554, %v1738
    %v1740 = vpop.f32.mrf.mxu0
    %1741 = vmatprep.mubr.bf16.mxu0 0
    %1742 = vmatmul.mubr.bf16.gmra.mxu0 %v698
    %v1743 = vpop.f32.mrf.mxu0
    %v1744 = vadd.f32 %v1559, %v1743
    %v1745 = vpop.f32.mrf.mxu0
    %v1746 = vpop.f32.mrf.mxu0
    %v1747 = vadd.f32 %v1562, %v1746
    %v1748 = vpop.f32.mrf.mxu0
    %1749 = vmatprep.mubr.bf16.mxu0 0
    %1750 = vmatmul.mubr.bf16.gmra.mxu0 %v701
    %v1751 = vpop.f32.mrf.mxu0
    %v1752 = vadd.f32 %v1567, %v1751
    %v1753 = vpop.f32.mrf.mxu0
    %v1754 = vpop.f32.mrf.mxu0
    %v1755 = vadd.f32 %v1570, %v1754
    %v1756 = vpop.f32.mrf.mxu0
    %1757 = vmatprep.mubr.bf16.mxu0 0
    %1758 = vmatmul.mubr.bf16.gmra.mxu0 %v704
    %v1759 = vpop.f32.mrf.mxu0
    %v1760 = vadd.f32 %v1575, %v1759
    %v1761 = vpop.f32.mrf.mxu0
    %v1762 = vpop.f32.mrf.mxu0
    %v1763 = vadd.f32 %v1578, %v1762
    %v1764 = vpop.f32.mrf.mxu0
    %1765 = vmatprep.mubr.bf16.mxu0 0
    %1766 = vmatmul.mubr.bf16.gmra.mxu0 %v707
    %v1767 = vpop.f32.mrf.mxu0
    %v1768 = vadd.f32 %v1583, %v1767
    %v1769 = vpop.f32.mrf.mxu0
    %v1770 = vpop.f32.mrf.mxu0
    %v1771 = vadd.f32 %v1586, %v1770
    %v1772 = vpop.f32.mrf.mxu0
    %1773 = vmatprep.mubr.bf16.mxu0 0
    %1774 = vmatmul.mubr.bf16.gmra.mxu0 %v710
    %v1775 = vpop.f32.mrf.mxu0
    %v1776 = vadd.f32 %v1591, %v1775
    %v1777 = vpop.f32.mrf.mxu0
    %v1778 = vpop.f32.mrf.mxu0
    %v1779 = vadd.f32 %v1594, %v1778
    %v1780 = vpop.f32.mrf.mxu0
    %1781 = vmatprep.mubr.bf16.mxu0 0
    %1782 = vmatmul.mubr.bf16.gmra.mxu0 %v713
    %v1783 = vpop.f32.mrf.mxu0
    %v1784 = vadd.f32 %v1599, %v1783
    %v1785 = vpop.f32.mrf.mxu0
    %v1786 = vpop.f32.mrf.mxu0
    %v1787 = vadd.f32 %v1602, %v1786
    %v1788 = vpop.f32.mrf.mxu0
    %1789 = vmatprep.mubr.bf16.mxu0 0
    %1790 = vmatmul.mubr.bf16.gmra.mxu0 %v716
    %v1791 = vpop.f32.mrf.mxu0
    %v1792 = vadd.f32 %v1607, %v1791
    %v1793 = vpop.f32.mrf.mxu0
    %v1794 = vpop.f32.mrf.mxu0
    %v1795 = vadd.f32 %v1610, %v1794
    %v1796 = vpop.f32.mrf.mxu0
    %1797 = vmatprep.mubr.bf16.mxu0 0
    %1798 = vmatmul.mubr.bf16.gmra.mxu0 %v719
    %v1799 = vpop.f32.mrf.mxu0
    %v1800 = vadd.f32 %v1615, %v1799
    %v1801 = vpop.f32.mrf.mxu0
    %v1802 = vpop.f32.mrf.mxu0
    %v1803 = vadd.f32 %v1618, %v1802
    %v1804 = vpop.f32.mrf.mxu0
    %1805 = vmatprep.mubr.bf16.mxu0 0
    %1806 = vmatmul.mubr.bf16.gmra.mxu0 %v722
    %v1807 = vpop.f32.mrf.mxu0
    %v1808 = vadd.f32 %v1623, %v1807
    %v1809 = vpop.f32.mrf.mxu0
    %v1810 = vpop.f32.mrf.mxu0
    %v1811 = vadd.f32 %v1626, %v1810
    %v1812 = vpop.f32.mrf.mxu0
    %1813 = vmatprep.mubr.bf16.mxu0 0
    %1814 = vmatmul.mubr.bf16.gmra.mxu0 %v725
    %v1815 = vpop.f32.mrf.mxu0
    %v1816 = vadd.f32 %v1631, %v1815
    %v1817 = vpop.f32.mrf.mxu0
    %v1818 = vpop.f32.mrf.mxu0
    %v1819 = vadd.f32 %v1634, %v1818
    %v1820 = vpop.f32.mrf.mxu0
    %1821 = vmatprep.mubr.bf16.mxu0 0
    %1822 = vmatmul.mubr.bf16.gmra.mxu0 %v728
    %v1823 = vpop.f32.mrf.mxu0
    %v1824 = vadd.f32 %v1639, %v1823
    %v1825 = vpop.f32.mrf.mxu0
    %v1826 = vpop.f32.mrf.mxu0
    %v1827 = vadd.f32 %v1642, %v1826
    %v1828 = vpop.f32.mrf.mxu0
    %1829 = vdwg.mxu0
    %v1831 = vsel %vm161, %v641, 0
    %v1834 = vsel %vm161, %v642, 0
    %v1837 = vsel %vm161, %v643, 0
    %v1840 = vsel %vm161, %v644, 0
    %v1843 = vsel %vm161, %v645, 0
    %v1846 = vsel %vm161, %v646, 0
    %v1849 = vsel %vm161, %v647, 0
    %v1852 = vsel %vm161, %v648, 0
    %v1855 = vsel %vm161, %v649, 0
    %v1858 = vsel %vm161, %v650, 0
    %v1861 = vsel %vm161, %v651, 0
    %v1864 = vsel %vm161, %v652, 0
    %v1867 = vsel %vm161, %v653, 0
    %v1870 = vsel %vm161, %v654, 0
    %v1873 = vsel %vm161, %v655, 0
    %v1876 = vsel %vm161, %v656, 0
    %v1879 = vsel %vm161, %v657, 0
    %v1882 = vsel %vm161, %v658, 0
    %v1885 = vsel %vm161, %v659, 0
    %1887 = vmatprep.subr.bf16.mxu0 0
    %1888 = vmatpush1.bf16.msra.mxu0 0
    %1889 = vmatprep.subr.bf16.mxu0 0
    %1890 = vmatpush1.bf16.msra.mxu0 0
    %1891 = vmatprep.subr.bf16.mxu0 0
    %1892 = vmatpush1.bf16.msra.mxu0 0
    %1893 = vmatprep.subr.bf16.mxu0 0
    %1894 = vmatpush1.bf16.msra.mxu0 0
    %1895 = vmatprep.subr.bf16.mxu0 0
    %1896 = vmatpush1.bf16.msra.mxu0 0
    %1897 = vmatprep.subr.bf16.mxu0 0
    %1898 = vmatpush1.bf16.msra.mxu0 0
    %1899 = vmatprep.subr.bf16.mxu0 0
    %1900 = vmatpush1.bf16.msra.mxu0 0
    %1901 = vmatprep.subr.bf16.mxu0 0
    %1902 = vmatpush1.bf16.msra.mxu0 %v1235
    %1903 = vmatprep.subr.bf16.mxu0 0
    %1904 = vmatpush2.bf16.msra.mxu0 0
    %1905 = vmatprep.subr.bf16.mxu0 0
    %1906 = vmatpush2.bf16.msra.mxu0 0
    %1907 = vmatprep.subr.bf16.mxu0 0
    %1908 = vmatpush2.bf16.msra.mxu0 0
    %1909 = vmatprep.subr.bf16.mxu0 0
    %1910 = vmatpush2.bf16.msra.mxu0 0
    %1911 = vmatprep.subr.bf16.mxu0 0
    %1912 = vmatpush2.bf16.msra.mxu0 0
    %1913 = vmatprep.subr.bf16.mxu0 0
    %1914 = vmatpush2.bf16.msra.mxu0 0
    %1915 = vmatprep.subr.bf16.mxu0 0
    %1916 = vmatpush2.bf16.msra.mxu0 0
    %1917 = vmatprep.subr.bf16.mxu0 0
    %1918 = vmatpush2.bf16.msra.mxu0 0
    %1919 = vmatprep.mubr.bf16.mxu0 0
    %1920 = vmatmul.mubr.bf16.gmra.mxu0 %v1831
    %v1921 = vpop.f32.mrf.mxu0
    %v1922 = vadd.f32 0.0, %v1921
    %v1923 = vpop.f32.mrf.mxu0
    %v1924 = vpop.f32.mrf.mxu0
    %v1925 = vadd.f32 0.0, %v1924
    %v1926 = vpop.f32.mrf.mxu0
    %1927 = vmatprep.mubr.bf16.mxu0 0
    %1928 = vmatmul.mubr.bf16.gmra.mxu0 %v1834
    %v1929 = vpop.f32.mrf.mxu0
    %v1930 = vadd.f32 0.0, %v1929
    %v1931 = vpop.f32.mrf.mxu0
    %v1932 = vpop.f32.mrf.mxu0
    %v1933 = vadd.f32 0.0, %v1932
    %v1934 = vpop.f32.mrf.mxu0
    %1935 = vmatprep.mubr.bf16.mxu0 0
    %1936 = vmatmul.mubr.bf16.gmra.mxu0 %v1837
    %v1937 = vpop.f32.mrf.mxu0
    %v1938 = vadd.f32 0.0, %v1937
    %v1939 = vpop.f32.mrf.mxu0
    %v1940 = vpop.f32.mrf.mxu0
    %v1941 = vadd.f32 0.0, %v1940
    %v1942 = vpop.f32.mrf.mxu0
    %1943 = vmatprep.mubr.bf16.mxu0 0
    %1944 = vmatmul.mubr.bf16.gmra.mxu0 %v1840
    %v1945 = vpop.f32.mrf.mxu0
    %v1946 = vadd.f32 0.0, %v1945
    %v1947 = vpop.f32.mrf.mxu0
    %v1948 = vpop.f32.mrf.mxu0
    %v1949 = vadd.f32 0.0, %v1948
    %v1950 = vpop.f32.mrf.mxu0
    %1951 = vmatprep.mubr.bf16.mxu0 0
    %1952 = vmatmul.mubr.bf16.gmra.mxu0 %v1843
    %v1953 = vpop.f32.mrf.mxu0
    %v1954 = vadd.f32 0.0, %v1953
    %v1955 = vpop.f32.mrf.mxu0
    %v1956 = vpop.f32.mrf.mxu0
    %v1957 = vadd.f32 0.0, %v1956
    %v1958 = vpop.f32.mrf.mxu0
    %1959 = vmatprep.mubr.bf16.mxu0 0
    %1960 = vmatmul.mubr.bf16.gmra.mxu0 %v1846
    %v1961 = vpop.f32.mrf.mxu0
    %v1962 = vadd.f32 0.0, %v1961
    %v1963 = vpop.f32.mrf.mxu0
    %v1964 = vpop.f32.mrf.mxu0
    %v1965 = vadd.f32 0.0, %v1964
    %v1966 = vpop.f32.mrf.mxu0
    %1967 = vmatprep.mubr.bf16.mxu0 0
    %1968 = vmatmul.mubr.bf16.gmra.mxu0 %v1849
    %v1969 = vpop.f32.mrf.mxu0
    %v1970 = vadd.f32 0.0, %v1969
    %v1971 = vpop.f32.mrf.mxu0
    %v1972 = vpop.f32.mrf.mxu0
    %v1973 = vadd.f32 0.0, %v1972
    %v1974 = vpop.f32.mrf.mxu0
    %1975 = vmatprep.mubr.bf16.mxu0 0
    %1976 = vmatmul.mubr.bf16.gmra.mxu0 %v1852
    %v1977 = vpop.f32.mrf.mxu0
    %v1978 = vadd.f32 0.0, %v1977
    %v1979 = vpop.f32.mrf.mxu0
    %v1980 = vpop.f32.mrf.mxu0
    %v1981 = vadd.f32 0.0, %v1980
    %v1982 = vpop.f32.mrf.mxu0
    %1983 = vmatprep.mubr.bf16.mxu0 0
    %1984 = vmatmul.mubr.bf16.gmra.mxu0 %v1855
    %v1985 = vpop.f32.mrf.mxu0
    %v1986 = vadd.f32 0.0, %v1985
    %v1987 = vpop.f32.mrf.mxu0
    %v1988 = vpop.f32.mrf.mxu0
    %v1989 = vadd.f32 0.0, %v1988
    %v1990 = vpop.f32.mrf.mxu0
    %1991 = vmatprep.mubr.bf16.mxu0 0
    %1992 = vmatmul.mubr.bf16.gmra.mxu0 %v1858
    %v1993 = vpop.f32.mrf.mxu0
    %v1994 = vadd.f32 0.0, %v1993
    %v1995 = vpop.f32.mrf.mxu0
    %v1996 = vpop.f32.mrf.mxu0
    %v1997 = vadd.f32 0.0, %v1996
    %v1998 = vpop.f32.mrf.mxu0
    %1999 = vmatprep.mubr.bf16.mxu0 0
    %2000 = vmatmul.mubr.bf16.gmra.mxu0 %v1861
    %v2001 = vpop.f32.mrf.mxu0
    %v2002 = vadd.f32 0.0, %v2001
    %v2003 = vpop.f32.mrf.mxu0
    %v2004 = vpop.f32.mrf.mxu0
    %v2005 = vadd.f32 0.0, %v2004
    %v2006 = vpop.f32.mrf.mxu0
    %2007 = vmatprep.mubr.bf16.mxu0 0
    %2008 = vmatmul.mubr.bf16.gmra.mxu0 %v1864
    %v2009 = vpop.f32.mrf.mxu0
    %v2010 = vadd.f32 0.0, %v2009
    %v2011 = vpop.f32.mrf.mxu0
    %v2012 = vpop.f32.mrf.mxu0
    %v2013 = vadd.f32 0.0, %v2012
    %v2014 = vpop.f32.mrf.mxu0
    %2015 = vmatprep.mubr.bf16.mxu0 0
    %2016 = vmatmul.mubr.bf16.gmra.mxu0 %v1867
    %v2017 = vpop.f32.mrf.mxu0
    %v2018 = vadd.f32 0.0, %v2017
    %v2019 = vpop.f32.mrf.mxu0
    %v2020 = vpop.f32.mrf.mxu0
    %v2021 = vadd.f32 0.0, %v2020
    %v2022 = vpop.f32.mrf.mxu0
    %2023 = vmatprep.mubr.bf16.mxu0 0
    %2024 = vmatmul.mubr.bf16.gmra.mxu0 %v1870
    %v2025 = vpop.f32.mrf.mxu0
    %v2026 = vadd.f32 0.0, %v2025
    %v2027 = vpop.f32.mrf.mxu0
    %v2028 = vpop.f32.mrf.mxu0
    %v2029 = vadd.f32 0.0, %v2028
    %v2030 = vpop.f32.mrf.mxu0
    %2031 = vmatprep.mubr.bf16.mxu0 0
    %2032 = vmatmul.mubr.bf16.gmra.mxu0 %v1873
    %v2033 = vpop.f32.mrf.mxu0
    %v2034 = vadd.f32 0.0, %v2033
    %v2035 = vpop.f32.mrf.mxu0
    %v2036 = vpop.f32.mrf.mxu0
    %v2037 = vadd.f32 0.0, %v2036
    %v2038 = vpop.f32.mrf.mxu0
    %2039 = vmatprep.mubr.bf16.mxu0 0
    %2040 = vmatmul.mubr.bf16.gmra.mxu0 %v1876
    %v2041 = vpop.f32.mrf.mxu0
    %v2042 = vadd.f32 0.0, %v2041
    %v2043 = vpop.f32.mrf.mxu0
    %v2044 = vpop.f32.mrf.mxu0
    %v2045 = vadd.f32 0.0, %v2044
    %v2046 = vpop.f32.mrf.mxu0
    %2047 = vmatprep.mubr.bf16.mxu0 0
    %2048 = vmatmul.mubr.bf16.gmra.mxu0 %v1879
    %v2049 = vpop.f32.mrf.mxu0
    %v2050 = vadd.f32 0.0, %v2049
    %v2051 = vpop.f32.mrf.mxu0
    %v2052 = vpop.f32.mrf.mxu0
    %v2053 = vadd.f32 0.0, %v2052
    %v2054 = vpop.f32.mrf.mxu0
    %2055 = vmatprep.mubr.bf16.mxu0 0
    %2056 = vmatmul.mubr.bf16.gmra.mxu0 %v1882
    %v2057 = vpop.f32.mrf.mxu0
    %v2058 = vadd.f32 0.0, %v2057
    %v2059 = vpop.f32.mrf.mxu0
    %v2060 = vpop.f32.mrf.mxu0
    %v2061 = vadd.f32 0.0, %v2060
    %v2062 = vpop.f32.mrf.mxu0
    %2063 = vmatprep.mubr.bf16.mxu0 0
    %2064 = vmatmul.mubr.bf16.gmra.mxu0 %v1885
    %v2065 = vpop.f32.mrf.mxu0
    %v2066 = vadd.f32 0.0, %v2065
    %v2067 = vpop.f32.mrf.mxu0
    %v2068 = vpop.f32.mrf.mxu0
    %v2069 = vadd.f32 0.0, %v2068
    %v2070 = vpop.f32.mrf.mxu0
    %2071 = vdwg.mxu0
    %v2072 = vadd.f32 %v1680, %v1922
    %v2073 = vadd.f32 %v1683, %v1925
    %v2074 = vadd.f32 %v1688, %v1930
    %v2075 = vadd.f32 %v1691, %v1933
    %v2076 = vadd.f32 %v1696, %v1938
    %v2077 = vadd.f32 %v1699, %v1941
    %v2078 = vadd.f32 %v1704, %v1946
    %v2079 = vadd.f32 %v1707, %v1949
    %v2080 = vadd.f32 %v1712, %v1954
    %v2081 = vadd.f32 %v1715, %v1957
    %v2082 = vadd.f32 %v1720, %v1962
    %v2083 = vadd.f32 %v1723, %v1965
    %v2084 = vadd.f32 %v1728, %v1970
    %v2085 = vadd.f32 %v1731, %v1973
    %v2086 = vadd.f32 %v1736, %v1978
    %v2087 = vadd.f32 %v1739, %v1981
    %v2088 = vadd.f32 %v1744, %v1986
    %v2089 = vadd.f32 %v1747, %v1989
    %v2090 = vadd.f32 %v1752, %v1994
    %v2091 = vadd.f32 %v1755, %v1997
    %v2092 = vadd.f32 %v1760, %v2002
    %v2093 = vadd.f32 %v1763, %v2005
    %v2094 = vadd.f32 %v1768, %v2010
    %v2095 = vadd.f32 %v1771, %v2013
    %v2096 = vadd.f32 %v1776, %v2018
    %v2097 = vadd.f32 %v1779, %v2021
    %v2098 = vadd.f32 %v1784, %v2026
    %v2099 = vadd.f32 %v1787, %v2029
    %v2100 = vadd.f32 %v1792, %v2034
    %v2101 = vadd.f32 %v1795, %v2037
    %v2102 = vadd.f32 %v1800, %v2042
    %v2103 = vadd.f32 %v1803, %v2045
    %v2104 = vadd.f32 %v1808, %v2050
    %v2105 = vadd.f32 %v1811, %v2053
    %v2106 = vadd.f32 %v1816, %v2058
    %v2107 = vadd.f32 %v1819, %v2061
    %v2108 = vadd.f32 %v1824, %v2066
    %v2109 = vadd.f32 %v1827, %v2069
    %v2110 = vmax.f32 %v1422, %v2072
    %v2111 = vmax.f32 %v1423, %v2073
    %v2112 = vmax.f32 %v1424, %v2074
    %v2113 = vmax.f32 %v1425, %v2075
    %v2114 = vmax.f32 %v1426, %v2076
    %v2115 = vmax.f32 %v1427, %v2077
    %v2116 = vmax.f32 %v1428, %v2078
    %v2117 = vmax.f32 %v1429, %v2079
    %v2118 = vmax.f32 %v1430, %v2080
    %v2119 = vmax.f32 %v1431, %v2081
    %v2120 = vmax.f32 %v1432, %v2082
    %v2121 = vmax.f32 %v1433, %v2083
    %v2122 = vmax.f32 %v1434, %v2084
    %v2123 = vmax.f32 %v1435, %v2085
    %v2124 = vmax.f32 %v1436, %v2086
    %v2125 = vmax.f32 %v1437, %v2087
    %v2126 = vmax.f32 %v1438, %v2088
    %v2127 = vmax.f32 %v1439, %v2089
    %v2128 = vmax.f32 %v1440, %v2090
    %v2129 = vmax.f32 %v1441, %v2091
    %v2130 = vmax.f32 %v1442, %v2092
    %v2131 = vmax.f32 %v1443, %v2093
    %v2132 = vmax.f32 %v1444, %v2094
    %v2133 = vmax.f32 %v1445, %v2095
    %v2134 = vmax.f32 %v1446, %v2096
    %v2135 = vmax.f32 %v1447, %v2097
    %v2136 = vmax.f32 %v1448, %v2098
    %v2137 = vmax.f32 %v1449, %v2099
    %v2138 = vmax.f32 %v1450, %v2100
    %v2139 = vmax.f32 %v1451, %v2101
    %v2140 = vmax.f32 %v1452, %v2102
    %v2141 = vmax.f32 %v1453, %v2103
    %v2142 = vmax.f32 %v1454, %v2104
    %v2143 = vmax.f32 %v1455, %v2105
    %v2144 = vmax.f32 %v1456, %v2106
    %v2145 = vmax.f32 %v1457, %v2107
    %v2146 = vmax.f32 %v1458, %v2108
    %v2147 = vmax.f32 %v1459, %v2109
    %v2148 = vld [vmem:[#allocation6] sm:$0x1]
    %v2150 = vlaneseq
    %v2151 = vshrl.u32 %v2150, 7
    %v2152 = vsub.s32 0, %v2151
    %v2153 = vrot.slane %v2148, %v2152
    %v2155 = vadd.f32 %v2110, %v2153
    %v2156 = vadd.f32 %v2111, %v2153
    %v2157 = vadd.f32 %v2112, %v2153
    %v2158 = vadd.f32 %v2113, %v2153
    %v2159 = vadd.f32 %v2114, %v2153
    %v2160 = vadd.f32 %v2115, %v2153
    %v2161 = vadd.f32 %v2116, %v2153
    %v2162 = vadd.f32 %v2117, %v2153
    %v2163 = vadd.f32 %v2118, %v2153
    %v2164 = vadd.f32 %v2119, %v2153
    %v2165 = vadd.f32 %v2120, %v2153
    %v2166 = vadd.f32 %v2121, %v2153
    %v2167 = vadd.f32 %v2122, %v2153
    %v2168 = vadd.f32 %v2123, %v2153
    %v2169 = vadd.f32 %v2124, %v2153
    %v2170 = vadd.f32 %v2125, %v2153
    %v2171 = vadd.f32 %v2126, %v2153
    %v2172 = vadd.f32 %v2127, %v2153
    %v2173 = vadd.f32 %v2128, %v2153
    %v2174 = vadd.f32 %v2129, %v2153
    %v2175 = vadd.f32 %v2130, %v2153
    %v2176 = vadd.f32 %v2131, %v2153
    %v2177 = vadd.f32 %v2132, %v2153
    %v2178 = vadd.f32 %v2133, %v2153
    %v2179 = vadd.f32 %v2134, %v2153
    %v2180 = vadd.f32 %v2135, %v2153
    %v2181 = vadd.f32 %v2136, %v2153
    %v2182 = vadd.f32 %v2137, %v2153
    %v2183 = vadd.f32 %v2138, %v2153
    %v2184 = vadd.f32 %v2139, %v2153
    %v2185 = vadd.f32 %v2140, %v2153
    %v2186 = vadd.f32 %v2141, %v2153
    %v2187 = vadd.f32 %v2142, %v2153
    %v2188 = vadd.f32 %v2143, %v2153
    %v2189 = vadd.f32 %v2144, %v2153
    %v2190 = vadd.f32 %v2145, %v2153
    %v2191 = vadd.f32 %v2146, %v2153
    %v2192 = vadd.f32 %v2147, %v2153
    %v2193 = vmax.f32 %v2155, 0.0
    %v2194 = vmax.f32 %v2156, 0.0
    %v2195 = vmax.f32 %v2157, 0.0
    %v2196 = vmax.f32 %v2158, 0.0
    %v2197 = vmax.f32 %v2159, 0.0
    %v2198 = vmax.f32 %v2160, 0.0
    %v2199 = vmax.f32 %v2161, 0.0
    %v2200 = vmax.f32 %v2162, 0.0
    %v2201 = vmax.f32 %v2163, 0.0
    %v2202 = vmax.f32 %v2164, 0.0
    %v2203 = vmax.f32 %v2165, 0.0
    %v2204 = vmax.f32 %v2166, 0.0
    %v2205 = vmax.f32 %v2167, 0.0
    %v2206 = vmax.f32 %v2168, 0.0
    %v2207 = vmax.f32 %v2169, 0.0
    %v2208 = vmax.f32 %v2170, 0.0
    %v2209 = vmax.f32 %v2171, 0.0
    %v2210 = vmax.f32 %v2172, 0.0
    %v2211 = vmax.f32 %v2173, 0.0
    %v2212 = vmax.f32 %v2174, 0.0
    %v2213 = vmax.f32 %v2175, 0.0
    %v2214 = vmax.f32 %v2176, 0.0
    %v2215 = vmax.f32 %v2177, 0.0
    %v2216 = vmax.f32 %v2178, 0.0
    %v2217 = vmax.f32 %v2179, 0.0
    %v2218 = vmax.f32 %v2180, 0.0
    %v2219 = vmax.f32 %v2181, 0.0
    %v2220 = vmax.f32 %v2182, 0.0
    %v2221 = vmax.f32 %v2183, 0.0
    %v2222 = vmax.f32 %v2184, 0.0
    %v2223 = vmax.f32 %v2185, 0.0
    %v2224 = vmax.f32 %v2186, 0.0
    %v2225 = vmax.f32 %v2187, 0.0
    %v2226 = vmax.f32 %v2188, 0.0
    %v2227 = vmax.f32 %v2189, 0.0
    %v2228 = vmax.f32 %v2190, 0.0
    %v2229 = vmax.f32 %v2191, 0.0
    %v2230 = vmax.f32 %v2192, 0.0
    %vm2231 = vcmask 253952
    %2232 = vst.msk [vmem:[#allocation3] sm:$0x1] %vm2231, 0.0
    %vm2233 = vcmask 261120
    %2234 = vst.msk [vmem:[#allocation3 + $0x1] sm:$0xff] %vm2233, %v2193
    %2235 = vst.msk [vmem:[#allocation3 + $0x9] sm:$0xff] %vm2233, %v2194
    %2236 = vst.msk [vmem:[#allocation3 + $0x11] sm:$0xff] %vm2233, %v2195
    %2237 = vst.msk [vmem:[#allocation3 + $0x19] sm:$0xff] %vm2233, %v2196
    %2238 = vst.msk [vmem:[#allocation3 + $0x21] sm:$0xff] %vm2233, %v2197
    %2239 = vst.msk [vmem:[#allocation3 + $0x29] sm:$0xff] %vm2233, %v2198
    %2240 = vst.msk [vmem:[#allocation3 + $0x31] sm:$0xff] %vm2233, %v2199
    %2241 = vst.msk [vmem:[#allocation3 + $0x39] sm:$0xff] %vm2233, %v2200
    %2242 = vst.msk [vmem:[#allocation3 + $0x41] sm:$0xff] %vm2233, %v2201
    %2243 = vst.msk [vmem:[#allocation3 + $0x49] sm:$0xff] %vm2233, %v2202
    %2244 = vst.msk [vmem:[#allocation3 + $0x51] sm:$0xff] %vm2233, %v2203
    %2245 = vst.msk [vmem:[#allocation3 + $0x59] sm:$0xff] %vm2233, %v2204
    %2246 = vst.msk [vmem:[#allocation3 + $0x61] sm:$0xff] %vm2233, %v2205
    %2247 = vst.msk [vmem:[#allocation3 + $0x69] sm:$0xff] %vm2233, %v2206
    %2248 = vst.msk [vmem:[#allocation3 + $0x71] sm:$0xff] %vm2233, %v2207
    %2249 = vst.msk [vmem:[#allocation3 + $0x79] sm:$0xff] %vm2233, %v2208
    %2250 = vst.msk [vmem:[#allocation3 + $0x81] sm:$0xff] %vm2233, %v2209
    %2251 = vst.msk [vmem:[#allocation3 + $0x89] sm:$0xff] %vm2233, %v2210
    %vm2252 = vcmask 259072
    %2253 = vst.msk [vmem:[#allocation3 + $0x91] sm:$0x3f] %vm2252, %v2211
    %2254 = vst.msk [vmem:[#allocation3 + $0x97] sm:$0x1] %vm2231, 0.0
    %2255 = vst.msk [vmem:[#allocation3 + $0xa0] sm:$0x1] %vm2231, 0.0
    %2256 = vst.msk [vmem:[#allocation3 + $0xa1] sm:$0xff] %vm2233, %v2212
    %2257 = vst.msk [vmem:[#allocation3 + $0xa9] sm:$0xff] %vm2233, %v2213
    %2258 = vst.msk [vmem:[#allocation3 + $0xb1] sm:$0xff] %vm2233, %v2214
    %2259 = vst.msk [vmem:[#allocation3 + $0xb9] sm:$0xff] %vm2233, %v2215
    %2260 = vst.msk [vmem:[#allocation3 + $0xc1] sm:$0xff] %vm2233, %v2216
    %2261 = vst.msk [vmem:[#allocation3 + $0xc9] sm:$0xff] %vm2233, %v2217
    %2262 = vst.msk [vmem:[#allocation3 + $0xd1] sm:$0xff] %vm2233, %v2218
    %2263 = vst.msk [vmem:[#allocation3 + $0xd9] sm:$0xff] %vm2233, %v2219
    %2264 = vst.msk [vmem:[#allocation3 + $0xe1] sm:$0xff] %vm2233, %v2220
    %2265 = vst.msk [vmem:[#allocation3 + $0xe9] sm:$0xff] %vm2233, %v2221
    %2266 = vst.msk [vmem:[#allocation3 + $0xf1] sm:$0xff] %vm2233, %v2222
    %2267 = vst.msk [vmem:[#allocation3 + $0xf9] sm:$0xff] %vm2233, %v2223
    %2268 = vst.msk [vmem:[#allocation3 + $0x101] sm:$0xff] %vm2233, %v2224
    %2269 = vst.msk [vmem:[#allocation3 + $0x109] sm:$0xff] %vm2233, %v2225
    %2270 = vst.msk [vmem:[#allocation3 + $0x111] sm:$0xff] %vm2233, %v2226
    %2271 = vst.msk [vmem:[#allocation3 + $0x119] sm:$0xff] %vm2233, %v2227
    %2272 = vst.msk [vmem:[#allocation3 + $0x121] sm:$0xff] %vm2233, %v2228
    %2273 = vst.msk [vmem:[#allocation3 + $0x129] sm:$0xff] %vm2233, %v2229
    %2274 = vst.msk [vmem:[#allocation3 + $0x131] sm:$0x3f] %vm2252, %v2230
    %2275 = vst.msk [vmem:[#allocation3 + $0x137] sm:$0x1] %vm2231, 0.0
    %v2276 = vld [vmem:[#allocation3] ss:$2 sm:$0xff]
    %s2277 = scalar_lea.vmem [#allocation3], 16
    %v2278 = vld [vmem:[%s2277] ss:$2 sm:$0xff]
    %s2279 = scalar_lea.vmem [#allocation3], 32
    %v2280 = vld [vmem:[%s2279] ss:$2 sm:$0xff]
    %s2281 = scalar_lea.vmem [#allocation3], 48
    %v2282 = vld [vmem:[%s2281] ss:$2 sm:$0xff]
    %s2283 = scalar_lea.vmem [#allocation3], 64
    %v2284 = vld [vmem:[%s2283] ss:$2 sm:$0xff]
    %s2285 = scalar_lea.vmem [#allocation3], 80
    %v2286 = vld [vmem:[%s2285] ss:$2 sm:$0xff]
    %s2287 = scalar_lea.vmem [#allocation3], 96
    %v2288 = vld [vmem:[%s2287] ss:$2 sm:$0xff]
    %s2289 = scalar_lea.vmem [#allocation3], 112
    %v2290 = vld [vmem:[%s2289] ss:$2 sm:$0xff]
    %s2291 = scalar_lea.vmem [#allocation3], 128
    %v2292 = vld [vmem:[%s2291] ss:$2 sm:$0xff]
    %s2293 = scalar_lea.vmem [#allocation3], 144
    %v2294 = vld [vmem:[%s2293] ss:$2 sm:$0xff]
    %s2295 = scalar_lea.vmem [#allocation3], 160
    %v2296 = vld [vmem:[%s2295] ss:$2 sm:$0xff]
    %s2297 = scalar_lea.vmem [#allocation3], 176
    %v2298 = vld [vmem:[%s2297] ss:$2 sm:$0xff]
    %s2299 = scalar_lea.vmem [#allocation3], 192
    %v2300 = vld [vmem:[%s2299] ss:$2 sm:$0xff]
    %s2301 = scalar_lea.vmem [#allocation3], 208
    %v2302 = vld [vmem:[%s2301] ss:$2 sm:$0xff]
    %s2303 = scalar_lea.vmem [#allocation3], 224
    %v2304 = vld [vmem:[%s2303] ss:$2 sm:$0xff]
    %s2305 = scalar_lea.vmem [#allocation3], 240
    %v2306 = vld [vmem:[%s2305] ss:$2 sm:$0xff]
    %s2307 = scalar_lea.vmem [#allocation3], 256
    %v2308 = vld [vmem:[%s2307] ss:$2 sm:$0xff]
    %s2309 = scalar_lea.vmem [#allocation3], 272
    %v2310 = vld [vmem:[%s2309] ss:$2 sm:$0xff]
    %s2311 = scalar_lea.vmem [#allocation3], 288
    %v2312 = vld [vmem:[%s2311] ss:$2 sm:$0xff]
    %s2313 = scalar_lea.vmem [#allocation3], 304
    %v2314 = vld [vmem:[%s2313] ss:$2 sm:$0xff]
    %v2315 = vpack.c.bf16 %v2278, %v2276
    %v2316 = vpack.c.bf16 %v2282, %v2280
    %v2317 = vpack.c.bf16 %v2286, %v2284
    %v2318 = vpack.c.bf16 %v2290, %v2288
    %v2319 = vpack.c.bf16 %v2294, %v2292
    %v2320 = vpack.c.bf16 %v2298, %v2296
    %v2321 = vpack.c.bf16 %v2302, %v2300
    %v2322 = vpack.c.bf16 %v2306, %v2304
    %v2323 = vpack.c.bf16 %v2310, %v2308
    %v2324 = vpack.c.bf16 %v2314, %v2312
    %s2325 = scalar_lea.vmem [#allocation3], 1
    %v2326 = vld [vmem:[%s2325] ss:$2 sm:$0xff]
    %s2327 = scalar_lea.vmem [#allocation3], 17
    %v2328 = vld [vmem:[%s2327] ss:$2 sm:$0xff]
    %s2329 = scalar_lea.vmem [#allocation3], 33
    %v2330 = vld [vmem:[%s2329] ss:$2 sm:$0xff]
    %s2331 = scalar_lea.vmem [#allocation3], 49
    %v2332 = vld [vmem:[%s2331] ss:$2 sm:$0xff]
    %s2333 = scalar_lea.vmem [#allocation3], 65
    %v2334 = vld [vmem:[%s2333] ss:$2 sm:$0xff]
    %s2335 = scalar_lea.vmem [#allocation3], 81
    %v2336 = vld [vmem:[%s2335] ss:$2 sm:$0xff]
    %s2337 = scalar_lea.vmem [#allocation3], 97
    %v2338 = vld [vmem:[%s2337] ss:$2 sm:$0xff]
    %s2339 = scalar_lea.vmem [#allocation3], 113
    %v2340 = vld [vmem:[%s2339] ss:$2 sm:$0xff]
    %s2341 = scalar_lea.vmem [#allocation3], 129
    %v2342 = vld [vmem:[%s2341] ss:$2 sm:$0xff]
    %s2343 = scalar_lea.vmem [#allocation3], 145
    %v2344 = vld [vmem:[%s2343] ss:$2 sm:$0xff]
    %s2345 = scalar_lea.vmem [#allocation3], 161
    %v2346 = vld [vmem:[%s2345] ss:$2 sm:$0xff]
    %s2347 = scalar_lea.vmem [#allocation3], 177
    %v2348 = vld [vmem:[%s2347] ss:$2 sm:$0xff]
    %s2349 = scalar_lea.vmem [#allocation3], 193
    %v2350 = vld [vmem:[%s2349] ss:$2 sm:$0xff]
    %s2351 = scalar_lea.vmem [#allocation3], 209
    %v2352 = vld [vmem:[%s2351] ss:$2 sm:$0xff]
    %s2353 = scalar_lea.vmem [#allocation3], 225
    %v2354 = vld [vmem:[%s2353] ss:$2 sm:$0xff]
    %s2355 = scalar_lea.vmem [#allocation3], 241
    %v2356 = vld [vmem:[%s2355] ss:$2 sm:$0xff]
    %s2357 = scalar_lea.vmem [#allocation3], 257
    %v2358 = vld [vmem:[%s2357] ss:$2 sm:$0xff]
    %s2359 = scalar_lea.vmem [#allocation3], 273
    %v2360 = vld [vmem:[%s2359] ss:$2 sm:$0xff]
    %s2361 = scalar_lea.vmem [#allocation3], 289
    %v2362 = vld [vmem:[%s2361] ss:$2 sm:$0xff]
    %s2363 = scalar_lea.vmem [#allocation3], 305
    %v2364 = vld [vmem:[%s2363] ss:$2 sm:$0xff]
    %v2365 = vpack.c.bf16 %v2328, %v2326
    %v2366 = vpack.c.bf16 %v2332, %v2330
    %v2367 = vpack.c.bf16 %v2336, %v2334
    %v2368 = vpack.c.bf16 %v2340, %v2338
    %v2369 = vpack.c.bf16 %v2344, %v2342
    %v2370 = vpack.c.bf16 %v2348, %v2346
    %v2371 = vpack.c.bf16 %v2352, %v2350
    %v2372 = vpack.c.bf16 %v2356, %v2354
    %v2373 = vpack.c.bf16 %v2360, %v2358
    %v2374 = vpack.c.bf16 %v2364, %v2362
    %s2375 = scalar_lea.vmem [#allocation3], 2
    %v2376 = vld [vmem:[%s2375] ss:$2 sm:$0xff]
    %s2377 = scalar_lea.vmem [#allocation3], 18
    %v2378 = vld [vmem:[%s2377] ss:$2 sm:$0xff]
    %s2379 = scalar_lea.vmem [#allocation3], 34
    %v2380 = vld [vmem:[%s2379] ss:$2 sm:$0xff]
    %s2381 = scalar_lea.vmem [#allocation3], 50
    %v2382 = vld [vmem:[%s2381] ss:$2 sm:$0xff]
    %s2383 = scalar_lea.vmem [#allocation3], 66
    %v2384 = vld [vmem:[%s2383] ss:$2 sm:$0xff]
    %s2385 = scalar_lea.vmem [#allocation3], 82
    %v2386 = vld [vmem:[%s2385] ss:$2 sm:$0xff]
    %s2387 = scalar_lea.vmem [#allocation3], 98
    %v2388 = vld [vmem:[%s2387] ss:$2 sm:$0xff]
    %s2389 = scalar_lea.vmem [#allocation3], 114
    %v2390 = vld [vmem:[%s2389] ss:$2 sm:$0xff]
    %s2391 = scalar_lea.vmem [#allocation3], 130
    %v2392 = vld [vmem:[%s2391] ss:$2 sm:$0xff]
    %s2393 = scalar_lea.vmem [#allocation3], 146
    %v2394 = vld [vmem:[%s2393] ss:$2 sm:$0xff]
    %s2395 = scalar_lea.vmem [#allocation3], 162
    %v2396 = vld [vmem:[%s2395] ss:$2 sm:$0xff]
    %s2397 = scalar_lea.vmem [#allocation3], 178
    %v2398 = vld [vmem:[%s2397] ss:$2 sm:$0xff]
    %s2399 = scalar_lea.vmem [#allocation3], 194
    %v2400 = vld [vmem:[%s2399] ss:$2 sm:$0xff]
    %s2401 = scalar_lea.vmem [#allocation3], 210
    %v2402 = vld [vmem:[%s2401] ss:$2 sm:$0xff]
    %s2403 = scalar_lea.vmem [#allocation3], 226
    %v2404 = vld [vmem:[%s2403] ss:$2 sm:$0xff]
    %s2405 = scalar_lea.vmem [#allocation3], 242
    %v2406 = vld [vmem:[%s2405] ss:$2 sm:$0xff]
    %s2407 = scalar_lea.vmem [#allocation3], 258
    %v2408 = vld [vmem:[%s2407] ss:$2 sm:$0xff]
    %s2409 = scalar_lea.vmem [#allocation3], 274
    %v2410 = vld [vmem:[%s2409] ss:$2 sm:$0xff]
    %s2411 = scalar_lea.vmem [#allocation3], 290
    %v2412 = vld [vmem:[%s2411] ss:$2 sm:$0xff]
    %s2413 = scalar_lea.vmem [#allocation3], 306
    %v2414 = vld [vmem:[%s2413] ss:$2 sm:$0xff]
    %v2415 = vpack.c.bf16 %v2378, %v2376
    %v2416 = vpack.c.bf16 %v2382, %v2380
    %v2417 = vpack.c.bf16 %v2386, %v2384
    %v2418 = vpack.c.bf16 %v2390, %v2388
    %v2419 = vpack.c.bf16 %v2394, %v2392
    %v2420 = vpack.c.bf16 %v2398, %v2396
    %v2421 = vpack.c.bf16 %v2402, %v2400
    %v2422 = vpack.c.bf16 %v2406, %v2404
    %v2423 = vpack.c.bf16 %v2410, %v2408
    %v2424 = vpack.c.bf16 %v2414, %v2412
    %s2425 = scalar_lea.vmem [#allocation3], 3
    %v2426 = vld [vmem:[%s2425] ss:$2 sm:$0xff]
    %s2427 = scalar_lea.vmem [#allocation3], 19
    %v2428 = vld [vmem:[%s2427] ss:$2 sm:$0xff]
    %s2429 = scalar_lea.vmem [#allocation3], 35
    %v2430 = vld [vmem:[%s2429] ss:$2 sm:$0xff]
    %s2431 = scalar_lea.vmem [#allocation3], 51
    %v2432 = vld [vmem:[%s2431] ss:$2 sm:$0xff]
    %s2433 = scalar_lea.vmem [#allocation3], 67
    %v2434 = vld [vmem:[%s2433] ss:$2 sm:$0xff]
    %s2435 = scalar_lea.vmem [#allocation3], 83
    %v2436 = vld [vmem:[%s2435] ss:$2 sm:$0xff]
    %s2437 = scalar_lea.vmem [#allocation3], 99
    %v2438 = vld [vmem:[%s2437] ss:$2 sm:$0xff]
    %s2439 = scalar_lea.vmem [#allocation3], 115
    %v2440 = vld [vmem:[%s2439] ss:$2 sm:$0xff]
    %s2441 = scalar_lea.vmem [#allocation3], 131
    %v2442 = vld [vmem:[%s2441] ss:$2 sm:$0xff]
    %s2443 = scalar_lea.vmem [#allocation3], 147
    %v2444 = vld [vmem:[%s2443] ss:$2 sm:$0xff]
    %s2445 = scalar_lea.vmem [#allocation3], 163
    %v2446 = vld [vmem:[%s2445] ss:$2 sm:$0xff]
    %s2447 = scalar_lea.vmem [#allocation3], 179
    %v2448 = vld [vmem:[%s2447] ss:$2 sm:$0xff]
    %s2449 = scalar_lea.vmem [#allocation3], 195
    %v2450 = vld [vmem:[%s2449] ss:$2 sm:$0xff]
    %s2451 = scalar_lea.vmem [#allocation3], 211
    %v2452 = vld [vmem:[%s2451] ss:$2 sm:$0xff]
    %s2453 = scalar_lea.vmem [#allocation3], 227
    %v2454 = vld [vmem:[%s2453] ss:$2 sm:$0xff]
    %s2455 = scalar_lea.vmem [#allocation3], 243
    %v2456 = vld [vmem:[%s2455] ss:$2 sm:$0xff]
    %s2457 = scalar_lea.vmem [#allocation3], 259
    %v2458 = vld [vmem:[%s2457] ss:$2 sm:$0xff]
    %s2459 = scalar_lea.vmem [#allocation3], 275
    %v2460 = vld [vmem:[%s2459] ss:$2 sm:$0xff]
    %s2461 = scalar_lea.vmem [#allocation3], 291
    %v2462 = vld [vmem:[%s2461] ss:$2 sm:$0xff]
    %s2463 = scalar_lea.vmem [#allocation3], 307
    %v2464 = vld [vmem:[%s2463] ss:$2 sm:$0xff]
    %v2465 = vpack.c.bf16 %v2428, %v2426
    %v2466 = vpack.c.bf16 %v2432, %v2430
    %v2467 = vpack.c.bf16 %v2436, %v2434
    %v2468 = vpack.c.bf16 %v2440, %v2438
    %v2469 = vpack.c.bf16 %v2444, %v2442
    %v2470 = vpack.c.bf16 %v2448, %v2446
    %v2471 = vpack.c.bf16 %v2452, %v2450
    %v2472 = vpack.c.bf16 %v2456, %v2454
    %v2473 = vpack.c.bf16 %v2460, %v2458
    %v2474 = vpack.c.bf16 %v2464, %v2462
    %v2475 = vld [vmem:[#allocation9] sm:$0xf]
    %v2476 = vld [vmem:[#allocation9 + $0x4] sm:$0xf]
    %v2477 = vld [vmem:[#allocation9 + $0x8] sm:$0xf]
    %v2478 = vld [vmem:[#allocation9 + $0xc] sm:$0xf]
    %s2479 = scalar_lea.vmem [#allocation9], 16
    %v2480 = vld [vmem:[%s2479] sm:$0xf]
    %v2481 = vld [vmem:[%s2479 + $0x4] sm:$0xf]
    %v2482 = vld [vmem:[%s2479 + $0x8] sm:$0xf]
    %v2483 = vld [vmem:[%s2479 + $0xc] sm:$0xf]
    %s2484 = scalar_lea.vmem [#allocation9], 32
    %v2485 = vld [vmem:[%s2484] sm:$0xf]
    %v2486 = vld [vmem:[%s2484 + $0x4] sm:$0xf]
    %v2487 = vld [vmem:[%s2484 + $0x8] sm:$0xf]
    %v2488 = vld [vmem:[%s2484 + $0xc] sm:$0xf]
    %v2493 = vunpack.c.l.b16 %v2480
    %v2494 = vunpack.c.l.b16 %v2481
    %v2495 = vunpack.c.l.b16 %v2482
    %v2496 = vunpack.c.l.b16 %v2483
    %v2497 = vpack.c.b16 %v2494, %v2493
    %v2498 = vpack.c.b16 %v2496, %v2495
    %v2502 = vsel %vm2233, %v2365, 0
    %v2505 = vsel %vm2233, %v2366, 0
    %v2508 = vsel %vm2233, %v2367, 0
    %v2511 = vsel %vm2233, %v2368, 0
    %v2514 = vsel %vm2233, %v2369, 0
    %v2517 = vsel %vm2233, %v2370, 0
    %v2520 = vsel %vm2233, %v2371, 0
    %v2523 = vsel %vm2233, %v2372, 0
    %v2526 = vsel %vm2233, %v2373, 0
    %v2529 = vsel %vm2233, %v2374, 0
    %2531 = vmatprep.subr.bf16.mxu0 0
    %2532 = vmatpush1.bf16.msra.mxu0 0
    %2533 = vmatprep.subr.bf16.mxu0 0
    %2534 = vmatpush1.bf16.msra.mxu0 0
    %2535 = vmatprep.subr.bf16.mxu0 0
    %2536 = vmatpush1.bf16.msra.mxu0 0
    %2537 = vmatprep.subr.bf16.mxu0 0
    %2538 = vmatpush1.bf16.msra.mxu0 0
    %2539 = vmatprep.subr.bf16.mxu0 0
    %2540 = vmatpush1.bf16.msra.mxu0 0
    %2541 = vmatprep.subr.bf16.mxu0 0
    %2542 = vmatpush1.bf16.msra.mxu0 0
    %2543 = vmatprep.subr.bf16.mxu0 0
    %2544 = vmatpush1.bf16.msra.mxu0 %v2498
    %2545 = vmatprep.subr.bf16.mxu0 0
    %2546 = vmatpush1.bf16.msra.mxu0 %v2497
    %2547 = vmatprep.subr.bf16.mxu0 0
    %2548 = vmatpush2.bf16.msra.mxu0 0
    %2549 = vmatprep.subr.bf16.mxu0 0
    %2550 = vmatpush2.bf16.msra.mxu0 0
    %2551 = vmatprep.subr.bf16.mxu0 0
    %2552 = vmatpush2.bf16.msra.mxu0 0
    %2553 = vmatprep.subr.bf16.mxu0 0
    %2554 = vmatpush2.bf16.msra.mxu0 0
    %2555 = vmatprep.subr.bf16.mxu0 0
    %2556 = vmatpush2.bf16.msra.mxu0 0
    %2557 = vmatprep.subr.bf16.mxu0 0
    %2558 = vmatpush2.bf16.msra.mxu0 0
    %2559 = vmatprep.subr.bf16.mxu0 0
    %2560 = vmatpush2.bf16.msra.mxu0 0
    %2561 = vmatprep.subr.bf16.mxu0 0
    %2562 = vmatpush2.bf16.msra.mxu0 0
    %2563 = vmatprep.mubr.bf16.mxu0 0
    %2564 = vmatmul.mubr.bf16.gmra.mxu0 %v2502
    %v2565 = vpop.f32.mrf.mxu0
    %v2566 = vadd.f32 0.0, %v2565
    %v2567 = vpop.f32.mrf.mxu0
    %v2568 = vpop.f32.mrf.mxu0
    %v2569 = vadd.f32 0.0, %v2568
    %v2570 = vpop.f32.mrf.mxu0
    %2571 = vmatprep.mubr.bf16.mxu0 0
    %2572 = vmatmul.mubr.bf16.gmra.mxu0 %v2505
    %v2573 = vpop.f32.mrf.mxu0
    %v2574 = vadd.f32 0.0, %v2573
    %v2575 = vpop.f32.mrf.mxu0
    %v2576 = vpop.f32.mrf.mxu0
    %v2577 = vadd.f32 0.0, %v2576
    %v2578 = vpop.f32.mrf.mxu0
    %2579 = vmatprep.mubr.bf16.mxu0 0
    %2580 = vmatmul.mubr.bf16.gmra.mxu0 %v2508
    %v2581 = vpop.f32.mrf.mxu0
    %v2582 = vadd.f32 0.0, %v2581
    %v2583 = vpop.f32.mrf.mxu0
    %v2584 = vpop.f32.mrf.mxu0
    %v2585 = vadd.f32 0.0, %v2584
    %v2586 = vpop.f32.mrf.mxu0
    %2587 = vmatprep.mubr.bf16.mxu0 0
    %2588 = vmatmul.mubr.bf16.gmra.mxu0 %v2511
    %v2589 = vpop.f32.mrf.mxu0
    %v2590 = vadd.f32 0.0, %v2589
    %v2591 = vpop.f32.mrf.mxu0
    %v2592 = vpop.f32.mrf.mxu0
    %v2593 = vadd.f32 0.0, %v2592
    %v2594 = vpop.f32.mrf.mxu0
    %2595 = vmatprep.mubr.bf16.mxu0 0
    %2596 = vmatmul.mubr.bf16.gmra.mxu0 %v2514
    %v2597 = vpop.f32.mrf.mxu0
    %v2598 = vadd.f32 0.0, %v2597
    %v2599 = vpop.f32.mrf.mxu0
    %v2600 = vpop.f32.mrf.mxu0
    %v2601 = vadd.f32 0.0, %v2600
    %v2602 = vpop.f32.mrf.mxu0
    %2603 = vmatprep.mubr.bf16.mxu0 0
    %2604 = vmatmul.mubr.bf16.gmra.mxu0 %v2517
    %v2605 = vpop.f32.mrf.mxu0
    %v2606 = vadd.f32 0.0, %v2605
    %v2607 = vpop.f32.mrf.mxu0
    %v2608 = vpop.f32.mrf.mxu0
    %v2609 = vadd.f32 0.0, %v2608
    %v2610 = vpop.f32.mrf.mxu0
    %2611 = vmatprep.mubr.bf16.mxu0 0
    %2612 = vmatmul.mubr.bf16.gmra.mxu0 %v2520
    %v2613 = vpop.f32.mrf.mxu0
    %v2614 = vadd.f32 0.0, %v2613
    %v2615 = vpop.f32.mrf.mxu0
    %v2616 = vpop.f32.mrf.mxu0
    %v2617 = vadd.f32 0.0, %v2616
    %v2618 = vpop.f32.mrf.mxu0
    %2619 = vmatprep.mubr.bf16.mxu0 0
    %2620 = vmatmul.mubr.bf16.gmra.mxu0 %v2523
    %v2621 = vpop.f32.mrf.mxu0
    %v2622 = vadd.f32 0.0, %v2621
    %v2623 = vpop.f32.mrf.mxu0
    %v2624 = vpop.f32.mrf.mxu0
    %v2625 = vadd.f32 0.0, %v2624
    %v2626 = vpop.f32.mrf.mxu0
    %2627 = vmatprep.mubr.bf16.mxu0 0
    %2628 = vmatmul.mubr.bf16.gmra.mxu0 %v2526
    %v2629 = vpop.f32.mrf.mxu0
    %v2630 = vadd.f32 0.0, %v2629
    %v2631 = vpop.f32.mrf.mxu0
    %v2632 = vpop.f32.mrf.mxu0
    %v2633 = vadd.f32 0.0, %v2632
    %v2634 = vpop.f32.mrf.mxu0
    %2635 = vmatprep.mubr.bf16.mxu0 0
    %2636 = vmatmul.mubr.bf16.gmra.mxu0 %v2529
    %v2637 = vpop.f32.mrf.mxu0
    %v2638 = vadd.f32 0.0, %v2637
    %v2639 = vpop.f32.mrf.mxu0
    %v2640 = vpop.f32.mrf.mxu0
    %v2641 = vadd.f32 0.0, %v2640
    %v2642 = vpop.f32.mrf.mxu0
    %2643 = vdwg.mxu0
    %v2648 = vunpack.c.l.b16 %v2475
    %v2649 = vunpack.c.l.b16 %v2476
    %v2650 = vunpack.c.l.b16 %v2477
    %v2651 = vunpack.c.l.b16 %v2478
    %v2652 = vpack.c.b16 %v2649, %v2648
    %v2653 = vpack.c.b16 %v2651, %v2650
    %v2657 = vsel %vm2233, %v2315, 0
    %v2660 = vsel %vm2233, %v2316, 0
    %v2663 = vsel %vm2233, %v2317, 0
    %v2666 = vsel %vm2233, %v2318, 0
    %v2669 = vsel %vm2233, %v2319, 0
    %v2672 = vsel %vm2233, %v2320, 0
    %v2675 = vsel %vm2233, %v2321, 0
    %v2678 = vsel %vm2233, %v2322, 0
    %v2681 = vsel %vm2233, %v2323, 0
    %v2684 = vsel %vm2233, %v2324, 0
    %2686 = vmatprep.subr.bf16.mxu0 0
    %2687 = vmatpush1.bf16.msra.mxu0 0
    %2688 = vmatprep.subr.bf16.mxu0 0
    %2689 = vmatpush1.bf16.msra.mxu0 0
    %2690 = vmatprep.subr.bf16.mxu0 0
    %2691 = vmatpush1.bf16.msra.mxu0 0
    %2692 = vmatprep.subr.bf16.mxu0 0
    %2693 = vmatpush1.bf16.msra.mxu0 0
    %2694 = vmatprep.subr.bf16.mxu0 0
    %2695 = vmatpush1.bf16.msra.mxu0 0
    %2696 = vmatprep.subr.bf16.mxu0 0
    %2697 = vmatpush1.bf16.msra.mxu0 0
    %2698 = vmatprep.subr.bf16.mxu0 0
    %2699 = vmatpush1.bf16.msra.mxu0 %v2653
    %2700 = vmatprep.subr.bf16.mxu0 0
    %2701 = vmatpush1.bf16.msra.mxu0 %v2652
    %2702 = vmatprep.subr.bf16.mxu0 0
    %2703 = vmatpush2.bf16.msra.mxu0 0
    %2704 = vmatprep.subr.bf16.mxu0 0
    %2705 = vmatpush2.bf16.msra.mxu0 0
    %2706 = vmatprep.subr.bf16.mxu0 0
    %2707 = vmatpush2.bf16.msra.mxu0 0
    %2708 = vmatprep.subr.bf16.mxu0 0
    %2709 = vmatpush2.bf16.msra.mxu0 0
    %2710 = vmatprep.subr.bf16.mxu0 0
    %2711 = vmatpush2.bf16.msra.mxu0 0
    %2712 = vmatprep.subr.bf16.mxu0 0
    %2713 = vmatpush2.bf16.msra.mxu0 0
    %2714 = vmatprep.subr.bf16.mxu0 0
    %2715 = vmatpush2.bf16.msra.mxu0 0
    %2716 = vmatprep.subr.bf16.mxu0 0
    %2717 = vmatpush2.bf16.msra.mxu0 0
    %2718 = vmatprep.mubr.bf16.mxu0 0
    %2719 = vmatmul.mubr.bf16.gmra.mxu0 %v2657
    %v2720 = vpop.f32.mrf.mxu0
    %v2721 = vadd.f32 %v2566, %v2720
    %v2722 = vpop.f32.mrf.mxu0
    %v2723 = vpop.f32.mrf.mxu0
    %v2724 = vadd.f32 %v2569, %v2723
    %v2725 = vpop.f32.mrf.mxu0
    %2726 = vmatprep.mubr.bf16.mxu0 0
    %2727 = vmatmul.mubr.bf16.gmra.mxu0 %v2660
    %v2728 = vpop.f32.mrf.mxu0
    %v2729 = vadd.f32 %v2574, %v2728
    %v2730 = vpop.f32.mrf.mxu0
    %v2731 = vpop.f32.mrf.mxu0
    %v2732 = vadd.f32 %v2577, %v2731
    %v2733 = vpop.f32.mrf.mxu0
    %2734 = vmatprep.mubr.bf16.mxu0 0
    %2735 = vmatmul.mubr.bf16.gmra.mxu0 %v2663
    %v2736 = vpop.f32.mrf.mxu0
    %v2737 = vadd.f32 %v2582, %v2736
    %v2738 = vpop.f32.mrf.mxu0
    %v2739 = vpop.f32.mrf.mxu0
    %v2740 = vadd.f32 %v2585, %v2739
    %v2741 = vpop.f32.mrf.mxu0
    %2742 = vmatprep.mubr.bf16.mxu0 0
    %2743 = vmatmul.mubr.bf16.gmra.mxu0 %v2666
    %v2744 = vpop.f32.mrf.mxu0
    %v2745 = vadd.f32 %v2590, %v2744
    %v2746 = vpop.f32.mrf.mxu0
    %v2747 = vpop.f32.mrf.mxu0
    %v2748 = vadd.f32 %v2593, %v2747
    %v2749 = vpop.f32.mrf.mxu0
    %2750 = vmatprep.mubr.bf16.mxu0 0
    %2751 = vmatmul.mubr.bf16.gmra.mxu0 %v2669
    %v2752 = vpop.f32.mrf.mxu0
    %v2753 = vadd.f32 %v2598, %v2752
    %v2754 = vpop.f32.mrf.mxu0
    %v2755 = vpop.f32.mrf.mxu0
    %v2756 = vadd.f32 %v2601, %v2755
    %v2757 = vpop.f32.mrf.mxu0
    %2758 = vmatprep.mubr.bf16.mxu0 0
    %2759 = vmatmul.mubr.bf16.gmra.mxu0 %v2672
    %v2760 = vpop.f32.mrf.mxu0
    %v2761 = vadd.f32 %v2606, %v2760
    %v2762 = vpop.f32.mrf.mxu0
    %v2763 = vpop.f32.mrf.mxu0
    %v2764 = vadd.f32 %v2609, %v2763
    %v2765 = vpop.f32.mrf.mxu0
    %2766 = vmatprep.mubr.bf16.mxu0 0
    %2767 = vmatmul.mubr.bf16.gmra.mxu0 %v2675
    %v2768 = vpop.f32.mrf.mxu0
    %v2769 = vadd.f32 %v2614, %v2768
    %v2770 = vpop.f32.mrf.mxu0
    %v2771 = vpop.f32.mrf.mxu0
    %v2772 = vadd.f32 %v2617, %v2771
    %v2773 = vpop.f32.mrf.mxu0
    %2774 = vmatprep.mubr.bf16.mxu0 0
    %2775 = vmatmul.mubr.bf16.gmra.mxu0 %v2678
    %v2776 = vpop.f32.mrf.mxu0
    %v2777 = vadd.f32 %v2622, %v2776
    %v2778 = vpop.f32.mrf.mxu0
    %v2779 = vpop.f32.mrf.mxu0
    %v2780 = vadd.f32 %v2625, %v2779
    %v2781 = vpop.f32.mrf.mxu0
    %2782 = vmatprep.mubr.bf16.mxu0 0
    %2783 = vmatmul.mubr.bf16.gmra.mxu0 %v2681
    %v2784 = vpop.f32.mrf.mxu0
    %v2785 = vadd.f32 %v2630, %v2784
    %v2786 = vpop.f32.mrf.mxu0
    %v2787 = vpop.f32.mrf.mxu0
    %v2788 = vadd.f32 %v2633, %v2787
    %v2789 = vpop.f32.mrf.mxu0
    %2790 = vmatprep.mubr.bf16.mxu0 0
    %2791 = vmatmul.mubr.bf16.gmra.mxu0 %v2684
    %v2792 = vpop.f32.mrf.mxu0
    %v2793 = vadd.f32 %v2638, %v2792
    %v2794 = vpop.f32.mrf.mxu0
    %v2795 = vpop.f32.mrf.mxu0
    %v2796 = vadd.f32 %v2641, %v2795
    %v2797 = vpop.f32.mrf.mxu0
    %2798 = vdwg.mxu0
    %v2803 = vunpack.c.l.b16 %v2485
    %v2804 = vunpack.c.l.b16 %v2486
    %v2805 = vunpack.c.l.b16 %v2487
    %v2806 = vunpack.c.l.b16 %v2488
    %v2807 = vpack.c.b16 %v2804, %v2803
    %v2808 = vpack.c.b16 %v2806, %v2805
    %v2812 = vsel %vm2233, %v2415, 0
    %v2815 = vsel %vm2233, %v2416, 0
    %v2818 = vsel %vm2233, %v2417, 0
    %v2821 = vsel %vm2233, %v2418, 0
    %v2824 = vsel %vm2233, %v2419, 0
    %v2827 = vsel %vm2233, %v2420, 0
    %v2830 = vsel %vm2233, %v2421, 0
    %v2833 = vsel %vm2233, %v2422, 0
    %v2836 = vsel %vm2233, %v2423, 0
    %v2839 = vsel %vm2233, %v2424, 0
    %2841 = vmatprep.subr.bf16.mxu0 0
    %2842 = vmatpush1.bf16.msra.mxu0 0
    %2843 = vmatprep.subr.bf16.mxu0 0
    %2844 = vmatpush1.bf16.msra.mxu0 0
    %2845 = vmatprep.subr.bf16.mxu0 0
    %2846 = vmatpush1.bf16.msra.mxu0 0
    %2847 = vmatprep.subr.bf16.mxu0 0
    %2848 = vmatpush1.bf16.msra.mxu0 0
    %2849 = vmatprep.subr.bf16.mxu0 0
    %2850 = vmatpush1.bf16.msra.mxu0 0
    %2851 = vmatprep.subr.bf16.mxu0 0
    %2852 = vmatpush1.bf16.msra.mxu0 0
    %2853 = vmatprep.subr.bf16.mxu0 0
    %2854 = vmatpush1.bf16.msra.mxu0 %v2808
    %2855 = vmatprep.subr.bf16.mxu0 0
    %2856 = vmatpush1.bf16.msra.mxu0 %v2807
    %2857 = vmatprep.subr.bf16.mxu0 0
    %2858 = vmatpush2.bf16.msra.mxu0 0
    %2859 = vmatprep.subr.bf16.mxu0 0
    %2860 = vmatpush2.bf16.msra.mxu0 0
    %2861 = vmatprep.subr.bf16.mxu0 0
    %2862 = vmatpush2.bf16.msra.mxu0 0
    %2863 = vmatprep.subr.bf16.mxu0 0
    %2864 = vmatpush2.bf16.msra.mxu0 0
    %2865 = vmatprep.subr.bf16.mxu0 0
    %2866 = vmatpush2.bf16.msra.mxu0 0
    %2867 = vmatprep.subr.bf16.mxu0 0
    %2868 = vmatpush2.bf16.msra.mxu0 0
    %2869 = vmatprep.subr.bf16.mxu0 0
    %2870 = vmatpush2.bf16.msra.mxu0 0
    %2871 = vmatprep.subr.bf16.mxu0 0
    %2872 = vmatpush2.bf16.msra.mxu0 0
    %2873 = vmatprep.mubr.bf16.mxu0 0
    %2874 = vmatmul.mubr.bf16.gmra.mxu0 %v2812
    %v2875 = vpop.f32.mrf.mxu0
    %v2876 = vadd.f32 0.0, %v2875
    %v2877 = vpop.f32.mrf.mxu0
    %v2878 = vpop.f32.mrf.mxu0
    %v2879 = vadd.f32 0.0, %v2878
    %v2880 = vpop.f32.mrf.mxu0
    %2881 = vmatprep.mubr.bf16.mxu0 0
    %2882 = vmatmul.mubr.bf16.gmra.mxu0 %v2815
    %v2883 = vpop.f32.mrf.mxu0
    %v2884 = vadd.f32 0.0, %v2883
    %v2885 = vpop.f32.mrf.mxu0
    %v2886 = vpop.f32.mrf.mxu0
    %v2887 = vadd.f32 0.0, %v2886
    %v2888 = vpop.f32.mrf.mxu0
    %2889 = vmatprep.mubr.bf16.mxu0 0
    %2890 = vmatmul.mubr.bf16.gmra.mxu0 %v2818
    %v2891 = vpop.f32.mrf.mxu0
    %v2892 = vadd.f32 0.0, %v2891
    %v2893 = vpop.f32.mrf.mxu0
    %v2894 = vpop.f32.mrf.mxu0
    %v2895 = vadd.f32 0.0, %v2894
    %v2896 = vpop.f32.mrf.mxu0
    %2897 = vmatprep.mubr.bf16.mxu0 0
    %2898 = vmatmul.mubr.bf16.gmra.mxu0 %v2821
    %v2899 = vpop.f32.mrf.mxu0
    %v2900 = vadd.f32 0.0, %v2899
    %v2901 = vpop.f32.mrf.mxu0
    %v2902 = vpop.f32.mrf.mxu0
    %v2903 = vadd.f32 0.0, %v2902
    %v2904 = vpop.f32.mrf.mxu0
    %2905 = vmatprep.mubr.bf16.mxu0 0
    %2906 = vmatmul.mubr.bf16.gmra.mxu0 %v2824
    %v2907 = vpop.f32.mrf.mxu0
    %v2908 = vadd.f32 0.0, %v2907
    %v2909 = vpop.f32.mrf.mxu0
    %v2910 = vpop.f32.mrf.mxu0
    %v2911 = vadd.f32 0.0, %v2910
    %v2912 = vpop.f32.mrf.mxu0
    %2913 = vmatprep.mubr.bf16.mxu0 0
    %2914 = vmatmul.mubr.bf16.gmra.mxu0 %v2827
    %v2915 = vpop.f32.mrf.mxu0
    %v2916 = vadd.f32 0.0, %v2915
    %v2917 = vpop.f32.mrf.mxu0
    %v2918 = vpop.f32.mrf.mxu0
    %v2919 = vadd.f32 0.0, %v2918
    %v2920 = vpop.f32.mrf.mxu0
    %2921 = vmatprep.mubr.bf16.mxu0 0
    %2922 = vmatmul.mubr.bf16.gmra.mxu0 %v2830
    %v2923 = vpop.f32.mrf.mxu0
    %v2924 = vadd.f32 0.0, %v2923
    %v2925 = vpop.f32.mrf.mxu0
    %v2926 = vpop.f32.mrf.mxu0
    %v2927 = vadd.f32 0.0, %v2926
    %v2928 = vpop.f32.mrf.mxu0
    %2929 = vmatprep.mubr.bf16.mxu0 0
    %2930 = vmatmul.mubr.bf16.gmra.mxu0 %v2833
    %v2931 = vpop.f32.mrf.mxu0
    %v2932 = vadd.f32 0.0, %v2931
    %v2933 = vpop.f32.mrf.mxu0
    %v2934 = vpop.f32.mrf.mxu0
    %v2935 = vadd.f32 0.0, %v2934
    %v2936 = vpop.f32.mrf.mxu0
    %2937 = vmatprep.mubr.bf16.mxu0 0
    %2938 = vmatmul.mubr.bf16.gmra.mxu0 %v2836
    %v2939 = vpop.f32.mrf.mxu0
    %v2940 = vadd.f32 0.0, %v2939
    %v2941 = vpop.f32.mrf.mxu0
    %v2942 = vpop.f32.mrf.mxu0
    %v2943 = vadd.f32 0.0, %v2942
    %v2944 = vpop.f32.mrf.mxu0
    %2945 = vmatprep.mubr.bf16.mxu0 0
    %2946 = vmatmul.mubr.bf16.gmra.mxu0 %v2839
    %v2947 = vpop.f32.mrf.mxu0
    %v2948 = vadd.f32 0.0, %v2947
    %v2949 = vpop.f32.mrf.mxu0
    %v2950 = vpop.f32.mrf.mxu0
    %v2951 = vadd.f32 0.0, %v2950
    %v2952 = vpop.f32.mrf.mxu0
    %2953 = vdwg.mxu0
    %v2954 = vadd.f32 %v2721, %v2876
    %v2955 = vadd.f32 %v2724, %v2879
    %v2956 = vadd.f32 %v2729, %v2884
    %v2957 = vadd.f32 %v2732, %v2887
    %v2958 = vadd.f32 %v2737, %v2892
    %v2959 = vadd.f32 %v2740, %v2895
    %v2960 = vadd.f32 %v2745, %v2900
    %v2961 = vadd.f32 %v2748, %v2903
    %v2962 = vadd.f32 %v2753, %v2908
    %v2963 = vadd.f32 %v2756, %v2911
    %v2964 = vadd.f32 %v2761, %v2916
    %v2965 = vadd.f32 %v2764, %v2919
    %v2966 = vadd.f32 %v2769, %v2924
    %v2967 = vadd.f32 %v2772, %v2927
    %v2968 = vadd.f32 %v2777, %v2932
    %v2969 = vadd.f32 %v2780, %v2935
    %v2970 = vadd.f32 %v2785, %v2940
    %v2971 = vadd.f32 %v2788, %v2943
    %v2972 = vadd.f32 %v2793, %v2948
    %v2973 = vadd.f32 %v2796, %v2951
    %2974 = vmatprep.subr.bf16.mxu0 0
    %2975 = vmatpush1.bf16.msra.mxu0 0
    %2976 = vmatprep.subr.bf16.mxu0 0
    %2977 = vmatpush1.bf16.msra.mxu0 0
    %2978 = vmatprep.subr.bf16.mxu0 0
    %2979 = vmatpush1.bf16.msra.mxu0 0
    %2980 = vmatprep.subr.bf16.mxu0 0
    %2981 = vmatpush1.bf16.msra.mxu0 0
    %2982 = vmatprep.subr.bf16.mxu0 0
    %2983 = vmatpush1.bf16.msra.mxu0 0
    %2984 = vmatprep.subr.bf16.mxu0 0
    %2985 = vmatpush1.bf16.msra.mxu0 0
    %2986 = vmatprep.subr.bf16.mxu0 0
    %2987 = vmatpush1.bf16.msra.mxu0 %v2498
    %2988 = vmatprep.subr.bf16.mxu0 0
    %2989 = vmatpush1.bf16.msra.mxu0 %v2497
    %2990 = vmatprep.subr.bf16.mxu0 0
    %2991 = vmatpush2.bf16.msra.mxu0 0
    %2992 = vmatprep.subr.bf16.mxu0 0
    %2993 = vmatpush2.bf16.msra.mxu0 0
    %2994 = vmatprep.subr.bf16.mxu0 0
    %2995 = vmatpush2.bf16.msra.mxu0 0
    %2996 = vmatprep.subr.bf16.mxu0 0
    %2997 = vmatpush2.bf16.msra.mxu0 0
    %2998 = vmatprep.subr.bf16.mxu0 0
    %2999 = vmatpush2.bf16.msra.mxu0 0
    %3000 = vmatprep.subr.bf16.mxu0 0
    %3001 = vmatpush2.bf16.msra.mxu0 0
    %3002 = vmatprep.subr.bf16.mxu0 0
    %3003 = vmatpush2.bf16.msra.mxu0 0
    %3004 = vmatprep.subr.bf16.mxu0 0
    %3005 = vmatpush2.bf16.msra.mxu0 0
    %3006 = vmatprep.mubr.bf16.mxu0 0
    %3007 = vmatmul.mubr.bf16.gmra.mxu0 %v2812
    %v3008 = vpop.f32.mrf.mxu0
    %v3009 = vadd.f32 0.0, %v3008
    %v3010 = vpop.f32.mrf.mxu0
    %v3011 = vpop.f32.mrf.mxu0
    %v3012 = vadd.f32 0.0, %v3011
    %v3013 = vpop.f32.mrf.mxu0
    %3014 = vmatprep.mubr.bf16.mxu0 0
    %3015 = vmatmul.mubr.bf16.gmra.mxu0 %v2815
    %v3016 = vpop.f32.mrf.mxu0
    %v3017 = vadd.f32 0.0, %v3016
    %v3018 = vpop.f32.mrf.mxu0
    %v3019 = vpop.f32.mrf.mxu0
    %v3020 = vadd.f32 0.0, %v3019
    %v3021 = vpop.f32.mrf.mxu0
    %3022 = vmatprep.mubr.bf16.mxu0 0
    %3023 = vmatmul.mubr.bf16.gmra.mxu0 %v2818
    %v3024 = vpop.f32.mrf.mxu0
    %v3025 = vadd.f32 0.0, %v3024
    %v3026 = vpop.f32.mrf.mxu0
    %v3027 = vpop.f32.mrf.mxu0
    %v3028 = vadd.f32 0.0, %v3027
    %v3029 = vpop.f32.mrf.mxu0
    %3030 = vmatprep.mubr.bf16.mxu0 0
    %3031 = vmatmul.mubr.bf16.gmra.mxu0 %v2821
    %v3032 = vpop.f32.mrf.mxu0
    %v3033 = vadd.f32 0.0, %v3032
    %v3034 = vpop.f32.mrf.mxu0
    %v3035 = vpop.f32.mrf.mxu0
    %v3036 = vadd.f32 0.0, %v3035
    %v3037 = vpop.f32.mrf.mxu0
    %3038 = vmatprep.mubr.bf16.mxu0 0
    %3039 = vmatmul.mubr.bf16.gmra.mxu0 %v2824
    %v3040 = vpop.f32.mrf.mxu0
    %v3041 = vadd.f32 0.0, %v3040
    %v3042 = vpop.f32.mrf.mxu0
    %v3043 = vpop.f32.mrf.mxu0
    %v3044 = vadd.f32 0.0, %v3043
    %v3045 = vpop.f32.mrf.mxu0
    %3046 = vmatprep.mubr.bf16.mxu0 0
    %3047 = vmatmul.mubr.bf16.gmra.mxu0 %v2827
    %v3048 = vpop.f32.mrf.mxu0
    %v3049 = vadd.f32 0.0, %v3048
    %v3050 = vpop.f32.mrf.mxu0
    %v3051 = vpop.f32.mrf.mxu0
    %v3052 = vadd.f32 0.0, %v3051
    %v3053 = vpop.f32.mrf.mxu0
    %3054 = vmatprep.mubr.bf16.mxu0 0
    %3055 = vmatmul.mubr.bf16.gmra.mxu0 %v2830
    %v3056 = vpop.f32.mrf.mxu0
    %v3057 = vadd.f32 0.0, %v3056
    %v3058 = vpop.f32.mrf.mxu0
    %v3059 = vpop.f32.mrf.mxu0
    %v3060 = vadd.f32 0.0, %v3059
    %v3061 = vpop.f32.mrf.mxu0
    %3062 = vmatprep.mubr.bf16.mxu0 0
    %3063 = vmatmul.mubr.bf16.gmra.mxu0 %v2833
    %v3064 = vpop.f32.mrf.mxu0
    %v3065 = vadd.f32 0.0, %v3064
    %v3066 = vpop.f32.mrf.mxu0
    %v3067 = vpop.f32.mrf.mxu0
    %v3068 = vadd.f32 0.0, %v3067
    %v3069 = vpop.f32.mrf.mxu0
    %3070 = vmatprep.mubr.bf16.mxu0 0
    %3071 = vmatmul.mubr.bf16.gmra.mxu0 %v2836
    %v3072 = vpop.f32.mrf.mxu0
    %v3073 = vadd.f32 0.0, %v3072
    %v3074 = vpop.f32.mrf.mxu0
    %v3075 = vpop.f32.mrf.mxu0
    %v3076 = vadd.f32 0.0, %v3075
    %v3077 = vpop.f32.mrf.mxu0
    %3078 = vmatprep.mubr.bf16.mxu0 0
    %3079 = vmatmul.mubr.bf16.gmra.mxu0 %v2839
    %v3080 = vpop.f32.mrf.mxu0
    %v3081 = vadd.f32 0.0, %v3080
    %v3082 = vpop.f32.mrf.mxu0
    %v3083 = vpop.f32.mrf.mxu0
    %v3084 = vadd.f32 0.0, %v3083
    %v3085 = vpop.f32.mrf.mxu0
    %3086 = vdwg.mxu0
    %3087 = vmatprep.subr.bf16.mxu0 0
    %3088 = vmatpush1.bf16.msra.mxu0 0
    %3089 = vmatprep.subr.bf16.mxu0 0
    %3090 = vmatpush1.bf16.msra.mxu0 0
    %3091 = vmatprep.subr.bf16.mxu0 0
    %3092 = vmatpush1.bf16.msra.mxu0 0
    %3093 = vmatprep.subr.bf16.mxu0 0
    %3094 = vmatpush1.bf16.msra.mxu0 0
    %3095 = vmatprep.subr.bf16.mxu0 0
    %3096 = vmatpush1.bf16.msra.mxu0 0
    %3097 = vmatprep.subr.bf16.mxu0 0
    %3098 = vmatpush1.bf16.msra.mxu0 0
    %3099 = vmatprep.subr.bf16.mxu0 0
    %3100 = vmatpush1.bf16.msra.mxu0 %v2653
    %3101 = vmatprep.subr.bf16.mxu0 0
    %3102 = vmatpush1.bf16.msra.mxu0 %v2652
    %3103 = vmatprep.subr.bf16.mxu0 0
    %3104 = vmatpush2.bf16.msra.mxu0 0
    %3105 = vmatprep.subr.bf16.mxu0 0
    %3106 = vmatpush2.bf16.msra.mxu0 0
    %3107 = vmatprep.subr.bf16.mxu0 0
    %3108 = vmatpush2.bf16.msra.mxu0 0
    %3109 = vmatprep.subr.bf16.mxu0 0
    %3110 = vmatpush2.bf16.msra.mxu0 0
    %3111 = vmatprep.subr.bf16.mxu0 0
    %3112 = vmatpush2.bf16.msra.mxu0 0
    %3113 = vmatprep.subr.bf16.mxu0 0
    %3114 = vmatpush2.bf16.msra.mxu0 0
    %3115 = vmatprep.subr.bf16.mxu0 0
    %3116 = vmatpush2.bf16.msra.mxu0 0
    %3117 = vmatprep.subr.bf16.mxu0 0
    %3118 = vmatpush2.bf16.msra.mxu0 0
    %3119 = vmatprep.mubr.bf16.mxu0 0
    %3120 = vmatmul.mubr.bf16.gmra.mxu0 %v2502
    %v3121 = vpop.f32.mrf.mxu0
    %v3122 = vadd.f32 %v3009, %v3121
    %v3123 = vpop.f32.mrf.mxu0
    %v3124 = vpop.f32.mrf.mxu0
    %v3125 = vadd.f32 %v3012, %v3124
    %v3126 = vpop.f32.mrf.mxu0
    %3127 = vmatprep.mubr.bf16.mxu0 0
    %3128 = vmatmul.mubr.bf16.gmra.mxu0 %v2505
    %v3129 = vpop.f32.mrf.mxu0
    %v3130 = vadd.f32 %v3017, %v3129
    %v3131 = vpop.f32.mrf.mxu0
    %v3132 = vpop.f32.mrf.mxu0
    %v3133 = vadd.f32 %v3020, %v3132
    %v3134 = vpop.f32.mrf.mxu0
    %3135 = vmatprep.mubr.bf16.mxu0 0
    %3136 = vmatmul.mubr.bf16.gmra.mxu0 %v2508
    %v3137 = vpop.f32.mrf.mxu0
    %v3138 = vadd.f32 %v3025, %v3137
    %v3139 = vpop.f32.mrf.mxu0
    %v3140 = vpop.f32.mrf.mxu0
    %v3141 = vadd.f32 %v3028, %v3140
    %v3142 = vpop.f32.mrf.mxu0
    %3143 = vmatprep.mubr.bf16.mxu0 0
    %3144 = vmatmul.mubr.bf16.gmra.mxu0 %v2511
    %v3145 = vpop.f32.mrf.mxu0
    %v3146 = vadd.f32 %v3033, %v3145
    %v3147 = vpop.f32.mrf.mxu0
    %v3148 = vpop.f32.mrf.mxu0
    %v3149 = vadd.f32 %v3036, %v3148
    %v3150 = vpop.f32.mrf.mxu0
    %3151 = vmatprep.mubr.bf16.mxu0 0
    %3152 = vmatmul.mubr.bf16.gmra.mxu0 %v2514
    %v3153 = vpop.f32.mrf.mxu0
    %v3154 = vadd.f32 %v3041, %v3153
    %v3155 = vpop.f32.mrf.mxu0
    %v3156 = vpop.f32.mrf.mxu0
    %v3157 = vadd.f32 %v3044, %v3156
    %v3158 = vpop.f32.mrf.mxu0
    %3159 = vmatprep.mubr.bf16.mxu0 0
    %3160 = vmatmul.mubr.bf16.gmra.mxu0 %v2517
    %v3161 = vpop.f32.mrf.mxu0
    %v3162 = vadd.f32 %v3049, %v3161
    %v3163 = vpop.f32.mrf.mxu0
    %v3164 = vpop.f32.mrf.mxu0
    %v3165 = vadd.f32 %v3052, %v3164
    %v3166 = vpop.f32.mrf.mxu0
    %3167 = vmatprep.mubr.bf16.mxu0 0
    %3168 = vmatmul.mubr.bf16.gmra.mxu0 %v2520
    %v3169 = vpop.f32.mrf.mxu0
    %v3170 = vadd.f32 %v3057, %v3169
    %v3171 = vpop.f32.mrf.mxu0
    %v3172 = vpop.f32.mrf.mxu0
    %v3173 = vadd.f32 %v3060, %v3172
    %v3174 = vpop.f32.mrf.mxu0
    %3175 = vmatprep.mubr.bf16.mxu0 0
    %3176 = vmatmul.mubr.bf16.gmra.mxu0 %v2523
    %v3177 = vpop.f32.mrf.mxu0
    %v3178 = vadd.f32 %v3065, %v3177
    %v3179 = vpop.f32.mrf.mxu0
    %v3180 = vpop.f32.mrf.mxu0
    %v3181 = vadd.f32 %v3068, %v3180
    %v3182 = vpop.f32.mrf.mxu0
    %3183 = vmatprep.mubr.bf16.mxu0 0
    %3184 = vmatmul.mubr.bf16.gmra.mxu0 %v2526
    %v3185 = vpop.f32.mrf.mxu0
    %v3186 = vadd.f32 %v3073, %v3185
    %v3187 = vpop.f32.mrf.mxu0
    %v3188 = vpop.f32.mrf.mxu0
    %v3189 = vadd.f32 %v3076, %v3188
    %v3190 = vpop.f32.mrf.mxu0
    %3191 = vmatprep.mubr.bf16.mxu0 0
    %3192 = vmatmul.mubr.bf16.gmra.mxu0 %v2529
    %v3193 = vpop.f32.mrf.mxu0
    %v3194 = vadd.f32 %v3081, %v3193
    %v3195 = vpop.f32.mrf.mxu0
    %v3196 = vpop.f32.mrf.mxu0
    %v3197 = vadd.f32 %v3084, %v3196
    %v3198 = vpop.f32.mrf.mxu0
    %3199 = vdwg.mxu0
    %v3201 = vsel %vm2233, %v2465, 0
    %v3204 = vsel %vm2233, %v2466, 0
    %v3207 = vsel %vm2233, %v2467, 0
    %v3210 = vsel %vm2233, %v2468, 0
    %v3213 = vsel %vm2233, %v2469, 0
    %v3216 = vsel %vm2233, %v2470, 0
    %v3219 = vsel %vm2233, %v2471, 0
    %v3222 = vsel %vm2233, %v2472, 0
    %v3225 = vsel %vm2233, %v2473, 0
    %v3228 = vsel %vm2233, %v2474, 0
    %3230 = vmatprep.subr.bf16.mxu0 0
    %3231 = vmatpush1.bf16.msra.mxu0 0
    %3232 = vmatprep.subr.bf16.mxu0 0
    %3233 = vmatpush1.bf16.msra.mxu0 0
    %3234 = vmatprep.subr.bf16.mxu0 0
    %3235 = vmatpush1.bf16.msra.mxu0 0
    %3236 = vmatprep.subr.bf16.mxu0 0
    %3237 = vmatpush1.bf16.msra.mxu0 0
    %3238 = vmatprep.subr.bf16.mxu0 0
    %3239 = vmatpush1.bf16.msra.mxu0 0
    %3240 = vmatprep.subr.bf16.mxu0 0
    %3241 = vmatpush1.bf16.msra.mxu0 0
    %3242 = vmatprep.subr.bf16.mxu0 0
    %3243 = vmatpush1.bf16.msra.mxu0 %v2808
    %3244 = vmatprep.subr.bf16.mxu0 0
    %3245 = vmatpush1.bf16.msra.mxu0 %v2807
    %3246 = vmatprep.subr.bf16.mxu0 0
    %3247 = vmatpush2.bf16.msra.mxu0 0
    %3248 = vmatprep.subr.bf16.mxu0 0
    %3249 = vmatpush2.bf16.msra.mxu0 0
    %3250 = vmatprep.subr.bf16.mxu0 0
    %3251 = vmatpush2.bf16.msra.mxu0 0
    %3252 = vmatprep.subr.bf16.mxu0 0
    %3253 = vmatpush2.bf16.msra.mxu0 0
    %3254 = vmatprep.subr.bf16.mxu0 0
    %3255 = vmatpush2.bf16.msra.mxu0 0
    %3256 = vmatprep.subr.bf16.mxu0 0
    %3257 = vmatpush2.bf16.msra.mxu0 0
    %3258 = vmatprep.subr.bf16.mxu0 0
    %3259 = vmatpush2.bf16.msra.mxu0 0
    %3260 = vmatprep.subr.bf16.mxu0 0
    %3261 = vmatpush2.bf16.msra.mxu0 0
    %3262 = vmatprep.mubr.bf16.mxu0 0
    %3263 = vmatmul.mubr.bf16.gmra.mxu0 %v3201
    %v3264 = vpop.f32.mrf.mxu0
    %v3265 = vadd.f32 0.0, %v3264
    %v3266 = vpop.f32.mrf.mxu0
    %v3267 = vpop.f32.mrf.mxu0
    %v3268 = vadd.f32 0.0, %v3267
    %v3269 = vpop.f32.mrf.mxu0
    %3270 = vmatprep.mubr.bf16.mxu0 0
    %3271 = vmatmul.mubr.bf16.gmra.mxu0 %v3204
    %v3272 = vpop.f32.mrf.mxu0
    %v3273 = vadd.f32 0.0, %v3272
    %v3274 = vpop.f32.mrf.mxu0
    %v3275 = vpop.f32.mrf.mxu0
    %v3276 = vadd.f32 0.0, %v3275
    %v3277 = vpop.f32.mrf.mxu0
    %3278 = vmatprep.mubr.bf16.mxu0 0
    %3279 = vmatmul.mubr.bf16.gmra.mxu0 %v3207
    %v3280 = vpop.f32.mrf.mxu0
    %v3281 = vadd.f32 0.0, %v3280
    %v3282 = vpop.f32.mrf.mxu0
    %v3283 = vpop.f32.mrf.mxu0
    %v3284 = vadd.f32 0.0, %v3283
    %v3285 = vpop.f32.mrf.mxu0
    %3286 = vmatprep.mubr.bf16.mxu0 0
    %3287 = vmatmul.mubr.bf16.gmra.mxu0 %v3210
    %v3288 = vpop.f32.mrf.mxu0
    %v3289 = vadd.f32 0.0, %v3288
    %v3290 = vpop.f32.mrf.mxu0
    %v3291 = vpop.f32.mrf.mxu0
    %v3292 = vadd.f32 0.0, %v3291
    %v3293 = vpop.f32.mrf.mxu0
    %3294 = vmatprep.mubr.bf16.mxu0 0
    %3295 = vmatmul.mubr.bf16.gmra.mxu0 %v3213
    %v3296 = vpop.f32.mrf.mxu0
    %v3297 = vadd.f32 0.0, %v3296
    %v3298 = vpop.f32.mrf.mxu0
    %v3299 = vpop.f32.mrf.mxu0
    %v3300 = vadd.f32 0.0, %v3299
    %v3301 = vpop.f32.mrf.mxu0
    %3302 = vmatprep.mubr.bf16.mxu0 0
    %3303 = vmatmul.mubr.bf16.gmra.mxu0 %v3216
    %v3304 = vpop.f32.mrf.mxu0
    %v3305 = vadd.f32 0.0, %v3304
    %v3306 = vpop.f32.mrf.mxu0
    %v3307 = vpop.f32.mrf.mxu0
    %v3308 = vadd.f32 0.0, %v3307
    %v3309 = vpop.f32.mrf.mxu0
    %3310 = vmatprep.mubr.bf16.mxu0 0
    %3311 = vmatmul.mubr.bf16.gmra.mxu0 %v3219
    %v3312 = vpop.f32.mrf.mxu0
    %v3313 = vadd.f32 0.0, %v3312
    %v3314 = vpop.f32.mrf.mxu0
    %v3315 = vpop.f32.mrf.mxu0
    %v3316 = vadd.f32 0.0, %v3315
    %v3317 = vpop.f32.mrf.mxu0
    %3318 = vmatprep.mubr.bf16.mxu0 0
    %3319 = vmatmul.mubr.bf16.gmra.mxu0 %v3222
    %v3320 = vpop.f32.mrf.mxu0
    %v3321 = vadd.f32 0.0, %v3320
    %v3322 = vpop.f32.mrf.mxu0
    %v3323 = vpop.f32.mrf.mxu0
    %v3324 = vadd.f32 0.0, %v3323
    %v3325 = vpop.f32.mrf.mxu0
    %3326 = vmatprep.mubr.bf16.mxu0 0
    %3327 = vmatmul.mubr.bf16.gmra.mxu0 %v3225
    %v3328 = vpop.f32.mrf.mxu0
    %v3329 = vadd.f32 0.0, %v3328
    %v3330 = vpop.f32.mrf.mxu0
    %v3331 = vpop.f32.mrf.mxu0
    %v3332 = vadd.f32 0.0, %v3331
    %v3333 = vpop.f32.mrf.mxu0
    %3334 = vmatprep.mubr.bf16.mxu0 0
    %3335 = vmatmul.mubr.bf16.gmra.mxu0 %v3228
    %v3336 = vpop.f32.mrf.mxu0
    %v3337 = vadd.f32 0.0, %v3336
    %v3338 = vpop.f32.mrf.mxu0
    %v3339 = vpop.f32.mrf.mxu0
    %v3340 = vadd.f32 0.0, %v3339
    %v3341 = vpop.f32.mrf.mxu0
    %3342 = vdwg.mxu0
    %v3343 = vadd.f32 %v3122, %v3265
    %v3344 = vadd.f32 %v3125, %v3268
    %v3345 = vadd.f32 %v3130, %v3273
    %v3346 = vadd.f32 %v3133, %v3276
    %v3347 = vadd.f32 %v3138, %v3281
    %v3348 = vadd.f32 %v3141, %v3284
    %v3349 = vadd.f32 %v3146, %v3289
    %v3350 = vadd.f32 %v3149, %v3292
    %v3351 = vadd.f32 %v3154, %v3297
    %v3352 = vadd.f32 %v3157, %v3300
    %v3353 = vadd.f32 %v3162, %v3305
    %v3354 = vadd.f32 %v3165, %v3308
    %v3355 = vadd.f32 %v3170, %v3313
    %v3356 = vadd.f32 %v3173, %v3316
    %v3357 = vadd.f32 %v3178, %v3321
    %v3358 = vadd.f32 %v3181, %v3324
    %v3359 = vadd.f32 %v3186, %v3329
    %v3360 = vadd.f32 %v3189, %v3332
    %v3361 = vadd.f32 %v3194, %v3337
    %v3362 = vadd.f32 %v3197, %v3340
    %v3363 = vmax.f32 %v2954, %v3343
    %v3364 = vmax.f32 %v2955, %v3344
    %v3365 = vmax.f32 %v2956, %v3345
    %v3366 = vmax.f32 %v2957, %v3346
    %v3367 = vmax.f32 %v2958, %v3347
    %v3368 = vmax.f32 %v2959, %v3348
    %v3369 = vmax.f32 %v2960, %v3349
    %v3370 = vmax.f32 %v2961, %v3350
    %v3371 = vmax.f32 %v2962, %v3351
    %v3372 = vmax.f32 %v2963, %v3352
    %v3373 = vmax.f32 %v2964, %v3353
    %v3374 = vmax.f32 %v2965, %v3354
    %v3375 = vmax.f32 %v2966, %v3355
    %v3376 = vmax.f32 %v2967, %v3356
    %v3377 = vmax.f32 %v2968, %v3357
    %v3378 = vmax.f32 %v2969, %v3358
    %v3379 = vmax.f32 %v2970, %v3359
    %v3380 = vmax.f32 %v2971, %v3360
    %v3381 = vmax.f32 %v2972, %v3361
    %v3382 = vmax.f32 %v2973, %v3362
    %v3383 = vld [vmem:[#allocation11] sm:$0x1]
    %v3385 = vlaneseq
    %v3386 = vshrl.u32 %v3385, 7
    %v3387 = vsub.s32 0, %v3386
    %v3388 = vrot.slane %v3383, %v3387
    %v3390 = vadd.f32 %v3363, %v3388
    %v3391 = vadd.f32 %v3364, %v3388
    %v3392 = vadd.f32 %v3365, %v3388
    %v3393 = vadd.f32 %v3366, %v3388
    %v3394 = vadd.f32 %v3367, %v3388
    %v3395 = vadd.f32 %v3368, %v3388
    %v3396 = vadd.f32 %v3369, %v3388
    %v3397 = vadd.f32 %v3370, %v3388
    %v3398 = vadd.f32 %v3371, %v3388
    %v3399 = vadd.f32 %v3372, %v3388
    %v3400 = vadd.f32 %v3373, %v3388
    %v3401 = vadd.f32 %v3374, %v3388
    %v3402 = vadd.f32 %v3375, %v3388
    %v3403 = vadd.f32 %v3376, %v3388
    %v3404 = vadd.f32 %v3377, %v3388
    %v3405 = vadd.f32 %v3378, %v3388
    %v3406 = vadd.f32 %v3379, %v3388
    %v3407 = vadd.f32 %v3380, %v3388
    %v3408 = vadd.f32 %v3381, %v3388
    %v3409 = vadd.f32 %v3382, %v3388
    %v3410 = vmax.f32 %v3390, 0.0
    %v3411 = vmax.f32 %v3391, 0.0
    %v3412 = vmax.f32 %v3392, 0.0
    %v3413 = vmax.f32 %v3393, 0.0
    %v3414 = vmax.f32 %v3394, 0.0
    %v3415 = vmax.f32 %v3395, 0.0
    %v3416 = vmax.f32 %v3396, 0.0
    %v3417 = vmax.f32 %v3397, 0.0
    %v3418 = vmax.f32 %v3398, 0.0
    %v3419 = vmax.f32 %v3399, 0.0
    %v3420 = vmax.f32 %v3400, 0.0
    %v3421 = vmax.f32 %v3401, 0.0
    %v3422 = vmax.f32 %v3402, 0.0
    %v3423 = vmax.f32 %v3403, 0.0
    %v3424 = vmax.f32 %v3404, 0.0
    %v3425 = vmax.f32 %v3405, 0.0
    %v3426 = vmax.f32 %v3406, 0.0
    %v3427 = vmax.f32 %v3407, 0.0
    %v3428 = vmax.f32 %v3408, 0.0
    %v3429 = vmax.f32 %v3409, 0.0
    %vm3430 = vcmask 516096
    %3431 = vst.msk [vmem:[#allocation4] sm:$0x1] %vm3430, 0.0
    %vm3432 = vcmask 523264
    %3433 = vst.msk [vmem:[#allocation4 + $0x1] sm:$0xff] %vm3432, %v3410
    %3434 = vst.msk [vmem:[#allocation4 + $0x9] sm:$0xff] %vm3432, %v3411
    %3435 = vst.msk [vmem:[#allocation4 + $0x11] sm:$0xff] %vm3432, %v3412
    %3436 = vst.msk [vmem:[#allocation4 + $0x19] sm:$0xff] %vm3432, %v3413
    %3437 = vst.msk [vmem:[#allocation4 + $0x21] sm:$0xff] %vm3432, %v3414
    %3438 = vst.msk [vmem:[#allocation4 + $0x29] sm:$0xff] %vm3432, %v3415
    %3439 = vst.msk [vmem:[#allocation4 + $0x31] sm:$0xff] %vm3432, %v3416
    %3440 = vst.msk [vmem:[#allocation4 + $0x39] sm:$0xff] %vm3432, %v3417
    %3441 = vst.msk [vmem:[#allocation4 + $0x41] sm:$0xff] %vm3432, %v3418
    %vm3442 = vcmask 518144
    %3443 = vst.msk [vmem:[#allocation4 + $0x49] sm:$0x7] %vm3442, %v3419
    %3444 = vst.msk [vmem:[#allocation4 + $0x50] sm:$0x1] %vm3430, 0.0
    %3445 = vst.msk [vmem:[#allocation4 + $0x51] sm:$0xff] %vm3432, %v3420
    %3446 = vst.msk [vmem:[#allocation4 + $0x59] sm:$0xff] %vm3432, %v3421
    %3447 = vst.msk [vmem:[#allocation4 + $0x61] sm:$0xff] %vm3432, %v3422
    %3448 = vst.msk [vmem:[#allocation4 + $0x69] sm:$0xff] %vm3432, %v3423
    %3449 = vst.msk [vmem:[#allocation4 + $0x71] sm:$0xff] %vm3432, %v3424
    %3450 = vst.msk [vmem:[#allocation4 + $0x79] sm:$0xff] %vm3432, %v3425
    %3451 = vst.msk [vmem:[#allocation4 + $0x81] sm:$0xff] %vm3432, %v3426
    %3452 = vst.msk [vmem:[#allocation4 + $0x89] sm:$0xff] %vm3432, %v3427
    %3453 = vst.msk [vmem:[#allocation4 + $0x91] sm:$0xff] %vm3432, %v3428
    %3454 = vst.msk [vmem:[#allocation4 + $0x99] sm:$0x7] %vm3442, %v3429
    %v3455 = vld [vmem:[#allocation4] ss:$2 sm:$0xff]
    %s3456 = scalar_lea.vmem [#allocation4], 16
    %v3457 = vld [vmem:[%s3456] ss:$2 sm:$0xff]
    %s3458 = scalar_lea.vmem [#allocation4], 32
    %v3459 = vld [vmem:[%s3458] ss:$2 sm:$0xff]
    %s3460 = scalar_lea.vmem [#allocation4], 48
    %v3461 = vld [vmem:[%s3460] ss:$2 sm:$0xff]
    %s3462 = scalar_lea.vmem [#allocation4], 64
    %v3463 = vld [vmem:[%s3462] ss:$2 sm:$0xff]
    %s3464 = scalar_lea.vmem [#allocation4], 80
    %v3465 = vld [vmem:[%s3464] ss:$2 sm:$0xff]
    %s3466 = scalar_lea.vmem [#allocation4], 96
    %v3467 = vld [vmem:[%s3466] ss:$2 sm:$0xff]
    %s3468 = scalar_lea.vmem [#allocation4], 112
    %v3469 = vld [vmem:[%s3468] ss:$2 sm:$0xff]
    %s3470 = scalar_lea.vmem [#allocation4], 128
    %v3471 = vld [vmem:[%s3470] ss:$2 sm:$0xff]
    %s3472 = scalar_lea.vmem [#allocation4], 144
    %v3473 = vld [vmem:[%s3472] ss:$2 sm:$0xff]
    %v3474 = vpack.c.bf16 %v3457, %v3455
    %v3475 = vpack.c.bf16 %v3461, %v3459
    %v3476 = vpack.c.bf16 %v3465, %v3463
    %v3477 = vpack.c.bf16 %v3469, %v3467
    %v3478 = vpack.c.bf16 %v3473, %v3471
    %s3479 = scalar_lea.vmem [#allocation4], 1
    %v3480 = vld [vmem:[%s3479] ss:$2 sm:$0xff]
    %s3481 = scalar_lea.vmem [#allocation4], 17
    %v3482 = vld [vmem:[%s3481] ss:$2 sm:$0xff]
    %s3483 = scalar_lea.vmem [#allocation4], 33
    %v3484 = vld [vmem:[%s3483] ss:$2 sm:$0xff]
    %s3485 = scalar_lea.vmem [#allocation4], 49
    %v3486 = vld [vmem:[%s3485] ss:$2 sm:$0xff]
    %s3487 = scalar_lea.vmem [#allocation4], 65
    %v3488 = vld [vmem:[%s3487] ss:$2 sm:$0xff]
    %s3489 = scalar_lea.vmem [#allocation4], 81
    %v3490 = vld [vmem:[%s3489] ss:$2 sm:$0xff]
    %s3491 = scalar_lea.vmem [#allocation4], 97
    %v3492 = vld [vmem:[%s3491] ss:$2 sm:$0xff]
    %s3493 = scalar_lea.vmem [#allocation4], 113
    %v3494 = vld [vmem:[%s3493] ss:$2 sm:$0xff]
    %s3495 = scalar_lea.vmem [#allocation4], 129
    %v3496 = vld [vmem:[%s3495] ss:$2 sm:$0xff]
    %s3497 = scalar_lea.vmem [#allocation4], 145
    %v3498 = vld [vmem:[%s3497] ss:$2 sm:$0xff]
    %v3499 = vpack.c.bf16 %v3482, %v3480
    %v3500 = vpack.c.bf16 %v3486, %v3484
    %v3501 = vpack.c.bf16 %v3490, %v3488
    %v3502 = vpack.c.bf16 %v3494, %v3492
    %v3503 = vpack.c.bf16 %v3498, %v3496
    %s3504 = scalar_lea.vmem [#allocation4], 2
    %v3505 = vld [vmem:[%s3504] ss:$2 sm:$0xff]
    %s3506 = scalar_lea.vmem [#allocation4], 18
    %v3507 = vld [vmem:[%s3506] ss:$2 sm:$0xff]
    %s3508 = scalar_lea.vmem [#allocation4], 34
    %v3509 = vld [vmem:[%s3508] ss:$2 sm:$0xff]
    %s3510 = scalar_lea.vmem [#allocation4], 50
    %v3511 = vld [vmem:[%s3510] ss:$2 sm:$0xff]
    %s3512 = scalar_lea.vmem [#allocation4], 66
    %v3513 = vld [vmem:[%s3512] ss:$2 sm:$0xff]
    %s3514 = scalar_lea.vmem [#allocation4], 82
    %v3515 = vld [vmem:[%s3514] ss:$2 sm:$0xff]
    %s3516 = scalar_lea.vmem [#allocation4], 98
    %v3517 = vld [vmem:[%s3516] ss:$2 sm:$0xff]
    %s3518 = scalar_lea.vmem [#allocation4], 114
    %v3519 = vld [vmem:[%s3518] ss:$2 sm:$0xff]
    %s3520 = scalar_lea.vmem [#allocation4], 130
    %v3521 = vld [vmem:[%s3520] ss:$2 sm:$0xff]
    %s3522 = scalar_lea.vmem [#allocation4], 146
    %v3523 = vld [vmem:[%s3522] ss:$2 sm:$0xff]
    %v3524 = vpack.c.bf16 %v3507, %v3505
    %v3525 = vpack.c.bf16 %v3511, %v3509
    %v3526 = vpack.c.bf16 %v3515, %v3513
    %v3527 = vpack.c.bf16 %v3519, %v3517
    %v3528 = vpack.c.bf16 %v3523, %v3521
    %s3529 = scalar_lea.vmem [#allocation4], 3
    %v3530 = vld [vmem:[%s3529] ss:$2 sm:$0xff]
    %s3531 = scalar_lea.vmem [#allocation4], 19
    %v3532 = vld [vmem:[%s3531] ss:$2 sm:$0xff]
    %s3533 = scalar_lea.vmem [#allocation4], 35
    %v3534 = vld [vmem:[%s3533] ss:$2 sm:$0xff]
    %s3535 = scalar_lea.vmem [#allocation4], 51
    %v3536 = vld [vmem:[%s3535] ss:$2 sm:$0xff]
    %s3537 = scalar_lea.vmem [#allocation4], 67
    %v3538 = vld [vmem:[%s3537] ss:$2 sm:$0xff]
    %s3539 = scalar_lea.vmem [#allocation4], 83
    %v3540 = vld [vmem:[%s3539] ss:$2 sm:$0xff]
    %s3541 = scalar_lea.vmem [#allocation4], 99
    %v3542 = vld [vmem:[%s3541] ss:$2 sm:$0xff]
    %s3543 = scalar_lea.vmem [#allocation4], 115
    %v3544 = vld [vmem:[%s3543] ss:$2 sm:$0xff]
    %s3545 = scalar_lea.vmem [#allocation4], 131
    %v3546 = vld [vmem:[%s3545] ss:$2 sm:$0xff]
    %s3547 = scalar_lea.vmem [#allocation4], 147
    %v3548 = vld [vmem:[%s3547] ss:$2 sm:$0xff]
    %v3549 = vpack.c.bf16 %v3532, %v3530
    %v3550 = vpack.c.bf16 %v3536, %v3534
    %v3551 = vpack.c.bf16 %v3540, %v3538
    %v3552 = vpack.c.bf16 %v3544, %v3542
    %v3553 = vpack.c.bf16 %v3548, %v3546
    %v3554 = vld [vmem:[#allocation12] sm:$0xf]
    %v3555 = vld [vmem:[#allocation12 + $0x4] sm:$0xf]
    %v3556 = vld [vmem:[#allocation12 + $0x8] sm:$0xf]
    %v3557 = vld [vmem:[#allocation12 + $0xc] sm:$0xf]
    %v3558 = vld [vmem:[#allocation12 + $0x10] sm:$0xf]
    %v3559 = vld [vmem:[#allocation12 + $0x14] sm:$0xf]
    %v3560 = vld [vmem:[#allocation12 + $0x18] sm:$0xf]
    %v3561 = vld [vmem:[#allocation12 + $0x1c] sm:$0xf]
    %s3562 = scalar_lea.vmem [#allocation12], 32
    %v3563 = vld [vmem:[%s3562] sm:$0xf]
    %v3564 = vld [vmem:[%s3562 + $0x4] sm:$0xf]
    %v3565 = vld [vmem:[%s3562 + $0x8] sm:$0xf]
    %v3566 = vld [vmem:[%s3562 + $0xc] sm:$0xf]
    %v3567 = vld [vmem:[%s3562 + $0x10] sm:$0xf]
    %v3568 = vld [vmem:[%s3562 + $0x14] sm:$0xf]
    %v3569 = vld [vmem:[%s3562 + $0x18] sm:$0xf]
    %v3570 = vld [vmem:[%s3562 + $0x1c] sm:$0xf]
    %s3571 = scalar_lea.vmem [#allocation12], 64
    %v3572 = vld [vmem:[%s3571] sm:$0xf]
    %v3573 = vld [vmem:[%s3571 + $0x4] sm:$0xf]
    %v3574 = vld [vmem:[%s3571 + $0x8] sm:$0xf]
    %v3575 = vld [vmem:[%s3571 + $0xc] sm:$0xf]
    %v3576 = vld [vmem:[%s3571 + $0x10] sm:$0xf]
    %v3577 = vld [vmem:[%s3571 + $0x14] sm:$0xf]
    %v3578 = vld [vmem:[%s3571 + $0x18] sm:$0xf]
    %v3579 = vld [vmem:[%s3571 + $0x1c] sm:$0xf]
    %v3588 = vunpack.c.l.b16 %v3563
    %v3589 = vunpack.c.l.b16 %v3564
    %v3590 = vunpack.c.l.b16 %v3565
    %v3591 = vunpack.c.l.b16 %v3566
    %v3592 = vunpack.c.l.b16 %v3567
    %v3593 = vunpack.c.l.b16 %v3568
    %v3594 = vunpack.c.l.b16 %v3569
    %v3595 = vunpack.c.l.b16 %v3570
    %v3596 = vpack.c.b16 %v3589, %v3588
    %v3597 = vpack.c.b16 %v3591, %v3590
    %v3598 = vpack.c.b16 %v3593, %v3592
    %v3599 = vpack.c.b16 %v3595, %v3594
    %v3605 = vsel %vm3432, %v3499, 0
    %v3608 = vsel %vm3432, %v3500, 0
    %v3611 = vsel %vm3432, %v3501, 0
    %v3614 = vsel %vm3432, %v3502, 0
    %v3617 = vsel %vm3432, %v3503, 0
    %3619 = vmatprep.subr.bf16.mxu0 0
    %3620 = vmatpush1.bf16.msra.mxu0 0
    %3621 = vmatprep.subr.bf16.mxu0 0
    %3622 = vmatpush1.bf16.msra.mxu0 0
    %3623 = vmatprep.subr.bf16.mxu0 0
    %3624 = vmatpush1.bf16.msra.mxu0 0
    %3625 = vmatprep.subr.bf16.mxu0 0
    %3626 = vmatpush1.bf16.msra.mxu0 0
    %3627 = vmatprep.subr.bf16.mxu0 0
    %3628 = vmatpush1.bf16.msra.mxu0 %v3599
    %3629 = vmatprep.subr.bf16.mxu0 0
    %3630 = vmatpush1.bf16.msra.mxu0 %v3598
    %3631 = vmatprep.subr.bf16.mxu0 0
    %3632 = vmatpush1.bf16.msra.mxu0 %v3597
    %3633 = vmatprep.subr.bf16.mxu0 0
    %3634 = vmatpush1.bf16.msra.mxu0 %v3596
    %3635 = vmatprep.subr.bf16.mxu0 0
    %3636 = vmatpush2.bf16.msra.mxu0 0
    %3637 = vmatprep.subr.bf16.mxu0 0
    %3638 = vmatpush2.bf16.msra.mxu0 0
    %3639 = vmatprep.subr.bf16.mxu0 0
    %3640 = vmatpush2.bf16.msra.mxu0 0
    %3641 = vmatprep.subr.bf16.mxu0 0
    %3642 = vmatpush2.bf16.msra.mxu0 0
    %3643 = vmatprep.subr.bf16.mxu0 0
    %3644 = vmatpush2.bf16.msra.mxu0 0
    %3645 = vmatprep.subr.bf16.mxu0 0
    %3646 = vmatpush2.bf16.msra.mxu0 0
    %3647 = vmatprep.subr.bf16.mxu0 0
    %3648 = vmatpush2.bf16.msra.mxu0 0
    %3649 = vmatprep.subr.bf16.mxu0 0
    %3650 = vmatpush2.bf16.msra.mxu0 0
    %3651 = vmatprep.mubr.bf16.mxu0 0
    %3652 = vmatmul.mubr.bf16.gmra.mxu0 %v3605
    %v3653 = vpop.f32.mrf.mxu0
    %v3654 = vadd.f32 0.0, %v3653
    %v3655 = vpop.f32.mrf.mxu0
    %v3656 = vpop.f32.mrf.mxu0
    %v3657 = vadd.f32 0.0, %v3656
    %v3658 = vpop.f32.mrf.mxu0
    %3659 = vmatprep.mubr.bf16.mxu0 0
    %3660 = vmatmul.mubr.bf16.gmra.mxu0 %v3608
    %v3661 = vpop.f32.mrf.mxu0
    %v3662 = vadd.f32 0.0, %v3661
    %v3663 = vpop.f32.mrf.mxu0
    %v3664 = vpop.f32.mrf.mxu0
    %v3665 = vadd.f32 0.0, %v3664
    %v3666 = vpop.f32.mrf.mxu0
    %3667 = vmatprep.mubr.bf16.mxu0 0
    %3668 = vmatmul.mubr.bf16.gmra.mxu0 %v3611
    %v3669 = vpop.f32.mrf.mxu0
    %v3670 = vadd.f32 0.0, %v3669
    %v3671 = vpop.f32.mrf.mxu0
    %v3672 = vpop.f32.mrf.mxu0
    %v3673 = vadd.f32 0.0, %v3672
    %v3674 = vpop.f32.mrf.mxu0
    %3675 = vmatprep.mubr.bf16.mxu0 0
    %3676 = vmatmul.mubr.bf16.gmra.mxu0 %v3614
    %v3677 = vpop.f32.mrf.mxu0
    %v3678 = vadd.f32 0.0, %v3677
    %v3679 = vpop.f32.mrf.mxu0
    %v3680 = vpop.f32.mrf.mxu0
    %v3681 = vadd.f32 0.0, %v3680
    %v3682 = vpop.f32.mrf.mxu0
    %3683 = vmatprep.mubr.bf16.mxu0 0
    %3684 = vmatmul.mubr.bf16.gmra.mxu0 %v3617
    %v3685 = vpop.f32.mrf.mxu0
    %v3686 = vadd.f32 0.0, %v3685
    %v3687 = vpop.f32.mrf.mxu0
    %v3688 = vpop.f32.mrf.mxu0
    %v3689 = vadd.f32 0.0, %v3688
    %v3690 = vpop.f32.mrf.mxu0
    %3691 = vdwg.mxu0
    %v3700 = vunpack.c.l.b16 %v3554
    %v3701 = vunpack.c.l.b16 %v3555
    %v3702 = vunpack.c.l.b16 %v3556
    %v3703 = vunpack.c.l.b16 %v3557
    %v3704 = vunpack.c.l.b16 %v3558
    %v3705 = vunpack.c.l.b16 %v3559
    %v3706 = vunpack.c.l.b16 %v3560
    %v3707 = vunpack.c.l.b16 %v3561
    %v3708 = vpack.c.b16 %v3701, %v3700
    %v3709 = vpack.c.b16 %v3703, %v3702
    %v3710 = vpack.c.b16 %v3705, %v3704
    %v3711 = vpack.c.b16 %v3707, %v3706
    %v3717 = vsel %vm3432, %v3474, 0
    %v3720 = vsel %vm3432, %v3475, 0
    %v3723 = vsel %vm3432, %v3476, 0
    %v3726 = vsel %vm3432, %v3477, 0
    %v3729 = vsel %vm3432, %v3478, 0
    %3731 = vmatprep.subr.bf16.mxu0 0
    %3732 = vmatpush1.bf16.msra.mxu0 0
    %3733 = vmatprep.subr.bf16.mxu0 0
    %3734 = vmatpush1.bf16.msra.mxu0 0
    %3735 = vmatprep.subr.bf16.mxu0 0
    %3736 = vmatpush1.bf16.msra.mxu0 0
    %3737 = vmatprep.subr.bf16.mxu0 0
    %3738 = vmatpush1.bf16.msra.mxu0 0
    %3739 = vmatprep.subr.bf16.mxu0 0
    %3740 = vmatpush1.bf16.msra.mxu0 %v3711
    %3741 = vmatprep.subr.bf16.mxu0 0
    %3742 = vmatpush1.bf16.msra.mxu0 %v3710
    %3743 = vmatprep.subr.bf16.mxu0 0
    %3744 = vmatpush1.bf16.msra.mxu0 %v3709
    %3745 = vmatprep.subr.bf16.mxu0 0
    %3746 = vmatpush1.bf16.msra.mxu0 %v3708
    %3747 = vmatprep.subr.bf16.mxu0 0
    %3748 = vmatpush2.bf16.msra.mxu0 0
    %3749 = vmatprep.subr.bf16.mxu0 0
    %3750 = vmatpush2.bf16.msra.mxu0 0
    %3751 = vmatprep.subr.bf16.mxu0 0
    %3752 = vmatpush2.bf16.msra.mxu0 0
    %3753 = vmatprep.subr.bf16.mxu0 0
    %3754 = vmatpush2.bf16.msra.mxu0 0
    %3755 = vmatprep.subr.bf16.mxu0 0
    %3756 = vmatpush2.bf16.msra.mxu0 0
    %3757 = vmatprep.subr.bf16.mxu0 0
    %3758 = vmatpush2.bf16.msra.mxu0 0
    %3759 = vmatprep.subr.bf16.mxu0 0
    %3760 = vmatpush2.bf16.msra.mxu0 0
    %3761 = vmatprep.subr.bf16.mxu0 0
    %3762 = vmatpush2.bf16.msra.mxu0 0
    %3763 = vmatprep.mubr.bf16.mxu0 0
    %3764 = vmatmul.mubr.bf16.gmra.mxu0 %v3717
    %v3765 = vpop.f32.mrf.mxu0
    %v3766 = vadd.f32 %v3654, %v3765
    %v3767 = vpop.f32.mrf.mxu0
    %v3768 = vpop.f32.mrf.mxu0
    %v3769 = vadd.f32 %v3657, %v3768
    %v3770 = vpop.f32.mrf.mxu0
    %3771 = vmatprep.mubr.bf16.mxu0 0
    %3772 = vmatmul.mubr.bf16.gmra.mxu0 %v3720
    %v3773 = vpop.f32.mrf.mxu0
    %v3774 = vadd.f32 %v3662, %v3773
    %v3775 = vpop.f32.mrf.mxu0
    %v3776 = vpop.f32.mrf.mxu0
    %v3777 = vadd.f32 %v3665, %v3776
    %v3778 = vpop.f32.mrf.mxu0
    %3779 = vmatprep.mubr.bf16.mxu0 0
    %3780 = vmatmul.mubr.bf16.gmra.mxu0 %v3723
    %v3781 = vpop.f32.mrf.mxu0
    %v3782 = vadd.f32 %v3670, %v3781
    %v3783 = vpop.f32.mrf.mxu0
    %v3784 = vpop.f32.mrf.mxu0
    %v3785 = vadd.f32 %v3673, %v3784
    %v3786 = vpop.f32.mrf.mxu0
    %3787 = vmatprep.mubr.bf16.mxu0 0
    %3788 = vmatmul.mubr.bf16.gmra.mxu0 %v3726
    %v3789 = vpop.f32.mrf.mxu0
    %v3790 = vadd.f32 %v3678, %v3789
    %v3791 = vpop.f32.mrf.mxu0
    %v3792 = vpop.f32.mrf.mxu0
    %v3793 = vadd.f32 %v3681, %v3792
    %v3794 = vpop.f32.mrf.mxu0
    %3795 = vmatprep.mubr.bf16.mxu0 0
    %3796 = vmatmul.mubr.bf16.gmra.mxu0 %v3729
    %v3797 = vpop.f32.mrf.mxu0
    %v3798 = vadd.f32 %v3686, %v3797
    %v3799 = vpop.f32.mrf.mxu0
    %v3800 = vpop.f32.mrf.mxu0
    %v3801 = vadd.f32 %v3689, %v3800
    %v3802 = vpop.f32.mrf.mxu0
    %3803 = vdwg.mxu0
    %v3812 = vunpack.c.l.b16 %v3572
    %v3813 = vunpack.c.l.b16 %v3573
    %v3814 = vunpack.c.l.b16 %v3574
    %v3815 = vunpack.c.l.b16 %v3575
    %v3816 = vunpack.c.l.b16 %v3576
    %v3817 = vunpack.c.l.b16 %v3577
    %v3818 = vunpack.c.l.b16 %v3578
    %v3819 = vunpack.c.l.b16 %v3579
    %v3820 = vpack.c.b16 %v3813, %v3812
    %v3821 = vpack.c.b16 %v3815, %v3814
    %v3822 = vpack.c.b16 %v3817, %v3816
    %v3823 = vpack.c.b16 %v3819, %v3818
    %v3829 = vsel %vm3432, %v3524, 0
    %v3832 = vsel %vm3432, %v3525, 0
    %v3835 = vsel %vm3432, %v3526, 0
    %v3838 = vsel %vm3432, %v3527, 0
    %v3841 = vsel %vm3432, %v3528, 0
    %3843 = vmatprep.subr.bf16.mxu0 0
    %3844 = vmatpush1.bf16.msra.mxu0 0
    %3845 = vmatprep.subr.bf16.mxu0 0
    %3846 = vmatpush1.bf16.msra.mxu0 0
    %3847 = vmatprep.subr.bf16.mxu0 0
    %3848 = vmatpush1.bf16.msra.mxu0 0
    %3849 = vmatprep.subr.bf16.mxu0 0
    %3850 = vmatpush1.bf16.msra.mxu0 0
    %3851 = vmatprep.subr.bf16.mxu0 0
    %3852 = vmatpush1.bf16.msra.mxu0 %v3823
    %3853 = vmatprep.subr.bf16.mxu0 0
    %3854 = vmatpush1.bf16.msra.mxu0 %v3822
    %3855 = vmatprep.subr.bf16.mxu0 0
    %3856 = vmatpush1.bf16.msra.mxu0 %v3821
    %3857 = vmatprep.subr.bf16.mxu0 0
    %3858 = vmatpush1.bf16.msra.mxu0 %v3820
    %3859 = vmatprep.subr.bf16.mxu0 0
    %3860 = vmatpush2.bf16.msra.mxu0 0
    %3861 = vmatprep.subr.bf16.mxu0 0
    %3862 = vmatpush2.bf16.msra.mxu0 0
    %3863 = vmatprep.subr.bf16.mxu0 0
    %3864 = vmatpush2.bf16.msra.mxu0 0
    %3865 = vmatprep.subr.bf16.mxu0 0
    %3866 = vmatpush2.bf16.msra.mxu0 0
    %3867 = vmatprep.subr.bf16.mxu0 0
    %3868 = vmatpush2.bf16.msra.mxu0 0
    %3869 = vmatprep.subr.bf16.mxu0 0
    %3870 = vmatpush2.bf16.msra.mxu0 0
    %3871 = vmatprep.subr.bf16.mxu0 0
    %3872 = vmatpush2.bf16.msra.mxu0 0
    %3873 = vmatprep.subr.bf16.mxu0 0
    %3874 = vmatpush2.bf16.msra.mxu0 0
    %3875 = vmatprep.mubr.bf16.mxu0 0
    %3876 = vmatmul.mubr.bf16.gmra.mxu0 %v3829
    %v3877 = vpop.f32.mrf.mxu0
    %v3878 = vadd.f32 0.0, %v3877
    %v3879 = vpop.f32.mrf.mxu0
    %v3880 = vpop.f32.mrf.mxu0
    %v3881 = vadd.f32 0.0, %v3880
    %v3882 = vpop.f32.mrf.mxu0
    %3883 = vmatprep.mubr.bf16.mxu0 0
    %3884 = vmatmul.mubr.bf16.gmra.mxu0 %v3832
    %v3885 = vpop.f32.mrf.mxu0
    %v3886 = vadd.f32 0.0, %v3885
    %v3887 = vpop.f32.mrf.mxu0
    %v3888 = vpop.f32.mrf.mxu0
    %v3889 = vadd.f32 0.0, %v3888
    %v3890 = vpop.f32.mrf.mxu0
    %3891 = vmatprep.mubr.bf16.mxu0 0
    %3892 = vmatmul.mubr.bf16.gmra.mxu0 %v3835
    %v3893 = vpop.f32.mrf.mxu0
    %v3894 = vadd.f32 0.0, %v3893
    %v3895 = vpop.f32.mrf.mxu0
    %v3896 = vpop.f32.mrf.mxu0
    %v3897 = vadd.f32 0.0, %v3896
    %v3898 = vpop.f32.mrf.mxu0
    %3899 = vmatprep.mubr.bf16.mxu0 0
    %3900 = vmatmul.mubr.bf16.gmra.mxu0 %v3838
    %v3901 = vpop.f32.mrf.mxu0
    %v3902 = vadd.f32 0.0, %v3901
    %v3903 = vpop.f32.mrf.mxu0
    %v3904 = vpop.f32.mrf.mxu0
    %v3905 = vadd.f32 0.0, %v3904
    %v3906 = vpop.f32.mrf.mxu0
    %3907 = vmatprep.mubr.bf16.mxu0 0
    %3908 = vmatmul.mubr.bf16.gmra.mxu0 %v3841
    %v3909 = vpop.f32.mrf.mxu0
    %v3910 = vadd.f32 0.0, %v3909
    %v3911 = vpop.f32.mrf.mxu0
    %v3912 = vpop.f32.mrf.mxu0
    %v3913 = vadd.f32 0.0, %v3912
    %v3914 = vpop.f32.mrf.mxu0
    %3915 = vdwg.mxu0
    %v3916 = vadd.f32 %v3766, %v3878
    %v3917 = vadd.f32 %v3769, %v3881
    %v3918 = vadd.f32 %v3774, %v3886
    %v3919 = vadd.f32 %v3777, %v3889
    %v3920 = vadd.f32 %v3782, %v3894
    %v3921 = vadd.f32 %v3785, %v3897
    %v3922 = vadd.f32 %v3790, %v3902
    %v3923 = vadd.f32 %v3793, %v3905
    %v3924 = vadd.f32 %v3798, %v3910
    %v3925 = vadd.f32 %v3801, %v3913
    %3926 = vmatprep.subr.bf16.mxu0 0
    %3927 = vmatpush1.bf16.msra.mxu0 0
    %3928 = vmatprep.subr.bf16.mxu0 0
    %3929 = vmatpush1.bf16.msra.mxu0 0
    %3930 = vmatprep.subr.bf16.mxu0 0
    %3931 = vmatpush1.bf16.msra.mxu0 0
    %3932 = vmatprep.subr.bf16.mxu0 0
    %3933 = vmatpush1.bf16.msra.mxu0 0
    %3934 = vmatprep.subr.bf16.mxu0 0
    %3935 = vmatpush1.bf16.msra.mxu0 %v3599
    %3936 = vmatprep.subr.bf16.mxu0 0
    %3937 = vmatpush1.bf16.msra.mxu0 %v3598
    %3938 = vmatprep.subr.bf16.mxu0 0
    %3939 = vmatpush1.bf16.msra.mxu0 %v3597
    %3940 = vmatprep.subr.bf16.mxu0 0
    %3941 = vmatpush1.bf16.msra.mxu0 %v3596
    %3942 = vmatprep.subr.bf16.mxu0 0
    %3943 = vmatpush2.bf16.msra.mxu0 0
    %3944 = vmatprep.subr.bf16.mxu0 0
    %3945 = vmatpush2.bf16.msra.mxu0 0
    %3946 = vmatprep.subr.bf16.mxu0 0
    %3947 = vmatpush2.bf16.msra.mxu0 0
    %3948 = vmatprep.subr.bf16.mxu0 0
    %3949 = vmatpush2.bf16.msra.mxu0 0
    %3950 = vmatprep.subr.bf16.mxu0 0
    %3951 = vmatpush2.bf16.msra.mxu0 0
    %3952 = vmatprep.subr.bf16.mxu0 0
    %3953 = vmatpush2.bf16.msra.mxu0 0
    %3954 = vmatprep.subr.bf16.mxu0 0
    %3955 = vmatpush2.bf16.msra.mxu0 0
    %3956 = vmatprep.subr.bf16.mxu0 0
    %3957 = vmatpush2.bf16.msra.mxu0 0
    %3958 = vmatprep.mubr.bf16.mxu0 0
    %3959 = vmatmul.mubr.bf16.gmra.mxu0 %v3829
    %v3960 = vpop.f32.mrf.mxu0
    %v3961 = vadd.f32 0.0, %v3960
    %v3962 = vpop.f32.mrf.mxu0
    %v3963 = vpop.f32.mrf.mxu0
    %v3964 = vadd.f32 0.0, %v3963
    %v3965 = vpop.f32.mrf.mxu0
    %3966 = vmatprep.mubr.bf16.mxu0 0
    %3967 = vmatmul.mubr.bf16.gmra.mxu0 %v3832
    %v3968 = vpop.f32.mrf.mxu0
    %v3969 = vadd.f32 0.0, %v3968
    %v3970 = vpop.f32.mrf.mxu0
    %v3971 = vpop.f32.mrf.mxu0
    %v3972 = vadd.f32 0.0, %v3971
    %v3973 = vpop.f32.mrf.mxu0
    %3974 = vmatprep.mubr.bf16.mxu0 0
    %3975 = vmatmul.mubr.bf16.gmra.mxu0 %v3835
    %v3976 = vpop.f32.mrf.mxu0
    %v3977 = vadd.f32 0.0, %v3976
    %v3978 = vpop.f32.mrf.mxu0
    %v3979 = vpop.f32.mrf.mxu0
    %v3980 = vadd.f32 0.0, %v3979
    %v3981 = vpop.f32.mrf.mxu0
    %3982 = vmatprep.mubr.bf16.mxu0 0
    %3983 = vmatmul.mubr.bf16.gmra.mxu0 %v3838
    %v3984 = vpop.f32.mrf.mxu0
    %v3985 = vadd.f32 0.0, %v3984
    %v3986 = vpop.f32.mrf.mxu0
    %v3987 = vpop.f32.mrf.mxu0
    %v3988 = vadd.f32 0.0, %v3987
    %v3989 = vpop.f32.mrf.mxu0
    %3990 = vmatprep.mubr.bf16.mxu0 0
    %3991 = vmatmul.mubr.bf16.gmra.mxu0 %v3841
    %v3992 = vpop.f32.mrf.mxu0
    %v3993 = vadd.f32 0.0, %v3992
    %v3994 = vpop.f32.mrf.mxu0
    %v3995 = vpop.f32.mrf.mxu0
    %v3996 = vadd.f32 0.0, %v3995
    %v3997 = vpop.f32.mrf.mxu0
    %3998 = vdwg.mxu0
    %3999 = vmatprep.subr.bf16.mxu0 0
    %4000 = vmatpush1.bf16.msra.mxu0 0
    %4001 = vmatprep.subr.bf16.mxu0 0
    %4002 = vmatpush1.bf16.msra.mxu0 0
    %4003 = vmatprep.subr.bf16.mxu0 0
    %4004 = vmatpush1.bf16.msra.mxu0 0
    %4005 = vmatprep.subr.bf16.mxu0 0
    %4006 = vmatpush1.bf16.msra.mxu0 0
    %4007 = vmatprep.subr.bf16.mxu0 0
    %4008 = vmatpush1.bf16.msra.mxu0 %v3711
    %4009 = vmatprep.subr.bf16.mxu0 0
    %4010 = vmatpush1.bf16.msra.mxu0 %v3710
    %4011 = vmatprep.subr.bf16.mxu0 0
    %4012 = vmatpush1.bf16.msra.mxu0 %v3709
    %4013 = vmatprep.subr.bf16.mxu0 0
    %4014 = vmatpush1.bf16.msra.mxu0 %v3708
    %4015 = vmatprep.subr.bf16.mxu0 0
    %4016 = vmatpush2.bf16.msra.mxu0 0
    %4017 = vmatprep.subr.bf16.mxu0 0
    %4018 = vmatpush2.bf16.msra.mxu0 0
    %4019 = vmatprep.subr.bf16.mxu0 0
    %4020 = vmatpush2.bf16.msra.mxu0 0
    %4021 = vmatprep.subr.bf16.mxu0 0
    %4022 = vmatpush2.bf16.msra.mxu0 0
    %4023 = vmatprep.subr.bf16.mxu0 0
    %4024 = vmatpush2.bf16.msra.mxu0 0
    %4025 = vmatprep.subr.bf16.mxu0 0
    %4026 = vmatpush2.bf16.msra.mxu0 0
    %4027 = vmatprep.subr.bf16.mxu0 0
    %4028 = vmatpush2.bf16.msra.mxu0 0
    %4029 = vmatprep.subr.bf16.mxu0 0
    %4030 = vmatpush2.bf16.msra.mxu0 0
    %4031 = vmatprep.mubr.bf16.mxu0 0
    %4032 = vmatmul.mubr.bf16.gmra.mxu0 %v3605
    %v4033 = vpop.f32.mrf.mxu0
    %v4034 = vadd.f32 %v3961, %v4033
    %v4035 = vpop.f32.mrf.mxu0
    %v4036 = vpop.f32.mrf.mxu0
    %v4037 = vadd.f32 %v3964, %v4036
    %v4038 = vpop.f32.mrf.mxu0
    %4039 = vmatprep.mubr.bf16.mxu0 0
    %4040 = vmatmul.mubr.bf16.gmra.mxu0 %v3608
    %v4041 = vpop.f32.mrf.mxu0
    %v4042 = vadd.f32 %v3969, %v4041
    %v4043 = vpop.f32.mrf.mxu0
    %v4044 = vpop.f32.mrf.mxu0
    %v4045 = vadd.f32 %v3972, %v4044
    %v4046 = vpop.f32.mrf.mxu0
    %4047 = vmatprep.mubr.bf16.mxu0 0
    %4048 = vmatmul.mubr.bf16.gmra.mxu0 %v3611
    %v4049 = vpop.f32.mrf.mxu0
    %v4050 = vadd.f32 %v3977, %v4049
    %v4051 = vpop.f32.mrf.mxu0
    %v4052 = vpop.f32.mrf.mxu0
    %v4053 = vadd.f32 %v3980, %v4052
    %v4054 = vpop.f32.mrf.mxu0
    %4055 = vmatprep.mubr.bf16.mxu0 0
    %4056 = vmatmul.mubr.bf16.gmra.mxu0 %v3614
    %v4057 = vpop.f32.mrf.mxu0
    %v4058 = vadd.f32 %v3985, %v4057
    %v4059 = vpop.f32.mrf.mxu0
    %v4060 = vpop.f32.mrf.mxu0
    %v4061 = vadd.f32 %v3988, %v4060
    %v4062 = vpop.f32.mrf.mxu0
    %4063 = vmatprep.mubr.bf16.mxu0 0
    %4064 = vmatmul.mubr.bf16.gmra.mxu0 %v3617
    %v4065 = vpop.f32.mrf.mxu0
    %v4066 = vadd.f32 %v3993, %v4065
    %v4067 = vpop.f32.mrf.mxu0
    %v4068 = vpop.f32.mrf.mxu0
    %v4069 = vadd.f32 %v3996, %v4068
    %v4070 = vpop.f32.mrf.mxu0
    %4071 = vdwg.mxu0
    %v4073 = vsel %vm3432, %v3549, 0
    %v4076 = vsel %vm3432, %v3550, 0
    %v4079 = vsel %vm3432, %v3551, 0
    %v4082 = vsel %vm3432, %v3552, 0
    %v4085 = vsel %vm3432, %v3553, 0
    %4087 = vmatprep.subr.bf16.mxu0 0
    %4088 = vmatpush1.bf16.msra.mxu0 0
    %4089 = vmatprep.subr.bf16.mxu0 0
    %4090 = vmatpush1.bf16.msra.mxu0 0
    %4091 = vmatprep.subr.bf16.mxu0 0
    %4092 = vmatpush1.bf16.msra.mxu0 0
    %4093 = vmatprep.subr.bf16.mxu0 0
    %4094 = vmatpush1.bf16.msra.mxu0 0
    %4095 = vmatprep.subr.bf16.mxu0 0
    %4096 = vmatpush1.bf16.msra.mxu0 %v3823
    %4097 = vmatprep.subr.bf16.mxu0 0
    %4098 = vmatpush1.bf16.msra.mxu0 %v3822
    %4099 = vmatprep.subr.bf16.mxu0 0
    %4100 = vmatpush1.bf16.msra.mxu0 %v3821
    %4101 = vmatprep.subr.bf16.mxu0 0
    %4102 = vmatpush1.bf16.msra.mxu0 %v3820
    %4103 = vmatprep.subr.bf16.mxu0 0
    %4104 = vmatpush2.bf16.msra.mxu0 0
    %4105 = vmatprep.subr.bf16.mxu0 0
    %4106 = vmatpush2.bf16.msra.mxu0 0
    %4107 = vmatprep.subr.bf16.mxu0 0
    %4108 = vmatpush2.bf16.msra.mxu0 0
    %4109 = vmatprep.subr.bf16.mxu0 0
    %4110 = vmatpush2.bf16.msra.mxu0 0
    %4111 = vmatprep.subr.bf16.mxu0 0
    %4112 = vmatpush2.bf16.msra.mxu0 0
    %4113 = vmatprep.subr.bf16.mxu0 0
    %4114 = vmatpush2.bf16.msra.mxu0 0
    %4115 = vmatprep.subr.bf16.mxu0 0
    %4116 = vmatpush2.bf16.msra.mxu0 0
    %4117 = vmatprep.subr.bf16.mxu0 0
    %4118 = vmatpush2.bf16.msra.mxu0 0
    %4119 = vmatprep.mubr.bf16.mxu0 0
    %4120 = vmatmul.mubr.bf16.gmra.mxu0 %v4073
    %v4121 = vpop.f32.mrf.mxu0
    %v4122 = vadd.f32 0.0, %v4121
    %v4123 = vpop.f32.mrf.mxu0
    %v4124 = vpop.f32.mrf.mxu0
    %v4125 = vadd.f32 0.0, %v4124
    %v4126 = vpop.f32.mrf.mxu0
    %4127 = vmatprep.mubr.bf16.mxu0 0
    %4128 = vmatmul.mubr.bf16.gmra.mxu0 %v4076
    %v4129 = vpop.f32.mrf.mxu0
    %v4130 = vadd.f32 0.0, %v4129
    %v4131 = vpop.f32.mrf.mxu0
    %v4132 = vpop.f32.mrf.mxu0
    %v4133 = vadd.f32 0.0, %v4132
    %v4134 = vpop.f32.mrf.mxu0
    %4135 = vmatprep.mubr.bf16.mxu0 0
    %4136 = vmatmul.mubr.bf16.gmra.mxu0 %v4079
    %v4137 = vpop.f32.mrf.mxu0
    %v4138 = vadd.f32 0.0, %v4137
    %v4139 = vpop.f32.mrf.mxu0
    %v4140 = vpop.f32.mrf.mxu0
    %v4141 = vadd.f32 0.0, %v4140
    %v4142 = vpop.f32.mrf.mxu0
    %4143 = vmatprep.mubr.bf16.mxu0 0
    %4144 = vmatmul.mubr.bf16.gmra.mxu0 %v4082
    %v4145 = vpop.f32.mrf.mxu0
    %v4146 = vadd.f32 0.0, %v4145
    %v4147 = vpop.f32.mrf.mxu0
    %v4148 = vpop.f32.mrf.mxu0
    %v4149 = vadd.f32 0.0, %v4148
    %v4150 = vpop.f32.mrf.mxu0
    %4151 = vmatprep.mubr.bf16.mxu0 0
    %4152 = vmatmul.mubr.bf16.gmra.mxu0 %v4085
    %v4153 = vpop.f32.mrf.mxu0
    %v4154 = vadd.f32 0.0, %v4153
    %v4155 = vpop.f32.mrf.mxu0
    %v4156 = vpop.f32.mrf.mxu0
    %v4157 = vadd.f32 0.0, %v4156
    %v4158 = vpop.f32.mrf.mxu0
    %4159 = vdwg.mxu0
    %v4160 = vadd.f32 %v4034, %v4122
    %v4161 = vadd.f32 %v4037, %v4125
    %v4162 = vadd.f32 %v4042, %v4130
    %v4163 = vadd.f32 %v4045, %v4133
    %v4164 = vadd.f32 %v4050, %v4138
    %v4165 = vadd.f32 %v4053, %v4141
    %v4166 = vadd.f32 %v4058, %v4146
    %v4167 = vadd.f32 %v4061, %v4149
    %v4168 = vadd.f32 %v4066, %v4154
    %v4169 = vadd.f32 %v4069, %v4157
    %v4170 = vmax.f32 %v3916, %v4160
    %v4171 = vmax.f32 %v3917, %v4161
    %v4172 = vmax.f32 %v3918, %v4162
    %v4173 = vmax.f32 %v3919, %v4163
    %v4174 = vmax.f32 %v3920, %v4164
    %v4175 = vmax.f32 %v3921, %v4165
    %v4176 = vmax.f32 %v3922, %v4166
    %v4177 = vmax.f32 %v3923, %v4167
    %v4178 = vmax.f32 %v3924, %v4168
    %v4179 = vmax.f32 %v3925, %v4169
    %v4180 = vld [vmem:[#allocation14] sm:$0x1]
    %v4182 = vlaneseq
    %v4183 = vshrl.u32 %v4182, 7
    %v4184 = vsub.s32 0, %v4183
    %v4185 = vrot.slane %v4180, %v4184
    %v4187 = vadd.f32 %v4170, %v4185
    %v4188 = vadd.f32 %v4171, %v4185
    %v4189 = vadd.f32 %v4172, %v4185
    %v4190 = vadd.f32 %v4173, %v4185
    %v4191 = vadd.f32 %v4174, %v4185
    %v4192 = vadd.f32 %v4175, %v4185
    %v4193 = vadd.f32 %v4176, %v4185
    %v4194 = vadd.f32 %v4177, %v4185
    %v4195 = vadd.f32 %v4178, %v4185
    %v4196 = vadd.f32 %v4179, %v4185
    %v4197 = vmax.f32 %v4187, 0.0
    %v4198 = vmax.f32 %v4188, 0.0
    %v4199 = vmax.f32 %v4189, 0.0
    %v4200 = vmax.f32 %v4190, 0.0
    %v4201 = vmax.f32 %v4191, 0.0
    %v4202 = vmax.f32 %v4192, 0.0
    %v4203 = vmax.f32 %v4193, 0.0
    %v4204 = vmax.f32 %v4194, 0.0
    %v4205 = vmax.f32 %v4195, 0.0
    %v4206 = vmax.f32 %v4196, 0.0
    %4207 = vst [vmem:[#allocation5] sm:$0xff] %v4197
    %4208 = vst [vmem:[#allocation5 + $0x8] sm:$0xff] %v4198
    %4209 = vst [vmem:[#allocation5 + $0x10] sm:$0xff] %v4199
    %4210 = vst [vmem:[#allocation5 + $0x18] sm:$0xff] %v4200
    %4211 = vst [vmem:[#allocation5 + $0x20] sm:$0xff] %v4201
    %4212 = vst [vmem:[#allocation5 + $0x28] sm:$0xff] %v4202
    %4213 = vst [vmem:[#allocation5 + $0x30] sm:$0xff] %v4203
    %4214 = vst [vmem:[#allocation5 + $0x38] sm:$0xff] %v4204
    %4215 = vst [vmem:[#allocation5 + $0x40] sm:$0xff] %v4205
    %4216 = vst [vmem:[#allocation5 + $0x48] sm:$0xff] %v4206
    %v4217 = vld [vmem:[#allocation5] ss:$40 sm:$0x3]
    %v4218 = vpack.c.bf16 %v4217, %v4217
    %v4219 = vld [vmem:[#allocation15] sm:$0xf]
    %v4220 = vld [vmem:[#allocation15 + $0x4] sm:$0xf]
    %v4221 = vld [vmem:[#allocation15 + $0x8] sm:$0xf]
    %v4222 = vld [vmem:[#allocation15 + $0xc] sm:$0xf]
    %v4223 = vld [vmem:[#allocation15 + $0x10] sm:$0xf]
    %v4224 = vld [vmem:[#allocation15 + $0x14] sm:$0xf]
    %v4225 = vld [vmem:[#allocation15 + $0x18] sm:$0xf]
    %v4226 = vld [vmem:[#allocation15 + $0x1c] sm:$0xf]
    %v4227 = vld [vmem:[#allocation15 + $0x20] sm:$0xf]
    %v4228 = vld [vmem:[#allocation15 + $0x24] sm:$0xf]
    %v4229 = vld [vmem:[#allocation15 + $0x28] sm:$0xf]
    %v4230 = vld [vmem:[#allocation15 + $0x2c] sm:$0xf]
    %v4231 = vld [vmem:[#allocation15 + $0x30] sm:$0xf]
    %v4232 = vld [vmem:[#allocation15 + $0x34] sm:$0xf]
    %v4233 = vld [vmem:[#allocation15 + $0x38] sm:$0xf]
    %v4234 = vld [vmem:[#allocation15 + $0x3c] sm:$0xf]
    %s4235 = scalar_lea.vmem [#allocation5], 1
    %v4236 = vld [vmem:[%s4235] ss:$40 sm:$0x3]
    %v4237 = vpack.c.bf16 %v4236, %v4236
    %s4238 = scalar_lea.vmem [#allocation15], 64
    %v4239 = vld [vmem:[%s4238] sm:$0xf]
    %v4240 = vld [vmem:[%s4238 + $0x4] sm:$0xf]
    %v4241 = vld [vmem:[%s4238 + $0x8] sm:$0xf]
    %v4242 = vld [vmem:[%s4238 + $0xc] sm:$0xf]
    %v4243 = vld [vmem:[%s4238 + $0x10] sm:$0xf]
    %v4244 = vld [vmem:[%s4238 + $0x14] sm:$0xf]
    %v4245 = vld [vmem:[%s4238 + $0x18] sm:$0xf]
    %v4246 = vld [vmem:[%s4238 + $0x1c] sm:$0xf]
    %v4247 = vld [vmem:[%s4238 + $0x20] sm:$0xf]
    %v4248 = vld [vmem:[%s4238 + $0x24] sm:$0xf]
    %v4249 = vld [vmem:[%s4238 + $0x28] sm:$0xf]
    %v4250 = vld [vmem:[%s4238 + $0x2c] sm:$0xf]
    %v4251 = vld [vmem:[%s4238 + $0x30] sm:$0xf]
    %v4252 = vld [vmem:[%s4238 + $0x34] sm:$0xf]
    %v4253 = vld [vmem:[%s4238 + $0x38] sm:$0xf]
    %v4254 = vld [vmem:[%s4238 + $0x3c] sm:$0xf]
    %v4271 = vunpack.c.l.b16 %v4239
    %v4272 = vunpack.c.l.b16 %v4240
    %v4273 = vunpack.c.l.b16 %v4241
    %v4274 = vunpack.c.l.b16 %v4242
    %v4275 = vunpack.c.l.b16 %v4243
    %v4276 = vunpack.c.l.b16 %v4244
    %v4277 = vunpack.c.l.b16 %v4245
    %v4278 = vunpack.c.l.b16 %v4246
    %v4279 = vunpack.c.l.b16 %v4247
    %v4280 = vunpack.c.l.b16 %v4248
    %v4281 = vunpack.c.l.b16 %v4249
    %v4282 = vunpack.c.l.b16 %v4250
    %v4283 = vunpack.c.l.b16 %v4251
    %v4284 = vunpack.c.l.b16 %v4252
    %v4285 = vunpack.c.l.b16 %v4253
    %v4286 = vunpack.c.l.b16 %v4254
    %v4287 = vpack.c.b16 %v4272, %v4271
    %v4288 = vpack.c.b16 %v4274, %v4273
    %v4289 = vpack.c.b16 %v4276, %v4275
    %v4290 = vpack.c.b16 %v4278, %v4277
    %v4291 = vpack.c.b16 %v4280, %v4279
    %v4292 = vpack.c.b16 %v4282, %v4281
    %v4293 = vpack.c.b16 %v4284, %v4283
    %v4294 = vpack.c.b16 %v4286, %v4285
    %4303 = vmatprep.subr.bf16.mxu0 0
    %4304 = vmatpush1.bf16.msra.mxu0 %v4294
    %4305 = vmatprep.subr.bf16.mxu0 0
    %4306 = vmatpush1.bf16.msra.mxu0 %v4293
    %4307 = vmatprep.subr.bf16.mxu0 0
    %4308 = vmatpush1.bf16.msra.mxu0 %v4292
    %4309 = vmatprep.subr.bf16.mxu0 0
    %4310 = vmatpush1.bf16.msra.mxu0 %v4291
    %4311 = vmatprep.subr.bf16.mxu0 0
    %4312 = vmatpush1.bf16.msra.mxu0 %v4290
    %4313 = vmatprep.subr.bf16.mxu0 0
    %4314 = vmatpush1.bf16.msra.mxu0 %v4289
    %4315 = vmatprep.subr.bf16.mxu0 0
    %4316 = vmatpush1.bf16.msra.mxu0 %v4288
    %4317 = vmatprep.subr.bf16.mxu0 0
    %4318 = vmatpush1.bf16.msra.mxu0 %v4287
    %4319 = vmatprep.subr.bf16.mxu0 0
    %4320 = vmatpush2.bf16.msra.mxu0 0
    %4321 = vmatprep.subr.bf16.mxu0 0
    %4322 = vmatpush2.bf16.msra.mxu0 0
    %4323 = vmatprep.subr.bf16.mxu0 0
    %4324 = vmatpush2.bf16.msra.mxu0 0
    %4325 = vmatprep.subr.bf16.mxu0 0
    %4326 = vmatpush2.bf16.msra.mxu0 0
    %4327 = vmatprep.subr.bf16.mxu0 0
    %4328 = vmatpush2.bf16.msra.mxu0 0
    %4329 = vmatprep.subr.bf16.mxu0 0
    %4330 = vmatpush2.bf16.msra.mxu0 0
    %4331 = vmatprep.subr.bf16.mxu0 0
    %4332 = vmatpush2.bf16.msra.mxu0 0
    %4333 = vmatprep.subr.bf16.mxu0 0
    %4334 = vmatpush2.bf16.msra.mxu0 0
    %4335 = vmatprep.mubr.bf16.mxu0 0
    %4336 = vmatmul.mubr.bf16.gmra.mxu0 %v4237
    %v4337 = vpop.f32.mrf.mxu0
    %v4338 = vadd.f32 0.0, %v4337
    %v4339 = vpop.f32.mrf.mxu0
    %v4340 = vpop.f32.mrf.mxu0
    %v4341 = vpop.f32.mrf.mxu0
    %4342 = vdwg.mxu0
    %v4359 = vunpack.c.l.b16 %v4219
    %v4360 = vunpack.c.l.b16 %v4220
    %v4361 = vunpack.c.l.b16 %v4221
    %v4362 = vunpack.c.l.b16 %v4222
    %v4363 = vunpack.c.l.b16 %v4223
    %v4364 = vunpack.c.l.b16 %v4224
    %v4365 = vunpack.c.l.b16 %v4225
    %v4366 = vunpack.c.l.b16 %v4226
    %v4367 = vunpack.c.l.b16 %v4227
    %v4368 = vunpack.c.l.b16 %v4228
    %v4369 = vunpack.c.l.b16 %v4229
    %v4370 = vunpack.c.l.b16 %v4230
    %v4371 = vunpack.c.l.b16 %v4231
    %v4372 = vunpack.c.l.b16 %v4232
    %v4373 = vunpack.c.l.b16 %v4233
    %v4374 = vunpack.c.l.b16 %v4234
    %v4375 = vpack.c.b16 %v4360, %v4359
    %v4376 = vpack.c.b16 %v4362, %v4361
    %v4377 = vpack.c.b16 %v4364, %v4363
    %v4378 = vpack.c.b16 %v4366, %v4365
    %v4379 = vpack.c.b16 %v4368, %v4367
    %v4380 = vpack.c.b16 %v4370, %v4369
    %v4381 = vpack.c.b16 %v4372, %v4371
    %v4382 = vpack.c.b16 %v4374, %v4373
    %4391 = vmatprep.subr.bf16.mxu0 0
    %4392 = vmatpush1.bf16.msra.mxu0 %v4382
    %4393 = vmatprep.subr.bf16.mxu0 0
    %4394 = vmatpush1.bf16.msra.mxu0 %v4381
    %4395 = vmatprep.subr.bf16.mxu0 0
    %4396 = vmatpush1.bf16.msra.mxu0 %v4380
    %4397 = vmatprep.subr.bf16.mxu0 0
    %4398 = vmatpush1.bf16.msra.mxu0 %v4379
    %4399 = vmatprep.subr.bf16.mxu0 0
    %4400 = vmatpush1.bf16.msra.mxu0 %v4378
    %4401 = vmatprep.subr.bf16.mxu0 0
    %4402 = vmatpush1.bf16.msra.mxu0 %v4377
    %4403 = vmatprep.subr.bf16.mxu0 0
    %4404 = vmatpush1.bf16.msra.mxu0 %v4376
    %4405 = vmatprep.subr.bf16.mxu0 0
    %4406 = vmatpush1.bf16.msra.mxu0 %v4375
    %4407 = vmatprep.subr.bf16.mxu0 0
    %4408 = vmatpush2.bf16.msra.mxu0 0
    %4409 = vmatprep.subr.bf16.mxu0 0
    %4410 = vmatpush2.bf16.msra.mxu0 0
    %4411 = vmatprep.subr.bf16.mxu0 0
    %4412 = vmatpush2.bf16.msra.mxu0 0
    %4413 = vmatprep.subr.bf16.mxu0 0
    %4414 = vmatpush2.bf16.msra.mxu0 0
    %4415 = vmatprep.subr.bf16.mxu0 0
    %4416 = vmatpush2.bf16.msra.mxu0 0
    %4417 = vmatprep.subr.bf16.mxu0 0
    %4418 = vmatpush2.bf16.msra.mxu0 0
    %4419 = vmatprep.subr.bf16.mxu0 0
    %4420 = vmatpush2.bf16.msra.mxu0 0
    %4421 = vmatprep.subr.bf16.mxu0 0
    %4422 = vmatpush2.bf16.msra.mxu0 0
    %4423 = vmatprep.mubr.bf16.mxu0 0
    %4424 = vmatmul.mubr.bf16.gmra.mxu0 %v4218
    %v4425 = vpop.f32.mrf.mxu0
    %v4426 = vadd.f32 %v4338, %v4425
    %v4427 = vpop.f32.mrf.mxu0
    %v4428 = vpop.f32.mrf.mxu0
    %v4429 = vpop.f32.mrf.mxu0
    %4430 = vdwg.mxu0
    %s4431 = scalar_lea.vmem [#allocation5], 2
    %v4432 = vld [vmem:[%s4431] ss:$40 sm:$0x3]
    %v4433 = vpack.c.bf16 %v4432, %v4432
    %s4434 = scalar_lea.vmem [#allocation15], 128
    %v4435 = vld [vmem:[%s4434] sm:$0xf]
    %v4436 = vld [vmem:[%s4434 + $0x4] sm:$0xf]
    %v4437 = vld [vmem:[%s4434 + $0x8] sm:$0xf]
    %v4438 = vld [vmem:[%s4434 + $0xc] sm:$0xf]
    %v4439 = vld [vmem:[%s4434 + $0x10] sm:$0xf]
    %v4440 = vld [vmem:[%s4434 + $0x14] sm:$0xf]
    %v4441 = vld [vmem:[%s4434 + $0x18] sm:$0xf]
    %v4442 = vld [vmem:[%s4434 + $0x1c] sm:$0xf]
    %v4443 = vld [vmem:[%s4434 + $0x20] sm:$0xf]
    %v4444 = vld [vmem:[%s4434 + $0x24] sm:$0xf]
    %v4445 = vld [vmem:[%s4434 + $0x28] sm:$0xf]
    %v4446 = vld [vmem:[%s4434 + $0x2c] sm:$0xf]
    %v4447 = vld [vmem:[%s4434 + $0x30] sm:$0xf]
    %v4448 = vld [vmem:[%s4434 + $0x34] sm:$0xf]
    %v4449 = vld [vmem:[%s4434 + $0x38] sm:$0xf]
    %v4450 = vld [vmem:[%s4434 + $0x3c] sm:$0xf]
    %v4467 = vunpack.c.l.b16 %v4435
    %v4468 = vunpack.c.l.b16 %v4436
    %v4469 = vunpack.c.l.b16 %v4437
    %v4470 = vunpack.c.l.b16 %v4438
    %v4471 = vunpack.c.l.b16 %v4439
    %v4472 = vunpack.c.l.b16 %v4440
    %v4473 = vunpack.c.l.b16 %v4441
    %v4474 = vunpack.c.l.b16 %v4442
    %v4475 = vunpack.c.l.b16 %v4443
    %v4476 = vunpack.c.l.b16 %v4444
    %v4477 = vunpack.c.l.b16 %v4445
    %v4478 = vunpack.c.l.b16 %v4446
    %v4479 = vunpack.c.l.b16 %v4447
    %v4480 = vunpack.c.l.b16 %v4448
    %v4481 = vunpack.c.l.b16 %v4449
    %v4482 = vunpack.c.l.b16 %v4450
    %v4483 = vpack.c.b16 %v4468, %v4467
    %v4484 = vpack.c.b16 %v4470, %v4469
    %v4485 = vpack.c.b16 %v4472, %v4471
    %v4486 = vpack.c.b16 %v4474, %v4473
    %v4487 = vpack.c.b16 %v4476, %v4475
    %v4488 = vpack.c.b16 %v4478, %v4477
    %v4489 = vpack.c.b16 %v4480, %v4479
    %v4490 = vpack.c.b16 %v4482, %v4481
    %4499 = vmatprep.subr.bf16.mxu0 0
    %4500 = vmatpush1.bf16.msra.mxu0 %v4490
    %4501 = vmatprep.subr.bf16.mxu0 0
    %4502 = vmatpush1.bf16.msra.mxu0 %v4489
    %4503 = vmatprep.subr.bf16.mxu0 0
    %4504 = vmatpush1.bf16.msra.mxu0 %v4488
    %4505 = vmatprep.subr.bf16.mxu0 0
    %4506 = vmatpush1.bf16.msra.mxu0 %v4487
    %4507 = vmatprep.subr.bf16.mxu0 0
    %4508 = vmatpush1.bf16.msra.mxu0 %v4486
    %4509 = vmatprep.subr.bf16.mxu0 0
    %4510 = vmatpush1.bf16.msra.mxu0 %v4485
    %4511 = vmatprep.subr.bf16.mxu0 0
    %4512 = vmatpush1.bf16.msra.mxu0 %v4484
    %4513 = vmatprep.subr.bf16.mxu0 0
    %4514 = vmatpush1.bf16.msra.mxu0 %v4483
    %4515 = vmatprep.subr.bf16.mxu0 0
    %4516 = vmatpush2.bf16.msra.mxu0 0
    %4517 = vmatprep.subr.bf16.mxu0 0
    %4518 = vmatpush2.bf16.msra.mxu0 0
    %4519 = vmatprep.subr.bf16.mxu0 0
    %4520 = vmatpush2.bf16.msra.mxu0 0
    %4521 = vmatprep.subr.bf16.mxu0 0
    %4522 = vmatpush2.bf16.msra.mxu0 0
    %4523 = vmatprep.subr.bf16.mxu0 0
    %4524 = vmatpush2.bf16.msra.mxu0 0
    %4525 = vmatprep.subr.bf16.mxu0 0
    %4526 = vmatpush2.bf16.msra.mxu0 0
    %4527 = vmatprep.subr.bf16.mxu0 0
    %4528 = vmatpush2.bf16.msra.mxu0 0
    %4529 = vmatprep.subr.bf16.mxu0 0
    %4530 = vmatpush2.bf16.msra.mxu0 0
    %4531 = vmatprep.mubr.bf16.mxu0 0
    %4532 = vmatmul.mubr.bf16.gmra.mxu0 %v4433
    %v4533 = vpop.f32.mrf.mxu0
    %v4534 = vadd.f32 0.0, %v4533
    %v4535 = vpop.f32.mrf.mxu0
    %v4536 = vpop.f32.mrf.mxu0
    %v4537 = vpop.f32.mrf.mxu0
    %4538 = vdwg.mxu0
    %v4539 = vadd.f32 %v4426, %v4534
    %s4540 = scalar_lea.vmem [#allocation5], 3
    %v4541 = vld [vmem:[%s4540] ss:$40 sm:$0x3]
    %v4542 = vpack.c.bf16 %v4541, %v4541
    %s4543 = scalar_lea.vmem [#allocation15], 192
    %v4544 = vld [vmem:[%s4543] sm:$0xf]
    %v4545 = vld [vmem:[%s4543 + $0x4] sm:$0xf]
    %v4546 = vld [vmem:[%s4543 + $0x8] sm:$0xf]
    %v4547 = vld [vmem:[%s4543 + $0xc] sm:$0xf]
    %v4548 = vld [vmem:[%s4543 + $0x10] sm:$0xf]
    %v4549 = vld [vmem:[%s4543 + $0x14] sm:$0xf]
    %v4550 = vld [vmem:[%s4543 + $0x18] sm:$0xf]
    %v4551 = vld [vmem:[%s4543 + $0x1c] sm:$0xf]
    %v4552 = vld [vmem:[%s4543 + $0x20] sm:$0xf]
    %v4553 = vld [vmem:[%s4543 + $0x24] sm:$0xf]
    %v4554 = vld [vmem:[%s4543 + $0x28] sm:$0xf]
    %v4555 = vld [vmem:[%s4543 + $0x2c] sm:$0xf]
    %v4556 = vld [vmem:[%s4543 + $0x30] sm:$0xf]
    %v4557 = vld [vmem:[%s4543 + $0x34] sm:$0xf]
    %v4558 = vld [vmem:[%s4543 + $0x38] sm:$0xf]
    %v4559 = vld [vmem:[%s4543 + $0x3c] sm:$0xf]
    %v4576 = vunpack.c.l.b16 %v4544
    %v4577 = vunpack.c.l.b16 %v4545
    %v4578 = vunpack.c.l.b16 %v4546
    %v4579 = vunpack.c.l.b16 %v4547
    %v4580 = vunpack.c.l.b16 %v4548
    %v4581 = vunpack.c.l.b16 %v4549
    %v4582 = vunpack.c.l.b16 %v4550
    %v4583 = vunpack.c.l.b16 %v4551
    %v4584 = vunpack.c.l.b16 %v4552
    %v4585 = vunpack.c.l.b16 %v4553
    %v4586 = vunpack.c.l.b16 %v4554
    %v4587 = vunpack.c.l.b16 %v4555
    %v4588 = vunpack.c.l.b16 %v4556
    %v4589 = vunpack.c.l.b16 %v4557
    %v4590 = vunpack.c.l.b16 %v4558
    %v4591 = vunpack.c.l.b16 %v4559
    %v4592 = vpack.c.b16 %v4577, %v4576
    %v4593 = vpack.c.b16 %v4579, %v4578
    %v4594 = vpack.c.b16 %v4581, %v4580
    %v4595 = vpack.c.b16 %v4583, %v4582
    %v4596 = vpack.c.b16 %v4585, %v4584
    %v4597 = vpack.c.b16 %v4587, %v4586
    %v4598 = vpack.c.b16 %v4589, %v4588
    %v4599 = vpack.c.b16 %v4591, %v4590
    %4608 = vmatprep.subr.bf16.mxu0 0
    %4609 = vmatpush1.bf16.msra.mxu0 %v4599
    %4610 = vmatprep.subr.bf16.mxu0 0
    %4611 = vmatpush1.bf16.msra.mxu0 %v4598
    %4612 = vmatprep.subr.bf16.mxu0 0
    %4613 = vmatpush1.bf16.msra.mxu0 %v4597
    %4614 = vmatprep.subr.bf16.mxu0 0
    %4615 = vmatpush1.bf16.msra.mxu0 %v4596
    %4616 = vmatprep.subr.bf16.mxu0 0
    %4617 = vmatpush1.bf16.msra.mxu0 %v4595
    %4618 = vmatprep.subr.bf16.mxu0 0
    %4619 = vmatpush1.bf16.msra.mxu0 %v4594
    %4620 = vmatprep.subr.bf16.mxu0 0
    %4621 = vmatpush1.bf16.msra.mxu0 %v4593
    %4622 = vmatprep.subr.bf16.mxu0 0
    %4623 = vmatpush1.bf16.msra.mxu0 %v4592
    %4624 = vmatprep.subr.bf16.mxu0 0
    %4625 = vmatpush2.bf16.msra.mxu0 0
    %4626 = vmatprep.subr.bf16.mxu0 0
    %4627 = vmatpush2.bf16.msra.mxu0 0
    %4628 = vmatprep.subr.bf16.mxu0 0
    %4629 = vmatpush2.bf16.msra.mxu0 0
    %4630 = vmatprep.subr.bf16.mxu0 0
    %4631 = vmatpush2.bf16.msra.mxu0 0
    %4632 = vmatprep.subr.bf16.mxu0 0
    %4633 = vmatpush2.bf16.msra.mxu0 0
    %4634 = vmatprep.subr.bf16.mxu0 0
    %4635 = vmatpush2.bf16.msra.mxu0 0
    %4636 = vmatprep.subr.bf16.mxu0 0
    %4637 = vmatpush2.bf16.msra.mxu0 0
    %4638 = vmatprep.subr.bf16.mxu0 0
    %4639 = vmatpush2.bf16.msra.mxu0 0
    %4640 = vmatprep.mubr.bf16.mxu0 0
    %4641 = vmatmul.mubr.bf16.gmra.mxu0 %v4542
    %v4642 = vpop.f32.mrf.mxu0
    %v4643 = vadd.f32 0.0, %v4642
    %v4644 = vpop.f32.mrf.mxu0
    %v4645 = vpop.f32.mrf.mxu0
    %v4646 = vpop.f32.mrf.mxu0
    %4647 = vdwg.mxu0
    %v4648 = vadd.f32 %v4539, %v4643
    %s4649 = scalar_lea.vmem [#allocation5], 4
    %v4650 = vld [vmem:[%s4649] ss:$40 sm:$0x3]
    %v4651 = vpack.c.bf16 %v4650, %v4650
    %s4652 = scalar_lea.vmem [#allocation15], 256
    %v4653 = vld [vmem:[%s4652] sm:$0xf]
    %v4654 = vld [vmem:[%s4652 + $0x4] sm:$0xf]
    %v4655 = vld [vmem:[%s4652 + $0x8] sm:$0xf]
    %v4656 = vld [vmem:[%s4652 + $0xc] sm:$0xf]
    %v4657 = vld [vmem:[%s4652 + $0x10] sm:$0xf]
    %v4658 = vld [vmem:[%s4652 + $0x14] sm:$0xf]
    %v4659 = vld [vmem:[%s4652 + $0x18] sm:$0xf]
    %v4660 = vld [vmem:[%s4652 + $0x1c] sm:$0xf]
    %v4661 = vld [vmem:[%s4652 + $0x20] sm:$0xf]
    %v4662 = vld [vmem:[%s4652 + $0x24] sm:$0xf]
    %v4663 = vld [vmem:[%s4652 + $0x28] sm:$0xf]
    %v4664 = vld [vmem:[%s4652 + $0x2c] sm:$0xf]
    %v4665 = vld [vmem:[%s4652 + $0x30] sm:$0xf]
    %v4666 = vld [vmem:[%s4652 + $0x34] sm:$0xf]
    %v4667 = vld [vmem:[%s4652 + $0x38] sm:$0xf]
    %v4668 = vld [vmem:[%s4652 + $0x3c] sm:$0xf]
    %v4685 = vunpack.c.l.b16 %v4653
    %v4686 = vunpack.c.l.b16 %v4654
    %v4687 = vunpack.c.l.b16 %v4655
    %v4688 = vunpack.c.l.b16 %v4656
    %v4689 = vunpack.c.l.b16 %v4657
    %v4690 = vunpack.c.l.b16 %v4658
    %v4691 = vunpack.c.l.b16 %v4659
    %v4692 = vunpack.c.l.b16 %v4660
    %v4693 = vunpack.c.l.b16 %v4661
    %v4694 = vunpack.c.l.b16 %v4662
    %v4695 = vunpack.c.l.b16 %v4663
    %v4696 = vunpack.c.l.b16 %v4664
    %v4697 = vunpack.c.l.b16 %v4665
    %v4698 = vunpack.c.l.b16 %v4666
    %v4699 = vunpack.c.l.b16 %v4667
    %v4700 = vunpack.c.l.b16 %v4668
    %v4701 = vpack.c.b16 %v4686, %v4685
    %v4702 = vpack.c.b16 %v4688, %v4687
    %v4703 = vpack.c.b16 %v4690, %v4689
    %v4704 = vpack.c.b16 %v4692, %v4691
    %v4705 = vpack.c.b16 %v4694, %v4693
    %v4706 = vpack.c.b16 %v4696, %v4695
    %v4707 = vpack.c.b16 %v4698, %v4697
    %v4708 = vpack.c.b16 %v4700, %v4699
    %4717 = vmatprep.subr.bf16.mxu0 0
    %4718 = vmatpush1.bf16.msra.mxu0 %v4708
    %4719 = vmatprep.subr.bf16.mxu0 0
    %4720 = vmatpush1.bf16.msra.mxu0 %v4707
    %4721 = vmatprep.subr.bf16.mxu0 0
    %4722 = vmatpush1.bf16.msra.mxu0 %v4706
    %4723 = vmatprep.subr.bf16.mxu0 0
    %4724 = vmatpush1.bf16.msra.mxu0 %v4705
    %4725 = vmatprep.subr.bf16.mxu0 0
    %4726 = vmatpush1.bf16.msra.mxu0 %v4704
    %4727 = vmatprep.subr.bf16.mxu0 0
    %4728 = vmatpush1.bf16.msra.mxu0 %v4703
    %4729 = vmatprep.subr.bf16.mxu0 0
    %4730 = vmatpush1.bf16.msra.mxu0 %v4702
    %4731 = vmatprep.subr.bf16.mxu0 0
    %4732 = vmatpush1.bf16.msra.mxu0 %v4701
    %4733 = vmatprep.subr.bf16.mxu0 0
    %4734 = vmatpush2.bf16.msra.mxu0 0
    %4735 = vmatprep.subr.bf16.mxu0 0
    %4736 = vmatpush2.bf16.msra.mxu0 0
    %4737 = vmatprep.subr.bf16.mxu0 0
    %4738 = vmatpush2.bf16.msra.mxu0 0
    %4739 = vmatprep.subr.bf16.mxu0 0
    %4740 = vmatpush2.bf16.msra.mxu0 0
    %4741 = vmatprep.subr.bf16.mxu0 0
    %4742 = vmatpush2.bf16.msra.mxu0 0
    %4743 = vmatprep.subr.bf16.mxu0 0
    %4744 = vmatpush2.bf16.msra.mxu0 0
    %4745 = vmatprep.subr.bf16.mxu0 0
    %4746 = vmatpush2.bf16.msra.mxu0 0
    %4747 = vmatprep.subr.bf16.mxu0 0
    %4748 = vmatpush2.bf16.msra.mxu0 0
    %4749 = vmatprep.mubr.bf16.mxu0 0
    %4750 = vmatmul.mubr.bf16.gmra.mxu0 %v4651
    %v4751 = vpop.f32.mrf.mxu0
    %v4752 = vadd.f32 0.0, %v4751
    %v4753 = vpop.f32.mrf.mxu0
    %v4754 = vpop.f32.mrf.mxu0
    %v4755 = vpop.f32.mrf.mxu0
    %4756 = vdwg.mxu0
    %v4757 = vadd.f32 %v4648, %v4752
    %s4758 = scalar_lea.vmem [#allocation5], 5
    %v4759 = vld [vmem:[%s4758] ss:$40 sm:$0x3]
    %v4760 = vpack.c.bf16 %v4759, %v4759
    %s4761 = scalar_lea.vmem [#allocation15], 320
    %v4762 = vld [vmem:[%s4761] sm:$0xf]
    %v4763 = vld [vmem:[%s4761 + $0x4] sm:$0xf]
    %v4764 = vld [vmem:[%s4761 + $0x8] sm:$0xf]
    %v4765 = vld [vmem:[%s4761 + $0xc] sm:$0xf]
    %v4766 = vld [vmem:[%s4761 + $0x10] sm:$0xf]
    %v4767 = vld [vmem:[%s4761 + $0x14] sm:$0xf]
    %v4768 = vld [vmem:[%s4761 + $0x18] sm:$0xf]
    %v4769 = vld [vmem:[%s4761 + $0x1c] sm:$0xf]
    %v4770 = vld [vmem:[%s4761 + $0x20] sm:$0xf]
    %v4771 = vld [vmem:[%s4761 + $0x24] sm:$0xf]
    %v4772 = vld [vmem:[%s4761 + $0x28] sm:$0xf]
    %v4773 = vld [vmem:[%s4761 + $0x2c] sm:$0xf]
    %v4774 = vld [vmem:[%s4761 + $0x30] sm:$0xf]
    %v4775 = vld [vmem:[%s4761 + $0x34] sm:$0xf]
    %v4776 = vld [vmem:[%s4761 + $0x38] sm:$0xf]
    %v4777 = vld [vmem:[%s4761 + $0x3c] sm:$0xf]
    %v4794 = vunpack.c.l.b16 %v4762
    %v4795 = vunpack.c.l.b16 %v4763
    %v4796 = vunpack.c.l.b16 %v4764
    %v4797 = vunpack.c.l.b16 %v4765
    %v4798 = vunpack.c.l.b16 %v4766
    %v4799 = vunpack.c.l.b16 %v4767
    %v4800 = vunpack.c.l.b16 %v4768
    %v4801 = vunpack.c.l.b16 %v4769
    %v4802 = vunpack.c.l.b16 %v4770
    %v4803 = vunpack.c.l.b16 %v4771
    %v4804 = vunpack.c.l.b16 %v4772
    %v4805 = vunpack.c.l.b16 %v4773
    %v4806 = vunpack.c.l.b16 %v4774
    %v4807 = vunpack.c.l.b16 %v4775
    %v4808 = vunpack.c.l.b16 %v4776
    %v4809 = vunpack.c.l.b16 %v4777
    %v4810 = vpack.c.b16 %v4795, %v4794
    %v4811 = vpack.c.b16 %v4797, %v4796
    %v4812 = vpack.c.b16 %v4799, %v4798
    %v4813 = vpack.c.b16 %v4801, %v4800
    %v4814 = vpack.c.b16 %v4803, %v4802
    %v4815 = vpack.c.b16 %v4805, %v4804
    %v4816 = vpack.c.b16 %v4807, %v4806
    %v4817 = vpack.c.b16 %v4809, %v4808
    %4826 = vmatprep.subr.bf16.mxu0 0
    %4827 = vmatpush1.bf16.msra.mxu0 %v4817
    %4828 = vmatprep.subr.bf16.mxu0 0
    %4829 = vmatpush1.bf16.msra.mxu0 %v4816
    %4830 = vmatprep.subr.bf16.mxu0 0
    %4831 = vmatpush1.bf16.msra.mxu0 %v4815
    %4832 = vmatprep.subr.bf16.mxu0 0
    %4833 = vmatpush1.bf16.msra.mxu0 %v4814
    %4834 = vmatprep.subr.bf16.mxu0 0
    %4835 = vmatpush1.bf16.msra.mxu0 %v4813
    %4836 = vmatprep.subr.bf16.mxu0 0
    %4837 = vmatpush1.bf16.msra.mxu0 %v4812
    %4838 = vmatprep.subr.bf16.mxu0 0
    %4839 = vmatpush1.bf16.msra.mxu0 %v4811
    %4840 = vmatprep.subr.bf16.mxu0 0
    %4841 = vmatpush1.bf16.msra.mxu0 %v4810
    %4842 = vmatprep.subr.bf16.mxu0 0
    %4843 = vmatpush2.bf16.msra.mxu0 0
    %4844 = vmatprep.subr.bf16.mxu0 0
    %4845 = vmatpush2.bf16.msra.mxu0 0
    %4846 = vmatprep.subr.bf16.mxu0 0
    %4847 = vmatpush2.bf16.msra.mxu0 0
    %4848 = vmatprep.subr.bf16.mxu0 0
    %4849 = vmatpush2.bf16.msra.mxu0 0
    %4850 = vmatprep.subr.bf16.mxu0 0
    %4851 = vmatpush2.bf16.msra.mxu0 0
    %4852 = vmatprep.subr.bf16.mxu0 0
    %4853 = vmatpush2.bf16.msra.mxu0 0
    %4854 = vmatprep.subr.bf16.mxu0 0
    %4855 = vmatpush2.bf16.msra.mxu0 0
    %4856 = vmatprep.subr.bf16.mxu0 0
    %4857 = vmatpush2.bf16.msra.mxu0 0
    %4858 = vmatprep.mubr.bf16.mxu0 0
    %4859 = vmatmul.mubr.bf16.gmra.mxu0 %v4760
    %v4860 = vpop.f32.mrf.mxu0
    %v4861 = vadd.f32 0.0, %v4860
    %v4862 = vpop.f32.mrf.mxu0
    %v4863 = vpop.f32.mrf.mxu0
    %v4864 = vpop.f32.mrf.mxu0
    %4865 = vdwg.mxu0
    %v4866 = vadd.f32 %v4757, %v4861
    %s4867 = scalar_lea.vmem [#allocation5], 6
    %v4868 = vld [vmem:[%s4867] ss:$40 sm:$0x3]
    %v4869 = vpack.c.bf16 %v4868, %v4868
    %s4870 = scalar_lea.vmem [#allocation15], 384
    %v4871 = vld [vmem:[%s4870] sm:$0xf]
    %v4872 = vld [vmem:[%s4870 + $0x4] sm:$0xf]
    %v4873 = vld [vmem:[%s4870 + $0x8] sm:$0xf]
    %v4874 = vld [vmem:[%s4870 + $0xc] sm:$0xf]
    %v4875 = vld [vmem:[%s4870 + $0x10] sm:$0xf]
    %v4876 = vld [vmem:[%s4870 + $0x14] sm:$0xf]
    %v4877 = vld [vmem:[%s4870 + $0x18] sm:$0xf]
    %v4878 = vld [vmem:[%s4870 + $0x1c] sm:$0xf]
    %v4879 = vld [vmem:[%s4870 + $0x20] sm:$0xf]
    %v4880 = vld [vmem:[%s4870 + $0x24] sm:$0xf]
    %v4881 = vld [vmem:[%s4870 + $0x28] sm:$0xf]
    %v4882 = vld [vmem:[%s4870 + $0x2c] sm:$0xf]
    %v4883 = vld [vmem:[%s4870 + $0x30] sm:$0xf]
    %v4884 = vld [vmem:[%s4870 + $0x34] sm:$0xf]
    %v4885 = vld [vmem:[%s4870 + $0x38] sm:$0xf]
    %v4886 = vld [vmem:[%s4870 + $0x3c] sm:$0xf]
    %v4903 = vunpack.c.l.b16 %v4871
    %v4904 = vunpack.c.l.b16 %v4872
    %v4905 = vunpack.c.l.b16 %v4873
    %v4906 = vunpack.c.l.b16 %v4874
    %v4907 = vunpack.c.l.b16 %v4875
    %v4908 = vunpack.c.l.b16 %v4876
    %v4909 = vunpack.c.l.b16 %v4877
    %v4910 = vunpack.c.l.b16 %v4878
    %v4911 = vunpack.c.l.b16 %v4879
    %v4912 = vunpack.c.l.b16 %v4880
    %v4913 = vunpack.c.l.b16 %v4881
    %v4914 = vunpack.c.l.b16 %v4882
    %v4915 = vunpack.c.l.b16 %v4883
    %v4916 = vunpack.c.l.b16 %v4884
    %v4917 = vunpack.c.l.b16 %v4885
    %v4918 = vunpack.c.l.b16 %v4886
    %v4919 = vpack.c.b16 %v4904, %v4903
    %v4920 = vpack.c.b16 %v4906, %v4905
    %v4921 = vpack.c.b16 %v4908, %v4907
    %v4922 = vpack.c.b16 %v4910, %v4909
    %v4923 = vpack.c.b16 %v4912, %v4911
    %v4924 = vpack.c.b16 %v4914, %v4913
    %v4925 = vpack.c.b16 %v4916, %v4915
    %v4926 = vpack.c.b16 %v4918, %v4917
    %4935 = vmatprep.subr.bf16.mxu0 0
    %4936 = vmatpush1.bf16.msra.mxu0 %v4926
    %4937 = vmatprep.subr.bf16.mxu0 0
    %4938 = vmatpush1.bf16.msra.mxu0 %v4925
    %4939 = vmatprep.subr.bf16.mxu0 0
    %4940 = vmatpush1.bf16.msra.mxu0 %v4924
    %4941 = vmatprep.subr.bf16.mxu0 0
    %4942 = vmatpush1.bf16.msra.mxu0 %v4923
    %4943 = vmatprep.subr.bf16.mxu0 0
    %4944 = vmatpush1.bf16.msra.mxu0 %v4922
    %4945 = vmatprep.subr.bf16.mxu0 0
    %4946 = vmatpush1.bf16.msra.mxu0 %v4921
    %4947 = vmatprep.subr.bf16.mxu0 0
    %4948 = vmatpush1.bf16.msra.mxu0 %v4920
    %4949 = vmatprep.subr.bf16.mxu0 0
    %4950 = vmatpush1.bf16.msra.mxu0 %v4919
    %4951 = vmatprep.subr.bf16.mxu0 0
    %4952 = vmatpush2.bf16.msra.mxu0 0
    %4953 = vmatprep.subr.bf16.mxu0 0
    %4954 = vmatpush2.bf16.msra.mxu0 0
    %4955 = vmatprep.subr.bf16.mxu0 0
    %4956 = vmatpush2.bf16.msra.mxu0 0
    %4957 = vmatprep.subr.bf16.mxu0 0
    %4958 = vmatpush2.bf16.msra.mxu0 0
    %4959 = vmatprep.subr.bf16.mxu0 0
    %4960 = vmatpush2.bf16.msra.mxu0 0
    %4961 = vmatprep.subr.bf16.mxu0 0
    %4962 = vmatpush2.bf16.msra.mxu0 0
    %4963 = vmatprep.subr.bf16.mxu0 0
    %4964 = vmatpush2.bf16.msra.mxu0 0
    %4965 = vmatprep.subr.bf16.mxu0 0
    %4966 = vmatpush2.bf16.msra.mxu0 0
    %4967 = vmatprep.mubr.bf16.mxu0 0
    %4968 = vmatmul.mubr.bf16.gmra.mxu0 %v4869
    %v4969 = vpop.f32.mrf.mxu0
    %v4970 = vadd.f32 0.0, %v4969
    %v4971 = vpop.f32.mrf.mxu0
    %v4972 = vpop.f32.mrf.mxu0
    %v4973 = vpop.f32.mrf.mxu0
    %4974 = vdwg.mxu0
    %v4975 = vadd.f32 %v4866, %v4970
    %s4976 = scalar_lea.vmem [#allocation5], 7
    %v4977 = vld [vmem:[%s4976] ss:$40 sm:$0x3]
    %v4978 = vpack.c.bf16 %v4977, %v4977
    %s4979 = scalar_lea.vmem [#allocation15], 448
    %v4980 = vld [vmem:[%s4979] sm:$0xf]
    %v4981 = vld [vmem:[%s4979 + $0x4] sm:$0xf]
    %v4982 = vld [vmem:[%s4979 + $0x8] sm:$0xf]
    %v4983 = vld [vmem:[%s4979 + $0xc] sm:$0xf]
    %v4984 = vld [vmem:[%s4979 + $0x10] sm:$0xf]
    %v4985 = vld [vmem:[%s4979 + $0x14] sm:$0xf]
    %v4986 = vld [vmem:[%s4979 + $0x18] sm:$0xf]
    %v4987 = vld [vmem:[%s4979 + $0x1c] sm:$0xf]
    %v4988 = vld [vmem:[%s4979 + $0x20] sm:$0xf]
    %v4989 = vld [vmem:[%s4979 + $0x24] sm:$0xf]
    %v4990 = vld [vmem:[%s4979 + $0x28] sm:$0xf]
    %v4991 = vld [vmem:[%s4979 + $0x2c] sm:$0xf]
    %v4992 = vld [vmem:[%s4979 + $0x30] sm:$0xf]
    %v4993 = vld [vmem:[%s4979 + $0x34] sm:$0xf]
    %v4994 = vld [vmem:[%s4979 + $0x38] sm:$0xf]
    %v4995 = vld [vmem:[%s4979 + $0x3c] sm:$0xf]
    %v5012 = vunpack.c.l.b16 %v4980
    %v5013 = vunpack.c.l.b16 %v4981
    %v5014 = vunpack.c.l.b16 %v4982
    %v5015 = vunpack.c.l.b16 %v4983
    %v5016 = vunpack.c.l.b16 %v4984
    %v5017 = vunpack.c.l.b16 %v4985
    %v5018 = vunpack.c.l.b16 %v4986
    %v5019 = vunpack.c.l.b16 %v4987
    %v5020 = vunpack.c.l.b16 %v4988
    %v5021 = vunpack.c.l.b16 %v4989
    %v5022 = vunpack.c.l.b16 %v4990
    %v5023 = vunpack.c.l.b16 %v4991
    %v5024 = vunpack.c.l.b16 %v4992
    %v5025 = vunpack.c.l.b16 %v4993
    %v5026 = vunpack.c.l.b16 %v4994
    %v5027 = vunpack.c.l.b16 %v4995
    %v5028 = vpack.c.b16 %v5013, %v5012
    %v5029 = vpack.c.b16 %v5015, %v5014
    %v5030 = vpack.c.b16 %v5017, %v5016
    %v5031 = vpack.c.b16 %v5019, %v5018
    %v5032 = vpack.c.b16 %v5021, %v5020
    %v5033 = vpack.c.b16 %v5023, %v5022
    %v5034 = vpack.c.b16 %v5025, %v5024
    %v5035 = vpack.c.b16 %v5027, %v5026
    %5044 = vmatprep.subr.bf16.mxu0 0
    %5045 = vmatpush1.bf16.msra.mxu0 %v5035
    %5046 = vmatprep.subr.bf16.mxu0 0
    %5047 = vmatpush1.bf16.msra.mxu0 %v5034
    %5048 = vmatprep.subr.bf16.mxu0 0
    %5049 = vmatpush1.bf16.msra.mxu0 %v5033
    %5050 = vmatprep.subr.bf16.mxu0 0
    %5051 = vmatpush1.bf16.msra.mxu0 %v5032
    %5052 = vmatprep.subr.bf16.mxu0 0
    %5053 = vmatpush1.bf16.msra.mxu0 %v5031
    %5054 = vmatprep.subr.bf16.mxu0 0
    %5055 = vmatpush1.bf16.msra.mxu0 %v5030
    %5056 = vmatprep.subr.bf16.mxu0 0
    %5057 = vmatpush1.bf16.msra.mxu0 %v5029
    %5058 = vmatprep.subr.bf16.mxu0 0
    %5059 = vmatpush1.bf16.msra.mxu0 %v5028
    %5060 = vmatprep.subr.bf16.mxu0 0
    %5061 = vmatpush2.bf16.msra.mxu0 0
    %5062 = vmatprep.subr.bf16.mxu0 0
    %5063 = vmatpush2.bf16.msra.mxu0 0
    %5064 = vmatprep.subr.bf16.mxu0 0
    %5065 = vmatpush2.bf16.msra.mxu0 0
    %5066 = vmatprep.subr.bf16.mxu0 0
    %5067 = vmatpush2.bf16.msra.mxu0 0
    %5068 = vmatprep.subr.bf16.mxu0 0
    %5069 = vmatpush2.bf16.msra.mxu0 0
    %5070 = vmatprep.subr.bf16.mxu0 0
    %5071 = vmatpush2.bf16.msra.mxu0 0
    %5072 = vmatprep.subr.bf16.mxu0 0
    %5073 = vmatpush2.bf16.msra.mxu0 0
    %5074 = vmatprep.subr.bf16.mxu0 0
    %5075 = vmatpush2.bf16.msra.mxu0 0
    %5076 = vmatprep.mubr.bf16.mxu0 0
    %5077 = vmatmul.mubr.bf16.gmra.mxu0 %v4978
    %v5078 = vpop.f32.mrf.mxu0
    %v5079 = vadd.f32 0.0, %v5078
    %v5080 = vpop.f32.mrf.mxu0
    %v5081 = vpop.f32.mrf.mxu0
    %v5082 = vpop.f32.mrf.mxu0
    %5083 = vdwg.mxu0
    %v5084 = vadd.f32 %v4975, %v5079
    %s5085 = scalar_lea.vmem [#allocation5], 8
    %v5086 = vld [vmem:[%s5085] ss:$40 sm:$0x3]
    %v5087 = vpack.c.bf16 %v5086, %v5086
    %s5088 = scalar_lea.vmem [#allocation15], 512
    %v5089 = vld [vmem:[%s5088] sm:$0xf]
    %v5090 = vld [vmem:[%s5088 + $0x4] sm:$0xf]
    %v5091 = vld [vmem:[%s5088 + $0x8] sm:$0xf]
    %v5092 = vld [vmem:[%s5088 + $0xc] sm:$0xf]
    %v5093 = vld [vmem:[%s5088 + $0x10] sm:$0xf]
    %v5094 = vld [vmem:[%s5088 + $0x14] sm:$0xf]
    %v5095 = vld [vmem:[%s5088 + $0x18] sm:$0xf]
    %v5096 = vld [vmem:[%s5088 + $0x1c] sm:$0xf]
    %v5097 = vld [vmem:[%s5088 + $0x20] sm:$0xf]
    %v5098 = vld [vmem:[%s5088 + $0x24] sm:$0xf]
    %v5099 = vld [vmem:[%s5088 + $0x28] sm:$0xf]
    %v5100 = vld [vmem:[%s5088 + $0x2c] sm:$0xf]
    %v5101 = vld [vmem:[%s5088 + $0x30] sm:$0xf]
    %v5102 = vld [vmem:[%s5088 + $0x34] sm:$0xf]
    %v5103 = vld [vmem:[%s5088 + $0x38] sm:$0xf]
    %v5104 = vld [vmem:[%s5088 + $0x3c] sm:$0xf]
    %v5121 = vunpack.c.l.b16 %v5089
    %v5122 = vunpack.c.l.b16 %v5090
    %v5123 = vunpack.c.l.b16 %v5091
    %v5124 = vunpack.c.l.b16 %v5092
    %v5125 = vunpack.c.l.b16 %v5093
    %v5126 = vunpack.c.l.b16 %v5094
    %v5127 = vunpack.c.l.b16 %v5095
    %v5128 = vunpack.c.l.b16 %v5096
    %v5129 = vunpack.c.l.b16 %v5097
    %v5130 = vunpack.c.l.b16 %v5098
    %v5131 = vunpack.c.l.b16 %v5099
    %v5132 = vunpack.c.l.b16 %v5100
    %v5133 = vunpack.c.l.b16 %v5101
    %v5134 = vunpack.c.l.b16 %v5102
    %v5135 = vunpack.c.l.b16 %v5103
    %v5136 = vunpack.c.l.b16 %v5104
    %v5137 = vpack.c.b16 %v5122, %v5121
    %v5138 = vpack.c.b16 %v5124, %v5123
    %v5139 = vpack.c.b16 %v5126, %v5125
    %v5140 = vpack.c.b16 %v5128, %v5127
    %v5141 = vpack.c.b16 %v5130, %v5129
    %v5142 = vpack.c.b16 %v5132, %v5131
    %v5143 = vpack.c.b16 %v5134, %v5133
    %v5144 = vpack.c.b16 %v5136, %v5135
    %5153 = vmatprep.subr.bf16.mxu0 0
    %5154 = vmatpush1.bf16.msra.mxu0 %v5144
    %5155 = vmatprep.subr.bf16.mxu0 0
    %5156 = vmatpush1.bf16.msra.mxu0 %v5143
    %5157 = vmatprep.subr.bf16.mxu0 0
    %5158 = vmatpush1.bf16.msra.mxu0 %v5142
    %5159 = vmatprep.subr.bf16.mxu0 0
    %5160 = vmatpush1.bf16.msra.mxu0 %v5141
    %5161 = vmatprep.subr.bf16.mxu0 0
    %5162 = vmatpush1.bf16.msra.mxu0 %v5140
    %5163 = vmatprep.subr.bf16.mxu0 0
    %5164 = vmatpush1.bf16.msra.mxu0 %v5139
    %5165 = vmatprep.subr.bf16.mxu0 0
    %5166 = vmatpush1.bf16.msra.mxu0 %v5138
    %5167 = vmatprep.subr.bf16.mxu0 0
    %5168 = vmatpush1.bf16.msra.mxu0 %v5137
    %5169 = vmatprep.subr.bf16.mxu0 0
    %5170 = vmatpush2.bf16.msra.mxu0 0
    %5171 = vmatprep.subr.bf16.mxu0 0
    %5172 = vmatpush2.bf16.msra.mxu0 0
    %5173 = vmatprep.subr.bf16.mxu0 0
    %5174 = vmatpush2.bf16.msra.mxu0 0
    %5175 = vmatprep.subr.bf16.mxu0 0
    %5176 = vmatpush2.bf16.msra.mxu0 0
    %5177 = vmatprep.subr.bf16.mxu0 0
    %5178 = vmatpush2.bf16.msra.mxu0 0
    %5179 = vmatprep.subr.bf16.mxu0 0
    %5180 = vmatpush2.bf16.msra.mxu0 0
    %5181 = vmatprep.subr.bf16.mxu0 0
    %5182 = vmatpush2.bf16.msra.mxu0 0
    %5183 = vmatprep.subr.bf16.mxu0 0
    %5184 = vmatpush2.bf16.msra.mxu0 0
    %5185 = vmatprep.mubr.bf16.mxu0 0
    %5186 = vmatmul.mubr.bf16.gmra.mxu0 %v5087
    %v5187 = vpop.f32.mrf.mxu0
    %v5188 = vadd.f32 0.0, %v5187
    %v5189 = vpop.f32.mrf.mxu0
    %v5190 = vpop.f32.mrf.mxu0
    %v5191 = vpop.f32.mrf.mxu0
    %5192 = vdwg.mxu0
    %v5193 = vadd.f32 %v5084, %v5188
    %s5194 = scalar_lea.vmem [#allocation5], 9
    %v5195 = vld [vmem:[%s5194] ss:$40 sm:$0x3]
    %v5196 = vpack.c.bf16 %v5195, %v5195
    %s5197 = scalar_lea.vmem [#allocation15], 576
    %v5198 = vld [vmem:[%s5197] sm:$0xf]
    %v5199 = vld [vmem:[%s5197 + $0x4] sm:$0xf]
    %v5200 = vld [vmem:[%s5197 + $0x8] sm:$0xf]
    %v5201 = vld [vmem:[%s5197 + $0xc] sm:$0xf]
    %v5202 = vld [vmem:[%s5197 + $0x10] sm:$0xf]
    %v5203 = vld [vmem:[%s5197 + $0x14] sm:$0xf]
    %v5204 = vld [vmem:[%s5197 + $0x18] sm:$0xf]
    %v5205 = vld [vmem:[%s5197 + $0x1c] sm:$0xf]
    %v5206 = vld [vmem:[%s5197 + $0x20] sm:$0xf]
    %v5207 = vld [vmem:[%s5197 + $0x24] sm:$0xf]
    %v5208 = vld [vmem:[%s5197 + $0x28] sm:$0xf]
    %v5209 = vld [vmem:[%s5197 + $0x2c] sm:$0xf]
    %v5210 = vld [vmem:[%s5197 + $0x30] sm:$0xf]
    %v5211 = vld [vmem:[%s5197 + $0x34] sm:$0xf]
    %v5212 = vld [vmem:[%s5197 + $0x38] sm:$0xf]
    %v5213 = vld [vmem:[%s5197 + $0x3c] sm:$0xf]
    %v5230 = vunpack.c.l.b16 %v5198
    %v5231 = vunpack.c.l.b16 %v5199
    %v5232 = vunpack.c.l.b16 %v5200
    %v5233 = vunpack.c.l.b16 %v5201
    %v5234 = vunpack.c.l.b16 %v5202
    %v5235 = vunpack.c.l.b16 %v5203
    %v5236 = vunpack.c.l.b16 %v5204
    %v5237 = vunpack.c.l.b16 %v5205
    %v5238 = vunpack.c.l.b16 %v5206
    %v5239 = vunpack.c.l.b16 %v5207
    %v5240 = vunpack.c.l.b16 %v5208
    %v5241 = vunpack.c.l.b16 %v5209
    %v5242 = vunpack.c.l.b16 %v5210
    %v5243 = vunpack.c.l.b16 %v5211
    %v5244 = vunpack.c.l.b16 %v5212
    %v5245 = vunpack.c.l.b16 %v5213
    %v5246 = vpack.c.b16 %v5231, %v5230
    %v5247 = vpack.c.b16 %v5233, %v5232
    %v5248 = vpack.c.b16 %v5235, %v5234
    %v5249 = vpack.c.b16 %v5237, %v5236
    %v5250 = vpack.c.b16 %v5239, %v5238
    %v5251 = vpack.c.b16 %v5241, %v5240
    %v5252 = vpack.c.b16 %v5243, %v5242
    %v5253 = vpack.c.b16 %v5245, %v5244
    %5262 = vmatprep.subr.bf16.mxu0 0
    %5263 = vmatpush1.bf16.msra.mxu0 %v5253
    %5264 = vmatprep.subr.bf16.mxu0 0
    %5265 = vmatpush1.bf16.msra.mxu0 %v5252
    %5266 = vmatprep.subr.bf16.mxu0 0
    %5267 = vmatpush1.bf16.msra.mxu0 %v5251
    %5268 = vmatprep.subr.bf16.mxu0 0
    %5269 = vmatpush1.bf16.msra.mxu0 %v5250
    %5270 = vmatprep.subr.bf16.mxu0 0
    %5271 = vmatpush1.bf16.msra.mxu0 %v5249
    %5272 = vmatprep.subr.bf16.mxu0 0
    %5273 = vmatpush1.bf16.msra.mxu0 %v5248
    %5274 = vmatprep.subr.bf16.mxu0 0
    %5275 = vmatpush1.bf16.msra.mxu0 %v5247
    %5276 = vmatprep.subr.bf16.mxu0 0
    %5277 = vmatpush1.bf16.msra.mxu0 %v5246
    %5278 = vmatprep.subr.bf16.mxu0 0
    %5279 = vmatpush2.bf16.msra.mxu0 0
    %5280 = vmatprep.subr.bf16.mxu0 0
    %5281 = vmatpush2.bf16.msra.mxu0 0
    %5282 = vmatprep.subr.bf16.mxu0 0
    %5283 = vmatpush2.bf16.msra.mxu0 0
    %5284 = vmatprep.subr.bf16.mxu0 0
    %5285 = vmatpush2.bf16.msra.mxu0 0
    %5286 = vmatprep.subr.bf16.mxu0 0
    %5287 = vmatpush2.bf16.msra.mxu0 0
    %5288 = vmatprep.subr.bf16.mxu0 0
    %5289 = vmatpush2.bf16.msra.mxu0 0
    %5290 = vmatprep.subr.bf16.mxu0 0
    %5291 = vmatpush2.bf16.msra.mxu0 0
    %5292 = vmatprep.subr.bf16.mxu0 0
    %5293 = vmatpush2.bf16.msra.mxu0 0
    %5294 = vmatprep.mubr.bf16.mxu0 0
    %5295 = vmatmul.mubr.bf16.gmra.mxu0 %v5196
    %v5296 = vpop.f32.mrf.mxu0
    %v5297 = vadd.f32 0.0, %v5296
    %v5298 = vpop.f32.mrf.mxu0
    %v5299 = vpop.f32.mrf.mxu0
    %v5300 = vpop.f32.mrf.mxu0
    %5301 = vdwg.mxu0
    %v5302 = vadd.f32 %v5193, %v5297
    %s5303 = scalar_lea.vmem [#allocation5], 10
    %v5304 = vld [vmem:[%s5303] ss:$40 sm:$0x3]
    %v5305 = vpack.c.bf16 %v5304, %v5304
    %s5306 = scalar_lea.vmem [#allocation15], 640
    %v5307 = vld [vmem:[%s5306] sm:$0xf]
    %v5308 = vld [vmem:[%s5306 + $0x4] sm:$0xf]
    %v5309 = vld [vmem:[%s5306 + $0x8] sm:$0xf]
    %v5310 = vld [vmem:[%s5306 + $0xc] sm:$0xf]
    %v5311 = vld [vmem:[%s5306 + $0x10] sm:$0xf]
    %v5312 = vld [vmem:[%s5306 + $0x14] sm:$0xf]
    %v5313 = vld [vmem:[%s5306 + $0x18] sm:$0xf]
    %v5314 = vld [vmem:[%s5306 + $0x1c] sm:$0xf]
    %v5315 = vld [vmem:[%s5306 + $0x20] sm:$0xf]
    %v5316 = vld [vmem:[%s5306 + $0x24] sm:$0xf]
    %v5317 = vld [vmem:[%s5306 + $0x28] sm:$0xf]
    %v5318 = vld [vmem:[%s5306 + $0x2c] sm:$0xf]
    %v5319 = vld [vmem:[%s5306 + $0x30] sm:$0xf]
    %v5320 = vld [vmem:[%s5306 + $0x34] sm:$0xf]
    %v5321 = vld [vmem:[%s5306 + $0x38] sm:$0xf]
    %v5322 = vld [vmem:[%s5306 + $0x3c] sm:$0xf]
    %v5339 = vunpack.c.l.b16 %v5307
    %v5340 = vunpack.c.l.b16 %v5308
    %v5341 = vunpack.c.l.b16 %v5309
    %v5342 = vunpack.c.l.b16 %v5310
    %v5343 = vunpack.c.l.b16 %v5311
    %v5344 = vunpack.c.l.b16 %v5312
    %v5345 = vunpack.c.l.b16 %v5313
    %v5346 = vunpack.c.l.b16 %v5314
    %v5347 = vunpack.c.l.b16 %v5315
    %v5348 = vunpack.c.l.b16 %v5316
    %v5349 = vunpack.c.l.b16 %v5317
    %v5350 = vunpack.c.l.b16 %v5318
    %v5351 = vunpack.c.l.b16 %v5319
    %v5352 = vunpack.c.l.b16 %v5320
    %v5353 = vunpack.c.l.b16 %v5321
    %v5354 = vunpack.c.l.b16 %v5322
    %v5355 = vpack.c.b16 %v5340, %v5339
    %v5356 = vpack.c.b16 %v5342, %v5341
    %v5357 = vpack.c.b16 %v5344, %v5343
    %v5358 = vpack.c.b16 %v5346, %v5345
    %v5359 = vpack.c.b16 %v5348, %v5347
    %v5360 = vpack.c.b16 %v5350, %v5349
    %v5361 = vpack.c.b16 %v5352, %v5351
    %v5362 = vpack.c.b16 %v5354, %v5353
    %5371 = vmatprep.subr.bf16.mxu0 0
    %5372 = vmatpush1.bf16.msra.mxu0 %v5362
    %5373 = vmatprep.subr.bf16.mxu0 0
    %5374 = vmatpush1.bf16.msra.mxu0 %v5361
    %5375 = vmatprep.subr.bf16.mxu0 0
    %5376 = vmatpush1.bf16.msra.mxu0 %v5360
    %5377 = vmatprep.subr.bf16.mxu0 0
    %5378 = vmatpush1.bf16.msra.mxu0 %v5359
    %5379 = vmatprep.subr.bf16.mxu0 0
    %5380 = vmatpush1.bf16.msra.mxu0 %v5358
    %5381 = vmatprep.subr.bf16.mxu0 0
    %5382 = vmatpush1.bf16.msra.mxu0 %v5357
    %5383 = vmatprep.subr.bf16.mxu0 0
    %5384 = vmatpush1.bf16.msra.mxu0 %v5356
    %5385 = vmatprep.subr.bf16.mxu0 0
    %5386 = vmatpush1.bf16.msra.mxu0 %v5355
    %5387 = vmatprep.subr.bf16.mxu0 0
    %5388 = vmatpush2.bf16.msra.mxu0 0
    %5389 = vmatprep.subr.bf16.mxu0 0
    %5390 = vmatpush2.bf16.msra.mxu0 0
    %5391 = vmatprep.subr.bf16.mxu0 0
    %5392 = vmatpush2.bf16.msra.mxu0 0
    %5393 = vmatprep.subr.bf16.mxu0 0
    %5394 = vmatpush2.bf16.msra.mxu0 0
    %5395 = vmatprep.subr.bf16.mxu0 0
    %5396 = vmatpush2.bf16.msra.mxu0 0
    %5397 = vmatprep.subr.bf16.mxu0 0
    %5398 = vmatpush2.bf16.msra.mxu0 0
    %5399 = vmatprep.subr.bf16.mxu0 0
    %5400 = vmatpush2.bf16.msra.mxu0 0
    %5401 = vmatprep.subr.bf16.mxu0 0
    %5402 = vmatpush2.bf16.msra.mxu0 0
    %5403 = vmatprep.mubr.bf16.mxu0 0
    %5404 = vmatmul.mubr.bf16.gmra.mxu0 %v5305
    %v5405 = vpop.f32.mrf.mxu0
    %v5406 = vadd.f32 0.0, %v5405
    %v5407 = vpop.f32.mrf.mxu0
    %v5408 = vpop.f32.mrf.mxu0
    %v5409 = vpop.f32.mrf.mxu0
    %5410 = vdwg.mxu0
    %v5411 = vadd.f32 %v5302, %v5406
    %s5412 = scalar_lea.vmem [#allocation5], 11
    %v5413 = vld [vmem:[%s5412] ss:$40 sm:$0x3]
    %v5414 = vpack.c.bf16 %v5413, %v5413
    %s5415 = scalar_lea.vmem [#allocation15], 704
    %v5416 = vld [vmem:[%s5415] sm:$0xf]
    %v5417 = vld [vmem:[%s5415 + $0x4] sm:$0xf]
    %v5418 = vld [vmem:[%s5415 + $0x8] sm:$0xf]
    %v5419 = vld [vmem:[%s5415 + $0xc] sm:$0xf]
    %v5420 = vld [vmem:[%s5415 + $0x10] sm:$0xf]
    %v5421 = vld [vmem:[%s5415 + $0x14] sm:$0xf]
    %v5422 = vld [vmem:[%s5415 + $0x18] sm:$0xf]
    %v5423 = vld [vmem:[%s5415 + $0x1c] sm:$0xf]
    %v5424 = vld [vmem:[%s5415 + $0x20] sm:$0xf]
    %v5425 = vld [vmem:[%s5415 + $0x24] sm:$0xf]
    %v5426 = vld [vmem:[%s5415 + $0x28] sm:$0xf]
    %v5427 = vld [vmem:[%s5415 + $0x2c] sm:$0xf]
    %v5428 = vld [vmem:[%s5415 + $0x30] sm:$0xf]
    %v5429 = vld [vmem:[%s5415 + $0x34] sm:$0xf]
    %v5430 = vld [vmem:[%s5415 + $0x38] sm:$0xf]
    %v5431 = vld [vmem:[%s5415 + $0x3c] sm:$0xf]
    %v5448 = vunpack.c.l.b16 %v5416
    %v5449 = vunpack.c.l.b16 %v5417
    %v5450 = vunpack.c.l.b16 %v5418
    %v5451 = vunpack.c.l.b16 %v5419
    %v5452 = vunpack.c.l.b16 %v5420
    %v5453 = vunpack.c.l.b16 %v5421
    %v5454 = vunpack.c.l.b16 %v5422
    %v5455 = vunpack.c.l.b16 %v5423
    %v5456 = vunpack.c.l.b16 %v5424
    %v5457 = vunpack.c.l.b16 %v5425
    %v5458 = vunpack.c.l.b16 %v5426
    %v5459 = vunpack.c.l.b16 %v5427
    %v5460 = vunpack.c.l.b16 %v5428
    %v5461 = vunpack.c.l.b16 %v5429
    %v5462 = vunpack.c.l.b16 %v5430
    %v5463 = vunpack.c.l.b16 %v5431
    %v5464 = vpack.c.b16 %v5449, %v5448
    %v5465 = vpack.c.b16 %v5451, %v5450
    %v5466 = vpack.c.b16 %v5453, %v5452
    %v5467 = vpack.c.b16 %v5455, %v5454
    %v5468 = vpack.c.b16 %v5457, %v5456
    %v5469 = vpack.c.b16 %v5459, %v5458
    %v5470 = vpack.c.b16 %v5461, %v5460
    %v5471 = vpack.c.b16 %v5463, %v5462
    %5480 = vmatprep.subr.bf16.mxu0 0
    %5481 = vmatpush1.bf16.msra.mxu0 %v5471
    %5482 = vmatprep.subr.bf16.mxu0 0
    %5483 = vmatpush1.bf16.msra.mxu0 %v5470
    %5484 = vmatprep.subr.bf16.mxu0 0
    %5485 = vmatpush1.bf16.msra.mxu0 %v5469
    %5486 = vmatprep.subr.bf16.mxu0 0
    %5487 = vmatpush1.bf16.msra.mxu0 %v5468
    %5488 = vmatprep.subr.bf16.mxu0 0
    %5489 = vmatpush1.bf16.msra.mxu0 %v5467
    %5490 = vmatprep.subr.bf16.mxu0 0
    %5491 = vmatpush1.bf16.msra.mxu0 %v5466
    %5492 = vmatprep.subr.bf16.mxu0 0
    %5493 = vmatpush1.bf16.msra.mxu0 %v5465
    %5494 = vmatprep.subr.bf16.mxu0 0
    %5495 = vmatpush1.bf16.msra.mxu0 %v5464
    %5496 = vmatprep.subr.bf16.mxu0 0
    %5497 = vmatpush2.bf16.msra.mxu0 0
    %5498 = vmatprep.subr.bf16.mxu0 0
    %5499 = vmatpush2.bf16.msra.mxu0 0
    %5500 = vmatprep.subr.bf16.mxu0 0
    %5501 = vmatpush2.bf16.msra.mxu0 0
    %5502 = vmatprep.subr.bf16.mxu0 0
    %5503 = vmatpush2.bf16.msra.mxu0 0
    %5504 = vmatprep.subr.bf16.mxu0 0
    %5505 = vmatpush2.bf16.msra.mxu0 0
    %5506 = vmatprep.subr.bf16.mxu0 0
    %5507 = vmatpush2.bf16.msra.mxu0 0
    %5508 = vmatprep.subr.bf16.mxu0 0
    %5509 = vmatpush2.bf16.msra.mxu0 0
    %5510 = vmatprep.subr.bf16.mxu0 0
    %5511 = vmatpush2.bf16.msra.mxu0 0
    %5512 = vmatprep.mubr.bf16.mxu0 0
    %5513 = vmatmul.mubr.bf16.gmra.mxu0 %v5414
    %v5514 = vpop.f32.mrf.mxu0
    %v5515 = vadd.f32 0.0, %v5514
    %v5516 = vpop.f32.mrf.mxu0
    %v5517 = vpop.f32.mrf.mxu0
    %v5518 = vpop.f32.mrf.mxu0
    %5519 = vdwg.mxu0
    %v5520 = vadd.f32 %v5411, %v5515
    %s5521 = scalar_lea.vmem [#allocation5], 12
    %v5522 = vld [vmem:[%s5521] ss:$40 sm:$0x3]
    %v5523 = vpack.c.bf16 %v5522, %v5522
    %s5524 = scalar_lea.vmem [#allocation15], 768
    %v5525 = vld [vmem:[%s5524] sm:$0xf]
    %v5526 = vld [vmem:[%s5524 + $0x4] sm:$0xf]
    %v5527 = vld [vmem:[%s5524 + $0x8] sm:$0xf]
    %v5528 = vld [vmem:[%s5524 + $0xc] sm:$0xf]
    %v5529 = vld [vmem:[%s5524 + $0x10] sm:$0xf]
    %v5530 = vld [vmem:[%s5524 + $0x14] sm:$0xf]
    %v5531 = vld [vmem:[%s5524 + $0x18] sm:$0xf]
    %v5532 = vld [vmem:[%s5524 + $0x1c] sm:$0xf]
    %v5533 = vld [vmem:[%s5524 + $0x20] sm:$0xf]
    %v5534 = vld [vmem:[%s5524 + $0x24] sm:$0xf]
    %v5535 = vld [vmem:[%s5524 + $0x28] sm:$0xf]
    %v5536 = vld [vmem:[%s5524 + $0x2c] sm:$0xf]
    %v5537 = vld [vmem:[%s5524 + $0x30] sm:$0xf]
    %v5538 = vld [vmem:[%s5524 + $0x34] sm:$0xf]
    %v5539 = vld [vmem:[%s5524 + $0x38] sm:$0xf]
    %v5540 = vld [vmem:[%s5524 + $0x3c] sm:$0xf]
    %v5557 = vunpack.c.l.b16 %v5525
    %v5558 = vunpack.c.l.b16 %v5526
    %v5559 = vunpack.c.l.b16 %v5527
    %v5560 = vunpack.c.l.b16 %v5528
    %v5561 = vunpack.c.l.b16 %v5529
    %v5562 = vunpack.c.l.b16 %v5530
    %v5563 = vunpack.c.l.b16 %v5531
    %v5564 = vunpack.c.l.b16 %v5532
    %v5565 = vunpack.c.l.b16 %v5533
    %v5566 = vunpack.c.l.b16 %v5534
    %v5567 = vunpack.c.l.b16 %v5535
    %v5568 = vunpack.c.l.b16 %v5536
    %v5569 = vunpack.c.l.b16 %v5537
    %v5570 = vunpack.c.l.b16 %v5538
    %v5571 = vunpack.c.l.b16 %v5539
    %v5572 = vunpack.c.l.b16 %v5540
    %v5573 = vpack.c.b16 %v5558, %v5557
    %v5574 = vpack.c.b16 %v5560, %v5559
    %v5575 = vpack.c.b16 %v5562, %v5561
    %v5576 = vpack.c.b16 %v5564, %v5563
    %v5577 = vpack.c.b16 %v5566, %v5565
    %v5578 = vpack.c.b16 %v5568, %v5567
    %v5579 = vpack.c.b16 %v5570, %v5569
    %v5580 = vpack.c.b16 %v5572, %v5571
    %5589 = vmatprep.subr.bf16.mxu0 0
    %5590 = vmatpush1.bf16.msra.mxu0 %v5580
    %5591 = vmatprep.subr.bf16.mxu0 0
    %5592 = vmatpush1.bf16.msra.mxu0 %v5579
    %5593 = vmatprep.subr.bf16.mxu0 0
    %5594 = vmatpush1.bf16.msra.mxu0 %v5578
    %5595 = vmatprep.subr.bf16.mxu0 0
    %5596 = vmatpush1.bf16.msra.mxu0 %v5577
    %5597 = vmatprep.subr.bf16.mxu0 0
    %5598 = vmatpush1.bf16.msra.mxu0 %v5576
    %5599 = vmatprep.subr.bf16.mxu0 0
    %5600 = vmatpush1.bf16.msra.mxu0 %v5575
    %5601 = vmatprep.subr.bf16.mxu0 0
    %5602 = vmatpush1.bf16.msra.mxu0 %v5574
    %5603 = vmatprep.subr.bf16.mxu0 0
    %5604 = vmatpush1.bf16.msra.mxu0 %v5573
    %5605 = vmatprep.subr.bf16.mxu0 0
    %5606 = vmatpush2.bf16.msra.mxu0 0
    %5607 = vmatprep.subr.bf16.mxu0 0
    %5608 = vmatpush2.bf16.msra.mxu0 0
    %5609 = vmatprep.subr.bf16.mxu0 0
    %5610 = vmatpush2.bf16.msra.mxu0 0
    %5611 = vmatprep.subr.bf16.mxu0 0
    %5612 = vmatpush2.bf16.msra.mxu0 0
    %5613 = vmatprep.subr.bf16.mxu0 0
    %5614 = vmatpush2.bf16.msra.mxu0 0
    %5615 = vmatprep.subr.bf16.mxu0 0
    %5616 = vmatpush2.bf16.msra.mxu0 0
    %5617 = vmatprep.subr.bf16.mxu0 0
    %5618 = vmatpush2.bf16.msra.mxu0 0
    %5619 = vmatprep.subr.bf16.mxu0 0
    %5620 = vmatpush2.bf16.msra.mxu0 0
    %5621 = vmatprep.mubr.bf16.mxu0 0
    %5622 = vmatmul.mubr.bf16.gmra.mxu0 %v5523
    %v5623 = vpop.f32.mrf.mxu0
    %v5624 = vadd.f32 0.0, %v5623
    %v5625 = vpop.f32.mrf.mxu0
    %v5626 = vpop.f32.mrf.mxu0
    %v5627 = vpop.f32.mrf.mxu0
    %5628 = vdwg.mxu0
    %v5629 = vadd.f32 %v5520, %v5624
    %s5630 = scalar_lea.vmem [#allocation5], 13
    %v5631 = vld [vmem:[%s5630] ss:$40 sm:$0x3]
    %v5632 = vpack.c.bf16 %v5631, %v5631
    %s5633 = scalar_lea.vmem [#allocation15], 832
    %v5634 = vld [vmem:[%s5633] sm:$0xf]
    %v5635 = vld [vmem:[%s5633 + $0x4] sm:$0xf]
    %v5636 = vld [vmem:[%s5633 + $0x8] sm:$0xf]
    %v5637 = vld [vmem:[%s5633 + $0xc] sm:$0xf]
    %v5638 = vld [vmem:[%s5633 + $0x10] sm:$0xf]
    %v5639 = vld [vmem:[%s5633 + $0x14] sm:$0xf]
    %v5640 = vld [vmem:[%s5633 + $0x18] sm:$0xf]
    %v5641 = vld [vmem:[%s5633 + $0x1c] sm:$0xf]
    %v5642 = vld [vmem:[%s5633 + $0x20] sm:$0xf]
    %v5643 = vld [vmem:[%s5633 + $0x24] sm:$0xf]
    %v5644 = vld [vmem:[%s5633 + $0x28] sm:$0xf]
    %v5645 = vld [vmem:[%s5633 + $0x2c] sm:$0xf]
    %v5646 = vld [vmem:[%s5633 + $0x30] sm:$0xf]
    %v5647 = vld [vmem:[%s5633 + $0x34] sm:$0xf]
    %v5648 = vld [vmem:[%s5633 + $0x38] sm:$0xf]
    %v5649 = vld [vmem:[%s5633 + $0x3c] sm:$0xf]
    %v5666 = vunpack.c.l.b16 %v5634
    %v5667 = vunpack.c.l.b16 %v5635
    %v5668 = vunpack.c.l.b16 %v5636
    %v5669 = vunpack.c.l.b16 %v5637
    %v5670 = vunpack.c.l.b16 %v5638
    %v5671 = vunpack.c.l.b16 %v5639
    %v5672 = vunpack.c.l.b16 %v5640
    %v5673 = vunpack.c.l.b16 %v5641
    %v5674 = vunpack.c.l.b16 %v5642
    %v5675 = vunpack.c.l.b16 %v5643
    %v5676 = vunpack.c.l.b16 %v5644
    %v5677 = vunpack.c.l.b16 %v5645
    %v5678 = vunpack.c.l.b16 %v5646
    %v5679 = vunpack.c.l.b16 %v5647
    %v5680 = vunpack.c.l.b16 %v5648
    %v5681 = vunpack.c.l.b16 %v5649
    %v5682 = vpack.c.b16 %v5667, %v5666
    %v5683 = vpack.c.b16 %v5669, %v5668
    %v5684 = vpack.c.b16 %v5671, %v5670
    %v5685 = vpack.c.b16 %v5673, %v5672
    %v5686 = vpack.c.b16 %v5675, %v5674
    %v5687 = vpack.c.b16 %v5677, %v5676
    %v5688 = vpack.c.b16 %v5679, %v5678
    %v5689 = vpack.c.b16 %v5681, %v5680
    %5698 = vmatprep.subr.bf16.mxu0 0
    %5699 = vmatpush1.bf16.msra.mxu0 %v5689
    %5700 = vmatprep.subr.bf16.mxu0 0
    %5701 = vmatpush1.bf16.msra.mxu0 %v5688
    %5702 = vmatprep.subr.bf16.mxu0 0
    %5703 = vmatpush1.bf16.msra.mxu0 %v5687
    %5704 = vmatprep.subr.bf16.mxu0 0
    %5705 = vmatpush1.bf16.msra.mxu0 %v5686
    %5706 = vmatprep.subr.bf16.mxu0 0
    %5707 = vmatpush1.bf16.msra.mxu0 %v5685
    %5708 = vmatprep.subr.bf16.mxu0 0
    %5709 = vmatpush1.bf16.msra.mxu0 %v5684
    %5710 = vmatprep.subr.bf16.mxu0 0
    %5711 = vmatpush1.bf16.msra.mxu0 %v5683
    %5712 = vmatprep.subr.bf16.mxu0 0
    %5713 = vmatpush1.bf16.msra.mxu0 %v5682
    %5714 = vmatprep.subr.bf16.mxu0 0
    %5715 = vmatpush2.bf16.msra.mxu0 0
    %5716 = vmatprep.subr.bf16.mxu0 0
    %5717 = vmatpush2.bf16.msra.mxu0 0
    %5718 = vmatprep.subr.bf16.mxu0 0
    %5719 = vmatpush2.bf16.msra.mxu0 0
    %5720 = vmatprep.subr.bf16.mxu0 0
    %5721 = vmatpush2.bf16.msra.mxu0 0
    %5722 = vmatprep.subr.bf16.mxu0 0
    %5723 = vmatpush2.bf16.msra.mxu0 0
    %5724 = vmatprep.subr.bf16.mxu0 0
    %5725 = vmatpush2.bf16.msra.mxu0 0
    %5726 = vmatprep.subr.bf16.mxu0 0
    %5727 = vmatpush2.bf16.msra.mxu0 0
    %5728 = vmatprep.subr.bf16.mxu0 0
    %5729 = vmatpush2.bf16.msra.mxu0 0
    %5730 = vmatprep.mubr.bf16.mxu0 0
    %5731 = vmatmul.mubr.bf16.gmra.mxu0 %v5632
    %v5732 = vpop.f32.mrf.mxu0
    %v5733 = vadd.f32 0.0, %v5732
    %v5734 = vpop.f32.mrf.mxu0
    %v5735 = vpop.f32.mrf.mxu0
    %v5736 = vpop.f32.mrf.mxu0
    %5737 = vdwg.mxu0
    %v5738 = vadd.f32 %v5629, %v5733
    %s5739 = scalar_lea.vmem [#allocation5], 14
    %v5740 = vld [vmem:[%s5739] ss:$40 sm:$0x3]
    %v5741 = vpack.c.bf16 %v5740, %v5740
    %s5742 = scalar_lea.vmem [#allocation15], 896
    %v5743 = vld [vmem:[%s5742] sm:$0xf]
    %v5744 = vld [vmem:[%s5742 + $0x4] sm:$0xf]
    %v5745 = vld [vmem:[%s5742 + $0x8] sm:$0xf]
    %v5746 = vld [vmem:[%s5742 + $0xc] sm:$0xf]
    %v5747 = vld [vmem:[%s5742 + $0x10] sm:$0xf]
    %v5748 = vld [vmem:[%s5742 + $0x14] sm:$0xf]
    %v5749 = vld [vmem:[%s5742 + $0x18] sm:$0xf]
    %v5750 = vld [vmem:[%s5742 + $0x1c] sm:$0xf]
    %v5751 = vld [vmem:[%s5742 + $0x20] sm:$0xf]
    %v5752 = vld [vmem:[%s5742 + $0x24] sm:$0xf]
    %v5753 = vld [vmem:[%s5742 + $0x28] sm:$0xf]
    %v5754 = vld [vmem:[%s5742 + $0x2c] sm:$0xf]
    %v5755 = vld [vmem:[%s5742 + $0x30] sm:$0xf]
    %v5756 = vld [vmem:[%s5742 + $0x34] sm:$0xf]
    %v5757 = vld [vmem:[%s5742 + $0x38] sm:$0xf]
    %v5758 = vld [vmem:[%s5742 + $0x3c] sm:$0xf]
    %v5775 = vunpack.c.l.b16 %v5743
    %v5776 = vunpack.c.l.b16 %v5744
    %v5777 = vunpack.c.l.b16 %v5745
    %v5778 = vunpack.c.l.b16 %v5746
    %v5779 = vunpack.c.l.b16 %v5747
    %v5780 = vunpack.c.l.b16 %v5748
    %v5781 = vunpack.c.l.b16 %v5749
    %v5782 = vunpack.c.l.b16 %v5750
    %v5783 = vunpack.c.l.b16 %v5751
    %v5784 = vunpack.c.l.b16 %v5752
    %v5785 = vunpack.c.l.b16 %v5753
    %v5786 = vunpack.c.l.b16 %v5754
    %v5787 = vunpack.c.l.b16 %v5755
    %v5788 = vunpack.c.l.b16 %v5756
    %v5789 = vunpack.c.l.b16 %v5757
    %v5790 = vunpack.c.l.b16 %v5758
    %v5791 = vpack.c.b16 %v5776, %v5775
    %v5792 = vpack.c.b16 %v5778, %v5777
    %v5793 = vpack.c.b16 %v5780, %v5779
    %v5794 = vpack.c.b16 %v5782, %v5781
    %v5795 = vpack.c.b16 %v5784, %v5783
    %v5796 = vpack.c.b16 %v5786, %v5785
    %v5797 = vpack.c.b16 %v5788, %v5787
    %v5798 = vpack.c.b16 %v5790, %v5789
    %5807 = vmatprep.subr.bf16.mxu0 0
    %5808 = vmatpush1.bf16.msra.mxu0 %v5798
    %5809 = vmatprep.subr.bf16.mxu0 0
    %5810 = vmatpush1.bf16.msra.mxu0 %v5797
    %5811 = vmatprep.subr.bf16.mxu0 0
    %5812 = vmatpush1.bf16.msra.mxu0 %v5796
    %5813 = vmatprep.subr.bf16.mxu0 0
    %5814 = vmatpush1.bf16.msra.mxu0 %v5795
    %5815 = vmatprep.subr.bf16.mxu0 0
    %5816 = vmatpush1.bf16.msra.mxu0 %v5794
    %5817 = vmatprep.subr.bf16.mxu0 0
    %5818 = vmatpush1.bf16.msra.mxu0 %v5793
    %5819 = vmatprep.subr.bf16.mxu0 0
    %5820 = vmatpush1.bf16.msra.mxu0 %v5792
    %5821 = vmatprep.subr.bf16.mxu0 0
    %5822 = vmatpush1.bf16.msra.mxu0 %v5791
    %5823 = vmatprep.subr.bf16.mxu0 0
    %5824 = vmatpush2.bf16.msra.mxu0 0
    %5825 = vmatprep.subr.bf16.mxu0 0
    %5826 = vmatpush2.bf16.msra.mxu0 0
    %5827 = vmatprep.subr.bf16.mxu0 0
    %5828 = vmatpush2.bf16.msra.mxu0 0
    %5829 = vmatprep.subr.bf16.mxu0 0
    %5830 = vmatpush2.bf16.msra.mxu0 0
    %5831 = vmatprep.subr.bf16.mxu0 0
    %5832 = vmatpush2.bf16.msra.mxu0 0
    %5833 = vmatprep.subr.bf16.mxu0 0
    %5834 = vmatpush2.bf16.msra.mxu0 0
    %5835 = vmatprep.subr.bf16.mxu0 0
    %5836 = vmatpush2.bf16.msra.mxu0 0
    %5837 = vmatprep.subr.bf16.mxu0 0
    %5838 = vmatpush2.bf16.msra.mxu0 0
    %5839 = vmatprep.mubr.bf16.mxu0 0
    %5840 = vmatmul.mubr.bf16.gmra.mxu0 %v5741
    %v5841 = vpop.f32.mrf.mxu0
    %v5842 = vadd.f32 0.0, %v5841
    %v5843 = vpop.f32.mrf.mxu0
    %v5844 = vpop.f32.mrf.mxu0
    %v5845 = vpop.f32.mrf.mxu0
    %5846 = vdwg.mxu0
    %v5847 = vadd.f32 %v5738, %v5842
    %s5848 = scalar_lea.vmem [#allocation5], 15
    %v5849 = vld [vmem:[%s5848] ss:$40 sm:$0x3]
    %v5850 = vpack.c.bf16 %v5849, %v5849
    %s5851 = scalar_lea.vmem [#allocation15], 960
    %v5852 = vld [vmem:[%s5851] sm:$0xf]
    %v5853 = vld [vmem:[%s5851 + $0x4] sm:$0xf]
    %v5854 = vld [vmem:[%s5851 + $0x8] sm:$0xf]
    %v5855 = vld [vmem:[%s5851 + $0xc] sm:$0xf]
    %v5856 = vld [vmem:[%s5851 + $0x10] sm:$0xf]
    %v5857 = vld [vmem:[%s5851 + $0x14] sm:$0xf]
    %v5858 = vld [vmem:[%s5851 + $0x18] sm:$0xf]
    %v5859 = vld [vmem:[%s5851 + $0x1c] sm:$0xf]
    %v5860 = vld [vmem:[%s5851 + $0x20] sm:$0xf]
    %v5861 = vld [vmem:[%s5851 + $0x24] sm:$0xf]
    %v5862 = vld [vmem:[%s5851 + $0x28] sm:$0xf]
    %v5863 = vld [vmem:[%s5851 + $0x2c] sm:$0xf]
    %v5864 = vld [vmem:[%s5851 + $0x30] sm:$0xf]
    %v5865 = vld [vmem:[%s5851 + $0x34] sm:$0xf]
    %v5866 = vld [vmem:[%s5851 + $0x38] sm:$0xf]
    %v5867 = vld [vmem:[%s5851 + $0x3c] sm:$0xf]
    %v5884 = vunpack.c.l.b16 %v5852
    %v5885 = vunpack.c.l.b16 %v5853
    %v5886 = vunpack.c.l.b16 %v5854
    %v5887 = vunpack.c.l.b16 %v5855
    %v5888 = vunpack.c.l.b16 %v5856
    %v5889 = vunpack.c.l.b16 %v5857
    %v5890 = vunpack.c.l.b16 %v5858
    %v5891 = vunpack.c.l.b16 %v5859
    %v5892 = vunpack.c.l.b16 %v5860
    %v5893 = vunpack.c.l.b16 %v5861
    %v5894 = vunpack.c.l.b16 %v5862
    %v5895 = vunpack.c.l.b16 %v5863
    %v5896 = vunpack.c.l.b16 %v5864
    %v5897 = vunpack.c.l.b16 %v5865
    %v5898 = vunpack.c.l.b16 %v5866
    %v5899 = vunpack.c.l.b16 %v5867
    %v5900 = vpack.c.b16 %v5885, %v5884
    %v5901 = vpack.c.b16 %v5887, %v5886
    %v5902 = vpack.c.b16 %v5889, %v5888
    %v5903 = vpack.c.b16 %v5891, %v5890
    %v5904 = vpack.c.b16 %v5893, %v5892
    %v5905 = vpack.c.b16 %v5895, %v5894
    %v5906 = vpack.c.b16 %v5897, %v5896
    %v5907 = vpack.c.b16 %v5899, %v5898
    %5916 = vmatprep.subr.bf16.mxu0 0
    %5917 = vmatpush1.bf16.msra.mxu0 %v5907
    %5918 = vmatprep.subr.bf16.mxu0 0
    %5919 = vmatpush1.bf16.msra.mxu0 %v5906
    %5920 = vmatprep.subr.bf16.mxu0 0
    %5921 = vmatpush1.bf16.msra.mxu0 %v5905
    %5922 = vmatprep.subr.bf16.mxu0 0
    %5923 = vmatpush1.bf16.msra.mxu0 %v5904
    %5924 = vmatprep.subr.bf16.mxu0 0
    %5925 = vmatpush1.bf16.msra.mxu0 %v5903
    %5926 = vmatprep.subr.bf16.mxu0 0
    %5927 = vmatpush1.bf16.msra.mxu0 %v5902
    %5928 = vmatprep.subr.bf16.mxu0 0
    %5929 = vmatpush1.bf16.msra.mxu0 %v5901
    %5930 = vmatprep.subr.bf16.mxu0 0
    %5931 = vmatpush1.bf16.msra.mxu0 %v5900
    %5932 = vmatprep.subr.bf16.mxu0 0
    %5933 = vmatpush2.bf16.msra.mxu0 0
    %5934 = vmatprep.subr.bf16.mxu0 0
    %5935 = vmatpush2.bf16.msra.mxu0 0
    %5936 = vmatprep.subr.bf16.mxu0 0
    %5937 = vmatpush2.bf16.msra.mxu0 0
    %5938 = vmatprep.subr.bf16.mxu0 0
    %5939 = vmatpush2.bf16.msra.mxu0 0
    %5940 = vmatprep.subr.bf16.mxu0 0
    %5941 = vmatpush2.bf16.msra.mxu0 0
    %5942 = vmatprep.subr.bf16.mxu0 0
    %5943 = vmatpush2.bf16.msra.mxu0 0
    %5944 = vmatprep.subr.bf16.mxu0 0
    %5945 = vmatpush2.bf16.msra.mxu0 0
    %5946 = vmatprep.subr.bf16.mxu0 0
    %5947 = vmatpush2.bf16.msra.mxu0 0
    %5948 = vmatprep.mubr.bf16.mxu0 0
    %5949 = vmatmul.mubr.bf16.gmra.mxu0 %v5850
    %v5950 = vpop.f32.mrf.mxu0
    %v5951 = vadd.f32 0.0, %v5950
    %v5952 = vpop.f32.mrf.mxu0
    %v5953 = vpop.f32.mrf.mxu0
    %v5954 = vpop.f32.mrf.mxu0
    %5955 = vdwg.mxu0
    %v5956 = vadd.f32 %v5847, %v5951
    %s5957 = scalar_lea.vmem [#allocation5], 16
    %v5958 = vld [vmem:[%s5957] ss:$40 sm:$0x3]
    %v5959 = vpack.c.bf16 %v5958, %v5958
    %s5960 = scalar_lea.vmem [#allocation15], 1024
    %v5961 = vld [vmem:[%s5960] sm:$0xf]
    %v5962 = vld [vmem:[%s5960 + $0x4] sm:$0xf]
    %v5963 = vld [vmem:[%s5960 + $0x8] sm:$0xf]
    %v5964 = vld [vmem:[%s5960 + $0xc] sm:$0xf]
    %v5965 = vld [vmem:[%s5960 + $0x10] sm:$0xf]
    %v5966 = vld [vmem:[%s5960 + $0x14] sm:$0xf]
    %v5967 = vld [vmem:[%s5960 + $0x18] sm:$0xf]
    %v5968 = vld [vmem:[%s5960 + $0x1c] sm:$0xf]
    %v5969 = vld [vmem:[%s5960 + $0x20] sm:$0xf]
    %v5970 = vld [vmem:[%s5960 + $0x24] sm:$0xf]
    %v5971 = vld [vmem:[%s5960 + $0x28] sm:$0xf]
    %v5972 = vld [vmem:[%s5960 + $0x2c] sm:$0xf]
    %v5973 = vld [vmem:[%s5960 + $0x30] sm:$0xf]
    %v5974 = vld [vmem:[%s5960 + $0x34] sm:$0xf]
    %v5975 = vld [vmem:[%s5960 + $0x38] sm:$0xf]
    %v5976 = vld [vmem:[%s5960 + $0x3c] sm:$0xf]
    %v5993 = vunpack.c.l.b16 %v5961
    %v5994 = vunpack.c.l.b16 %v5962
    %v5995 = vunpack.c.l.b16 %v5963
    %v5996 = vunpack.c.l.b16 %v5964
    %v5997 = vunpack.c.l.b16 %v5965
    %v5998 = vunpack.c.l.b16 %v5966
    %v5999 = vunpack.c.l.b16 %v5967
    %v6000 = vunpack.c.l.b16 %v5968
    %v6001 = vunpack.c.l.b16 %v5969
    %v6002 = vunpack.c.l.b16 %v5970
    %v6003 = vunpack.c.l.b16 %v5971
    %v6004 = vunpack.c.l.b16 %v5972
    %v6005 = vunpack.c.l.b16 %v5973
    %v6006 = vunpack.c.l.b16 %v5974
    %v6007 = vunpack.c.l.b16 %v5975
    %v6008 = vunpack.c.l.b16 %v5976
    %v6009 = vpack.c.b16 %v5994, %v5993
    %v6010 = vpack.c.b16 %v5996, %v5995
    %v6011 = vpack.c.b16 %v5998, %v5997
    %v6012 = vpack.c.b16 %v6000, %v5999
    %v6013 = vpack.c.b16 %v6002, %v6001
    %v6014 = vpack.c.b16 %v6004, %v6003
    %v6015 = vpack.c.b16 %v6006, %v6005
    %v6016 = vpack.c.b16 %v6008, %v6007
    %6025 = vmatprep.subr.bf16.mxu0 0
    %6026 = vmatpush1.bf16.msra.mxu0 %v6016
    %6027 = vmatprep.subr.bf16.mxu0 0
    %6028 = vmatpush1.bf16.msra.mxu0 %v6015
    %6029 = vmatprep.subr.bf16.mxu0 0
    %6030 = vmatpush1.bf16.msra.mxu0 %v6014
    %6031 = vmatprep.subr.bf16.mxu0 0
    %6032 = vmatpush1.bf16.msra.mxu0 %v6013
    %6033 = vmatprep.subr.bf16.mxu0 0
    %6034 = vmatpush1.bf16.msra.mxu0 %v6012
    %6035 = vmatprep.subr.bf16.mxu0 0
    %6036 = vmatpush1.bf16.msra.mxu0 %v6011
    %6037 = vmatprep.subr.bf16.mxu0 0
    %6038 = vmatpush1.bf16.msra.mxu0 %v6010
    %6039 = vmatprep.subr.bf16.mxu0 0
    %6040 = vmatpush1.bf16.msra.mxu0 %v6009
    %6041 = vmatprep.subr.bf16.mxu0 0
    %6042 = vmatpush2.bf16.msra.mxu0 0
    %6043 = vmatprep.subr.bf16.mxu0 0
    %6044 = vmatpush2.bf16.msra.mxu0 0
    %6045 = vmatprep.subr.bf16.mxu0 0
    %6046 = vmatpush2.bf16.msra.mxu0 0
    %6047 = vmatprep.subr.bf16.mxu0 0
    %6048 = vmatpush2.bf16.msra.mxu0 0
    %6049 = vmatprep.subr.bf16.mxu0 0
    %6050 = vmatpush2.bf16.msra.mxu0 0
    %6051 = vmatprep.subr.bf16.mxu0 0
    %6052 = vmatpush2.bf16.msra.mxu0 0
    %6053 = vmatprep.subr.bf16.mxu0 0
    %6054 = vmatpush2.bf16.msra.mxu0 0
    %6055 = vmatprep.subr.bf16.mxu0 0
    %6056 = vmatpush2.bf16.msra.mxu0 0
    %6057 = vmatprep.mubr.bf16.mxu0 0
    %6058 = vmatmul.mubr.bf16.gmra.mxu0 %v5959
    %v6059 = vpop.f32.mrf.mxu0
    %v6060 = vadd.f32 0.0, %v6059
    %v6061 = vpop.f32.mrf.mxu0
    %v6062 = vpop.f32.mrf.mxu0
    %v6063 = vpop.f32.mrf.mxu0
    %6064 = vdwg.mxu0
    %v6065 = vadd.f32 %v5956, %v6060
    %s6066 = scalar_lea.vmem [#allocation5], 17
    %v6067 = vld [vmem:[%s6066] ss:$40 sm:$0x3]
    %v6068 = vpack.c.bf16 %v6067, %v6067
    %s6069 = scalar_lea.vmem [#allocation15], 1088
    %v6070 = vld [vmem:[%s6069] sm:$0xf]
    %v6071 = vld [vmem:[%s6069 + $0x4] sm:$0xf]
    %v6072 = vld [vmem:[%s6069 + $0x8] sm:$0xf]
    %v6073 = vld [vmem:[%s6069 + $0xc] sm:$0xf]
    %v6074 = vld [vmem:[%s6069 + $0x10] sm:$0xf]
    %v6075 = vld [vmem:[%s6069 + $0x14] sm:$0xf]
    %v6076 = vld [vmem:[%s6069 + $0x18] sm:$0xf]
    %v6077 = vld [vmem:[%s6069 + $0x1c] sm:$0xf]
    %v6078 = vld [vmem:[%s6069 + $0x20] sm:$0xf]
    %v6079 = vld [vmem:[%s6069 + $0x24] sm:$0xf]
    %v6080 = vld [vmem:[%s6069 + $0x28] sm:$0xf]
    %v6081 = vld [vmem:[%s6069 + $0x2c] sm:$0xf]
    %v6082 = vld [vmem:[%s6069 + $0x30] sm:$0xf]
    %v6083 = vld [vmem:[%s6069 + $0x34] sm:$0xf]
    %v6084 = vld [vmem:[%s6069 + $0x38] sm:$0xf]
    %v6085 = vld [vmem:[%s6069 + $0x3c] sm:$0xf]
    %v6102 = vunpack.c.l.b16 %v6070
    %v6103 = vunpack.c.l.b16 %v6071
    %v6104 = vunpack.c.l.b16 %v6072
    %v6105 = vunpack.c.l.b16 %v6073
    %v6106 = vunpack.c.l.b16 %v6074
    %v6107 = vunpack.c.l.b16 %v6075
    %v6108 = vunpack.c.l.b16 %v6076
    %v6109 = vunpack.c.l.b16 %v6077
    %v6110 = vunpack.c.l.b16 %v6078
    %v6111 = vunpack.c.l.b16 %v6079
    %v6112 = vunpack.c.l.b16 %v6080
    %v6113 = vunpack.c.l.b16 %v6081
    %v6114 = vunpack.c.l.b16 %v6082
    %v6115 = vunpack.c.l.b16 %v6083
    %v6116 = vunpack.c.l.b16 %v6084
    %v6117 = vunpack.c.l.b16 %v6085
    %v6118 = vpack.c.b16 %v6103, %v6102
    %v6119 = vpack.c.b16 %v6105, %v6104
    %v6120 = vpack.c.b16 %v6107, %v6106
    %v6121 = vpack.c.b16 %v6109, %v6108
    %v6122 = vpack.c.b16 %v6111, %v6110
    %v6123 = vpack.c.b16 %v6113, %v6112
    %v6124 = vpack.c.b16 %v6115, %v6114
    %v6125 = vpack.c.b16 %v6117, %v6116
    %6134 = vmatprep.subr.bf16.mxu0 0
    %6135 = vmatpush1.bf16.msra.mxu0 %v6125
    %6136 = vmatprep.subr.bf16.mxu0 0
    %6137 = vmatpush1.bf16.msra.mxu0 %v6124
    %6138 = vmatprep.subr.bf16.mxu0 0
    %6139 = vmatpush1.bf16.msra.mxu0 %v6123
    %6140 = vmatprep.subr.bf16.mxu0 0
    %6141 = vmatpush1.bf16.msra.mxu0 %v6122
    %6142 = vmatprep.subr.bf16.mxu0 0
    %6143 = vmatpush1.bf16.msra.mxu0 %v6121
    %6144 = vmatprep.subr.bf16.mxu0 0
    %6145 = vmatpush1.bf16.msra.mxu0 %v6120
    %6146 = vmatprep.subr.bf16.mxu0 0
    %6147 = vmatpush1.bf16.msra.mxu0 %v6119
    %6148 = vmatprep.subr.bf16.mxu0 0
    %6149 = vmatpush1.bf16.msra.mxu0 %v6118
    %6150 = vmatprep.subr.bf16.mxu0 0
    %6151 = vmatpush2.bf16.msra.mxu0 0
    %6152 = vmatprep.subr.bf16.mxu0 0
    %6153 = vmatpush2.bf16.msra.mxu0 0
    %6154 = vmatprep.subr.bf16.mxu0 0
    %6155 = vmatpush2.bf16.msra.mxu0 0
    %6156 = vmatprep.subr.bf16.mxu0 0
    %6157 = vmatpush2.bf16.msra.mxu0 0
    %6158 = vmatprep.subr.bf16.mxu0 0
    %6159 = vmatpush2.bf16.msra.mxu0 0
    %6160 = vmatprep.subr.bf16.mxu0 0
    %6161 = vmatpush2.bf16.msra.mxu0 0
    %6162 = vmatprep.subr.bf16.mxu0 0
    %6163 = vmatpush2.bf16.msra.mxu0 0
    %6164 = vmatprep.subr.bf16.mxu0 0
    %6165 = vmatpush2.bf16.msra.mxu0 0
    %6166 = vmatprep.mubr.bf16.mxu0 0
    %6167 = vmatmul.mubr.bf16.gmra.mxu0 %v6068
    %v6168 = vpop.f32.mrf.mxu0
    %v6169 = vadd.f32 0.0, %v6168
    %v6170 = vpop.f32.mrf.mxu0
    %v6171 = vpop.f32.mrf.mxu0
    %v6172 = vpop.f32.mrf.mxu0
    %6173 = vdwg.mxu0
    %v6174 = vadd.f32 %v6065, %v6169
    %s6175 = scalar_lea.vmem [#allocation5], 18
    %v6176 = vld [vmem:[%s6175] ss:$40 sm:$0x3]
    %v6177 = vpack.c.bf16 %v6176, %v6176
    %s6178 = scalar_lea.vmem [#allocation15], 1152
    %v6179 = vld [vmem:[%s6178] sm:$0xf]
    %v6180 = vld [vmem:[%s6178 + $0x4] sm:$0xf]
    %v6181 = vld [vmem:[%s6178 + $0x8] sm:$0xf]
    %v6182 = vld [vmem:[%s6178 + $0xc] sm:$0xf]
    %v6183 = vld [vmem:[%s6178 + $0x10] sm:$0xf]
    %v6184 = vld [vmem:[%s6178 + $0x14] sm:$0xf]
    %v6185 = vld [vmem:[%s6178 + $0x18] sm:$0xf]
    %v6186 = vld [vmem:[%s6178 + $0x1c] sm:$0xf]
    %v6187 = vld [vmem:[%s6178 + $0x20] sm:$0xf]
    %v6188 = vld [vmem:[%s6178 + $0x24] sm:$0xf]
    %v6189 = vld [vmem:[%s6178 + $0x28] sm:$0xf]
    %v6190 = vld [vmem:[%s6178 + $0x2c] sm:$0xf]
    %v6191 = vld [vmem:[%s6178 + $0x30] sm:$0xf]
    %v6192 = vld [vmem:[%s6178 + $0x34] sm:$0xf]
    %v6193 = vld [vmem:[%s6178 + $0x38] sm:$0xf]
    %v6194 = vld [vmem:[%s6178 + $0x3c] sm:$0xf]
    %v6211 = vunpack.c.l.b16 %v6179
    %v6212 = vunpack.c.l.b16 %v6180
    %v6213 = vunpack.c.l.b16 %v6181
    %v6214 = vunpack.c.l.b16 %v6182
    %v6215 = vunpack.c.l.b16 %v6183
    %v6216 = vunpack.c.l.b16 %v6184
    %v6217 = vunpack.c.l.b16 %v6185
    %v6218 = vunpack.c.l.b16 %v6186
    %v6219 = vunpack.c.l.b16 %v6187
    %v6220 = vunpack.c.l.b16 %v6188
    %v6221 = vunpack.c.l.b16 %v6189
    %v6222 = vunpack.c.l.b16 %v6190
    %v6223 = vunpack.c.l.b16 %v6191
    %v6224 = vunpack.c.l.b16 %v6192
    %v6225 = vunpack.c.l.b16 %v6193
    %v6226 = vunpack.c.l.b16 %v6194
    %v6227 = vpack.c.b16 %v6212, %v6211
    %v6228 = vpack.c.b16 %v6214, %v6213
    %v6229 = vpack.c.b16 %v6216, %v6215
    %v6230 = vpack.c.b16 %v6218, %v6217
    %v6231 = vpack.c.b16 %v6220, %v6219
    %v6232 = vpack.c.b16 %v6222, %v6221
    %v6233 = vpack.c.b16 %v6224, %v6223
    %v6234 = vpack.c.b16 %v6226, %v6225
    %6243 = vmatprep.subr.bf16.mxu0 0
    %6244 = vmatpush1.bf16.msra.mxu0 %v6234
    %6245 = vmatprep.subr.bf16.mxu0 0
    %6246 = vmatpush1.bf16.msra.mxu0 %v6233
    %6247 = vmatprep.subr.bf16.mxu0 0
    %6248 = vmatpush1.bf16.msra.mxu0 %v6232
    %6249 = vmatprep.subr.bf16.mxu0 0
    %6250 = vmatpush1.bf16.msra.mxu0 %v6231
    %6251 = vmatprep.subr.bf16.mxu0 0
    %6252 = vmatpush1.bf16.msra.mxu0 %v6230
    %6253 = vmatprep.subr.bf16.mxu0 0
    %6254 = vmatpush1.bf16.msra.mxu0 %v6229
    %6255 = vmatprep.subr.bf16.mxu0 0
    %6256 = vmatpush1.bf16.msra.mxu0 %v6228
    %6257 = vmatprep.subr.bf16.mxu0 0
    %6258 = vmatpush1.bf16.msra.mxu0 %v6227
    %6259 = vmatprep.subr.bf16.mxu0 0
    %6260 = vmatpush2.bf16.msra.mxu0 0
    %6261 = vmatprep.subr.bf16.mxu0 0
    %6262 = vmatpush2.bf16.msra.mxu0 0
    %6263 = vmatprep.subr.bf16.mxu0 0
    %6264 = vmatpush2.bf16.msra.mxu0 0
    %6265 = vmatprep.subr.bf16.mxu0 0
    %6266 = vmatpush2.bf16.msra.mxu0 0
    %6267 = vmatprep.subr.bf16.mxu0 0
    %6268 = vmatpush2.bf16.msra.mxu0 0
    %6269 = vmatprep.subr.bf16.mxu0 0
    %6270 = vmatpush2.bf16.msra.mxu0 0
    %6271 = vmatprep.subr.bf16.mxu0 0
    %6272 = vmatpush2.bf16.msra.mxu0 0
    %6273 = vmatprep.subr.bf16.mxu0 0
    %6274 = vmatpush2.bf16.msra.mxu0 0
    %6275 = vmatprep.mubr.bf16.mxu0 0
    %6276 = vmatmul.mubr.bf16.gmra.mxu0 %v6177
    %v6277 = vpop.f32.mrf.mxu0
    %v6278 = vadd.f32 0.0, %v6277
    %v6279 = vpop.f32.mrf.mxu0
    %v6280 = vpop.f32.mrf.mxu0
    %v6281 = vpop.f32.mrf.mxu0
    %6282 = vdwg.mxu0
    %v6283 = vadd.f32 %v6174, %v6278
    %s6284 = scalar_lea.vmem [#allocation5], 19
    %v6285 = vld [vmem:[%s6284] ss:$40 sm:$0x3]
    %v6286 = vpack.c.bf16 %v6285, %v6285
    %s6287 = scalar_lea.vmem [#allocation15], 1216
    %v6288 = vld [vmem:[%s6287] sm:$0xf]
    %v6289 = vld [vmem:[%s6287 + $0x4] sm:$0xf]
    %v6290 = vld [vmem:[%s6287 + $0x8] sm:$0xf]
    %v6291 = vld [vmem:[%s6287 + $0xc] sm:$0xf]
    %v6292 = vld [vmem:[%s6287 + $0x10] sm:$0xf]
    %v6293 = vld [vmem:[%s6287 + $0x14] sm:$0xf]
    %v6294 = vld [vmem:[%s6287 + $0x18] sm:$0xf]
    %v6295 = vld [vmem:[%s6287 + $0x1c] sm:$0xf]
    %v6296 = vld [vmem:[%s6287 + $0x20] sm:$0xf]
    %v6297 = vld [vmem:[%s6287 + $0x24] sm:$0xf]
    %v6298 = vld [vmem:[%s6287 + $0x28] sm:$0xf]
    %v6299 = vld [vmem:[%s6287 + $0x2c] sm:$0xf]
    %v6300 = vld [vmem:[%s6287 + $0x30] sm:$0xf]
    %v6301 = vld [vmem:[%s6287 + $0x34] sm:$0xf]
    %v6302 = vld [vmem:[%s6287 + $0x38] sm:$0xf]
    %v6303 = vld [vmem:[%s6287 + $0x3c] sm:$0xf]
    %v6320 = vunpack.c.l.b16 %v6288
    %v6321 = vunpack.c.l.b16 %v6289
    %v6322 = vunpack.c.l.b16 %v6290
    %v6323 = vunpack.c.l.b16 %v6291
    %v6324 = vunpack.c.l.b16 %v6292
    %v6325 = vunpack.c.l.b16 %v6293
    %v6326 = vunpack.c.l.b16 %v6294
    %v6327 = vunpack.c.l.b16 %v6295
    %v6328 = vunpack.c.l.b16 %v6296
    %v6329 = vunpack.c.l.b16 %v6297
    %v6330 = vunpack.c.l.b16 %v6298
    %v6331 = vunpack.c.l.b16 %v6299
    %v6332 = vunpack.c.l.b16 %v6300
    %v6333 = vunpack.c.l.b16 %v6301
    %v6334 = vunpack.c.l.b16 %v6302
    %v6335 = vunpack.c.l.b16 %v6303
    %v6336 = vpack.c.b16 %v6321, %v6320
    %v6337 = vpack.c.b16 %v6323, %v6322
    %v6338 = vpack.c.b16 %v6325, %v6324
    %v6339 = vpack.c.b16 %v6327, %v6326
    %v6340 = vpack.c.b16 %v6329, %v6328
    %v6341 = vpack.c.b16 %v6331, %v6330
    %v6342 = vpack.c.b16 %v6333, %v6332
    %v6343 = vpack.c.b16 %v6335, %v6334
    %6352 = vmatprep.subr.bf16.mxu0 0
    %6353 = vmatpush1.bf16.msra.mxu0 %v6343
    %6354 = vmatprep.subr.bf16.mxu0 0
    %6355 = vmatpush1.bf16.msra.mxu0 %v6342
    %6356 = vmatprep.subr.bf16.mxu0 0
    %6357 = vmatpush1.bf16.msra.mxu0 %v6341
    %6358 = vmatprep.subr.bf16.mxu0 0
    %6359 = vmatpush1.bf16.msra.mxu0 %v6340
    %6360 = vmatprep.subr.bf16.mxu0 0
    %6361 = vmatpush1.bf16.msra.mxu0 %v6339
    %6362 = vmatprep.subr.bf16.mxu0 0
    %6363 = vmatpush1.bf16.msra.mxu0 %v6338
    %6364 = vmatprep.subr.bf16.mxu0 0
    %6365 = vmatpush1.bf16.msra.mxu0 %v6337
    %6366 = vmatprep.subr.bf16.mxu0 0
    %6367 = vmatpush1.bf16.msra.mxu0 %v6336
    %6368 = vmatprep.subr.bf16.mxu0 0
    %6369 = vmatpush2.bf16.msra.mxu0 0
    %6370 = vmatprep.subr.bf16.mxu0 0
    %6371 = vmatpush2.bf16.msra.mxu0 0
    %6372 = vmatprep.subr.bf16.mxu0 0
    %6373 = vmatpush2.bf16.msra.mxu0 0
    %6374 = vmatprep.subr.bf16.mxu0 0
    %6375 = vmatpush2.bf16.msra.mxu0 0
    %6376 = vmatprep.subr.bf16.mxu0 0
    %6377 = vmatpush2.bf16.msra.mxu0 0
    %6378 = vmatprep.subr.bf16.mxu0 0
    %6379 = vmatpush2.bf16.msra.mxu0 0
    %6380 = vmatprep.subr.bf16.mxu0 0
    %6381 = vmatpush2.bf16.msra.mxu0 0
    %6382 = vmatprep.subr.bf16.mxu0 0
    %6383 = vmatpush2.bf16.msra.mxu0 0
    %6384 = vmatprep.mubr.bf16.mxu0 0
    %6385 = vmatmul.mubr.bf16.gmra.mxu0 %v6286
    %v6386 = vpop.f32.mrf.mxu0
    %v6387 = vadd.f32 0.0, %v6386
    %v6388 = vpop.f32.mrf.mxu0
    %v6389 = vpop.f32.mrf.mxu0
    %v6390 = vpop.f32.mrf.mxu0
    %6391 = vdwg.mxu0
    %v6392 = vadd.f32 %v6283, %v6387
    %s6393 = scalar_lea.vmem [#allocation5], 20
    %v6394 = vld [vmem:[%s6393] ss:$40 sm:$0x3]
    %v6395 = vpack.c.bf16 %v6394, %v6394
    %s6396 = scalar_lea.vmem [#allocation15], 1280
    %v6397 = vld [vmem:[%s6396] sm:$0xf]
    %v6398 = vld [vmem:[%s6396 + $0x4] sm:$0xf]
    %v6399 = vld [vmem:[%s6396 + $0x8] sm:$0xf]
    %v6400 = vld [vmem:[%s6396 + $0xc] sm:$0xf]
    %v6401 = vld [vmem:[%s6396 + $0x10] sm:$0xf]
    %v6402 = vld [vmem:[%s6396 + $0x14] sm:$0xf]
    %v6403 = vld [vmem:[%s6396 + $0x18] sm:$0xf]
    %v6404 = vld [vmem:[%s6396 + $0x1c] sm:$0xf]
    %v6405 = vld [vmem:[%s6396 + $0x20] sm:$0xf]
    %v6406 = vld [vmem:[%s6396 + $0x24] sm:$0xf]
    %v6407 = vld [vmem:[%s6396 + $0x28] sm:$0xf]
    %v6408 = vld [vmem:[%s6396 + $0x2c] sm:$0xf]
    %v6409 = vld [vmem:[%s6396 + $0x30] sm:$0xf]
    %v6410 = vld [vmem:[%s6396 + $0x34] sm:$0xf]
    %v6411 = vld [vmem:[%s6396 + $0x38] sm:$0xf]
    %v6412 = vld [vmem:[%s6396 + $0x3c] sm:$0xf]
    %v6429 = vunpack.c.l.b16 %v6397
    %v6430 = vunpack.c.l.b16 %v6398
    %v6431 = vunpack.c.l.b16 %v6399
    %v6432 = vunpack.c.l.b16 %v6400
    %v6433 = vunpack.c.l.b16 %v6401
    %v6434 = vunpack.c.l.b16 %v6402
    %v6435 = vunpack.c.l.b16 %v6403
    %v6436 = vunpack.c.l.b16 %v6404
    %v6437 = vunpack.c.l.b16 %v6405
    %v6438 = vunpack.c.l.b16 %v6406
    %v6439 = vunpack.c.l.b16 %v6407
    %v6440 = vunpack.c.l.b16 %v6408
    %v6441 = vunpack.c.l.b16 %v6409
    %v6442 = vunpack.c.l.b16 %v6410
    %v6443 = vunpack.c.l.b16 %v6411
    %v6444 = vunpack.c.l.b16 %v6412
    %v6445 = vpack.c.b16 %v6430, %v6429
    %v6446 = vpack.c.b16 %v6432, %v6431
    %v6447 = vpack.c.b16 %v6434, %v6433
    %v6448 = vpack.c.b16 %v6436, %v6435
    %v6449 = vpack.c.b16 %v6438, %v6437
    %v6450 = vpack.c.b16 %v6440, %v6439
    %v6451 = vpack.c.b16 %v6442, %v6441
    %v6452 = vpack.c.b16 %v6444, %v6443
    %6461 = vmatprep.subr.bf16.mxu0 0
    %6462 = vmatpush1.bf16.msra.mxu0 %v6452
    %6463 = vmatprep.subr.bf16.mxu0 0
    %6464 = vmatpush1.bf16.msra.mxu0 %v6451
    %6465 = vmatprep.subr.bf16.mxu0 0
    %6466 = vmatpush1.bf16.msra.mxu0 %v6450
    %6467 = vmatprep.subr.bf16.mxu0 0
    %6468 = vmatpush1.bf16.msra.mxu0 %v6449
    %6469 = vmatprep.subr.bf16.mxu0 0
    %6470 = vmatpush1.bf16.msra.mxu0 %v6448
    %6471 = vmatprep.subr.bf16.mxu0 0
    %6472 = vmatpush1.bf16.msra.mxu0 %v6447
    %6473 = vmatprep.subr.bf16.mxu0 0
    %6474 = vmatpush1.bf16.msra.mxu0 %v6446
    %6475 = vmatprep.subr.bf16.mxu0 0
    %6476 = vmatpush1.bf16.msra.mxu0 %v6445
    %6477 = vmatprep.subr.bf16.mxu0 0
    %6478 = vmatpush2.bf16.msra.mxu0 0
    %6479 = vmatprep.subr.bf16.mxu0 0
    %6480 = vmatpush2.bf16.msra.mxu0 0
    %6481 = vmatprep.subr.bf16.mxu0 0
    %6482 = vmatpush2.bf16.msra.mxu0 0
    %6483 = vmatprep.subr.bf16.mxu0 0
    %6484 = vmatpush2.bf16.msra.mxu0 0
    %6485 = vmatprep.subr.bf16.mxu0 0
    %6486 = vmatpush2.bf16.msra.mxu0 0
    %6487 = vmatprep.subr.bf16.mxu0 0
    %6488 = vmatpush2.bf16.msra.mxu0 0
    %6489 = vmatprep.subr.bf16.mxu0 0
    %6490 = vmatpush2.bf16.msra.mxu0 0
    %6491 = vmatprep.subr.bf16.mxu0 0
    %6492 = vmatpush2.bf16.msra.mxu0 0
    %6493 = vmatprep.mubr.bf16.mxu0 0
    %6494 = vmatmul.mubr.bf16.gmra.mxu0 %v6395
    %v6495 = vpop.f32.mrf.mxu0
    %v6496 = vadd.f32 0.0, %v6495
    %v6497 = vpop.f32.mrf.mxu0
    %v6498 = vpop.f32.mrf.mxu0
    %v6499 = vpop.f32.mrf.mxu0
    %6500 = vdwg.mxu0
    %v6501 = vadd.f32 %v6392, %v6496
    %s6502 = scalar_lea.vmem [#allocation5], 21
    %v6503 = vld [vmem:[%s6502] ss:$40 sm:$0x3]
    %v6504 = vpack.c.bf16 %v6503, %v6503
    %s6505 = scalar_lea.vmem [#allocation15], 1344
    %v6506 = vld [vmem:[%s6505] sm:$0xf]
    %v6507 = vld [vmem:[%s6505 + $0x4] sm:$0xf]
    %v6508 = vld [vmem:[%s6505 + $0x8] sm:$0xf]
    %v6509 = vld [vmem:[%s6505 + $0xc] sm:$0xf]
    %v6510 = vld [vmem:[%s6505 + $0x10] sm:$0xf]
    %v6511 = vld [vmem:[%s6505 + $0x14] sm:$0xf]
    %v6512 = vld [vmem:[%s6505 + $0x18] sm:$0xf]
    %v6513 = vld [vmem:[%s6505 + $0x1c] sm:$0xf]
    %v6514 = vld [vmem:[%s6505 + $0x20] sm:$0xf]
    %v6515 = vld [vmem:[%s6505 + $0x24] sm:$0xf]
    %v6516 = vld [vmem:[%s6505 + $0x28] sm:$0xf]
    %v6517 = vld [vmem:[%s6505 + $0x2c] sm:$0xf]
    %v6518 = vld [vmem:[%s6505 + $0x30] sm:$0xf]
    %v6519 = vld [vmem:[%s6505 + $0x34] sm:$0xf]
    %v6520 = vld [vmem:[%s6505 + $0x38] sm:$0xf]
    %v6521 = vld [vmem:[%s6505 + $0x3c] sm:$0xf]
    %v6538 = vunpack.c.l.b16 %v6506
    %v6539 = vunpack.c.l.b16 %v6507
    %v6540 = vunpack.c.l.b16 %v6508
    %v6541 = vunpack.c.l.b16 %v6509
    %v6542 = vunpack.c.l.b16 %v6510
    %v6543 = vunpack.c.l.b16 %v6511
    %v6544 = vunpack.c.l.b16 %v6512
    %v6545 = vunpack.c.l.b16 %v6513
    %v6546 = vunpack.c.l.b16 %v6514
    %v6547 = vunpack.c.l.b16 %v6515
    %v6548 = vunpack.c.l.b16 %v6516
    %v6549 = vunpack.c.l.b16 %v6517
    %v6550 = vunpack.c.l.b16 %v6518
    %v6551 = vunpack.c.l.b16 %v6519
    %v6552 = vunpack.c.l.b16 %v6520
    %v6553 = vunpack.c.l.b16 %v6521
    %v6554 = vpack.c.b16 %v6539, %v6538
    %v6555 = vpack.c.b16 %v6541, %v6540
    %v6556 = vpack.c.b16 %v6543, %v6542
    %v6557 = vpack.c.b16 %v6545, %v6544
    %v6558 = vpack.c.b16 %v6547, %v6546
    %v6559 = vpack.c.b16 %v6549, %v6548
    %v6560 = vpack.c.b16 %v6551, %v6550
    %v6561 = vpack.c.b16 %v6553, %v6552
    %6570 = vmatprep.subr.bf16.mxu0 0
    %6571 = vmatpush1.bf16.msra.mxu0 %v6561
    %6572 = vmatprep.subr.bf16.mxu0 0
    %6573 = vmatpush1.bf16.msra.mxu0 %v6560
    %6574 = vmatprep.subr.bf16.mxu0 0
    %6575 = vmatpush1.bf16.msra.mxu0 %v6559
    %6576 = vmatprep.subr.bf16.mxu0 0
    %6577 = vmatpush1.bf16.msra.mxu0 %v6558
    %6578 = vmatprep.subr.bf16.mxu0 0
    %6579 = vmatpush1.bf16.msra.mxu0 %v6557
    %6580 = vmatprep.subr.bf16.mxu0 0
    %6581 = vmatpush1.bf16.msra.mxu0 %v6556
    %6582 = vmatprep.subr.bf16.mxu0 0
    %6583 = vmatpush1.bf16.msra.mxu0 %v6555
    %6584 = vmatprep.subr.bf16.mxu0 0
    %6585 = vmatpush1.bf16.msra.mxu0 %v6554
    %6586 = vmatprep.subr.bf16.mxu0 0
    %6587 = vmatpush2.bf16.msra.mxu0 0
    %6588 = vmatprep.subr.bf16.mxu0 0
    %6589 = vmatpush2.bf16.msra.mxu0 0
    %6590 = vmatprep.subr.bf16.mxu0 0
    %6591 = vmatpush2.bf16.msra.mxu0 0
    %6592 = vmatprep.subr.bf16.mxu0 0
    %6593 = vmatpush2.bf16.msra.mxu0 0
    %6594 = vmatprep.subr.bf16.mxu0 0
    %6595 = vmatpush2.bf16.msra.mxu0 0
    %6596 = vmatprep.subr.bf16.mxu0 0
    %6597 = vmatpush2.bf16.msra.mxu0 0
    %6598 = vmatprep.subr.bf16.mxu0 0
    %6599 = vmatpush2.bf16.msra.mxu0 0
    %6600 = vmatprep.subr.bf16.mxu0 0
    %6601 = vmatpush2.bf16.msra.mxu0 0
    %6602 = vmatprep.mubr.bf16.mxu0 0
    %6603 = vmatmul.mubr.bf16.gmra.mxu0 %v6504
    %v6604 = vpop.f32.mrf.mxu0
    %v6605 = vadd.f32 0.0, %v6604
    %v6606 = vpop.f32.mrf.mxu0
    %v6607 = vpop.f32.mrf.mxu0
    %v6608 = vpop.f32.mrf.mxu0
    %6609 = vdwg.mxu0
    %v6610 = vadd.f32 %v6501, %v6605
    %s6611 = scalar_lea.vmem [#allocation5], 22
    %v6612 = vld [vmem:[%s6611] ss:$40 sm:$0x3]
    %v6613 = vpack.c.bf16 %v6612, %v6612
    %s6614 = scalar_lea.vmem [#allocation15], 1408
    %v6615 = vld [vmem:[%s6614] sm:$0xf]
    %v6616 = vld [vmem:[%s6614 + $0x4] sm:$0xf]
    %v6617 = vld [vmem:[%s6614 + $0x8] sm:$0xf]
    %v6618 = vld [vmem:[%s6614 + $0xc] sm:$0xf]
    %v6619 = vld [vmem:[%s6614 + $0x10] sm:$0xf]
    %v6620 = vld [vmem:[%s6614 + $0x14] sm:$0xf]
    %v6621 = vld [vmem:[%s6614 + $0x18] sm:$0xf]
    %v6622 = vld [vmem:[%s6614 + $0x1c] sm:$0xf]
    %v6623 = vld [vmem:[%s6614 + $0x20] sm:$0xf]
    %v6624 = vld [vmem:[%s6614 + $0x24] sm:$0xf]
    %v6625 = vld [vmem:[%s6614 + $0x28] sm:$0xf]
    %v6626 = vld [vmem:[%s6614 + $0x2c] sm:$0xf]
    %v6627 = vld [vmem:[%s6614 + $0x30] sm:$0xf]
    %v6628 = vld [vmem:[%s6614 + $0x34] sm:$0xf]
    %v6629 = vld [vmem:[%s6614 + $0x38] sm:$0xf]
    %v6630 = vld [vmem:[%s6614 + $0x3c] sm:$0xf]
    %v6647 = vunpack.c.l.b16 %v6615
    %v6648 = vunpack.c.l.b16 %v6616
    %v6649 = vunpack.c.l.b16 %v6617
    %v6650 = vunpack.c.l.b16 %v6618
    %v6651 = vunpack.c.l.b16 %v6619
    %v6652 = vunpack.c.l.b16 %v6620
    %v6653 = vunpack.c.l.b16 %v6621
    %v6654 = vunpack.c.l.b16 %v6622
    %v6655 = vunpack.c.l.b16 %v6623
    %v6656 = vunpack.c.l.b16 %v6624
    %v6657 = vunpack.c.l.b16 %v6625
    %v6658 = vunpack.c.l.b16 %v6626
    %v6659 = vunpack.c.l.b16 %v6627
    %v6660 = vunpack.c.l.b16 %v6628
    %v6661 = vunpack.c.l.b16 %v6629
    %v6662 = vunpack.c.l.b16 %v6630
    %v6663 = vpack.c.b16 %v6648, %v6647
    %v6664 = vpack.c.b16 %v6650, %v6649
    %v6665 = vpack.c.b16 %v6652, %v6651
    %v6666 = vpack.c.b16 %v6654, %v6653
    %v6667 = vpack.c.b16 %v6656, %v6655
    %v6668 = vpack.c.b16 %v6658, %v6657
    %v6669 = vpack.c.b16 %v6660, %v6659
    %v6670 = vpack.c.b16 %v6662, %v6661
    %6679 = vmatprep.subr.bf16.mxu0 0
    %6680 = vmatpush1.bf16.msra.mxu0 %v6670
    %6681 = vmatprep.subr.bf16.mxu0 0
    %6682 = vmatpush1.bf16.msra.mxu0 %v6669
    %6683 = vmatprep.subr.bf16.mxu0 0
    %6684 = vmatpush1.bf16.msra.mxu0 %v6668
    %6685 = vmatprep.subr.bf16.mxu0 0
    %6686 = vmatpush1.bf16.msra.mxu0 %v6667
    %6687 = vmatprep.subr.bf16.mxu0 0
    %6688 = vmatpush1.bf16.msra.mxu0 %v6666
    %6689 = vmatprep.subr.bf16.mxu0 0
    %6690 = vmatpush1.bf16.msra.mxu0 %v6665
    %6691 = vmatprep.subr.bf16.mxu0 0
    %6692 = vmatpush1.bf16.msra.mxu0 %v6664
    %6693 = vmatprep.subr.bf16.mxu0 0
    %6694 = vmatpush1.bf16.msra.mxu0 %v6663
    %6695 = vmatprep.subr.bf16.mxu0 0
    %6696 = vmatpush2.bf16.msra.mxu0 0
    %6697 = vmatprep.subr.bf16.mxu0 0
    %6698 = vmatpush2.bf16.msra.mxu0 0
    %6699 = vmatprep.subr.bf16.mxu0 0
    %6700 = vmatpush2.bf16.msra.mxu0 0
    %6701 = vmatprep.subr.bf16.mxu0 0
    %6702 = vmatpush2.bf16.msra.mxu0 0
    %6703 = vmatprep.subr.bf16.mxu0 0
    %6704 = vmatpush2.bf16.msra.mxu0 0
    %6705 = vmatprep.subr.bf16.mxu0 0
    %6706 = vmatpush2.bf16.msra.mxu0 0
    %6707 = vmatprep.subr.bf16.mxu0 0
    %6708 = vmatpush2.bf16.msra.mxu0 0
    %6709 = vmatprep.subr.bf16.mxu0 0
    %6710 = vmatpush2.bf16.msra.mxu0 0
    %6711 = vmatprep.mubr.bf16.mxu0 0
    %6712 = vmatmul.mubr.bf16.gmra.mxu0 %v6613
    %v6713 = vpop.f32.mrf.mxu0
    %v6714 = vadd.f32 0.0, %v6713
    %v6715 = vpop.f32.mrf.mxu0
    %v6716 = vpop.f32.mrf.mxu0
    %v6717 = vpop.f32.mrf.mxu0
    %6718 = vdwg.mxu0
    %v6719 = vadd.f32 %v6610, %v6714
    %s6720 = scalar_lea.vmem [#allocation5], 23
    %v6721 = vld [vmem:[%s6720] ss:$40 sm:$0x3]
    %v6722 = vpack.c.bf16 %v6721, %v6721
    %s6723 = scalar_lea.vmem [#allocation15], 1472
    %v6724 = vld [vmem:[%s6723] sm:$0xf]
    %v6725 = vld [vmem:[%s6723 + $0x4] sm:$0xf]
    %v6726 = vld [vmem:[%s6723 + $0x8] sm:$0xf]
    %v6727 = vld [vmem:[%s6723 + $0xc] sm:$0xf]
    %v6728 = vld [vmem:[%s6723 + $0x10] sm:$0xf]
    %v6729 = vld [vmem:[%s6723 + $0x14] sm:$0xf]
    %v6730 = vld [vmem:[%s6723 + $0x18] sm:$0xf]
    %v6731 = vld [vmem:[%s6723 + $0x1c] sm:$0xf]
    %v6732 = vld [vmem:[%s6723 + $0x20] sm:$0xf]
    %v6733 = vld [vmem:[%s6723 + $0x24] sm:$0xf]
    %v6734 = vld [vmem:[%s6723 + $0x28] sm:$0xf]
    %v6735 = vld [vmem:[%s6723 + $0x2c] sm:$0xf]
    %v6736 = vld [vmem:[%s6723 + $0x30] sm:$0xf]
    %v6737 = vld [vmem:[%s6723 + $0x34] sm:$0xf]
    %v6738 = vld [vmem:[%s6723 + $0x38] sm:$0xf]
    %v6739 = vld [vmem:[%s6723 + $0x3c] sm:$0xf]
    %v6756 = vunpack.c.l.b16 %v6724
    %v6757 = vunpack.c.l.b16 %v6725
    %v6758 = vunpack.c.l.b16 %v6726
    %v6759 = vunpack.c.l.b16 %v6727
    %v6760 = vunpack.c.l.b16 %v6728
    %v6761 = vunpack.c.l.b16 %v6729
    %v6762 = vunpack.c.l.b16 %v6730
    %v6763 = vunpack.c.l.b16 %v6731
    %v6764 = vunpack.c.l.b16 %v6732
    %v6765 = vunpack.c.l.b16 %v6733
    %v6766 = vunpack.c.l.b16 %v6734
    %v6767 = vunpack.c.l.b16 %v6735
    %v6768 = vunpack.c.l.b16 %v6736
    %v6769 = vunpack.c.l.b16 %v6737
    %v6770 = vunpack.c.l.b16 %v6738
    %v6771 = vunpack.c.l.b16 %v6739
    %v6772 = vpack.c.b16 %v6757, %v6756
    %v6773 = vpack.c.b16 %v6759, %v6758
    %v6774 = vpack.c.b16 %v6761, %v6760
    %v6775 = vpack.c.b16 %v6763, %v6762
    %v6776 = vpack.c.b16 %v6765, %v6764
    %v6777 = vpack.c.b16 %v6767, %v6766
    %v6778 = vpack.c.b16 %v6769, %v6768
    %v6779 = vpack.c.b16 %v6771, %v6770
    %6788 = vmatprep.subr.bf16.mxu0 0
    %6789 = vmatpush1.bf16.msra.mxu0 %v6779
    %6790 = vmatprep.subr.bf16.mxu0 0
    %6791 = vmatpush1.bf16.msra.mxu0 %v6778
    %6792 = vmatprep.subr.bf16.mxu0 0
    %6793 = vmatpush1.bf16.msra.mxu0 %v6777
    %6794 = vmatprep.subr.bf16.mxu0 0
    %6795 = vmatpush1.bf16.msra.mxu0 %v6776
    %6796 = vmatprep.subr.bf16.mxu0 0
    %6797 = vmatpush1.bf16.msra.mxu0 %v6775
    %6798 = vmatprep.subr.bf16.mxu0 0
    %6799 = vmatpush1.bf16.msra.mxu0 %v6774
    %6800 = vmatprep.subr.bf16.mxu0 0
    %6801 = vmatpush1.bf16.msra.mxu0 %v6773
    %6802 = vmatprep.subr.bf16.mxu0 0
    %6803 = vmatpush1.bf16.msra.mxu0 %v6772
    %6804 = vmatprep.subr.bf16.mxu0 0
    %6805 = vmatpush2.bf16.msra.mxu0 0
    %6806 = vmatprep.subr.bf16.mxu0 0
    %6807 = vmatpush2.bf16.msra.mxu0 0
    %6808 = vmatprep.subr.bf16.mxu0 0
    %6809 = vmatpush2.bf16.msra.mxu0 0
    %6810 = vmatprep.subr.bf16.mxu0 0
    %6811 = vmatpush2.bf16.msra.mxu0 0
    %6812 = vmatprep.subr.bf16.mxu0 0
    %6813 = vmatpush2.bf16.msra.mxu0 0
    %6814 = vmatprep.subr.bf16.mxu0 0
    %6815 = vmatpush2.bf16.msra.mxu0 0
    %6816 = vmatprep.subr.bf16.mxu0 0
    %6817 = vmatpush2.bf16.msra.mxu0 0
    %6818 = vmatprep.subr.bf16.mxu0 0
    %6819 = vmatpush2.bf16.msra.mxu0 0
    %6820 = vmatprep.mubr.bf16.mxu0 0
    %6821 = vmatmul.mubr.bf16.gmra.mxu0 %v6722
    %v6822 = vpop.f32.mrf.mxu0
    %v6823 = vadd.f32 0.0, %v6822
    %v6824 = vpop.f32.mrf.mxu0
    %v6825 = vpop.f32.mrf.mxu0
    %v6826 = vpop.f32.mrf.mxu0
    %6827 = vdwg.mxu0
    %v6828 = vadd.f32 %v6719, %v6823
    %s6829 = scalar_lea.vmem [#allocation5], 24
    %v6830 = vld [vmem:[%s6829] ss:$40 sm:$0x3]
    %v6831 = vpack.c.bf16 %v6830, %v6830
    %s6832 = scalar_lea.vmem [#allocation15], 1536
    %v6833 = vld [vmem:[%s6832] sm:$0xf]
    %v6834 = vld [vmem:[%s6832 + $0x4] sm:$0xf]
    %v6835 = vld [vmem:[%s6832 + $0x8] sm:$0xf]
    %v6836 = vld [vmem:[%s6832 + $0xc] sm:$0xf]
    %v6837 = vld [vmem:[%s6832 + $0x10] sm:$0xf]
    %v6838 = vld [vmem:[%s6832 + $0x14] sm:$0xf]
    %v6839 = vld [vmem:[%s6832 + $0x18] sm:$0xf]
    %v6840 = vld [vmem:[%s6832 + $0x1c] sm:$0xf]
    %v6841 = vld [vmem:[%s6832 + $0x20] sm:$0xf]
    %v6842 = vld [vmem:[%s6832 + $0x24] sm:$0xf]
    %v6843 = vld [vmem:[%s6832 + $0x28] sm:$0xf]
    %v6844 = vld [vmem:[%s6832 + $0x2c] sm:$0xf]
    %v6845 = vld [vmem:[%s6832 + $0x30] sm:$0xf]
    %v6846 = vld [vmem:[%s6832 + $0x34] sm:$0xf]
    %v6847 = vld [vmem:[%s6832 + $0x38] sm:$0xf]
    %v6848 = vld [vmem:[%s6832 + $0x3c] sm:$0xf]
    %v6865 = vunpack.c.l.b16 %v6833
    %v6866 = vunpack.c.l.b16 %v6834
    %v6867 = vunpack.c.l.b16 %v6835
    %v6868 = vunpack.c.l.b16 %v6836
    %v6869 = vunpack.c.l.b16 %v6837
    %v6870 = vunpack.c.l.b16 %v6838
    %v6871 = vunpack.c.l.b16 %v6839
    %v6872 = vunpack.c.l.b16 %v6840
    %v6873 = vunpack.c.l.b16 %v6841
    %v6874 = vunpack.c.l.b16 %v6842
    %v6875 = vunpack.c.l.b16 %v6843
    %v6876 = vunpack.c.l.b16 %v6844
    %v6877 = vunpack.c.l.b16 %v6845
    %v6878 = vunpack.c.l.b16 %v6846
    %v6879 = vunpack.c.l.b16 %v6847
    %v6880 = vunpack.c.l.b16 %v6848
    %v6881 = vpack.c.b16 %v6866, %v6865
    %v6882 = vpack.c.b16 %v6868, %v6867
    %v6883 = vpack.c.b16 %v6870, %v6869
    %v6884 = vpack.c.b16 %v6872, %v6871
    %v6885 = vpack.c.b16 %v6874, %v6873
    %v6886 = vpack.c.b16 %v6876, %v6875
    %v6887 = vpack.c.b16 %v6878, %v6877
    %v6888 = vpack.c.b16 %v6880, %v6879
    %6897 = vmatprep.subr.bf16.mxu0 0
    %6898 = vmatpush1.bf16.msra.mxu0 %v6888
    %6899 = vmatprep.subr.bf16.mxu0 0
    %6900 = vmatpush1.bf16.msra.mxu0 %v6887
    %6901 = vmatprep.subr.bf16.mxu0 0
    %6902 = vmatpush1.bf16.msra.mxu0 %v6886
    %6903 = vmatprep.subr.bf16.mxu0 0
    %6904 = vmatpush1.bf16.msra.mxu0 %v6885
    %6905 = vmatprep.subr.bf16.mxu0 0
    %6906 = vmatpush1.bf16.msra.mxu0 %v6884
    %6907 = vmatprep.subr.bf16.mxu0 0
    %6908 = vmatpush1.bf16.msra.mxu0 %v6883
    %6909 = vmatprep.subr.bf16.mxu0 0
    %6910 = vmatpush1.bf16.msra.mxu0 %v6882
    %6911 = vmatprep.subr.bf16.mxu0 0
    %6912 = vmatpush1.bf16.msra.mxu0 %v6881
    %6913 = vmatprep.subr.bf16.mxu0 0
    %6914 = vmatpush2.bf16.msra.mxu0 0
    %6915 = vmatprep.subr.bf16.mxu0 0
    %6916 = vmatpush2.bf16.msra.mxu0 0
    %6917 = vmatprep.subr.bf16.mxu0 0
    %6918 = vmatpush2.bf16.msra.mxu0 0
    %6919 = vmatprep.subr.bf16.mxu0 0
    %6920 = vmatpush2.bf16.msra.mxu0 0
    %6921 = vmatprep.subr.bf16.mxu0 0
    %6922 = vmatpush2.bf16.msra.mxu0 0
    %6923 = vmatprep.subr.bf16.mxu0 0
    %6924 = vmatpush2.bf16.msra.mxu0 0
    %6925 = vmatprep.subr.bf16.mxu0 0
    %6926 = vmatpush2.bf16.msra.mxu0 0
    %6927 = vmatprep.subr.bf16.mxu0 0
    %6928 = vmatpush2.bf16.msra.mxu0 0
    %6929 = vmatprep.mubr.bf16.mxu0 0
    %6930 = vmatmul.mubr.bf16.gmra.mxu0 %v6831
    %v6931 = vpop.f32.mrf.mxu0
    %v6932 = vadd.f32 0.0, %v6931
    %v6933 = vpop.f32.mrf.mxu0
    %v6934 = vpop.f32.mrf.mxu0
    %v6935 = vpop.f32.mrf.mxu0
    %6936 = vdwg.mxu0
    %v6937 = vadd.f32 %v6828, %v6932
    %s6938 = scalar_lea.vmem [#allocation5], 25
    %v6939 = vld [vmem:[%s6938] ss:$40 sm:$0x3]
    %v6940 = vpack.c.bf16 %v6939, %v6939
    %s6941 = scalar_lea.vmem [#allocation15], 1600
    %v6942 = vld [vmem:[%s6941] sm:$0xf]
    %v6943 = vld [vmem:[%s6941 + $0x4] sm:$0xf]
    %v6944 = vld [vmem:[%s6941 + $0x8] sm:$0xf]
    %v6945 = vld [vmem:[%s6941 + $0xc] sm:$0xf]
    %v6946 = vld [vmem:[%s6941 + $0x10] sm:$0xf]
    %v6947 = vld [vmem:[%s6941 + $0x14] sm:$0xf]
    %v6948 = vld [vmem:[%s6941 + $0x18] sm:$0xf]
    %v6949 = vld [vmem:[%s6941 + $0x1c] sm:$0xf]
    %v6950 = vld [vmem:[%s6941 + $0x20] sm:$0xf]
    %v6951 = vld [vmem:[%s6941 + $0x24] sm:$0xf]
    %v6952 = vld [vmem:[%s6941 + $0x28] sm:$0xf]
    %v6953 = vld [vmem:[%s6941 + $0x2c] sm:$0xf]
    %v6954 = vld [vmem:[%s6941 + $0x30] sm:$0xf]
    %v6955 = vld [vmem:[%s6941 + $0x34] sm:$0xf]
    %v6956 = vld [vmem:[%s6941 + $0x38] sm:$0xf]
    %v6957 = vld [vmem:[%s6941 + $0x3c] sm:$0xf]
    %v6974 = vunpack.c.l.b16 %v6942
    %v6975 = vunpack.c.l.b16 %v6943
    %v6976 = vunpack.c.l.b16 %v6944
    %v6977 = vunpack.c.l.b16 %v6945
    %v6978 = vunpack.c.l.b16 %v6946
    %v6979 = vunpack.c.l.b16 %v6947
    %v6980 = vunpack.c.l.b16 %v6948
    %v6981 = vunpack.c.l.b16 %v6949
    %v6982 = vunpack.c.l.b16 %v6950
    %v6983 = vunpack.c.l.b16 %v6951
    %v6984 = vunpack.c.l.b16 %v6952
    %v6985 = vunpack.c.l.b16 %v6953
    %v6986 = vunpack.c.l.b16 %v6954
    %v6987 = vunpack.c.l.b16 %v6955
    %v6988 = vunpack.c.l.b16 %v6956
    %v6989 = vunpack.c.l.b16 %v6957
    %v6990 = vpack.c.b16 %v6975, %v6974
    %v6991 = vpack.c.b16 %v6977, %v6976
    %v6992 = vpack.c.b16 %v6979, %v6978
    %v6993 = vpack.c.b16 %v6981, %v6980
    %v6994 = vpack.c.b16 %v6983, %v6982
    %v6995 = vpack.c.b16 %v6985, %v6984
    %v6996 = vpack.c.b16 %v6987, %v6986
    %v6997 = vpack.c.b16 %v6989, %v6988
    %7006 = vmatprep.subr.bf16.mxu0 0
    %7007 = vmatpush1.bf16.msra.mxu0 %v6997
    %7008 = vmatprep.subr.bf16.mxu0 0
    %7009 = vmatpush1.bf16.msra.mxu0 %v6996
    %7010 = vmatprep.subr.bf16.mxu0 0
    %7011 = vmatpush1.bf16.msra.mxu0 %v6995
    %7012 = vmatprep.subr.bf16.mxu0 0
    %7013 = vmatpush1.bf16.msra.mxu0 %v6994
    %7014 = vmatprep.subr.bf16.mxu0 0
    %7015 = vmatpush1.bf16.msra.mxu0 %v6993
    %7016 = vmatprep.subr.bf16.mxu0 0
    %7017 = vmatpush1.bf16.msra.mxu0 %v6992
    %7018 = vmatprep.subr.bf16.mxu0 0
    %7019 = vmatpush1.bf16.msra.mxu0 %v6991
    %7020 = vmatprep.subr.bf16.mxu0 0
    %7021 = vmatpush1.bf16.msra.mxu0 %v6990
    %7022 = vmatprep.subr.bf16.mxu0 0
    %7023 = vmatpush2.bf16.msra.mxu0 0
    %7024 = vmatprep.subr.bf16.mxu0 0
    %7025 = vmatpush2.bf16.msra.mxu0 0
    %7026 = vmatprep.subr.bf16.mxu0 0
    %7027 = vmatpush2.bf16.msra.mxu0 0
    %7028 = vmatprep.subr.bf16.mxu0 0
    %7029 = vmatpush2.bf16.msra.mxu0 0
    %7030 = vmatprep.subr.bf16.mxu0 0
    %7031 = vmatpush2.bf16.msra.mxu0 0
    %7032 = vmatprep.subr.bf16.mxu0 0
    %7033 = vmatpush2.bf16.msra.mxu0 0
    %7034 = vmatprep.subr.bf16.mxu0 0
    %7035 = vmatpush2.bf16.msra.mxu0 0
    %7036 = vmatprep.subr.bf16.mxu0 0
    %7037 = vmatpush2.bf16.msra.mxu0 0
    %7038 = vmatprep.mubr.bf16.mxu0 0
    %7039 = vmatmul.mubr.bf16.gmra.mxu0 %v6940
    %v7040 = vpop.f32.mrf.mxu0
    %v7041 = vadd.f32 0.0, %v7040
    %v7042 = vpop.f32.mrf.mxu0
    %v7043 = vpop.f32.mrf.mxu0
    %v7044 = vpop.f32.mrf.mxu0
    %7045 = vdwg.mxu0
    %v7046 = vadd.f32 %v6937, %v7041
    %s7047 = scalar_lea.vmem [#allocation5], 26
    %v7048 = vld [vmem:[%s7047] ss:$40 sm:$0x3]
    %v7049 = vpack.c.bf16 %v7048, %v7048
    %s7050 = scalar_lea.vmem [#allocation15], 1664
    %v7051 = vld [vmem:[%s7050] sm:$0xf]
    %v7052 = vld [vmem:[%s7050 + $0x4] sm:$0xf]
    %v7053 = vld [vmem:[%s7050 + $0x8] sm:$0xf]
    %v7054 = vld [vmem:[%s7050 + $0xc] sm:$0xf]
    %v7055 = vld [vmem:[%s7050 + $0x10] sm:$0xf]
    %v7056 = vld [vmem:[%s7050 + $0x14] sm:$0xf]
    %v7057 = vld [vmem:[%s7050 + $0x18] sm:$0xf]
    %v7058 = vld [vmem:[%s7050 + $0x1c] sm:$0xf]
    %v7059 = vld [vmem:[%s7050 + $0x20] sm:$0xf]
    %v7060 = vld [vmem:[%s7050 + $0x24] sm:$0xf]
    %v7061 = vld [vmem:[%s7050 + $0x28] sm:$0xf]
    %v7062 = vld [vmem:[%s7050 + $0x2c] sm:$0xf]
    %v7063 = vld [vmem:[%s7050 + $0x30] sm:$0xf]
    %v7064 = vld [vmem:[%s7050 + $0x34] sm:$0xf]
    %v7065 = vld [vmem:[%s7050 + $0x38] sm:$0xf]
    %v7066 = vld [vmem:[%s7050 + $0x3c] sm:$0xf]
    %v7083 = vunpack.c.l.b16 %v7051
    %v7084 = vunpack.c.l.b16 %v7052
    %v7085 = vunpack.c.l.b16 %v7053
    %v7086 = vunpack.c.l.b16 %v7054
    %v7087 = vunpack.c.l.b16 %v7055
    %v7088 = vunpack.c.l.b16 %v7056
    %v7089 = vunpack.c.l.b16 %v7057
    %v7090 = vunpack.c.l.b16 %v7058
    %v7091 = vunpack.c.l.b16 %v7059
    %v7092 = vunpack.c.l.b16 %v7060
    %v7093 = vunpack.c.l.b16 %v7061
    %v7094 = vunpack.c.l.b16 %v7062
    %v7095 = vunpack.c.l.b16 %v7063
    %v7096 = vunpack.c.l.b16 %v7064
    %v7097 = vunpack.c.l.b16 %v7065
    %v7098 = vunpack.c.l.b16 %v7066
    %v7099 = vpack.c.b16 %v7084, %v7083
    %v7100 = vpack.c.b16 %v7086, %v7085
    %v7101 = vpack.c.b16 %v7088, %v7087
    %v7102 = vpack.c.b16 %v7090, %v7089
    %v7103 = vpack.c.b16 %v7092, %v7091
    %v7104 = vpack.c.b16 %v7094, %v7093
    %v7105 = vpack.c.b16 %v7096, %v7095
    %v7106 = vpack.c.b16 %v7098, %v7097
    %7115 = vmatprep.subr.bf16.mxu0 0
    %7116 = vmatpush1.bf16.msra.mxu0 %v7106
    %7117 = vmatprep.subr.bf16.mxu0 0
    %7118 = vmatpush1.bf16.msra.mxu0 %v7105
    %7119 = vmatprep.subr.bf16.mxu0 0
    %7120 = vmatpush1.bf16.msra.mxu0 %v7104
    %7121 = vmatprep.subr.bf16.mxu0 0
    %7122 = vmatpush1.bf16.msra.mxu0 %v7103
    %7123 = vmatprep.subr.bf16.mxu0 0
    %7124 = vmatpush1.bf16.msra.mxu0 %v7102
    %7125 = vmatprep.subr.bf16.mxu0 0
    %7126 = vmatpush1.bf16.msra.mxu0 %v7101
    %7127 = vmatprep.subr.bf16.mxu0 0
    %7128 = vmatpush1.bf16.msra.mxu0 %v7100
    %7129 = vmatprep.subr.bf16.mxu0 0
    %7130 = vmatpush1.bf16.msra.mxu0 %v7099
    %7131 = vmatprep.subr.bf16.mxu0 0
    %7132 = vmatpush2.bf16.msra.mxu0 0
    %7133 = vmatprep.subr.bf16.mxu0 0
    %7134 = vmatpush2.bf16.msra.mxu0 0
    %7135 = vmatprep.subr.bf16.mxu0 0
    %7136 = vmatpush2.bf16.msra.mxu0 0
    %7137 = vmatprep.subr.bf16.mxu0 0
    %7138 = vmatpush2.bf16.msra.mxu0 0
    %7139 = vmatprep.subr.bf16.mxu0 0
    %7140 = vmatpush2.bf16.msra.mxu0 0
    %7141 = vmatprep.subr.bf16.mxu0 0
    %7142 = vmatpush2.bf16.msra.mxu0 0
    %7143 = vmatprep.subr.bf16.mxu0 0
    %7144 = vmatpush2.bf16.msra.mxu0 0
    %7145 = vmatprep.subr.bf16.mxu0 0
    %7146 = vmatpush2.bf16.msra.mxu0 0
    %7147 = vmatprep.mubr.bf16.mxu0 0
    %7148 = vmatmul.mubr.bf16.gmra.mxu0 %v7049
    %v7149 = vpop.f32.mrf.mxu0
    %v7150 = vadd.f32 0.0, %v7149
    %v7151 = vpop.f32.mrf.mxu0
    %v7152 = vpop.f32.mrf.mxu0
    %v7153 = vpop.f32.mrf.mxu0
    %7154 = vdwg.mxu0
    %v7155 = vadd.f32 %v7046, %v7150
    %s7156 = scalar_lea.vmem [#allocation5], 27
    %v7157 = vld [vmem:[%s7156] ss:$40 sm:$0x3]
    %v7158 = vpack.c.bf16 %v7157, %v7157
    %s7159 = scalar_lea.vmem [#allocation15], 1728
    %v7160 = vld [vmem:[%s7159] sm:$0xf]
    %v7161 = vld [vmem:[%s7159 + $0x4] sm:$0xf]
    %v7162 = vld [vmem:[%s7159 + $0x8] sm:$0xf]
    %v7163 = vld [vmem:[%s7159 + $0xc] sm:$0xf]
    %v7164 = vld [vmem:[%s7159 + $0x10] sm:$0xf]
    %v7165 = vld [vmem:[%s7159 + $0x14] sm:$0xf]
    %v7166 = vld [vmem:[%s7159 + $0x18] sm:$0xf]
    %v7167 = vld [vmem:[%s7159 + $0x1c] sm:$0xf]
    %v7168 = vld [vmem:[%s7159 + $0x20] sm:$0xf]
    %v7169 = vld [vmem:[%s7159 + $0x24] sm:$0xf]
    %v7170 = vld [vmem:[%s7159 + $0x28] sm:$0xf]
    %v7171 = vld [vmem:[%s7159 + $0x2c] sm:$0xf]
    %v7172 = vld [vmem:[%s7159 + $0x30] sm:$0xf]
    %v7173 = vld [vmem:[%s7159 + $0x34] sm:$0xf]
    %v7174 = vld [vmem:[%s7159 + $0x38] sm:$0xf]
    %v7175 = vld [vmem:[%s7159 + $0x3c] sm:$0xf]
    %v7192 = vunpack.c.l.b16 %v7160
    %v7193 = vunpack.c.l.b16 %v7161
    %v7194 = vunpack.c.l.b16 %v7162
    %v7195 = vunpack.c.l.b16 %v7163
    %v7196 = vunpack.c.l.b16 %v7164
    %v7197 = vunpack.c.l.b16 %v7165
    %v7198 = vunpack.c.l.b16 %v7166
    %v7199 = vunpack.c.l.b16 %v7167
    %v7200 = vunpack.c.l.b16 %v7168
    %v7201 = vunpack.c.l.b16 %v7169
    %v7202 = vunpack.c.l.b16 %v7170
    %v7203 = vunpack.c.l.b16 %v7171
    %v7204 = vunpack.c.l.b16 %v7172
    %v7205 = vunpack.c.l.b16 %v7173
    %v7206 = vunpack.c.l.b16 %v7174
    %v7207 = vunpack.c.l.b16 %v7175
    %v7208 = vpack.c.b16 %v7193, %v7192
    %v7209 = vpack.c.b16 %v7195, %v7194
    %v7210 = vpack.c.b16 %v7197, %v7196
    %v7211 = vpack.c.b16 %v7199, %v7198
    %v7212 = vpack.c.b16 %v7201, %v7200
    %v7213 = vpack.c.b16 %v7203, %v7202
    %v7214 = vpack.c.b16 %v7205, %v7204
    %v7215 = vpack.c.b16 %v7207, %v7206
    %7224 = vmatprep.subr.bf16.mxu0 0
    %7225 = vmatpush1.bf16.msra.mxu0 %v7215
    %7226 = vmatprep.subr.bf16.mxu0 0
    %7227 = vmatpush1.bf16.msra.mxu0 %v7214
    %7228 = vmatprep.subr.bf16.mxu0 0
    %7229 = vmatpush1.bf16.msra.mxu0 %v7213
    %7230 = vmatprep.subr.bf16.mxu0 0
    %7231 = vmatpush1.bf16.msra.mxu0 %v7212
    %7232 = vmatprep.subr.bf16.mxu0 0
    %7233 = vmatpush1.bf16.msra.mxu0 %v7211
    %7234 = vmatprep.subr.bf16.mxu0 0
    %7235 = vmatpush1.bf16.msra.mxu0 %v7210
    %7236 = vmatprep.subr.bf16.mxu0 0
    %7237 = vmatpush1.bf16.msra.mxu0 %v7209
    %7238 = vmatprep.subr.bf16.mxu0 0
    %7239 = vmatpush1.bf16.msra.mxu0 %v7208
    %7240 = vmatprep.subr.bf16.mxu0 0
    %7241 = vmatpush2.bf16.msra.mxu0 0
    %7242 = vmatprep.subr.bf16.mxu0 0
    %7243 = vmatpush2.bf16.msra.mxu0 0
    %7244 = vmatprep.subr.bf16.mxu0 0
    %7245 = vmatpush2.bf16.msra.mxu0 0
    %7246 = vmatprep.subr.bf16.mxu0 0
    %7247 = vmatpush2.bf16.msra.mxu0 0
    %7248 = vmatprep.subr.bf16.mxu0 0
    %7249 = vmatpush2.bf16.msra.mxu0 0
    %7250 = vmatprep.subr.bf16.mxu0 0
    %7251 = vmatpush2.bf16.msra.mxu0 0
    %7252 = vmatprep.subr.bf16.mxu0 0
    %7253 = vmatpush2.bf16.msra.mxu0 0
    %7254 = vmatprep.subr.bf16.mxu0 0
    %7255 = vmatpush2.bf16.msra.mxu0 0
    %7256 = vmatprep.mubr.bf16.mxu0 0
    %7257 = vmatmul.mubr.bf16.gmra.mxu0 %v7158
    %v7258 = vpop.f32.mrf.mxu0
    %v7259 = vadd.f32 0.0, %v7258
    %v7260 = vpop.f32.mrf.mxu0
    %v7261 = vpop.f32.mrf.mxu0
    %v7262 = vpop.f32.mrf.mxu0
    %7263 = vdwg.mxu0
    %v7264 = vadd.f32 %v7155, %v7259
    %s7265 = scalar_lea.vmem [#allocation5], 28
    %v7266 = vld [vmem:[%s7265] ss:$40 sm:$0x3]
    %v7267 = vpack.c.bf16 %v7266, %v7266
    %s7268 = scalar_lea.vmem [#allocation15], 1792
    %v7269 = vld [vmem:[%s7268] sm:$0xf]
    %v7270 = vld [vmem:[%s7268 + $0x4] sm:$0xf]
    %v7271 = vld [vmem:[%s7268 + $0x8] sm:$0xf]
    %v7272 = vld [vmem:[%s7268 + $0xc] sm:$0xf]
    %v7273 = vld [vmem:[%s7268 + $0x10] sm:$0xf]
    %v7274 = vld [vmem:[%s7268 + $0x14] sm:$0xf]
    %v7275 = vld [vmem:[%s7268 + $0x18] sm:$0xf]
    %v7276 = vld [vmem:[%s7268 + $0x1c] sm:$0xf]
    %v7277 = vld [vmem:[%s7268 + $0x20] sm:$0xf]
    %v7278 = vld [vmem:[%s7268 + $0x24] sm:$0xf]
    %v7279 = vld [vmem:[%s7268 + $0x28] sm:$0xf]
    %v7280 = vld [vmem:[%s7268 + $0x2c] sm:$0xf]
    %v7281 = vld [vmem:[%s7268 + $0x30] sm:$0xf]
    %v7282 = vld [vmem:[%s7268 + $0x34] sm:$0xf]
    %v7283 = vld [vmem:[%s7268 + $0x38] sm:$0xf]
    %v7284 = vld [vmem:[%s7268 + $0x3c] sm:$0xf]
    %v7301 = vunpack.c.l.b16 %v7269
    %v7302 = vunpack.c.l.b16 %v7270
    %v7303 = vunpack.c.l.b16 %v7271
    %v7304 = vunpack.c.l.b16 %v7272
    %v7305 = vunpack.c.l.b16 %v7273
    %v7306 = vunpack.c.l.b16 %v7274
    %v7307 = vunpack.c.l.b16 %v7275
    %v7308 = vunpack.c.l.b16 %v7276
    %v7309 = vunpack.c.l.b16 %v7277
    %v7310 = vunpack.c.l.b16 %v7278
    %v7311 = vunpack.c.l.b16 %v7279
    %v7312 = vunpack.c.l.b16 %v7280
    %v7313 = vunpack.c.l.b16 %v7281
    %v7314 = vunpack.c.l.b16 %v7282
    %v7315 = vunpack.c.l.b16 %v7283
    %v7316 = vunpack.c.l.b16 %v7284
    %v7317 = vpack.c.b16 %v7302, %v7301
    %v7318 = vpack.c.b16 %v7304, %v7303
    %v7319 = vpack.c.b16 %v7306, %v7305
    %v7320 = vpack.c.b16 %v7308, %v7307
    %v7321 = vpack.c.b16 %v7310, %v7309
    %v7322 = vpack.c.b16 %v7312, %v7311
    %v7323 = vpack.c.b16 %v7314, %v7313
    %v7324 = vpack.c.b16 %v7316, %v7315
    %7333 = vmatprep.subr.bf16.mxu0 0
    %7334 = vmatpush1.bf16.msra.mxu0 %v7324
    %7335 = vmatprep.subr.bf16.mxu0 0
    %7336 = vmatpush1.bf16.msra.mxu0 %v7323
    %7337 = vmatprep.subr.bf16.mxu0 0
    %7338 = vmatpush1.bf16.msra.mxu0 %v7322
    %7339 = vmatprep.subr.bf16.mxu0 0
    %7340 = vmatpush1.bf16.msra.mxu0 %v7321
    %7341 = vmatprep.subr.bf16.mxu0 0
    %7342 = vmatpush1.bf16.msra.mxu0 %v7320
    %7343 = vmatprep.subr.bf16.mxu0 0
    %7344 = vmatpush1.bf16.msra.mxu0 %v7319
    %7345 = vmatprep.subr.bf16.mxu0 0
    %7346 = vmatpush1.bf16.msra.mxu0 %v7318
    %7347 = vmatprep.subr.bf16.mxu0 0
    %7348 = vmatpush1.bf16.msra.mxu0 %v7317
    %7349 = vmatprep.subr.bf16.mxu0 0
    %7350 = vmatpush2.bf16.msra.mxu0 0
    %7351 = vmatprep.subr.bf16.mxu0 0
    %7352 = vmatpush2.bf16.msra.mxu0 0
    %7353 = vmatprep.subr.bf16.mxu0 0
    %7354 = vmatpush2.bf16.msra.mxu0 0
    %7355 = vmatprep.subr.bf16.mxu0 0
    %7356 = vmatpush2.bf16.msra.mxu0 0
    %7357 = vmatprep.subr.bf16.mxu0 0
    %7358 = vmatpush2.bf16.msra.mxu0 0
    %7359 = vmatprep.subr.bf16.mxu0 0
    %7360 = vmatpush2.bf16.msra.mxu0 0
    %7361 = vmatprep.subr.bf16.mxu0 0
    %7362 = vmatpush2.bf16.msra.mxu0 0
    %7363 = vmatprep.subr.bf16.mxu0 0
    %7364 = vmatpush2.bf16.msra.mxu0 0
    %7365 = vmatprep.mubr.bf16.mxu0 0
    %7366 = vmatmul.mubr.bf16.gmra.mxu0 %v7267
    %v7367 = vpop.f32.mrf.mxu0
    %v7368 = vadd.f32 0.0, %v7367
    %v7369 = vpop.f32.mrf.mxu0
    %v7370 = vpop.f32.mrf.mxu0
    %v7371 = vpop.f32.mrf.mxu0
    %7372 = vdwg.mxu0
    %v7373 = vadd.f32 %v7264, %v7368
    %s7374 = scalar_lea.vmem [#allocation5], 29
    %v7375 = vld [vmem:[%s7374] ss:$40 sm:$0x3]
    %v7376 = vpack.c.bf16 %v7375, %v7375
    %s7377 = scalar_lea.vmem [#allocation15], 1856
    %v7378 = vld [vmem:[%s7377] sm:$0xf]
    %v7379 = vld [vmem:[%s7377 + $0x4] sm:$0xf]
    %v7380 = vld [vmem:[%s7377 + $0x8] sm:$0xf]
    %v7381 = vld [vmem:[%s7377 + $0xc] sm:$0xf]
    %v7382 = vld [vmem:[%s7377 + $0x10] sm:$0xf]
    %v7383 = vld [vmem:[%s7377 + $0x14] sm:$0xf]
    %v7384 = vld [vmem:[%s7377 + $0x18] sm:$0xf]
    %v7385 = vld [vmem:[%s7377 + $0x1c] sm:$0xf]
    %v7386 = vld [vmem:[%s7377 + $0x20] sm:$0xf]
    %v7387 = vld [vmem:[%s7377 + $0x24] sm:$0xf]
    %v7388 = vld [vmem:[%s7377 + $0x28] sm:$0xf]
    %v7389 = vld [vmem:[%s7377 + $0x2c] sm:$0xf]
    %v7390 = vld [vmem:[%s7377 + $0x30] sm:$0xf]
    %v7391 = vld [vmem:[%s7377 + $0x34] sm:$0xf]
    %v7392 = vld [vmem:[%s7377 + $0x38] sm:$0xf]
    %v7393 = vld [vmem:[%s7377 + $0x3c] sm:$0xf]
    %v7410 = vunpack.c.l.b16 %v7378
    %v7411 = vunpack.c.l.b16 %v7379
    %v7412 = vunpack.c.l.b16 %v7380
    %v7413 = vunpack.c.l.b16 %v7381
    %v7414 = vunpack.c.l.b16 %v7382
    %v7415 = vunpack.c.l.b16 %v7383
    %v7416 = vunpack.c.l.b16 %v7384
    %v7417 = vunpack.c.l.b16 %v7385
    %v7418 = vunpack.c.l.b16 %v7386
    %v7419 = vunpack.c.l.b16 %v7387
    %v7420 = vunpack.c.l.b16 %v7388
    %v7421 = vunpack.c.l.b16 %v7389
    %v7422 = vunpack.c.l.b16 %v7390
    %v7423 = vunpack.c.l.b16 %v7391
    %v7424 = vunpack.c.l.b16 %v7392
    %v7425 = vunpack.c.l.b16 %v7393
    %v7426 = vpack.c.b16 %v7411, %v7410
    %v7427 = vpack.c.b16 %v7413, %v7412
    %v7428 = vpack.c.b16 %v7415, %v7414
    %v7429 = vpack.c.b16 %v7417, %v7416
    %v7430 = vpack.c.b16 %v7419, %v7418
    %v7431 = vpack.c.b16 %v7421, %v7420
    %v7432 = vpack.c.b16 %v7423, %v7422
    %v7433 = vpack.c.b16 %v7425, %v7424
    %7442 = vmatprep.subr.bf16.mxu0 0
    %7443 = vmatpush1.bf16.msra.mxu0 %v7433
    %7444 = vmatprep.subr.bf16.mxu0 0
    %7445 = vmatpush1.bf16.msra.mxu0 %v7432
    %7446 = vmatprep.subr.bf16.mxu0 0
    %7447 = vmatpush1.bf16.msra.mxu0 %v7431
    %7448 = vmatprep.subr.bf16.mxu0 0
    %7449 = vmatpush1.bf16.msra.mxu0 %v7430
    %7450 = vmatprep.subr.bf16.mxu0 0
    %7451 = vmatpush1.bf16.msra.mxu0 %v7429
    %7452 = vmatprep.subr.bf16.mxu0 0
    %7453 = vmatpush1.bf16.msra.mxu0 %v7428
    %7454 = vmatprep.subr.bf16.mxu0 0
    %7455 = vmatpush1.bf16.msra.mxu0 %v7427
    %7456 = vmatprep.subr.bf16.mxu0 0
    %7457 = vmatpush1.bf16.msra.mxu0 %v7426
    %7458 = vmatprep.subr.bf16.mxu0 0
    %7459 = vmatpush2.bf16.msra.mxu0 0
    %7460 = vmatprep.subr.bf16.mxu0 0
    %7461 = vmatpush2.bf16.msra.mxu0 0
    %7462 = vmatprep.subr.bf16.mxu0 0
    %7463 = vmatpush2.bf16.msra.mxu0 0
    %7464 = vmatprep.subr.bf16.mxu0 0
    %7465 = vmatpush2.bf16.msra.mxu0 0
    %7466 = vmatprep.subr.bf16.mxu0 0
    %7467 = vmatpush2.bf16.msra.mxu0 0
    %7468 = vmatprep.subr.bf16.mxu0 0
    %7469 = vmatpush2.bf16.msra.mxu0 0
    %7470 = vmatprep.subr.bf16.mxu0 0
    %7471 = vmatpush2.bf16.msra.mxu0 0
    %7472 = vmatprep.subr.bf16.mxu0 0
    %7473 = vmatpush2.bf16.msra.mxu0 0
    %7474 = vmatprep.mubr.bf16.mxu0 0
    %7475 = vmatmul.mubr.bf16.gmra.mxu0 %v7376
    %v7476 = vpop.f32.mrf.mxu0
    %v7477 = vadd.f32 0.0, %v7476
    %v7478 = vpop.f32.mrf.mxu0
    %v7479 = vpop.f32.mrf.mxu0
    %v7480 = vpop.f32.mrf.mxu0
    %7481 = vdwg.mxu0
    %v7482 = vadd.f32 %v7373, %v7477
    %s7483 = scalar_lea.vmem [#allocation5], 30
    %v7484 = vld [vmem:[%s7483] ss:$40 sm:$0x3]
    %v7485 = vpack.c.bf16 %v7484, %v7484
    %s7486 = scalar_lea.vmem [#allocation15], 1920
    %v7487 = vld [vmem:[%s7486] sm:$0xf]
    %v7488 = vld [vmem:[%s7486 + $0x4] sm:$0xf]
    %v7489 = vld [vmem:[%s7486 + $0x8] sm:$0xf]
    %v7490 = vld [vmem:[%s7486 + $0xc] sm:$0xf]
    %v7491 = vld [vmem:[%s7486 + $0x10] sm:$0xf]
    %v7492 = vld [vmem:[%s7486 + $0x14] sm:$0xf]
    %v7493 = vld [vmem:[%s7486 + $0x18] sm:$0xf]
    %v7494 = vld [vmem:[%s7486 + $0x1c] sm:$0xf]
    %v7495 = vld [vmem:[%s7486 + $0x20] sm:$0xf]
    %v7496 = vld [vmem:[%s7486 + $0x24] sm:$0xf]
    %v7497 = vld [vmem:[%s7486 + $0x28] sm:$0xf]
    %v7498 = vld [vmem:[%s7486 + $0x2c] sm:$0xf]
    %v7499 = vld [vmem:[%s7486 + $0x30] sm:$0xf]
    %v7500 = vld [vmem:[%s7486 + $0x34] sm:$0xf]
    %v7501 = vld [vmem:[%s7486 + $0x38] sm:$0xf]
    %v7502 = vld [vmem:[%s7486 + $0x3c] sm:$0xf]
    %v7519 = vunpack.c.l.b16 %v7487
    %v7520 = vunpack.c.l.b16 %v7488
    %v7521 = vunpack.c.l.b16 %v7489
    %v7522 = vunpack.c.l.b16 %v7490
    %v7523 = vunpack.c.l.b16 %v7491
    %v7524 = vunpack.c.l.b16 %v7492
    %v7525 = vunpack.c.l.b16 %v7493
    %v7526 = vunpack.c.l.b16 %v7494
    %v7527 = vunpack.c.l.b16 %v7495
    %v7528 = vunpack.c.l.b16 %v7496
    %v7529 = vunpack.c.l.b16 %v7497
    %v7530 = vunpack.c.l.b16 %v7498
    %v7531 = vunpack.c.l.b16 %v7499
    %v7532 = vunpack.c.l.b16 %v7500
    %v7533 = vunpack.c.l.b16 %v7501
    %v7534 = vunpack.c.l.b16 %v7502
    %v7535 = vpack.c.b16 %v7520, %v7519
    %v7536 = vpack.c.b16 %v7522, %v7521
    %v7537 = vpack.c.b16 %v7524, %v7523
    %v7538 = vpack.c.b16 %v7526, %v7525
    %v7539 = vpack.c.b16 %v7528, %v7527
    %v7540 = vpack.c.b16 %v7530, %v7529
    %v7541 = vpack.c.b16 %v7532, %v7531
    %v7542 = vpack.c.b16 %v7534, %v7533
    %7551 = vmatprep.subr.bf16.mxu0 0
    %7552 = vmatpush1.bf16.msra.mxu0 %v7542
    %7553 = vmatprep.subr.bf16.mxu0 0
    %7554 = vmatpush1.bf16.msra.mxu0 %v7541
    %7555 = vmatprep.subr.bf16.mxu0 0
    %7556 = vmatpush1.bf16.msra.mxu0 %v7540
    %7557 = vmatprep.subr.bf16.mxu0 0
    %7558 = vmatpush1.bf16.msra.mxu0 %v7539
    %7559 = vmatprep.subr.bf16.mxu0 0
    %7560 = vmatpush1.bf16.msra.mxu0 %v7538
    %7561 = vmatprep.subr.bf16.mxu0 0
    %7562 = vmatpush1.bf16.msra.mxu0 %v7537
    %7563 = vmatprep.subr.bf16.mxu0 0
    %7564 = vmatpush1.bf16.msra.mxu0 %v7536
    %7565 = vmatprep.subr.bf16.mxu0 0
    %7566 = vmatpush1.bf16.msra.mxu0 %v7535
    %7567 = vmatprep.subr.bf16.mxu0 0
    %7568 = vmatpush2.bf16.msra.mxu0 0
    %7569 = vmatprep.subr.bf16.mxu0 0
    %7570 = vmatpush2.bf16.msra.mxu0 0
    %7571 = vmatprep.subr.bf16.mxu0 0
    %7572 = vmatpush2.bf16.msra.mxu0 0
    %7573 = vmatprep.subr.bf16.mxu0 0
    %7574 = vmatpush2.bf16.msra.mxu0 0
    %7575 = vmatprep.subr.bf16.mxu0 0
    %7576 = vmatpush2.bf16.msra.mxu0 0
    %7577 = vmatprep.subr.bf16.mxu0 0
    %7578 = vmatpush2.bf16.msra.mxu0 0
    %7579 = vmatprep.subr.bf16.mxu0 0
    %7580 = vmatpush2.bf16.msra.mxu0 0
    %7581 = vmatprep.subr.bf16.mxu0 0
    %7582 = vmatpush2.bf16.msra.mxu0 0
    %7583 = vmatprep.mubr.bf16.mxu0 0
    %7584 = vmatmul.mubr.bf16.gmra.mxu0 %v7485
    %v7585 = vpop.f32.mrf.mxu0
    %v7586 = vadd.f32 0.0, %v7585
    %v7587 = vpop.f32.mrf.mxu0
    %v7588 = vpop.f32.mrf.mxu0
    %v7589 = vpop.f32.mrf.mxu0
    %7590 = vdwg.mxu0
    %v7591 = vadd.f32 %v7482, %v7586
    %s7592 = scalar_lea.vmem [#allocation5], 31
    %v7593 = vld [vmem:[%s7592] ss:$40 sm:$0x3]
    %v7594 = vpack.c.bf16 %v7593, %v7593
    %s7595 = scalar_lea.vmem [#allocation15], 1984
    %v7596 = vld [vmem:[%s7595] sm:$0xf]
    %v7597 = vld [vmem:[%s7595 + $0x4] sm:$0xf]
    %v7598 = vld [vmem:[%s7595 + $0x8] sm:$0xf]
    %v7599 = vld [vmem:[%s7595 + $0xc] sm:$0xf]
    %v7600 = vld [vmem:[%s7595 + $0x10] sm:$0xf]
    %v7601 = vld [vmem:[%s7595 + $0x14] sm:$0xf]
    %v7602 = vld [vmem:[%s7595 + $0x18] sm:$0xf]
    %v7603 = vld [vmem:[%s7595 + $0x1c] sm:$0xf]
    %v7604 = vld [vmem:[%s7595 + $0x20] sm:$0xf]
    %v7605 = vld [vmem:[%s7595 + $0x24] sm:$0xf]
    %v7606 = vld [vmem:[%s7595 + $0x28] sm:$0xf]
    %v7607 = vld [vmem:[%s7595 + $0x2c] sm:$0xf]
    %v7608 = vld [vmem:[%s7595 + $0x30] sm:$0xf]
    %v7609 = vld [vmem:[%s7595 + $0x34] sm:$0xf]
    %v7610 = vld [vmem:[%s7595 + $0x38] sm:$0xf]
    %v7611 = vld [vmem:[%s7595 + $0x3c] sm:$0xf]
    %v7628 = vunpack.c.l.b16 %v7596
    %v7629 = vunpack.c.l.b16 %v7597
    %v7630 = vunpack.c.l.b16 %v7598
    %v7631 = vunpack.c.l.b16 %v7599
    %v7632 = vunpack.c.l.b16 %v7600
    %v7633 = vunpack.c.l.b16 %v7601
    %v7634 = vunpack.c.l.b16 %v7602
    %v7635 = vunpack.c.l.b16 %v7603
    %v7636 = vunpack.c.l.b16 %v7604
    %v7637 = vunpack.c.l.b16 %v7605
    %v7638 = vunpack.c.l.b16 %v7606
    %v7639 = vunpack.c.l.b16 %v7607
    %v7640 = vunpack.c.l.b16 %v7608
    %v7641 = vunpack.c.l.b16 %v7609
    %v7642 = vunpack.c.l.b16 %v7610
    %v7643 = vunpack.c.l.b16 %v7611
    %v7644 = vpack.c.b16 %v7629, %v7628
    %v7645 = vpack.c.b16 %v7631, %v7630
    %v7646 = vpack.c.b16 %v7633, %v7632
    %v7647 = vpack.c.b16 %v7635, %v7634
    %v7648 = vpack.c.b16 %v7637, %v7636
    %v7649 = vpack.c.b16 %v7639, %v7638
    %v7650 = vpack.c.b16 %v7641, %v7640
    %v7651 = vpack.c.b16 %v7643, %v7642
    %7660 = vmatprep.subr.bf16.mxu0 0
    %7661 = vmatpush1.bf16.msra.mxu0 %v7651
    %7662 = vmatprep.subr.bf16.mxu0 0
    %7663 = vmatpush1.bf16.msra.mxu0 %v7650
    %7664 = vmatprep.subr.bf16.mxu0 0
    %7665 = vmatpush1.bf16.msra.mxu0 %v7649
    %7666 = vmatprep.subr.bf16.mxu0 0
    %7667 = vmatpush1.bf16.msra.mxu0 %v7648
    %7668 = vmatprep.subr.bf16.mxu0 0
    %7669 = vmatpush1.bf16.msra.mxu0 %v7647
    %7670 = vmatprep.subr.bf16.mxu0 0
    %7671 = vmatpush1.bf16.msra.mxu0 %v7646
    %7672 = vmatprep.subr.bf16.mxu0 0
    %7673 = vmatpush1.bf16.msra.mxu0 %v7645
    %7674 = vmatprep.subr.bf16.mxu0 0
    %7675 = vmatpush1.bf16.msra.mxu0 %v7644
    %7676 = vmatprep.subr.bf16.mxu0 0
    %7677 = vmatpush2.bf16.msra.mxu0 0
    %7678 = vmatprep.subr.bf16.mxu0 0
    %7679 = vmatpush2.bf16.msra.mxu0 0
    %7680 = vmatprep.subr.bf16.mxu0 0
    %7681 = vmatpush2.bf16.msra.mxu0 0
    %7682 = vmatprep.subr.bf16.mxu0 0
    %7683 = vmatpush2.bf16.msra.mxu0 0
    %7684 = vmatprep.subr.bf16.mxu0 0
    %7685 = vmatpush2.bf16.msra.mxu0 0
    %7686 = vmatprep.subr.bf16.mxu0 0
    %7687 = vmatpush2.bf16.msra.mxu0 0
    %7688 = vmatprep.subr.bf16.mxu0 0
    %7689 = vmatpush2.bf16.msra.mxu0 0
    %7690 = vmatprep.subr.bf16.mxu0 0
    %7691 = vmatpush2.bf16.msra.mxu0 0
    %7692 = vmatprep.mubr.bf16.mxu0 0
    %7693 = vmatmul.mubr.bf16.gmra.mxu0 %v7594
    %v7694 = vpop.f32.mrf.mxu0
    %v7695 = vadd.f32 0.0, %v7694
    %v7696 = vpop.f32.mrf.mxu0
    %v7697 = vpop.f32.mrf.mxu0
    %v7698 = vpop.f32.mrf.mxu0
    %7699 = vdwg.mxu0
    %v7700 = vadd.f32 %v7591, %v7695
    %s7701 = scalar_lea.vmem [#allocation5], 32
    %v7702 = vld [vmem:[%s7701] ss:$40 sm:$0x3]
    %v7703 = vpack.c.bf16 %v7702, %v7702
    %s7704 = scalar_lea.vmem [#allocation15], 2048
    %v7705 = vld [vmem:[%s7704] sm:$0xf]
    %v7706 = vld [vmem:[%s7704 + $0x4] sm:$0xf]
    %v7707 = vld [vmem:[%s7704 + $0x8] sm:$0xf]
    %v7708 = vld [vmem:[%s7704 + $0xc] sm:$0xf]
    %v7709 = vld [vmem:[%s7704 + $0x10] sm:$0xf]
    %v7710 = vld [vmem:[%s7704 + $0x14] sm:$0xf]
    %v7711 = vld [vmem:[%s7704 + $0x18] sm:$0xf]
    %v7712 = vld [vmem:[%s7704 + $0x1c] sm:$0xf]
    %v7713 = vld [vmem:[%s7704 + $0x20] sm:$0xf]
    %v7714 = vld [vmem:[%s7704 + $0x24] sm:$0xf]
    %v7715 = vld [vmem:[%s7704 + $0x28] sm:$0xf]
    %v7716 = vld [vmem:[%s7704 + $0x2c] sm:$0xf]
    %v7717 = vld [vmem:[%s7704 + $0x30] sm:$0xf]
    %v7718 = vld [vmem:[%s7704 + $0x34] sm:$0xf]
    %v7719 = vld [vmem:[%s7704 + $0x38] sm:$0xf]
    %v7720 = vld [vmem:[%s7704 + $0x3c] sm:$0xf]
    %v7737 = vunpack.c.l.b16 %v7705
    %v7738 = vunpack.c.l.b16 %v7706
    %v7739 = vunpack.c.l.b16 %v7707
    %v7740 = vunpack.c.l.b16 %v7708
    %v7741 = vunpack.c.l.b16 %v7709
    %v7742 = vunpack.c.l.b16 %v7710
    %v7743 = vunpack.c.l.b16 %v7711
    %v7744 = vunpack.c.l.b16 %v7712
    %v7745 = vunpack.c.l.b16 %v7713
    %v7746 = vunpack.c.l.b16 %v7714
    %v7747 = vunpack.c.l.b16 %v7715
    %v7748 = vunpack.c.l.b16 %v7716
    %v7749 = vunpack.c.l.b16 %v7717
    %v7750 = vunpack.c.l.b16 %v7718
    %v7751 = vunpack.c.l.b16 %v7719
    %v7752 = vunpack.c.l.b16 %v7720
    %v7753 = vpack.c.b16 %v7738, %v7737
    %v7754 = vpack.c.b16 %v7740, %v7739
    %v7755 = vpack.c.b16 %v7742, %v7741
    %v7756 = vpack.c.b16 %v7744, %v7743
    %v7757 = vpack.c.b16 %v7746, %v7745
    %v7758 = vpack.c.b16 %v7748, %v7747
    %v7759 = vpack.c.b16 %v7750, %v7749
    %v7760 = vpack.c.b16 %v7752, %v7751
    %7769 = vmatprep.subr.bf16.mxu0 0
    %7770 = vmatpush1.bf16.msra.mxu0 %v7760
    %7771 = vmatprep.subr.bf16.mxu0 0
    %7772 = vmatpush1.bf16.msra.mxu0 %v7759
    %7773 = vmatprep.subr.bf16.mxu0 0
    %7774 = vmatpush1.bf16.msra.mxu0 %v7758
    %7775 = vmatprep.subr.bf16.mxu0 0
    %7776 = vmatpush1.bf16.msra.mxu0 %v7757
    %7777 = vmatprep.subr.bf16.mxu0 0
    %7778 = vmatpush1.bf16.msra.mxu0 %v7756
    %7779 = vmatprep.subr.bf16.mxu0 0
    %7780 = vmatpush1.bf16.msra.mxu0 %v7755
    %7781 = vmatprep.subr.bf16.mxu0 0
    %7782 = vmatpush1.bf16.msra.mxu0 %v7754
    %7783 = vmatprep.subr.bf16.mxu0 0
    %7784 = vmatpush1.bf16.msra.mxu0 %v7753
    %7785 = vmatprep.subr.bf16.mxu0 0
    %7786 = vmatpush2.bf16.msra.mxu0 0
    %7787 = vmatprep.subr.bf16.mxu0 0
    %7788 = vmatpush2.bf16.msra.mxu0 0
    %7789 = vmatprep.subr.bf16.mxu0 0
    %7790 = vmatpush2.bf16.msra.mxu0 0
    %7791 = vmatprep.subr.bf16.mxu0 0
    %7792 = vmatpush2.bf16.msra.mxu0 0
    %7793 = vmatprep.subr.bf16.mxu0 0
    %7794 = vmatpush2.bf16.msra.mxu0 0
    %7795 = vmatprep.subr.bf16.mxu0 0
    %7796 = vmatpush2.bf16.msra.mxu0 0
    %7797 = vmatprep.subr.bf16.mxu0 0
    %7798 = vmatpush2.bf16.msra.mxu0 0
    %7799 = vmatprep.subr.bf16.mxu0 0
    %7800 = vmatpush2.bf16.msra.mxu0 0
    %7801 = vmatprep.mubr.bf16.mxu0 0
    %7802 = vmatmul.mubr.bf16.gmra.mxu0 %v7703
    %v7803 = vpop.f32.mrf.mxu0
    %v7804 = vadd.f32 0.0, %v7803
    %v7805 = vpop.f32.mrf.mxu0
    %v7806 = vpop.f32.mrf.mxu0
    %v7807 = vpop.f32.mrf.mxu0
    %7808 = vdwg.mxu0
    %v7809 = vadd.f32 %v7700, %v7804
    %s7810 = scalar_lea.vmem [#allocation5], 33
    %v7811 = vld [vmem:[%s7810] ss:$40 sm:$0x3]
    %v7812 = vpack.c.bf16 %v7811, %v7811
    %s7813 = scalar_lea.vmem [#allocation15], 2112
    %v7814 = vld [vmem:[%s7813] sm:$0xf]
    %v7815 = vld [vmem:[%s7813 + $0x4] sm:$0xf]
    %v7816 = vld [vmem:[%s7813 + $0x8] sm:$0xf]
    %v7817 = vld [vmem:[%s7813 + $0xc] sm:$0xf]
    %v7818 = vld [vmem:[%s7813 + $0x10] sm:$0xf]
    %v7819 = vld [vmem:[%s7813 + $0x14] sm:$0xf]
    %v7820 = vld [vmem:[%s7813 + $0x18] sm:$0xf]
    %v7821 = vld [vmem:[%s7813 + $0x1c] sm:$0xf]
    %v7822 = vld [vmem:[%s7813 + $0x20] sm:$0xf]
    %v7823 = vld [vmem:[%s7813 + $0x24] sm:$0xf]
    %v7824 = vld [vmem:[%s7813 + $0x28] sm:$0xf]
    %v7825 = vld [vmem:[%s7813 + $0x2c] sm:$0xf]
    %v7826 = vld [vmem:[%s7813 + $0x30] sm:$0xf]
    %v7827 = vld [vmem:[%s7813 + $0x34] sm:$0xf]
    %v7828 = vld [vmem:[%s7813 + $0x38] sm:$0xf]
    %v7829 = vld [vmem:[%s7813 + $0x3c] sm:$0xf]
    %v7846 = vunpack.c.l.b16 %v7814
    %v7847 = vunpack.c.l.b16 %v7815
    %v7848 = vunpack.c.l.b16 %v7816
    %v7849 = vunpack.c.l.b16 %v7817
    %v7850 = vunpack.c.l.b16 %v7818
    %v7851 = vunpack.c.l.b16 %v7819
    %v7852 = vunpack.c.l.b16 %v7820
    %v7853 = vunpack.c.l.b16 %v7821
    %v7854 = vunpack.c.l.b16 %v7822
    %v7855 = vunpack.c.l.b16 %v7823
    %v7856 = vunpack.c.l.b16 %v7824
    %v7857 = vunpack.c.l.b16 %v7825
    %v7858 = vunpack.c.l.b16 %v7826
    %v7859 = vunpack.c.l.b16 %v7827
    %v7860 = vunpack.c.l.b16 %v7828
    %v7861 = vunpack.c.l.b16 %v7829
    %v7862 = vpack.c.b16 %v7847, %v7846
    %v7863 = vpack.c.b16 %v7849, %v7848
    %v7864 = vpack.c.b16 %v7851, %v7850
    %v7865 = vpack.c.b16 %v7853, %v7852
    %v7866 = vpack.c.b16 %v7855, %v7854
    %v7867 = vpack.c.b16 %v7857, %v7856
    %v7868 = vpack.c.b16 %v7859, %v7858
    %v7869 = vpack.c.b16 %v7861, %v7860
    %7878 = vmatprep.subr.bf16.mxu0 0
    %7879 = vmatpush1.bf16.msra.mxu0 %v7869
    %7880 = vmatprep.subr.bf16.mxu0 0
    %7881 = vmatpush1.bf16.msra.mxu0 %v7868
    %7882 = vmatprep.subr.bf16.mxu0 0
    %7883 = vmatpush1.bf16.msra.mxu0 %v7867
    %7884 = vmatprep.subr.bf16.mxu0 0
    %7885 = vmatpush1.bf16.msra.mxu0 %v7866
    %7886 = vmatprep.subr.bf16.mxu0 0
    %7887 = vmatpush1.bf16.msra.mxu0 %v7865
    %7888 = vmatprep.subr.bf16.mxu0 0
    %7889 = vmatpush1.bf16.msra.mxu0 %v7864
    %7890 = vmatprep.subr.bf16.mxu0 0
    %7891 = vmatpush1.bf16.msra.mxu0 %v7863
    %7892 = vmatprep.subr.bf16.mxu0 0
    %7893 = vmatpush1.bf16.msra.mxu0 %v7862
    %7894 = vmatprep.subr.bf16.mxu0 0
    %7895 = vmatpush2.bf16.msra.mxu0 0
    %7896 = vmatprep.subr.bf16.mxu0 0
    %7897 = vmatpush2.bf16.msra.mxu0 0
    %7898 = vmatprep.subr.bf16.mxu0 0
    %7899 = vmatpush2.bf16.msra.mxu0 0
    %7900 = vmatprep.subr.bf16.mxu0 0
    %7901 = vmatpush2.bf16.msra.mxu0 0
    %7902 = vmatprep.subr.bf16.mxu0 0
    %7903 = vmatpush2.bf16.msra.mxu0 0
    %7904 = vmatprep.subr.bf16.mxu0 0
    %7905 = vmatpush2.bf16.msra.mxu0 0
    %7906 = vmatprep.subr.bf16.mxu0 0
    %7907 = vmatpush2.bf16.msra.mxu0 0
    %7908 = vmatprep.subr.bf16.mxu0 0
    %7909 = vmatpush2.bf16.msra.mxu0 0
    %7910 = vmatprep.mubr.bf16.mxu0 0
    %7911 = vmatmul.mubr.bf16.gmra.mxu0 %v7812
    %v7912 = vpop.f32.mrf.mxu0
    %v7913 = vadd.f32 0.0, %v7912
    %v7914 = vpop.f32.mrf.mxu0
    %v7915 = vpop.f32.mrf.mxu0
    %v7916 = vpop.f32.mrf.mxu0
    %7917 = vdwg.mxu0
    %v7918 = vadd.f32 %v7809, %v7913
    %s7919 = scalar_lea.vmem [#allocation5], 34
    %v7920 = vld [vmem:[%s7919] ss:$40 sm:$0x3]
    %v7921 = vpack.c.bf16 %v7920, %v7920
    %s7922 = scalar_lea.vmem [#allocation15], 2176
    %v7923 = vld [vmem:[%s7922] sm:$0xf]
    %v7924 = vld [vmem:[%s7922 + $0x4] sm:$0xf]
    %v7925 = vld [vmem:[%s7922 + $0x8] sm:$0xf]
    %v7926 = vld [vmem:[%s7922 + $0xc] sm:$0xf]
    %v7927 = vld [vmem:[%s7922 + $0x10] sm:$0xf]
    %v7928 = vld [vmem:[%s7922 + $0x14] sm:$0xf]
    %v7929 = vld [vmem:[%s7922 + $0x18] sm:$0xf]
    %v7930 = vld [vmem:[%s7922 + $0x1c] sm:$0xf]
    %v7931 = vld [vmem:[%s7922 + $0x20] sm:$0xf]
    %v7932 = vld [vmem:[%s7922 + $0x24] sm:$0xf]
    %v7933 = vld [vmem:[%s7922 + $0x28] sm:$0xf]
    %v7934 = vld [vmem:[%s7922 + $0x2c] sm:$0xf]
    %v7935 = vld [vmem:[%s7922 + $0x30] sm:$0xf]
    %v7936 = vld [vmem:[%s7922 + $0x34] sm:$0xf]
    %v7937 = vld [vmem:[%s7922 + $0x38] sm:$0xf]
    %v7938 = vld [vmem:[%s7922 + $0x3c] sm:$0xf]
    %v7955 = vunpack.c.l.b16 %v7923
    %v7956 = vunpack.c.l.b16 %v7924
    %v7957 = vunpack.c.l.b16 %v7925
    %v7958 = vunpack.c.l.b16 %v7926
    %v7959 = vunpack.c.l.b16 %v7927
    %v7960 = vunpack.c.l.b16 %v7928
    %v7961 = vunpack.c.l.b16 %v7929
    %v7962 = vunpack.c.l.b16 %v7930
    %v7963 = vunpack.c.l.b16 %v7931
    %v7964 = vunpack.c.l.b16 %v7932
    %v7965 = vunpack.c.l.b16 %v7933
    %v7966 = vunpack.c.l.b16 %v7934
    %v7967 = vunpack.c.l.b16 %v7935
    %v7968 = vunpack.c.l.b16 %v7936
    %v7969 = vunpack.c.l.b16 %v7937
    %v7970 = vunpack.c.l.b16 %v7938
    %v7971 = vpack.c.b16 %v7956, %v7955
    %v7972 = vpack.c.b16 %v7958, %v7957
    %v7973 = vpack.c.b16 %v7960, %v7959
    %v7974 = vpack.c.b16 %v7962, %v7961
    %v7975 = vpack.c.b16 %v7964, %v7963
    %v7976 = vpack.c.b16 %v7966, %v7965
    %v7977 = vpack.c.b16 %v7968, %v7967
    %v7978 = vpack.c.b16 %v7970, %v7969
    %7987 = vmatprep.subr.bf16.mxu0 0
    %7988 = vmatpush1.bf16.msra.mxu0 %v7978
    %7989 = vmatprep.subr.bf16.mxu0 0
    %7990 = vmatpush1.bf16.msra.mxu0 %v7977
    %7991 = vmatprep.subr.bf16.mxu0 0
    %7992 = vmatpush1.bf16.msra.mxu0 %v7976
    %7993 = vmatprep.subr.bf16.mxu0 0
    %7994 = vmatpush1.bf16.msra.mxu0 %v7975
    %7995 = vmatprep.subr.bf16.mxu0 0
    %7996 = vmatpush1.bf16.msra.mxu0 %v7974
    %7997 = vmatprep.subr.bf16.mxu0 0
    %7998 = vmatpush1.bf16.msra.mxu0 %v7973
    %7999 = vmatprep.subr.bf16.mxu0 0
    %8000 = vmatpush1.bf16.msra.mxu0 %v7972
    %8001 = vmatprep.subr.bf16.mxu0 0
    %8002 = vmatpush1.bf16.msra.mxu0 %v7971
    %8003 = vmatprep.subr.bf16.mxu0 0
    %8004 = vmatpush2.bf16.msra.mxu0 0
    %8005 = vmatprep.subr.bf16.mxu0 0
    %8006 = vmatpush2.bf16.msra.mxu0 0
    %8007 = vmatprep.subr.bf16.mxu0 0
    %8008 = vmatpush2.bf16.msra.mxu0 0
    %8009 = vmatprep.subr.bf16.mxu0 0
    %8010 = vmatpush2.bf16.msra.mxu0 0
    %8011 = vmatprep.subr.bf16.mxu0 0
    %8012 = vmatpush2.bf16.msra.mxu0 0
    %8013 = vmatprep.subr.bf16.mxu0 0
    %8014 = vmatpush2.bf16.msra.mxu0 0
    %8015 = vmatprep.subr.bf16.mxu0 0
    %8016 = vmatpush2.bf16.msra.mxu0 0
    %8017 = vmatprep.subr.bf16.mxu0 0
    %8018 = vmatpush2.bf16.msra.mxu0 0
    %8019 = vmatprep.mubr.bf16.mxu0 0
    %8020 = vmatmul.mubr.bf16.gmra.mxu0 %v7921
    %v8021 = vpop.f32.mrf.mxu0
    %v8022 = vadd.f32 0.0, %v8021
    %v8023 = vpop.f32.mrf.mxu0
    %v8024 = vpop.f32.mrf.mxu0
    %v8025 = vpop.f32.mrf.mxu0
    %8026 = vdwg.mxu0
    %v8027 = vadd.f32 %v7918, %v8022
    %s8028 = scalar_lea.vmem [#allocation5], 35
    %v8029 = vld [vmem:[%s8028] ss:$40 sm:$0x3]
    %v8030 = vpack.c.bf16 %v8029, %v8029
    %s8031 = scalar_lea.vmem [#allocation15], 2240
    %v8032 = vld [vmem:[%s8031] sm:$0xf]
    %v8033 = vld [vmem:[%s8031 + $0x4] sm:$0xf]
    %v8034 = vld [vmem:[%s8031 + $0x8] sm:$0xf]
    %v8035 = vld [vmem:[%s8031 + $0xc] sm:$0xf]
    %v8036 = vld [vmem:[%s8031 + $0x10] sm:$0xf]
    %v8037 = vld [vmem:[%s8031 + $0x14] sm:$0xf]
    %v8038 = vld [vmem:[%s8031 + $0x18] sm:$0xf]
    %v8039 = vld [vmem:[%s8031 + $0x1c] sm:$0xf]
    %v8040 = vld [vmem:[%s8031 + $0x20] sm:$0xf]
    %v8041 = vld [vmem:[%s8031 + $0x24] sm:$0xf]
    %v8042 = vld [vmem:[%s8031 + $0x28] sm:$0xf]
    %v8043 = vld [vmem:[%s8031 + $0x2c] sm:$0xf]
    %v8044 = vld [vmem:[%s8031 + $0x30] sm:$0xf]
    %v8045 = vld [vmem:[%s8031 + $0x34] sm:$0xf]
    %v8046 = vld [vmem:[%s8031 + $0x38] sm:$0xf]
    %v8047 = vld [vmem:[%s8031 + $0x3c] sm:$0xf]
    %v8064 = vunpack.c.l.b16 %v8032
    %v8065 = vunpack.c.l.b16 %v8033
    %v8066 = vunpack.c.l.b16 %v8034
    %v8067 = vunpack.c.l.b16 %v8035
    %v8068 = vunpack.c.l.b16 %v8036
    %v8069 = vunpack.c.l.b16 %v8037
    %v8070 = vunpack.c.l.b16 %v8038
    %v8071 = vunpack.c.l.b16 %v8039
    %v8072 = vunpack.c.l.b16 %v8040
    %v8073 = vunpack.c.l.b16 %v8041
    %v8074 = vunpack.c.l.b16 %v8042
    %v8075 = vunpack.c.l.b16 %v8043
    %v8076 = vunpack.c.l.b16 %v8044
    %v8077 = vunpack.c.l.b16 %v8045
    %v8078 = vunpack.c.l.b16 %v8046
    %v8079 = vunpack.c.l.b16 %v8047
    %v8080 = vpack.c.b16 %v8065, %v8064
    %v8081 = vpack.c.b16 %v8067, %v8066
    %v8082 = vpack.c.b16 %v8069, %v8068
    %v8083 = vpack.c.b16 %v8071, %v8070
    %v8084 = vpack.c.b16 %v8073, %v8072
    %v8085 = vpack.c.b16 %v8075, %v8074
    %v8086 = vpack.c.b16 %v8077, %v8076
    %v8087 = vpack.c.b16 %v8079, %v8078
    %8096 = vmatprep.subr.bf16.mxu0 0
    %8097 = vmatpush1.bf16.msra.mxu0 %v8087
    %8098 = vmatprep.subr.bf16.mxu0 0
    %8099 = vmatpush1.bf16.msra.mxu0 %v8086
    %8100 = vmatprep.subr.bf16.mxu0 0
    %8101 = vmatpush1.bf16.msra.mxu0 %v8085
    %8102 = vmatprep.subr.bf16.mxu0 0
    %8103 = vmatpush1.bf16.msra.mxu0 %v8084
    %8104 = vmatprep.subr.bf16.mxu0 0
    %8105 = vmatpush1.bf16.msra.mxu0 %v8083
    %8106 = vmatprep.subr.bf16.mxu0 0
    %8107 = vmatpush1.bf16.msra.mxu0 %v8082
    %8108 = vmatprep.subr.bf16.mxu0 0
    %8109 = vmatpush1.bf16.msra.mxu0 %v8081
    %8110 = vmatprep.subr.bf16.mxu0 0
    %8111 = vmatpush1.bf16.msra.mxu0 %v8080
    %8112 = vmatprep.subr.bf16.mxu0 0
    %8113 = vmatpush2.bf16.msra.mxu0 0
    %8114 = vmatprep.subr.bf16.mxu0 0
    %8115 = vmatpush2.bf16.msra.mxu0 0
    %8116 = vmatprep.subr.bf16.mxu0 0
    %8117 = vmatpush2.bf16.msra.mxu0 0
    %8118 = vmatprep.subr.bf16.mxu0 0
    %8119 = vmatpush2.bf16.msra.mxu0 0
    %8120 = vmatprep.subr.bf16.mxu0 0
    %8121 = vmatpush2.bf16.msra.mxu0 0
    %8122 = vmatprep.subr.bf16.mxu0 0
    %8123 = vmatpush2.bf16.msra.mxu0 0
    %8124 = vmatprep.subr.bf16.mxu0 0
    %8125 = vmatpush2.bf16.msra.mxu0 0
    %8126 = vmatprep.subr.bf16.mxu0 0
    %8127 = vmatpush2.bf16.msra.mxu0 0
    %8128 = vmatprep.mubr.bf16.mxu0 0
    %8129 = vmatmul.mubr.bf16.gmra.mxu0 %v8030
    %v8130 = vpop.f32.mrf.mxu0
    %v8131 = vadd.f32 0.0, %v8130
    %v8132 = vpop.f32.mrf.mxu0
    %v8133 = vpop.f32.mrf.mxu0
    %v8134 = vpop.f32.mrf.mxu0
    %8135 = vdwg.mxu0
    %v8136 = vadd.f32 %v8027, %v8131
    %s8137 = scalar_lea.vmem [#allocation5], 36
    %v8138 = vld [vmem:[%s8137] ss:$40 sm:$0x3]
    %v8139 = vpack.c.bf16 %v8138, %v8138
    %s8140 = scalar_lea.vmem [#allocation15], 2304
    %v8141 = vld [vmem:[%s8140] sm:$0xf]
    %v8142 = vld [vmem:[%s8140 + $0x4] sm:$0xf]
    %v8143 = vld [vmem:[%s8140 + $0x8] sm:$0xf]
    %v8144 = vld [vmem:[%s8140 + $0xc] sm:$0xf]
    %v8145 = vld [vmem:[%s8140 + $0x10] sm:$0xf]
    %v8146 = vld [vmem:[%s8140 + $0x14] sm:$0xf]
    %v8147 = vld [vmem:[%s8140 + $0x18] sm:$0xf]
    %v8148 = vld [vmem:[%s8140 + $0x1c] sm:$0xf]
    %v8149 = vld [vmem:[%s8140 + $0x20] sm:$0xf]
    %v8150 = vld [vmem:[%s8140 + $0x24] sm:$0xf]
    %v8151 = vld [vmem:[%s8140 + $0x28] sm:$0xf]
    %v8152 = vld [vmem:[%s8140 + $0x2c] sm:$0xf]
    %v8153 = vld [vmem:[%s8140 + $0x30] sm:$0xf]
    %v8154 = vld [vmem:[%s8140 + $0x34] sm:$0xf]
    %v8155 = vld [vmem:[%s8140 + $0x38] sm:$0xf]
    %v8156 = vld [vmem:[%s8140 + $0x3c] sm:$0xf]
    %v8173 = vunpack.c.l.b16 %v8141
    %v8174 = vunpack.c.l.b16 %v8142
    %v8175 = vunpack.c.l.b16 %v8143
    %v8176 = vunpack.c.l.b16 %v8144
    %v8177 = vunpack.c.l.b16 %v8145
    %v8178 = vunpack.c.l.b16 %v8146
    %v8179 = vunpack.c.l.b16 %v8147
    %v8180 = vunpack.c.l.b16 %v8148
    %v8181 = vunpack.c.l.b16 %v8149
    %v8182 = vunpack.c.l.b16 %v8150
    %v8183 = vunpack.c.l.b16 %v8151
    %v8184 = vunpack.c.l.b16 %v8152
    %v8185 = vunpack.c.l.b16 %v8153
    %v8186 = vunpack.c.l.b16 %v8154
    %v8187 = vunpack.c.l.b16 %v8155
    %v8188 = vunpack.c.l.b16 %v8156
    %v8189 = vpack.c.b16 %v8174, %v8173
    %v8190 = vpack.c.b16 %v8176, %v8175
    %v8191 = vpack.c.b16 %v8178, %v8177
    %v8192 = vpack.c.b16 %v8180, %v8179
    %v8193 = vpack.c.b16 %v8182, %v8181
    %v8194 = vpack.c.b16 %v8184, %v8183
    %v8195 = vpack.c.b16 %v8186, %v8185
    %v8196 = vpack.c.b16 %v8188, %v8187
    %8205 = vmatprep.subr.bf16.mxu0 0
    %8206 = vmatpush1.bf16.msra.mxu0 %v8196
    %8207 = vmatprep.subr.bf16.mxu0 0
    %8208 = vmatpush1.bf16.msra.mxu0 %v8195
    %8209 = vmatprep.subr.bf16.mxu0 0
    %8210 = vmatpush1.bf16.msra.mxu0 %v8194
    %8211 = vmatprep.subr.bf16.mxu0 0
    %8212 = vmatpush1.bf16.msra.mxu0 %v8193
    %8213 = vmatprep.subr.bf16.mxu0 0
    %8214 = vmatpush1.bf16.msra.mxu0 %v8192
    %8215 = vmatprep.subr.bf16.mxu0 0
    %8216 = vmatpush1.bf16.msra.mxu0 %v8191
    %8217 = vmatprep.subr.bf16.mxu0 0
    %8218 = vmatpush1.bf16.msra.mxu0 %v8190
    %8219 = vmatprep.subr.bf16.mxu0 0
    %8220 = vmatpush1.bf16.msra.mxu0 %v8189
    %8221 = vmatprep.subr.bf16.mxu0 0
    %8222 = vmatpush2.bf16.msra.mxu0 0
    %8223 = vmatprep.subr.bf16.mxu0 0
    %8224 = vmatpush2.bf16.msra.mxu0 0
    %8225 = vmatprep.subr.bf16.mxu0 0
    %8226 = vmatpush2.bf16.msra.mxu0 0
    %8227 = vmatprep.subr.bf16.mxu0 0
    %8228 = vmatpush2.bf16.msra.mxu0 0
    %8229 = vmatprep.subr.bf16.mxu0 0
    %8230 = vmatpush2.bf16.msra.mxu0 0
    %8231 = vmatprep.subr.bf16.mxu0 0
    %8232 = vmatpush2.bf16.msra.mxu0 0
    %8233 = vmatprep.subr.bf16.mxu0 0
    %8234 = vmatpush2.bf16.msra.mxu0 0
    %8235 = vmatprep.subr.bf16.mxu0 0
    %8236 = vmatpush2.bf16.msra.mxu0 0
    %8237 = vmatprep.mubr.bf16.mxu0 0
    %8238 = vmatmul.mubr.bf16.gmra.mxu0 %v8139
    %v8239 = vpop.f32.mrf.mxu0
    %v8240 = vadd.f32 0.0, %v8239
    %v8241 = vpop.f32.mrf.mxu0
    %v8242 = vpop.f32.mrf.mxu0
    %v8243 = vpop.f32.mrf.mxu0
    %8244 = vdwg.mxu0
    %v8245 = vadd.f32 %v8136, %v8240
    %v8246 = vld [vmem:[#allocation17] sm:$0x1]
    %v8248 = vlaneseq
    %v8249 = vshrl.u32 %v8248, 7
    %v8250 = vsub.s32 0, %v8249
    %v8251 = vrot.slane %v8246, %v8250
    %v8253 = vadd.f32 %v8245, %v8251
    %v8254 = vmax.f32 %v8253, 0.0
    %8255 = vst [vmem:[#allocation18] sm:$0x3] %v8254
    // Predicated region
    $region66: #{phys_branch_forward.1} parent=1 // pred_check
      _
    $region67: #{phys_branch_forward.1} parent=1 // pred_check_branch
      %8257 = sbr.rel (0) target = $region69
    $region68: #{phys_branch_forward.1} parent=1 // pred_region
      %s8259 = ssub.s32 32, 32
      %8260 = vsyncadd [#allocation8], %s8259
      %s8262 = sshll.u32 [#allocation18], 4
      %s8263 = int_to_ptr.vmem [resolvable:$true] %s8262
      %8265 = dma.vmem_to_hbm [thread:$0]  %s8263, 32, %s9, [#allocation8]
    $region69: #{phys_branch_forward.1} parent=1 // pred_fallthru
      _
    // Predicated region
    $region70: #{phys_branch_forward.1} parent=1 // pred_check
      _
    $region71: #{phys_branch_forward.1} parent=1 // pred_check_branch
      %8267 = sbr.rel (0) target = $region73
    $region72: #{phys_branch_forward.1} parent=1 // pred_region
      %8268 = dma.done [#allocation8], 32
    $region73: #{phys_branch_forward.1} parent=1 // pred_fallthru
      _
    %8269 = vsyncpa [#allocation7], 1
    %8270 = vsyncpa [#allocation10], 1
    %8271 = vsyncpa [#allocation13], 1
    %8272 = vsyncpa [#allocation16], 1
    %8273 = vsyncpa [#allocation8], 1

</llo_original>
